<compile_context>
chip_gen: v7x
topology: tpu7x:2x2x1
jax: 0.10.0
libtpu: 0.0.40
codegen_flags: <defaults>
</compile_context>

<pallas_src>
import jax
import jax.numpy as jnp
from jax.experimental import pallas as pl
from jax.experimental.pallas import tpu as pltpu

N_REGION = 10
N_ROI = 2 * N_REGION          # 20 ROI branches (roi_conv_i / roi_fc_i)
NFC = 150                     # out_features of each roi_fc_i
UP = 6                        # 3x3 patch -> bilinear upsample x2 -> 6x6
N_POS = UP * UP               # 36 spatial positions per ROI after upsample


def _upsample_matrix():
    # nn.Upsample(scale_factor=2, mode='bilinear', align_corners=False), 3 -> 6,
    # expressed as a 6x3 linear map (separable along H and W).
    rows = []
    for d in range(UP):
        src = max((d + 0.5) * 0.5 - 0.5, 0.0)
        i0 = int(src)
        i1 = min(i0 + 1, 2)
        w1 = src - i0
        r = [0.0, 0.0, 0.0]
        r[i0] += 1.0 - w1
        r[i1] += w1
        rows.append(r)
    return jnp.array(rows, dtype=jnp.float32)


def process_landmarks(landmarks):
    # landmarks: (B, 68, 2) float32 -> (B, 10, 4) / 16   (same math as the module)
    arr2d = jnp.transpose(landmarks, (0, 2, 1))           # (B, 2, 68)
    xs, ys = arr2d[:, 0, :], arr2d[:, 1, :]
    ruler = jnp.abs(xs[:, 39] - xs[:, 42])
    zero = jnp.zeros_like(ruler)

    def mk(i1, dy1, i2, dy2):
        return jnp.stack([xs[:, i1], ys[:, i1] + dy1, xs[:, i2], ys[:, i2] + dy2], axis=1)

    region = jnp.stack([
        mk(21, -ruler / 2, 22, -ruler / 2),
        mk(18, -ruler / 3, 25, -ruler / 3),
        mk(19, ruler / 3, 24, ruler / 3),
        mk(41, ruler, 46, ruler),
        mk(38, zero, 43, zero),
        mk(49, zero, 53, zero),
        mk(48, zero, 54, zero),
        mk(51, zero, 57, zero),
        mk(61, zero, 63, zero),
        mk(56, ruler / 2, 58, ruler / 2),
    ], axis=1)                                            # (B, 10, 4)
    return region / 16.0


def _clamped_positions(y, H, W):
    # Module semantics: clamp(int(pos), 1, 12).  Additionally clip to the real
    # feature-map bounds so 3x3 crops stay in-bounds for any H/W.
    pos = process_landmarks(y).astype(jnp.int32)          # (B, 10, 4) = [x1,y1,x2,y2]
    limits = jnp.array([min(12, W - 2), min(12, H - 2),
                        min(12, W - 2), min(12, H - 2)], dtype=jnp.int32)
    return jnp.clip(pos, 1, limits)


def extract_patches(x, pos):
    # x: (B, C, H, W); pos: (B, 10, 4) int32 (in-bounds)
    # returns (B, 20, C, 3, 3) in the same order as new_input's channel blocks.
    B, C, _, _ = x.shape

    def crop_one(img, p):                                  # img (C,H,W), p (4,)
        a = jax.lax.dynamic_slice(img, (0, p[1] - 1, p[0] - 1), (C, 3, 3))
        b = jax.lax.dynamic_slice(img, (0, p[3] - 1, p[2] - 1), (C, 3, 3))
        return jnp.stack([a, b], axis=0)                   # (2, C, 3, 3)

    crops = jax.vmap(jax.vmap(crop_one, in_axes=(None, 0)), in_axes=(0, 0))(x, pos)
    return crops.reshape(B, N_ROI, C, 3, 3)                # (B, 20, C, 3, 3)


def build_cols(x, y, dtype=jnp.bfloat16):
    """Glue: landmarks -> ROI crops -> fused (upsample+pad+3x3 tap) -> im2col cols.

    Output: (N_ROI, B*36, 9*C) in `dtype`, rows (batch-major, position-minor) and
    lanes ordered (di, dj, c) with c minor — exactly the kernel layout.
    """
    B, C, H, W = x.shape
    pos = _clamped_positions(y, H, W)
    patches = extract_patches(x, pos)                      # (B, 20, C, 3, 3)
    U = _upsample_matrix()                                 # (6, 3)
    Upad = jnp.pad(U, ((1, 1), (0, 0)))                    # rows for out idx -1..6
    # A[i, d, a] = Upad[i + d, a]: fuses bilinear-upsample, zero padding and the
    # 3x3 conv tap offset d into one constant (6, 3, 3) operator.
    A = jnp.stack([Upad[d:d + UP] for d in range(3)], axis=1)  # (6, 3, 3)
    # cols[t, b*36 + i*6 + j, (di*3+dj)*C + c] = up_padded[b, t, c, i+di-1, j+dj-1]
    cols = jnp.einsum('pda,qeb,ntcab->tnpqdec', A, A, patches)
    return cols.reshape(N_ROI, B * N_POS, 9 * C).astype(dtype)


def roi_conv_fc_kernel(cols_ref, wconv_ref, bconv_ref, wfc_ref, bfc_ref, out_ref):
    # cols_ref : (R, B*36, 9C)   bf16 im2col of the upsampled ROI patches
    # wconv_ref: (R, 9C, C)      bf16 conv weight, row idx (di,dj,ci)
    # bconv_ref: (R, 1, C)       f32
    # wfc_ref  : (R, 150, 36*C)  bf16 fc weight, lane dim 36*C (mult of 128), idx p*C+c
    # bfc_ref  : (R, 1, 150)     f32
    # out_ref  : (R, B, 150)     f32
    R, B = out_ref.shape[0], out_ref.shape[1]
    C = wconv_ref.shape[2]
    for r in range(R):  # static, unrolled (R in {1, 2})
        cols = cols_ref[r]                                               # (B*36, 9C)
        conv = jnp.dot(cols, wconv_ref[r], preferred_element_type=jnp.float32)
        conv = jnp.maximum(conv + bconv_ref[r], 0.0)                     # (B*36, C) f32
        # Rows are (b, p) so a row-major reshape gives (B, 36*C) with index p*C+c.
        # TODO(synk): check in a bundle dump that this small relayout stays off
        # the critical path (it is ~144 KiB even at prod scale).
        conv_flat = conv.reshape(B, N_POS * C).astype(wfc_ref.dtype)
        # Single FC matmul per ROI: contract last axes of both operands
        # (same Q@K^T pattern as flash attention -> MXU-native).
        fc = jax.lax.dot_general(conv_flat, wfc_ref[r],
                                 dimension_numbers=(((1,), (1,)), ((), ())),
                                 preferred_element_type=jnp.float32)     # (B, 150)
        out_ref[r] = jnp.maximum(fc + bfc_ref[r], 0.0)


def prepare_roi_params(params, weight_dtype=jnp.bfloat16):
    """One-time weight re-layout + dtype narrowing (hoisted out of forward).

    Weights go to bf16 (HBM-bandwidth bound kernel); biases stay f32.
    """
    C = params['wconv'].shape[1]
    # (20, Cout, Cin, 3, 3) -> (20, 3, 3, Cin, Cout) -> (20, 9*Cin, Cout), row (di*3+dj)*Cin+ci
    wconv_mat = params['wconv'].transpose(0, 3, 4, 2, 1).reshape(N_ROI, 9 * C, C)
    bconv2 = params['bconv'].reshape(N_ROI, 1, C).astype(jnp.float32)
    # (20, 150, C*36) flat index c*36+p  ->  (20, 150, 36*C) flat index p*C+c
    wfc_k = (params['wfc'].reshape(N_ROI, NFC, C, N_POS)
             .transpose(0, 1, 3, 2).reshape(N_ROI, NFC, N_POS * C))
    bfc2 = params['bfc'].reshape(N_ROI, 1, NFC).astype(jnp.float32)
    return {'wconv': wconv_mat.astype(weight_dtype), 'bconv': bconv2,
            'wfc': wfc_k.astype(weight_dtype), 'bfc': bfc2}


def _plan_grid(B, C, weight_itemsize):
    """Pick ROIs-per-step and a VMEM limit from the actual block footprint."""
    per_roi_bytes = (B * N_POS * 9 * C        # cols block
                     + 9 * C * C              # wconv block
                     + NFC * N_POS * C        # wfc block (dominant)
                     ) * weight_itemsize \
                    + (C + NFC + B * NFC) * 4  # f32 biases + f32 out block
    # 2 ROIs per step halves grid-step overhead on single-TC v5e/v6e and keeps
    # v7x's two cores balanced; fall back to 1 when double-buffered blocks get big
    # (e.g. prod C=512) so the footprint stays well inside v7x's 64 MiB VMEM.
    roi_per_step = 2 if (2 * 2 * per_roi_bytes) <= (24 << 20) else 1
    need = 2 * roi_per_step * per_roi_bytes            # double-buffered working set
    vmem_limit = int(min(max(need + (8 << 20), 32 << 20), 64 << 20))
    return roi_per_step, vmem_limit


def roi_layer_forward(x, y, kparams):
    B, C, _, _ = x.shape
    w_dtype = kparams['wfc'].dtype
    cols_k = build_cols(x, y, dtype=w_dtype)               # (20, B*36, 9C)
    rps, vmem_limit = _plan_grid(B, C, jnp.dtype(w_dtype).itemsize)
    assert N_ROI % rps == 0
    out = pl.pallas_call(
        roi_conv_fc_kernel,
        out_shape=jax.ShapeDtypeStruct((N_ROI, B, NFC), jnp.float32),
        grid=(N_ROI // rps,),
        in_specs=[
            pl.BlockSpec((rps, B * N_POS, 9 * C), lambda i: (i, 0, 0)),
            pl.BlockSpec((rps, 9 * C, C), lambda i: (i, 0, 0)),
            pl.BlockSpec((rps, 1, C), lambda i: (i, 0, 0)),
            pl.BlockSpec((rps, NFC, N_POS * C), lambda i: (i, 0, 0)),
            pl.BlockSpec((rps, 1, NFC), lambda i: (i, 0, 0)),
        ],
        out_specs=pl.BlockSpec((rps, B, NFC), lambda i: (i, 0, 0)),
        # ROI axis writes disjoint output blocks -> parallel (uses both v7x cores).
        compiler_params=pltpu.CompilerParams(
            dimension_semantics=("parallel",),
            vmem_limit_bytes=vmem_limit),
    )(cols_k, kparams['wconv'], kparams['bconv'], kparams['wfc'], kparams['bfc'])
    # torch.cat([fc_0, ..., fc_19], dim=1)
    return out.transpose(1, 0, 2).reshape(B, N_ROI * NFC)
    # NOTE: the kernel is HBM-bound at small B; only a larger batch (tile B with
    # an extra "parallel" grid axis on cols/out) can move it toward the MXU roofline.


def reference_forward(x, y, params):
    """Pure-JAX f32 reference with the same semantics (for correctness check)."""
    B, C, H, W = x.shape
    pos = _clamped_positions(y, H, W)
    patches = extract_patches(x, pos)                      # (B, 20, C, 3, 3)
    U = _upsample_matrix()
    up = jnp.einsum('ia,jb,ntcab->ntcij', U, U, patches)   # (B, 20, C, 6, 6)
    outs = []
    for t in range(N_ROI):
        conv = jax.lax.conv_general_dilated(
            up[:, t], params['wconv'][t], window_strides=(1, 1),
            padding=((1, 1), (1, 1)), dimension_numbers=('NCHW', 'OIHW', 'NCHW'))
        conv = jnp.maximum(conv + params['bconv'][t][None, :, None, None], 0.0)
        flat = conv.reshape(B, -1)                          # (B, C*36), channel-major
        fc = jnp.maximum(flat @ params['wfc'][t].T + params['bfc'][t], 0.0)
        outs.append(fc)
    return jnp.concatenate(outs, axis=1)


if __name__ == "__main__":
    # The PyTorch module hard-codes 512 channels; we keep the exact structure but run a
    # small C=128 instance (14x14 feature map, 68 landmarks) to keep the demo light.
    B, C, H, W = 2, 128, 14, 14
    key = jax.random.PRNGKey(0)
    kx, ky, kw1, kw2, kw3, kw4 = jax.random.split(key, 6)

    x = jax.random.normal(kx, (B, C, H, W), dtype=jnp.float32)
    # 68 facial landmarks in pixel coordinates; /16 + clamp keeps crops in-bounds.
    y = jax.random.uniform(ky, (B, 68, 2), minval=24.0, maxval=200.0, dtype=jnp.float32)

    params = {
        'wconv': 0.05 * jax.random.normal(kw1, (N_ROI, C, C, 3, 3), dtype=jnp.float32),
        'bconv': 0.05 * jax.random.normal(kw2, (N_ROI, C), dtype=jnp.float32),
        'wfc':   0.02 * jax.random.normal(kw3, (N_ROI, NFC, C * N_POS), dtype=jnp.float32),
        'bfc':   0.02 * jax.random.normal(kw4, (N_ROI, NFC), dtype=jnp.float32),
    }

    # Weight re-layout + bf16 narrowing done once at load time (NOT per forward).
    kparams = jax.tree_util.tree_map(jax.block_until_ready, prepare_roi_params(params))

    fwd = jax.jit(roi_layer_forward)
    out = jax.block_until_ready(fwd(x, y, kparams))
    ref = jax.block_until_ready(reference_forward(x, y, params))

    assert out.shape == (B, N_ROI * NFC), out.shape
    rel = jnp.linalg.norm(out - ref) / (jnp.linalg.norm(ref) + 1e-6)
    assert float(rel) < 2e-2, f"mismatch vs reference: rel={float(rel)}"
    print("KERNEL_OK")
</pallas_src>

<mosaic_0001>
module attributes {stable_mosaic.version = 11 : i64} {
  func.func @roi_conv_fc_kernel(%arg0: i32, %arg1: memref<2x72x1152xbf16, #tpu.memory_space<vmem>>, %arg2: memref<2x1152x128xbf16, #tpu.memory_space<vmem>>, %arg3: memref<2x1x128xf32, #tpu.memory_space<vmem>>, %arg4: memref<2x150x4608xbf16, #tpu.memory_space<vmem>>, %arg5: memref<2x1x150xf32, #tpu.memory_space<vmem>>, %arg6: memref<2x2x150xf32, #tpu.memory_space<vmem>>) attributes {dimension_semantics = [#tpu.dimension_semantics<parallel>], iteration_bounds = array<i64: 10>, scalar_prefetch = 0 : i64, scratch_operands = 0 : i64, tpu.core_type = #tpu.core_type<tc>, window_params = [{transform_indices = @transform_0, window_bounds = array<i64: 2, 72, 1152>}, {transform_indices = @transform_1, window_bounds = array<i64: 2, 1152, 128>}, {transform_indices = @transform_2, window_bounds = array<i64: 2, 1, 128>}, {transform_indices = @transform_3, window_bounds = array<i64: 2, 150, 4608>}, {transform_indices = @transform_4, window_bounds = array<i64: 2, 1, 150>}, {transform_indices = @transform_5, window_bounds = array<i64: 2, 2, 150>}]} {
    %c0 = arith.constant 0 : index
    %c0_0 = arith.constant 0 : index
    %c0_1 = arith.constant 0 : index
    %0 = vector.load %arg1[%c0, %c0_0, %c0_1] : memref<2x72x1152xbf16, #tpu.memory_space<vmem>>, vector<1x72x1152xbf16>
    %1 = vector.shape_cast %0 : vector<1x72x1152xbf16> to vector<72x1152xbf16>
    %c0_2 = arith.constant 0 : index
    %c0_3 = arith.constant 0 : index
    %c0_4 = arith.constant 0 : index
    %2 = vector.load %arg2[%c0_2, %c0_3, %c0_4] : memref<2x1152x128xbf16, #tpu.memory_space<vmem>>, vector<1x1152x128xbf16>
    %3 = vector.shape_cast %2 : vector<1x1152x128xbf16> to vector<1152x128xbf16>
    %cst = arith.constant dense<0.000000e+00> : vector<72x128xf32>
    %4 = tpu.matmul %1, %3, %cst {dimension_numbers = #tpu.dot_dimension_numbers<[1], [0], [0], [1], [0, 0, 1, 1], [], []>} : vector<72x1152xbf16>, vector<1152x128xbf16>, vector<72x128xf32> -> vector<72x128xf32>
    %c0_5 = arith.constant 0 : index
    %c0_6 = arith.constant 0 : index
    %c0_7 = arith.constant 0 : index
    %5 = vector.load %arg3[%c0_5, %c0_6, %c0_7] : memref<2x1x128xf32, #tpu.memory_space<vmem>>, vector<1x1x128xf32>
    %6 = vector.shape_cast %5 : vector<1x1x128xf32> to vector<1x128xf32>
    %7 = vector.broadcast %6 : vector<1x128xf32> to vector<72x128xf32>
    %8 = arith.addf %4, %7 : vector<72x128xf32>
    %cst_8 = arith.constant 0.000000e+00 : f32
    %9 = vector.broadcast %cst_8 : f32 to vector<72x128xf32>
    %10 = arith.maximumf %8, %9 : vector<72x128xf32>
    %11 = vector.shape_cast %10 : vector<72x128xf32> to vector<2x4608xf32>
    %12 = arith.truncf %11 : vector<2x4608xf32> to vector<2x4608xbf16>
    %c0_9 = arith.constant 0 : index
    %c0_10 = arith.constant 0 : index
    %c0_11 = arith.constant 0 : index
    %13 = vector.load %arg4[%c0_9, %c0_10, %c0_11] : memref<2x150x4608xbf16, #tpu.memory_space<vmem>>, vector<1x150x4608xbf16>
    %14 = vector.shape_cast %13 : vector<1x150x4608xbf16> to vector<150x4608xbf16>
    %cst_12 = arith.constant dense<0.000000e+00> : vector<2x150xf32>
    %15 = tpu.matmul %12, %14, %cst_12 {dimension_numbers = #tpu.dot_dimension_numbers<[1], [1], [0], [0], [0, 0, 1, 0], [], []>} : vector<2x4608xbf16>, vector<150x4608xbf16>, vector<2x150xf32> -> vector<2x150xf32>
    %c0_13 = arith.constant 0 : index
    %c0_14 = arith.constant 0 : index
    %c0_15 = arith.constant 0 : index
    %16 = vector.load %arg5[%c0_13, %c0_14, %c0_15] : memref<2x1x150xf32, #tpu.memory_space<vmem>>, vector<1x1x150xf32>
    %17 = vector.shape_cast %16 : vector<1x1x150xf32> to vector<1x150xf32>
    %18 = vector.broadcast %17 : vector<1x150xf32> to vector<2x150xf32>
    %19 = arith.addf %15, %18 : vector<2x150xf32>
    %cst_16 = arith.constant 0.000000e+00 : f32
    %20 = vector.broadcast %cst_16 : f32 to vector<2x150xf32>
    %21 = arith.maximumf %19, %20 : vector<2x150xf32>
    %c0_17 = arith.constant 0 : index
    %c0_18 = arith.constant 0 : index
    %c0_19 = arith.constant 0 : index
    %22 = vector.load %arg6[%c0_17, %c0_18, %c0_19] : memref<2x2x150xf32, #tpu.memory_space<vmem>>, vector<1x2x150xf32>
    %23 = vector.shape_cast %22 : vector<1x2x150xf32> to vector<2x150xf32>
    %24 = vector.shape_cast %21 : vector<2x150xf32> to vector<1x2x150xf32>
    tpu.vector_store %arg6[%c0_17, %c0_18, %c0_19], %24 {strides = array<i32>} : memref<2x2x150xf32, #tpu.memory_space<vmem>>, vector<1x2x150xf32>,
    %c1 = arith.constant 1 : index
    %c0_20 = arith.constant 0 : index
    %c0_21 = arith.constant 0 : index
    %25 = vector.load %arg1[%c1, %c0_20, %c0_21] : memref<2x72x1152xbf16, #tpu.memory_space<vmem>>, vector<1x72x1152xbf16>
    %26 = vector.shape_cast %25 : vector<1x72x1152xbf16> to vector<72x1152xbf16>
    %c1_22 = arith.constant 1 : index
    %c0_23 = arith.constant 0 : index
    %c0_24 = arith.constant 0 : index
    %27 = vector.load %arg2[%c1_22, %c0_23, %c0_24] : memref<2x1152x128xbf16, #tpu.memory_space<vmem>>, vector<1x1152x128xbf16>
    %28 = vector.shape_cast %27 : vector<1x1152x128xbf16> to vector<1152x128xbf16>
    %cst_25 = arith.constant dense<0.000000e+00> : vector<72x128xf32>
    %29 = tpu.matmul %26, %28, %cst_25 {dimension_numbers = #tpu.dot_dimension_numbers<[1], [0], [0], [1], [0, 0, 1, 1], [], []>} : vector<72x1152xbf16>, vector<1152x128xbf16>, vector<72x128xf32> -> vector<72x128xf32>
    %c1_26 = arith.constant 1 : index
    %c0_27 = arith.constant 0 : index
    %c0_28 = arith.constant 0 : index
    %30 = vector.load %arg3[%c1_26, %c0_27, %c0_28] : memref<2x1x128xf32, #tpu.memory_space<vmem>>, vector<1x1x128xf32>
    %31 = vector.shape_cast %30 : vector<1x1x128xf32> to vector<1x128xf32>
    %32 = vector.broadcast %31 : vector<1x128xf32> to vector<72x128xf32>
    %33 = arith.addf %29, %32 : vector<72x128xf32>
    %cst_29 = arith.constant 0.000000e+00 : f32
    %34 = vector.broadcast %cst_29 : f32 to vector<72x128xf32>
    %35 = arith.maximumf %33, %34 : vector<72x128xf32>
    %36 = vector.shape_cast %35 : vector<72x128xf32> to vector<2x4608xf32>
    %37 = arith.truncf %36 : vector<2x4608xf32> to vector<2x4608xbf16>
    %c1_30 = arith.constant 1 : index
    %c0_31 = arith.constant 0 : index
    %c0_32 = arith.constant 0 : index
    %38 = vector.load %arg4[%c1_30, %c0_31, %c0_32] : memref<2x150x4608xbf16, #tpu.memory_space<vmem>>, vector<1x150x4608xbf16>
    %39 = vector.shape_cast %38 : vector<1x150x4608xbf16> to vector<150x4608xbf16>
    %cst_33 = arith.constant dense<0.000000e+00> : vector<2x150xf32>
    %40 = tpu.matmul %37, %39, %cst_33 {dimension_numbers = #tpu.dot_dimension_numbers<[1], [1], [0], [0], [0, 0, 1, 0], [], []>} : vector<2x4608xbf16>, vector<150x4608xbf16>, vector<2x150xf32> -> vector<2x150xf32>
    %c1_34 = arith.constant 1 : index
    %c0_35 = arith.constant 0 : index
    %c0_36 = arith.constant 0 : index
    %41 = vector.load %arg5[%c1_34, %c0_35, %c0_36] : memref<2x1x150xf32, #tpu.memory_space<vmem>>, vector<1x1x150xf32>
    %42 = vector.shape_cast %41 : vector<1x1x150xf32> to vector<1x150xf32>
    %43 = vector.broadcast %42 : vector<1x150xf32> to vector<2x150xf32>
    %44 = arith.addf %40, %43 : vector<2x150xf32>
    %cst_37 = arith.constant 0.000000e+00 : f32
    %45 = vector.broadcast %cst_37 : f32 to vector<2x150xf32>
    %46 = arith.maximumf %44, %45 : vector<2x150xf32>
    %c1_38 = arith.constant 1 : index
    %c0_39 = arith.constant 0 : index
    %c0_40 = arith.constant 0 : index
    %47 = vector.load %arg6[%c1_38, %c0_39, %c0_40] : memref<2x2x150xf32, #tpu.memory_space<vmem>>, vector<1x2x150xf32>
    %48 = vector.shape_cast %47 : vector<1x2x150xf32> to vector<2x150xf32>
    %49 = vector.shape_cast %46 : vector<2x150xf32> to vector<1x2x150xf32>
    tpu.vector_store %arg6[%c1_38, %c0_39, %c0_40], %49 {strides = array<i32>} : memref<2x2x150xf32, #tpu.memory_space<vmem>>, vector<1x2x150xf32>,
    return
  }
  func.func @transform_0(%arg0: i32) -> (i32, i32, i32) {
    %c0_i32 = arith.constant 0 : i32
    %c0_i32_0 = arith.constant 0 : i32
    %c0_i32_1 = arith.constant 0 : i32
    return %arg0, %c0_i32, %c0_i32_0 : i32, i32, i32
  }
  func.func @transform_1(%arg0: i32) -> (i32, i32, i32) {
    %c0_i32 = arith.constant 0 : i32
    %c0_i32_0 = arith.constant 0 : i32
    %c0_i32_1 = arith.constant 0 : i32
    return %arg0, %c0_i32, %c0_i32_0 : i32, i32, i32
  }
  func.func @transform_2(%arg0: i32) -> (i32, i32, i32) {
    %c0_i32 = arith.constant 0 : i32
    %c0_i32_0 = arith.constant 0 : i32
    %c0_i32_1 = arith.constant 0 : i32
    return %arg0, %c0_i32, %c0_i32_0 : i32, i32, i32
  }
  func.func @transform_3(%arg0: i32) -> (i32, i32, i32) {
    %c0_i32 = arith.constant 0 : i32
    %c0_i32_0 = arith.constant 0 : i32
    %c0_i32_1 = arith.constant 0 : i32
    return %arg0, %c0_i32, %c0_i32_0 : i32, i32, i32
  }
  func.func @transform_4(%arg0: i32) -> (i32, i32, i32) {
    %c0_i32 = arith.constant 0 : i32
    %c0_i32_0 = arith.constant 0 : i32
    %c0_i32_1 = arith.constant 0 : i32
    return %arg0, %c0_i32, %c0_i32_0 : i32, i32, i32
  }
  func.func @transform_5(%arg0: i32) -> (i32, i32, i32) {
    %c0_i32 = arith.constant 0 : i32
    %c0_i32_0 = arith.constant 0 : i32
    %c0_i32_1 = arith.constant 0 : i32
    return %arg0, %c0_i32, %c0_i32_0 : i32, i32, i32
  }
}

</mosaic_0001>

<llo_original>
// kernel: roi_layer_forward.1
$region0: #{roi_layer_forward.1}
  #allocation0 [shape = 'u32[]', space=smem, size = 0x4, offset = 0x4, fixed_abs, tag = 'smem constant byte address 0x4 - core index']
  #allocation1 [shape = 'u32[144,128]{1,0:T(1,128)}', space=vmem, size = 0x12000, scoped, tag = 'internal scratch']
  %s0 = inlined_call_operand.hbm [shape: bf16[20,72,1152], index: 0, kind: input, shape index: {}]
  %s1 = inlined_call_operand.hbm [shape: bf16[20,1152,128], index: 1, kind: input, shape index: {}]
  %s2 = inlined_call_operand.vmem [shape: f32[20,1,128], index: 2, kind: input, shape index: {}]
  %s3 = inlined_call_operand.vmem [shape: bf16[20,150,4608], index: 3, kind: input, shape index: {}]
  %s4 = inlined_call_operand.vmem [shape: f32[20,1,150], index: 4, kind: input, shape index: {}]
  %s5 = inlined_call_operand.vmem [shape: f32[20,2,150], index: 5, kind: output, shape index: {}]
  %s6 = sld [smem:[#allocation0]]
  $region61: #{roi_layer_forward.1} parent=0
    _
  %s8 = ssub.s32 1, %s6
  %s9 = scalar_select 0, %s8, %s6
  $region1: #{roi_layer_forward.1} parent=0
    #allocation2 [shape = 'u8[663552]{0}', space=vmem, size = 0xa2000, scoped, tag = 'input window, operand 0']
    #allocation3 [shape = 's32[2]{0}', space=sflag, size = 0x8, scoped, tag = 'scoped memory for roi_layer_forward.1']
    #allocation4 [shape = 'u8[1179648]{0}', space=vmem, size = 0x120000, scoped, tag = 'input window, operand 1']
    #allocation5 [shape = 's32[2]{0}', space=sflag, size = 0x8, scoped, tag = 'scoped memory for roi_layer_forward.1']
    %10 = vsyncpa [#allocation3], 0
    %s11 = scalar_lea.sflag [#allocation3], 1
    %12 = vsyncpa %s11, 0
    %13 = vsyncpa [#allocation5], 0
    %s14 = scalar_lea.sflag [#allocation5], 1
    %15 = vsyncpa %s14, 0
    loop: start=0, step=1, limit=12
    $region2: #{roi_layer_forward.1} parent=1 // loop_pre_header
      _
    $region3: #{roi_layer_forward.1} parent=1 // loop_header
      %s17 = sphi 0, %s21
      %p18 = scmp.ge.s32.totalorder %s17, 12
      %s27 = sphi 0, %s29
      %s30 = sphi 0, %s27
      %s31 = sphi 0, %s30
      %s47 = sphi 0, %s31
      %s53 = sphi 0, %s55
      %s56 = sphi 0, %s53
      %s57 = sphi 0, %s56
      %s73 = sphi 0, %s57
      %s79 = sphi 0, %s81
      %s82 = sphi 0, %s79
      %s83 = sphi 0, %s82
      %s99 = sphi 0, %s83
      %s105 = sphi 0, %s107
      %s108 = sphi 0, %s105
      %s109 = sphi 0, %s108
      %s125 = sphi 0, %s109
      %s131 = sphi 0, %s133
      %s134 = sphi 0, %s131
      %s135 = sphi 0, %s134
      %s151 = sphi 0, %s135
      %s157 = sphi 0, %s159
      %s160 = sphi 0, %s157
      %s161 = sphi 0, %s160
      %s177 = sphi 0, %s161
    $region4: #{roi_layer_forward.1} parent=1 // loop_header_branch
      %20 = sbr.rel (%p18) target = $region8
    $region5: #{roi_layer_forward.1} parent=1 // loop_body
      %s22 = ssub.s32 %s17, 1
      %s23 = ssub.s32 %s17, 2
      %s24 = sadd.s32 %s17, 1
      %s25 = ssub.s32 %s17, %s24
      %p26 = scmp.eq.s32.totalorder %s25, 0
      %s28 = sadd.s32 %s27, 1
      %s29 = scalar_select %p26, %s27, %s28
      %p32 = pneg %p26
      %p33 = scmp.eq.s32.totalorder %s17, 9
      %p34 = por %p32, %p33
      %p35 = scmp.ne.s32.totalorder %s27, %s30
      %p36 = scmp.eq.s32.totalorder %s17, 0
      %p37 = por %p35, %p36
      %p38 = scmp.ne.s32.totalorder %s27, %s30
      %p39 = scmp.eq.s32.totalorder %s22, 9
      %p40 = por %p38, %p39
      %p41 = scmp.ne.s32.totalorder %s30, %s31
      %p42 = scmp.eq.s32.totalorder %s22, 0
      %p43 = por %p41, %p42
      %p44 = scmp.ne.s32.totalorder %s30, %s31
      %p45 = scmp.eq.s32.totalorder %s23, 9
      %p46 = por %p44, %p45
      %p48 = scmp.ne.s32.totalorder %s31, %s47
      %p49 = scmp.eq.s32.totalorder %s23, 0
      %p50 = por %p48, %p49
      %s51 = ssub.s32 %s17, %s24
      %p52 = scmp.eq.s32.totalorder %s51, 0
      %s54 = sadd.s32 %s53, 1
      %s55 = scalar_select %p52, %s53, %s54
      %p58 = pneg %p52
      %p59 = scmp.eq.s32.totalorder %s17, 9
      %p60 = por %p58, %p59
      %p61 = scmp.ne.s32.totalorder %s53, %s56
      %p62 = scmp.eq.s32.totalorder %s17, 0
      %p63 = por %p61, %p62
      %p64 = scmp.ne.s32.totalorder %s53, %s56
      %p65 = scmp.eq.s32.totalorder %s22, 9
      %p66 = por %p64, %p65
      %p67 = scmp.ne.s32.totalorder %s56, %s57
      %p68 = scmp.eq.s32.totalorder %s22, 0
      %p69 = por %p67, %p68
      %p70 = scmp.ne.s32.totalorder %s56, %s57
      %p71 = scmp.eq.s32.totalorder %s23, 9
      %p72 = por %p70, %p71
      %p74 = scmp.ne.s32.totalorder %s57, %s73
      %p75 = scmp.eq.s32.totalorder %s23, 0
      %p76 = por %p74, %p75
      %s77 = ssub.s32 %s17, %s24
      %p78 = scmp.eq.s32.totalorder %s77, 0
      %s80 = sadd.s32 %s79, 1
      %s81 = scalar_select %p78, %s79, %s80
      %p84 = pneg %p78
      %p85 = scmp.eq.s32.totalorder %s17, 9
      %p86 = por %p84, %p85
      %p87 = scmp.ne.s32.totalorder %s79, %s82
      %p88 = scmp.eq.s32.totalorder %s17, 0
      %p89 = por %p87, %p88
      %p90 = scmp.ne.s32.totalorder %s79, %s82
      %p91 = scmp.eq.s32.totalorder %s22, 9
      %p92 = por %p90, %p91
      %p93 = scmp.ne.s32.totalorder %s82, %s83
      %p94 = scmp.eq.s32.totalorder %s22, 0
      %p95 = por %p93, %p94
      %p96 = scmp.ne.s32.totalorder %s82, %s83
      %p97 = scmp.eq.s32.totalorder %s23, 9
      %p98 = por %p96, %p97
      %p100 = scmp.ne.s32.totalorder %s83, %s99
      %p101 = scmp.eq.s32.totalorder %s23, 0
      %p102 = por %p100, %p101
      %s103 = ssub.s32 %s17, %s24
      %p104 = scmp.eq.s32.totalorder %s103, 0
      %s106 = sadd.s32 %s105, 1
      %s107 = scalar_select %p104, %s105, %s106
      %p110 = pneg %p104
      %p111 = scmp.eq.s32.totalorder %s17, 9
      %p112 = por %p110, %p111
      %p113 = scmp.ne.s32.totalorder %s105, %s108
      %p114 = scmp.eq.s32.totalorder %s17, 0
      %p115 = por %p113, %p114
      %p116 = scmp.ne.s32.totalorder %s105, %s108
      %p117 = scmp.eq.s32.totalorder %s22, 9
      %p118 = por %p116, %p117
      %p119 = scmp.ne.s32.totalorder %s108, %s109
      %p120 = scmp.eq.s32.totalorder %s22, 0
      %p121 = por %p119, %p120
      %p122 = scmp.ne.s32.totalorder %s108, %s109
      %p123 = scmp.eq.s32.totalorder %s23, 9
      %p124 = por %p122, %p123
      %p126 = scmp.ne.s32.totalorder %s109, %s125
      %p127 = scmp.eq.s32.totalorder %s23, 0
      %p128 = por %p126, %p127
      %s129 = ssub.s32 %s17, %s24
      %p130 = scmp.eq.s32.totalorder %s129, 0
      %s132 = sadd.s32 %s131, 1
      %s133 = scalar_select %p130, %s131, %s132
      %p136 = pneg %p130
      %p137 = scmp.eq.s32.totalorder %s17, 9
      %p138 = por %p136, %p137
      %p139 = scmp.ne.s32.totalorder %s131, %s134
      %p140 = scmp.eq.s32.totalorder %s17, 0
      %p141 = por %p139, %p140
      %p142 = scmp.ne.s32.totalorder %s131, %s134
      %p143 = scmp.eq.s32.totalorder %s22, 9
      %p144 = por %p142, %p143
      %p145 = scmp.ne.s32.totalorder %s134, %s135
      %p146 = scmp.eq.s32.totalorder %s22, 0
      %p147 = por %p145, %p146
      %p148 = scmp.ne.s32.totalorder %s134, %s135
      %p149 = scmp.eq.s32.totalorder %s23, 9
      %p150 = por %p148, %p149
      %p152 = scmp.ne.s32.totalorder %s135, %s151
      %p153 = scmp.eq.s32.totalorder %s23, 0
      %p154 = por %p152, %p153
      %s155 = ssub.s32 %s17, %s24
      %p156 = scmp.eq.s32.totalorder %s155, 0
      %s158 = sadd.s32 %s157, 1
      %s159 = scalar_select %p156, %s157, %s158
      %p162 = pneg %p156
      %p163 = scmp.eq.s32.totalorder %s17, 9
      %p164 = por %p162, %p163
      %p165 = scmp.ne.s32.totalorder %s157, %s160
      %p166 = scmp.eq.s32.totalorder %s17, 0
      %p167 = por %p165, %p166
      %p168 = scmp.ne.s32.totalorder %s157, %s160
      %p169 = scmp.eq.s32.totalorder %s22, 9
      %p170 = por %p168, %p169
      %p171 = scmp.ne.s32.totalorder %s160, %s161
      %p172 = scmp.eq.s32.totalorder %s22, 0
      %p173 = por %p171, %p172
      %p174 = scmp.ne.s32.totalorder %s160, %s161
      %p175 = scmp.eq.s32.totalorder %s23, 9
      %p176 = por %p174, %p175
      %p178 = scmp.ne.s32.totalorder %s161, %s177
      %p179 = scmp.eq.s32.totalorder %s23, 0
      %p180 = por %p178, %p179
      %p181 = scmp.le.s32.totalorder 1, %s17
      %p182 = scmp.lt.s32.totalorder %s17, 11
      %p183 = pnand %p181, %p182
      %p184 = pneg %p183
      // Predicated region
      $region9: #{roi_layer_forward.1} parent=5 // pred_check
        _
      $region10: #{roi_layer_forward.1} parent=5 // pred_check_branch
        %186 = sbr.rel (%p183) target = $region12
      $region11: #{roi_layer_forward.1} parent=5 // pred_region
        %s187 = ssub.s32 %s17, 1
      $region12: #{roi_layer_forward.1} parent=5 // pred_fallthru
        _
      %p188 = scmp.lt.s32.totalorder %s17, 10
      // Predicated region
      $region13: #{roi_layer_forward.1} parent=5 // pred_check
        %p189 = pneg %p188
      $region14: #{roi_layer_forward.1} parent=5 // pred_check_branch
        %191 = sbr.rel (%p189) target = $region16
      $region15: #{roi_layer_forward.1} parent=5 // pred_region
        // Predicated region
        $region17: #{roi_layer_forward.1} parent=15 // pred_check
          %p192 = pneg %p37
        $region18: #{roi_layer_forward.1} parent=15 // pred_check_branch
          %194 = sbr.rel (%p192) target = $region20
        $region19: #{roi_layer_forward.1} parent=15 // pred_region
          %s195 = sand.u32 %s27, 1
          %s196 = scalar_lea.sflag [#allocation3], %s195
          %s197 = sand.u32 %s27, 1
          %s198 = smul.addr %s197, 648
          %s199 = scalar_lea.vmem [#allocation2], %s198
          %s200 = smul.u32 2, %s17
          %s202 = ssub.s32 10368, 10368
          %203 = vsyncadd %s196, %s202
          %s204 = smul.addr %s200, 81
          %s205 = smul.addr %s204, 64
          %s206 = scalar_lea.hbm %s0, %s205
          %s207 = sshll.u32 %s199, 4
          %s208 = int_to_ptr.vmem [resolvable:$true] %s207
          %213 = dma.hbm_to_vmem [thread:$0]  %s206, 10368, %s208, %s196, 576, 576, 36
        $region20: #{roi_layer_forward.1} parent=15 // pred_fallthru
          _
        // Predicated region
        $region21: #{roi_layer_forward.1} parent=15 // pred_check
          %p214 = pneg %p63
        $region22: #{roi_layer_forward.1} parent=15 // pred_check_branch
          %216 = sbr.rel (%p214) target = $region24
        $region23: #{roi_layer_forward.1} parent=15 // pred_region
          %s217 = sand.u32 %s53, 1
          %s218 = scalar_lea.sflag [#allocation5], %s217
          %s219 = sand.u32 %s53, 1
          %s220 = smul.addr %s219, 1152
          %s221 = scalar_lea.vmem [#allocation4], %s220
          %s222 = smul.u32 2, %s17
          %s224 = ssub.s32 18432, 18432
          %225 = vsyncadd %s218, %s224
          %s226 = smul.addr %s222, 144
          %s227 = smul.addr %s226, 64
          %s228 = scalar_lea.hbm %s1, %s227
          %s229 = sshll.u32 %s221, 4
          %s230 = int_to_ptr.vmem [resolvable:$true] %s229
          %235 = dma.hbm_to_vmem [thread:$0]  %s228, 18432, %s230, %s218, 64, 64, 4
        $region24: #{roi_layer_forward.1} parent=15 // pred_fallthru
          _
        // Predicated region
        $region25: #{roi_layer_forward.1} parent=15 // pred_check
          %p236 = pneg %p89
        $region26: #{roi_layer_forward.1} parent=15 // pred_check_branch
          %238 = sbr.rel (%p236) target = $region28
        $region27: #{roi_layer_forward.1} parent=15 // pred_region
          %s239 = smul.u32 2, %s17
          %p240 = scmp.lt.s32.totalorder %s239, 19
          %s241 = scalar_select %p240, %s239, 19
          %s242 = scalar_lea.vmem %s2, %s241
          %s243 = smul.u32 2, %s17
        $region28: #{roi_layer_forward.1} parent=15 // pred_fallthru
          _
        // Predicated region
        $region29: #{roi_layer_forward.1} parent=15 // pred_check
          %p244 = pneg %p115
        $region30: #{roi_layer_forward.1} parent=15 // pred_check_branch
          %246 = sbr.rel (%p244) target = $region32
        $region31: #{roi_layer_forward.1} parent=15 // pred_region
          %s247 = smul.u32 2, %s17
          %p248 = scmp.lt.s32.totalorder %s247, 19
          %s249 = scalar_select %p248, %s247, 19
          %s250 = smul.addr %s249, 684
          %s251 = smul.addr %s250, 4
          %s252 = scalar_lea.vmem %s3, %s251
          %s253 = smul.u32 2, %s17
        $region32: #{roi_layer_forward.1} parent=15 // pred_fallthru
          _
        // Predicated region
        $region33: #{roi_layer_forward.1} parent=15 // pred_check
          %p254 = pneg %p141
        $region34: #{roi_layer_forward.1} parent=15 // pred_check_branch
          %256 = sbr.rel (%p254) target = $region36
        $region35: #{roi_layer_forward.1} parent=15 // pred_region
          %s257 = smul.u32 2, %s17
          %p258 = scmp.lt.s32.totalorder %s257, 19
          %s259 = scalar_select %p258, %s257, 19
          %s260 = smul.addr %s259, 2
          %s261 = scalar_lea.vmem %s4, %s260
          %s262 = smul.u32 2, %s17
        $region36: #{roi_layer_forward.1} parent=15 // pred_fallthru
          _
      $region16: #{roi_layer_forward.1} parent=5 // pred_fallthru
        _
      %p263 = scmp.le.s32.totalorder 1, %s17
      %p264 = scmp.lt.s32.totalorder %s17, 11
      %p265 = pnand %p263, %p264
      %p266 = pneg %p265
      // Predicated region
      $region37: #{roi_layer_forward.1} parent=5 // pred_check
        _
      $region38: #{roi_layer_forward.1} parent=5 // pred_check_branch
        %268 = sbr.rel (%p265) target = $region40
      $region39: #{roi_layer_forward.1} parent=5 // pred_region
        %s269 = ssub.s32 %s17, 1
        %s270 = sand.u32 %s30, 1
        %s271 = scalar_lea.sflag [#allocation3], %s270
        %s272 = sand.u32 %s30, 1
        %s273 = smul.addr %s272, 648
        %s274 = scalar_lea.vmem [#allocation2], %s273
        // Predicated region
        $region41: #{roi_layer_forward.1} parent=39 // pred_check
          %p275 = pneg %p43
        $region42: #{roi_layer_forward.1} parent=39 // pred_check_branch
          %277 = sbr.rel (%p275) target = $region44
        $region43: #{roi_layer_forward.1} parent=39 // pred_region
          %278 = dma.done %s271, 10368
        $region44: #{roi_layer_forward.1} parent=39 // pred_fallthru
          _
        %s279 = sand.u32 %s56, 1
        %s280 = scalar_lea.sflag [#allocation5], %s279
        %s281 = sand.u32 %s56, 1
        %s282 = smul.addr %s281, 1152
        %s283 = scalar_lea.vmem [#allocation4], %s282
        // Predicated region
        $region45: #{roi_layer_forward.1} parent=39 // pred_check
          %p284 = pneg %p69
        $region46: #{roi_layer_forward.1} parent=39 // pred_check_branch
          %286 = sbr.rel (%p284) target = $region48
        $region47: #{roi_layer_forward.1} parent=39 // pred_region
          %287 = dma.done %s280, 18432
        $region48: #{roi_layer_forward.1} parent=39 // pred_fallthru
          _
        %s288 = sand.u32 %s30, 1
        %s289 = scalar_lea.sflag [#allocation3], %s288
        %s290 = sand.u32 %s30, 1
        %s291 = smul.addr %s290, 648
        %s292 = scalar_lea.vmem [#allocation2], %s291
        %p293 = pneg %p43
        %p294 = pneg %p40
        %s295 = sand.u32 %s56, 1
        %s296 = scalar_lea.sflag [#allocation5], %s295
        %s297 = sand.u32 %s56, 1
        %s298 = smul.addr %s297, 1152
        %s299 = scalar_lea.vmem [#allocation4], %s298
        %p300 = pneg %p69
        %p301 = pneg %p66
        %s302 = smul.u32 2, %s22
        %p303 = scmp.lt.s32.totalorder %s302, 19
        %s304 = scalar_select %p303, %s302, 19
        %s305 = scalar_lea.vmem %s2, %s304
        %p306 = pneg %p95
        %p307 = pneg %p92
        %s308 = smul.u32 2, %s22
        %p309 = scmp.lt.s32.totalorder %s308, 19
        %s310 = scalar_select %p309, %s308, 19
        %s311 = smul.addr %s310, 684
        %s312 = smul.addr %s311, 4
        %s313 = scalar_lea.vmem %s3, %s312
        %p314 = pneg %p121
        %p315 = pneg %p118
        %s316 = smul.u32 2, %s22
        %p317 = scmp.lt.s32.totalorder %s316, 19
        %s318 = scalar_select %p317, %s316, 19
        %s319 = smul.addr %s318, 2
        %s320 = scalar_lea.vmem %s4, %s319
        %p321 = pneg %p147
        %p322 = pneg %p144
        %p323 = pneg %p173
        %p324 = pneg %p170
        %s325 = smul.u32 2, %s22
        %p326 = scmp.lt.s32.totalorder %s325, 19
        %s327 = scalar_select %p326, %s325, 19
        %s328 = smul.addr %s327, 2
        %s329 = smul.addr %s328, 2
        %s330 = scalar_lea.vmem %s5, %s329
        %s331 = smul.u32 2, %s22
        %s332 = smul.u32 2, %s22
        %s333 = smul.u32 2, %s22
        %p334 = scmp.lt.s32.totalorder %s333, 19
        %s335 = scalar_select %p334, %s333, 19
        %s336 = scalar_lea.vmem %s2, %s335
        %s337 = smul.u32 2, %s22
        %s338 = smul.u32 2, %s22
        %p339 = scmp.lt.s32.totalorder %s338, 19
        %s340 = scalar_select %p339, %s338, 19
        %s341 = smul.addr %s340, 684
        %s342 = smul.addr %s341, 4
        %s343 = scalar_lea.vmem %s3, %s342
        %s344 = smul.u32 2, %s22
        %s345 = smul.u32 2, %s22
        %p346 = scmp.lt.s32.totalorder %s345, 19
        %s347 = scalar_select %p346, %s345, 19
        %s348 = smul.addr %s347, 2
        %s349 = scalar_lea.vmem %s4, %s348
        %s350 = smul.u32 2, %s22
        %s351 = smul.u32 2, %s22
        %p352 = scmp.lt.s32.totalorder %s351, 19
        %s353 = scalar_select %p352, %s351, 19
        %s354 = smul.addr %s353, 2
        %s355 = smul.addr %s354, 2
        %s356 = scalar_lea.vmem %s5, %s355
        %s357 = smul.u32 2, %s22
        %v359 = vld [vmem:[%s274] sm:$0xff]
        %v360 = vld [vmem:[%s274 + $0x8] sm:$0xff]
        %v361 = vld [vmem:[%s274 + $0x10] sm:$0xff]
        %v362 = vld [vmem:[%s274 + $0x18] sm:$0xff]
        %v363 = vld [vmem:[%s274 + $0x20] sm:$0xf]
        %v364 = vld [vmem:[%s274 + $0x24] sm:$0xff]
        %v365 = vld [vmem:[%s274 + $0x2c] sm:$0xff]
        %v366 = vld [vmem:[%s274 + $0x34] sm:$0xff]
        %v367 = vld [vmem:[%s274 + $0x3c] sm:$0xff]
        %v368 = vld [vmem:[%s274 + $0x44] sm:$0xf]
        %v369 = vld [vmem:[%s274 + $0x48] sm:$0xff]
        %v370 = vld [vmem:[%s274 + $0x50] sm:$0xff]
        %v371 = vld [vmem:[%s274 + $0x58] sm:$0xff]
        %v372 = vld [vmem:[%s274 + $0x60] sm:$0xff]
        %v373 = vld [vmem:[%s274 + $0x68] sm:$0xf]
        %v374 = vld [vmem:[%s274 + $0x6c] sm:$0xff]
        %v375 = vld [vmem:[%s274 + $0x74] sm:$0xff]
        %v376 = vld [vmem:[%s274 + $0x7c] sm:$0xff]
        %v377 = vld [vmem:[%s274 + $0x84] sm:$0xff]
        %v378 = vld [vmem:[%s274 + $0x8c] sm:$0xf]
        %v379 = vld [vmem:[%s274 + $0x90] sm:$0xff]
        %v380 = vld [vmem:[%s274 + $0x98] sm:$0xff]
        %v381 = vld [vmem:[%s274 + $0xa0] sm:$0xff]
        %v382 = vld [vmem:[%s274 + $0xa8] sm:$0xff]
        %v383 = vld [vmem:[%s274 + $0xb0] sm:$0xf]
        %v384 = vld [vmem:[%s274 + $0xb4] sm:$0xff]
        %v385 = vld [vmem:[%s274 + $0xbc] sm:$0xff]
        %v386 = vld [vmem:[%s274 + $0xc4] sm:$0xff]
        %v387 = vld [vmem:[%s274 + $0xcc] sm:$0xff]
        %v388 = vld [vmem:[%s274 + $0xd4] sm:$0xf]
        %v389 = vld [vmem:[%s274 + $0xd8] sm:$0xff]
        %v390 = vld [vmem:[%s274 + $0xe0] sm:$0xff]
        %v391 = vld [vmem:[%s274 + $0xe8] sm:$0xff]
        %v392 = vld [vmem:[%s274 + $0xf0] sm:$0xff]
        %v393 = vld [vmem:[%s274 + $0xf8] sm:$0xf]
        %v394 = vld [vmem:[%s274 + $0xfc] sm:$0xff]
        %v395 = vld [vmem:[%s274 + $0x104] sm:$0xff]
        %v396 = vld [vmem:[%s274 + $0x10c] sm:$0xff]
        %v397 = vld [vmem:[%s274 + $0x114] sm:$0xff]
        %v398 = vld [vmem:[%s274 + $0x11c] sm:$0xf]
        %v399 = vld [vmem:[%s274 + $0x120] sm:$0xff]
        %v400 = vld [vmem:[%s274 + $0x128] sm:$0xff]
        %v401 = vld [vmem:[%s274 + $0x130] sm:$0xff]
        %v402 = vld [vmem:[%s274 + $0x138] sm:$0xff]
        %v403 = vld [vmem:[%s274 + $0x140] sm:$0xf]
        %v404 = vld [vmem:[%s283] sm:$0xf]
        %v405 = vld [vmem:[%s283 + $0x4] sm:$0xf]
        %v406 = vld [vmem:[%s283 + $0x8] sm:$0xf]
        %v407 = vld [vmem:[%s283 + $0xc] sm:$0xf]
        %v408 = vld [vmem:[%s283 + $0x10] sm:$0xf]
        %v409 = vld [vmem:[%s283 + $0x14] sm:$0xf]
        %v410 = vld [vmem:[%s283 + $0x18] sm:$0xf]
        %v411 = vld [vmem:[%s283 + $0x1c] sm:$0xf]
        %v412 = vld [vmem:[%s283 + $0x20] sm:$0xf]
        %v413 = vld [vmem:[%s283 + $0x24] sm:$0xf]
        %v414 = vld [vmem:[%s283 + $0x28] sm:$0xf]
        %v415 = vld [vmem:[%s283 + $0x2c] sm:$0xf]
        %v416 = vld [vmem:[%s283 + $0x30] sm:$0xf]
        %v417 = vld [vmem:[%s283 + $0x34] sm:$0xf]
        %v418 = vld [vmem:[%s283 + $0x38] sm:$0xf]
        %v419 = vld [vmem:[%s283 + $0x3c] sm:$0xf]
        %v420 = vld [vmem:[%s283 + $0x40] sm:$0xf]
        %v421 = vld [vmem:[%s283 + $0x44] sm:$0xf]
        %v422 = vld [vmem:[%s283 + $0x48] sm:$0xf]
        %v423 = vld [vmem:[%s283 + $0x4c] sm:$0xf]
        %v424 = vld [vmem:[%s283 + $0x50] sm:$0xf]
        %v425 = vld [vmem:[%s283 + $0x54] sm:$0xf]
        %v426 = vld [vmem:[%s283 + $0x58] sm:$0xf]
        %v427 = vld [vmem:[%s283 + $0x5c] sm:$0xf]
        %v428 = vld [vmem:[%s283 + $0x60] sm:$0xf]
        %v429 = vld [vmem:[%s283 + $0x64] sm:$0xf]
        %v430 = vld [vmem:[%s283 + $0x68] sm:$0xf]
        %v431 = vld [vmem:[%s283 + $0x6c] sm:$0xf]
        %v432 = vld [vmem:[%s283 + $0x70] sm:$0xf]
        %v433 = vld [vmem:[%s283 + $0x74] sm:$0xf]
        %v434 = vld [vmem:[%s283 + $0x78] sm:$0xf]
        %v435 = vld [vmem:[%s283 + $0x7c] sm:$0xf]
        %v436 = vld [vmem:[%s283 + $0x80] sm:$0xf]
        %v437 = vld [vmem:[%s283 + $0x84] sm:$0xf]
        %v438 = vld [vmem:[%s283 + $0x88] sm:$0xf]
        %v439 = vld [vmem:[%s283 + $0x8c] sm:$0xf]
        %v440 = vld [vmem:[%s283 + $0x90] sm:$0xf]
        %v441 = vld [vmem:[%s283 + $0x94] sm:$0xf]
        %v442 = vld [vmem:[%s283 + $0x98] sm:$0xf]
        %v443 = vld [vmem:[%s283 + $0x9c] sm:$0xf]
        %v444 = vld [vmem:[%s283 + $0xa0] sm:$0xf]
        %v445 = vld [vmem:[%s283 + $0xa4] sm:$0xf]
        %v446 = vld [vmem:[%s283 + $0xa8] sm:$0xf]
        %v447 = vld [vmem:[%s283 + $0xac] sm:$0xf]
        %v448 = vld [vmem:[%s283 + $0xb0] sm:$0xf]
        %v449 = vld [vmem:[%s283 + $0xb4] sm:$0xf]
        %v450 = vld [vmem:[%s283 + $0xb8] sm:$0xf]
        %v451 = vld [vmem:[%s283 + $0xbc] sm:$0xf]
        %v452 = vld [vmem:[%s283 + $0xc0] sm:$0xf]
        %v453 = vld [vmem:[%s283 + $0xc4] sm:$0xf]
        %v454 = vld [vmem:[%s283 + $0xc8] sm:$0xf]
        %v455 = vld [vmem:[%s283 + $0xcc] sm:$0xf]
        %v456 = vld [vmem:[%s283 + $0xd0] sm:$0xf]
        %v457 = vld [vmem:[%s283 + $0xd4] sm:$0xf]
        %v458 = vld [vmem:[%s283 + $0xd8] sm:$0xf]
        %v459 = vld [vmem:[%s283 + $0xdc] sm:$0xf]
        %v460 = vld [vmem:[%s283 + $0xe0] sm:$0xf]
        %v461 = vld [vmem:[%s283 + $0xe4] sm:$0xf]
        %v462 = vld [vmem:[%s283 + $0xe8] sm:$0xf]
        %v463 = vld [vmem:[%s283 + $0xec] sm:$0xf]
        %v464 = vld [vmem:[%s283 + $0xf0] sm:$0xf]
        %v465 = vld [vmem:[%s283 + $0xf4] sm:$0xf]
        %v466 = vld [vmem:[%s283 + $0xf8] sm:$0xf]
        %v467 = vld [vmem:[%s283 + $0xfc] sm:$0xf]
        %v468 = vld [vmem:[%s283 + $0x100] sm:$0xf]
        %v469 = vld [vmem:[%s283 + $0x104] sm:$0xf]
        %v470 = vld [vmem:[%s283 + $0x108] sm:$0xf]
        %v471 = vld [vmem:[%s283 + $0x10c] sm:$0xf]
        %v472 = vld [vmem:[%s283 + $0x110] sm:$0xf]
        %v473 = vld [vmem:[%s283 + $0x114] sm:$0xf]
        %v474 = vld [vmem:[%s283 + $0x118] sm:$0xf]
        %v475 = vld [vmem:[%s283 + $0x11c] sm:$0xf]
        %v476 = vld [vmem:[%s283 + $0x120] sm:$0xf]
        %v477 = vld [vmem:[%s283 + $0x124] sm:$0xf]
        %v478 = vld [vmem:[%s283 + $0x128] sm:$0xf]
        %v479 = vld [vmem:[%s283 + $0x12c] sm:$0xf]
        %v480 = vld [vmem:[%s283 + $0x130] sm:$0xf]
        %v481 = vld [vmem:[%s283 + $0x134] sm:$0xf]
        %v482 = vld [vmem:[%s283 + $0x138] sm:$0xf]
        %v483 = vld [vmem:[%s283 + $0x13c] sm:$0xf]
        %v484 = vld [vmem:[%s283 + $0x140] sm:$0xf]
        %v485 = vld [vmem:[%s283 + $0x144] sm:$0xf]
        %v486 = vld [vmem:[%s283 + $0x148] sm:$0xf]
        %v487 = vld [vmem:[%s283 + $0x14c] sm:$0xf]
        %v488 = vld [vmem:[%s283 + $0x150] sm:$0xf]
        %v489 = vld [vmem:[%s283 + $0x154] sm:$0xf]
        %v490 = vld [vmem:[%s283 + $0x158] sm:$0xf]
        %v491 = vld [vmem:[%s283 + $0x15c] sm:$0xf]
        %v492 = vld [vmem:[%s283 + $0x160] sm:$0xf]
        %v493 = vld [vmem:[%s283 + $0x164] sm:$0xf]
        %v494 = vld [vmem:[%s283 + $0x168] sm:$0xf]
        %v495 = vld [vmem:[%s283 + $0x16c] sm:$0xf]
        %v496 = vld [vmem:[%s283 + $0x170] sm:$0xf]
        %v497 = vld [vmem:[%s283 + $0x174] sm:$0xf]
        %v498 = vld [vmem:[%s283 + $0x178] sm:$0xf]
        %v499 = vld [vmem:[%s283 + $0x17c] sm:$0xf]
        %v500 = vld [vmem:[%s283 + $0x180] sm:$0xf]
        %v501 = vld [vmem:[%s283 + $0x184] sm:$0xf]
        %v502 = vld [vmem:[%s283 + $0x188] sm:$0xf]
        %v503 = vld [vmem:[%s283 + $0x18c] sm:$0xf]
        %v504 = vld [vmem:[%s283 + $0x190] sm:$0xf]
        %v505 = vld [vmem:[%s283 + $0x194] sm:$0xf]
        %v506 = vld [vmem:[%s283 + $0x198] sm:$0xf]
        %v507 = vld [vmem:[%s283 + $0x19c] sm:$0xf]
        %v508 = vld [vmem:[%s283 + $0x1a0] sm:$0xf]
        %v509 = vld [vmem:[%s283 + $0x1a4] sm:$0xf]
        %v510 = vld [vmem:[%s283 + $0x1a8] sm:$0xf]
        %v511 = vld [vmem:[%s283 + $0x1ac] sm:$0xf]
        %v512 = vld [vmem:[%s283 + $0x1b0] sm:$0xf]
        %v513 = vld [vmem:[%s283 + $0x1b4] sm:$0xf]
        %v514 = vld [vmem:[%s283 + $0x1b8] sm:$0xf]
        %v515 = vld [vmem:[%s283 + $0x1bc] sm:$0xf]
        %v516 = vld [vmem:[%s283 + $0x1c0] sm:$0xf]
        %v517 = vld [vmem:[%s283 + $0x1c4] sm:$0xf]
        %v518 = vld [vmem:[%s283 + $0x1c8] sm:$0xf]
        %v519 = vld [vmem:[%s283 + $0x1cc] sm:$0xf]
        %v520 = vld [vmem:[%s283 + $0x1d0] sm:$0xf]
        %v521 = vld [vmem:[%s283 + $0x1d4] sm:$0xf]
        %v522 = vld [vmem:[%s283 + $0x1d8] sm:$0xf]
        %v523 = vld [vmem:[%s283 + $0x1dc] sm:$0xf]
        %v524 = vld [vmem:[%s283 + $0x1e0] sm:$0xf]
        %v525 = vld [vmem:[%s283 + $0x1e4] sm:$0xf]
        %v526 = vld [vmem:[%s283 + $0x1e8] sm:$0xf]
        %v527 = vld [vmem:[%s283 + $0x1ec] sm:$0xf]
        %v528 = vld [vmem:[%s283 + $0x1f0] sm:$0xf]
        %v529 = vld [vmem:[%s283 + $0x1f4] sm:$0xf]
        %v530 = vld [vmem:[%s283 + $0x1f8] sm:$0xf]
        %v531 = vld [vmem:[%s283 + $0x1fc] sm:$0xf]
        %v532 = vld [vmem:[%s283 + $0x200] sm:$0xf]
        %v533 = vld [vmem:[%s283 + $0x204] sm:$0xf]
        %v534 = vld [vmem:[%s283 + $0x208] sm:$0xf]
        %v535 = vld [vmem:[%s283 + $0x20c] sm:$0xf]
        %v536 = vld [vmem:[%s283 + $0x210] sm:$0xf]
        %v537 = vld [vmem:[%s283 + $0x214] sm:$0xf]
        %v538 = vld [vmem:[%s283 + $0x218] sm:$0xf]
        %v539 = vld [vmem:[%s283 + $0x21c] sm:$0xf]
        %v540 = vld [vmem:[%s283 + $0x220] sm:$0xf]
        %v541 = vld [vmem:[%s283 + $0x224] sm:$0xf]
        %v542 = vld [vmem:[%s283 + $0x228] sm:$0xf]
        %v543 = vld [vmem:[%s283 + $0x22c] sm:$0xf]
        %v544 = vld [vmem:[%s283 + $0x230] sm:$0xf]
        %v545 = vld [vmem:[%s283 + $0x234] sm:$0xf]
        %v546 = vld [vmem:[%s283 + $0x238] sm:$0xf]
        %v547 = vld [vmem:[%s283 + $0x23c] sm:$0xf]
        %v548 = vld [vmem:[%s336] sm:$0x1]
        %v550 = vlaneseq
        %v551 = vshrl.u32 %v550, 7
        %v552 = vsub.s32 0, %v551
        %v553 = vrot.slane %v548, %v552
        %v600 = vunpack.c.l.b16 %v359
        %v601 = vunpack.c.h.b16 %v359
        %v602 = vunpack.c.l.b16 %v360
        %v603 = vunpack.c.h.b16 %v360
        %v604 = vunpack.c.l.b16 %v361
        %v605 = vunpack.c.h.b16 %v361
        %v606 = vunpack.c.l.b16 %v362
        %v607 = vunpack.c.h.b16 %v362
        %v608 = vunpack.c.l.b16 %v363
        %v609 = vunpack.c.l.b16 %v364
        %v610 = vunpack.c.h.b16 %v364
        %v611 = vunpack.c.l.b16 %v365
        %v612 = vunpack.c.h.b16 %v365
        %v613 = vunpack.c.l.b16 %v366
        %v614 = vunpack.c.h.b16 %v366
        %v615 = vunpack.c.l.b16 %v367
        %v616 = vunpack.c.h.b16 %v367
        %v617 = vunpack.c.l.b16 %v368
        %v618 = vunpack.c.l.b16 %v369
        %v619 = vunpack.c.h.b16 %v369
        %v620 = vunpack.c.l.b16 %v370
        %v621 = vunpack.c.h.b16 %v370
        %v622 = vunpack.c.l.b16 %v371
        %v623 = vunpack.c.h.b16 %v371
        %v624 = vunpack.c.l.b16 %v372
        %v625 = vunpack.c.h.b16 %v372
        %v626 = vunpack.c.l.b16 %v373
        %v627 = vunpack.c.l.b16 %v374
        %v628 = vunpack.c.h.b16 %v374
        %v629 = vunpack.c.l.b16 %v375
        %v630 = vunpack.c.h.b16 %v375
        %v631 = vunpack.c.l.b16 %v376
        %v632 = vunpack.c.h.b16 %v376
        %v633 = vunpack.c.l.b16 %v377
        %v634 = vunpack.c.h.b16 %v377
        %v635 = vunpack.c.l.b16 %v378
        %v636 = vunpack.c.l.b16 %v379
        %v637 = vunpack.c.h.b16 %v379
        %v638 = vunpack.c.l.b16 %v380
        %v639 = vunpack.c.h.b16 %v380
        %v640 = vunpack.c.l.b16 %v381
        %v641 = vunpack.c.h.b16 %v381
        %v642 = vunpack.c.l.b16 %v382
        %v643 = vunpack.c.h.b16 %v382
        %v644 = vunpack.c.l.b16 %v383
        %v645 = vunpack.c.l.b16 %v384
        %v646 = vunpack.c.h.b16 %v384
        %v647 = vunpack.c.l.b16 %v385
        %v648 = vunpack.c.h.b16 %v385
        %v649 = vunpack.c.l.b16 %v386
        %v650 = vunpack.c.h.b16 %v386
        %v651 = vunpack.c.l.b16 %v387
        %v652 = vunpack.c.h.b16 %v387
        %v653 = vunpack.c.l.b16 %v388
        %v654 = vunpack.c.l.b16 %v389
        %v655 = vunpack.c.h.b16 %v389
        %v656 = vunpack.c.l.b16 %v390
        %v657 = vunpack.c.h.b16 %v390
        %v658 = vunpack.c.l.b16 %v391
        %v659 = vunpack.c.h.b16 %v391
        %v660 = vunpack.c.l.b16 %v392
        %v661 = vunpack.c.h.b16 %v392
        %v662 = vunpack.c.l.b16 %v393
        %v663 = vunpack.c.l.b16 %v394
        %v664 = vunpack.c.h.b16 %v394
        %v665 = vunpack.c.l.b16 %v395
        %v666 = vunpack.c.h.b16 %v395
        %v667 = vunpack.c.l.b16 %v396
        %v668 = vunpack.c.h.b16 %v396
        %v669 = vunpack.c.l.b16 %v397
        %v670 = vunpack.c.h.b16 %v397
        %v671 = vunpack.c.l.b16 %v398
        %v672 = vunpack.c.l.b16 %v399
        %v673 = vunpack.c.h.b16 %v399
        %v674 = vunpack.c.l.b16 %v400
        %v675 = vunpack.c.h.b16 %v400
        %v676 = vunpack.c.l.b16 %v401
        %v677 = vunpack.c.h.b16 %v401
        %v678 = vunpack.c.l.b16 %v402
        %v679 = vunpack.c.h.b16 %v402
        %v680 = vunpack.c.l.b16 %v403
        %v681 = vpack.c.b16 %v609, %v600
        %v682 = vpack.c.b16 %v610, %v601
        %v683 = vpack.c.b16 %v611, %v602
        %v684 = vpack.c.b16 %v612, %v603
        %v685 = vpack.c.b16 %v613, %v604
        %v686 = vpack.c.b16 %v614, %v605
        %v687 = vpack.c.b16 %v615, %v606
        %v688 = vpack.c.b16 %v616, %v607
        %v689 = vpack.c.b16 %v617, %v608
        %v690 = vpack.c.b16 %v627, %v618
        %v691 = vpack.c.b16 %v628, %v619
        %v692 = vpack.c.b16 %v629, %v620
        %v693 = vpack.c.b16 %v630, %v621
        %v694 = vpack.c.b16 %v631, %v622
        %v695 = vpack.c.b16 %v632, %v623
        %v696 = vpack.c.b16 %v633, %v624
        %v697 = vpack.c.b16 %v634, %v625
        %v698 = vpack.c.b16 %v635, %v626
        %v699 = vpack.c.b16 %v645, %v636
        %v700 = vpack.c.b16 %v646, %v637
        %v701 = vpack.c.b16 %v647, %v638
        %v702 = vpack.c.b16 %v648, %v639
        %v703 = vpack.c.b16 %v649, %v640
        %v704 = vpack.c.b16 %v650, %v641
        %v705 = vpack.c.b16 %v651, %v642
        %v706 = vpack.c.b16 %v652, %v643
        %v707 = vpack.c.b16 %v653, %v644
        %v708 = vpack.c.b16 %v663, %v654
        %v709 = vpack.c.b16 %v664, %v655
        %v710 = vpack.c.b16 %v665, %v656
        %v711 = vpack.c.b16 %v666, %v657
        %v712 = vpack.c.b16 %v667, %v658
        %v713 = vpack.c.b16 %v668, %v659
        %v714 = vpack.c.b16 %v669, %v660
        %v715 = vpack.c.b16 %v670, %v661
        %v716 = vpack.c.b16 %v671, %v662
        %v717 = vpack.c.b16 %v672, %v672
        %v718 = vpack.c.b16 %v673, %v673
        %v719 = vpack.c.b16 %v674, %v674
        %v720 = vpack.c.b16 %v675, %v675
        %v721 = vpack.c.b16 %v676, %v676
        %v722 = vpack.c.b16 %v677, %v677
        %v723 = vpack.c.b16 %v678, %v678
        %v724 = vpack.c.b16 %v679, %v679
        %v725 = vpack.c.b16 %v680, %v680
        %v915 = vunpack.c.l.b16 %v404
        %v916 = vunpack.c.l.b16 %v405
        %v917 = vunpack.c.l.b16 %v406
        %v918 = vunpack.c.l.b16 %v407
        %v919 = vunpack.c.l.b16 %v408
        %v920 = vunpack.c.l.b16 %v409
        %v921 = vunpack.c.l.b16 %v410
        %v922 = vunpack.c.l.b16 %v411
        %v923 = vunpack.c.l.b16 %v412
        %v924 = vunpack.c.l.b16 %v413
        %v925 = vunpack.c.l.b16 %v414
        %v926 = vunpack.c.l.b16 %v415
        %v927 = vunpack.c.l.b16 %v416
        %v928 = vunpack.c.l.b16 %v417
        %v929 = vunpack.c.l.b16 %v418
        %v930 = vunpack.c.l.b16 %v419
        %v931 = vunpack.c.l.b16 %v420
        %v932 = vunpack.c.l.b16 %v421
        %v933 = vunpack.c.l.b16 %v422
        %v934 = vunpack.c.l.b16 %v423
        %v935 = vunpack.c.l.b16 %v424
        %v936 = vunpack.c.l.b16 %v425
        %v937 = vunpack.c.l.b16 %v426
        %v938 = vunpack.c.l.b16 %v427
        %v939 = vunpack.c.l.b16 %v428
        %v940 = vunpack.c.l.b16 %v429
        %v941 = vunpack.c.l.b16 %v430
        %v942 = vunpack.c.l.b16 %v431
        %v943 = vunpack.c.l.b16 %v432
        %v944 = vunpack.c.l.b16 %v433
        %v945 = vunpack.c.l.b16 %v434
        %v946 = vunpack.c.l.b16 %v435
        %v947 = vunpack.c.l.b16 %v436
        %v948 = vunpack.c.l.b16 %v437
        %v949 = vunpack.c.l.b16 %v438
        %v950 = vunpack.c.l.b16 %v439
        %v951 = vunpack.c.l.b16 %v440
        %v952 = vunpack.c.l.b16 %v441
        %v953 = vunpack.c.l.b16 %v442
        %v954 = vunpack.c.l.b16 %v443
        %v955 = vunpack.c.l.b16 %v444
        %v956 = vunpack.c.l.b16 %v445
        %v957 = vunpack.c.l.b16 %v446
        %v958 = vunpack.c.l.b16 %v447
        %v959 = vunpack.c.l.b16 %v448
        %v960 = vunpack.c.l.b16 %v449
        %v961 = vunpack.c.l.b16 %v450
        %v962 = vunpack.c.l.b16 %v451
        %v963 = vunpack.c.l.b16 %v452
        %v964 = vunpack.c.l.b16 %v453
        %v965 = vunpack.c.l.b16 %v454
        %v966 = vunpack.c.l.b16 %v455
        %v967 = vunpack.c.l.b16 %v456
        %v968 = vunpack.c.l.b16 %v457
        %v969 = vunpack.c.l.b16 %v458
        %v970 = vunpack.c.l.b16 %v459
        %v971 = vunpack.c.l.b16 %v460
        %v972 = vunpack.c.l.b16 %v461
        %v973 = vunpack.c.l.b16 %v462
        %v974 = vunpack.c.l.b16 %v463
        %v975 = vunpack.c.l.b16 %v464
        %v976 = vunpack.c.l.b16 %v465
        %v977 = vunpack.c.l.b16 %v466
        %v978 = vunpack.c.l.b16 %v467
        %v979 = vunpack.c.l.b16 %v468
        %v980 = vunpack.c.l.b16 %v469
        %v981 = vunpack.c.l.b16 %v470
        %v982 = vunpack.c.l.b16 %v471
        %v983 = vunpack.c.l.b16 %v472
        %v984 = vunpack.c.l.b16 %v473
        %v985 = vunpack.c.l.b16 %v474
        %v986 = vunpack.c.l.b16 %v475
        %v987 = vunpack.c.l.b16 %v476
        %v988 = vunpack.c.l.b16 %v477
        %v989 = vunpack.c.l.b16 %v478
        %v990 = vunpack.c.l.b16 %v479
        %v991 = vunpack.c.l.b16 %v480
        %v992 = vunpack.c.l.b16 %v481
        %v993 = vunpack.c.l.b16 %v482
        %v994 = vunpack.c.l.b16 %v483
        %v995 = vunpack.c.l.b16 %v484
        %v996 = vunpack.c.l.b16 %v485
        %v997 = vunpack.c.l.b16 %v486
        %v998 = vunpack.c.l.b16 %v487
        %v999 = vunpack.c.l.b16 %v488
        %v1000 = vunpack.c.l.b16 %v489
        %v1001 = vunpack.c.l.b16 %v490
        %v1002 = vunpack.c.l.b16 %v491
        %v1003 = vunpack.c.l.b16 %v492
        %v1004 = vunpack.c.l.b16 %v493
        %v1005 = vunpack.c.l.b16 %v494
        %v1006 = vunpack.c.l.b16 %v495
        %v1007 = vunpack.c.l.b16 %v496
        %v1008 = vunpack.c.l.b16 %v497
        %v1009 = vunpack.c.l.b16 %v498
        %v1010 = vunpack.c.l.b16 %v499
        %v1011 = vunpack.c.l.b16 %v500
        %v1012 = vunpack.c.l.b16 %v501
        %v1013 = vunpack.c.l.b16 %v502
        %v1014 = vunpack.c.l.b16 %v503
        %v1015 = vunpack.c.l.b16 %v504
        %v1016 = vunpack.c.l.b16 %v505
        %v1017 = vunpack.c.l.b16 %v506
        %v1018 = vunpack.c.l.b16 %v507
        %v1019 = vunpack.c.l.b16 %v508
        %v1020 = vunpack.c.l.b16 %v509
        %v1021 = vunpack.c.l.b16 %v510
        %v1022 = vunpack.c.l.b16 %v511
        %v1023 = vunpack.c.l.b16 %v512
        %v1024 = vunpack.c.l.b16 %v513
        %v1025 = vunpack.c.l.b16 %v514
        %v1026 = vunpack.c.l.b16 %v515
        %v1027 = vunpack.c.l.b16 %v516
        %v1028 = vunpack.c.l.b16 %v517
        %v1029 = vunpack.c.l.b16 %v518
        %v1030 = vunpack.c.l.b16 %v519
        %v1031 = vunpack.c.l.b16 %v520
        %v1032 = vunpack.c.l.b16 %v521
        %v1033 = vunpack.c.l.b16 %v522
        %v1034 = vunpack.c.l.b16 %v523
        %v1035 = vunpack.c.l.b16 %v524
        %v1036 = vunpack.c.l.b16 %v525
        %v1037 = vunpack.c.l.b16 %v526
        %v1038 = vunpack.c.l.b16 %v527
        %v1039 = vunpack.c.l.b16 %v528
        %v1040 = vunpack.c.l.b16 %v529
        %v1041 = vunpack.c.l.b16 %v530
        %v1042 = vunpack.c.l.b16 %v531
        %v1043 = vunpack.c.l.b16 %v532
        %v1044 = vunpack.c.l.b16 %v533
        %v1045 = vunpack.c.l.b16 %v534
        %v1046 = vunpack.c.l.b16 %v535
        %v1047 = vunpack.c.l.b16 %v536
        %v1048 = vunpack.c.l.b16 %v537
        %v1049 = vunpack.c.l.b16 %v538
        %v1050 = vunpack.c.l.b16 %v539
        %v1051 = vunpack.c.l.b16 %v540
        %v1052 = vunpack.c.l.b16 %v541
        %v1053 = vunpack.c.l.b16 %v542
        %v1054 = vunpack.c.l.b16 %v543
        %v1055 = vunpack.c.l.b16 %v544
        %v1056 = vunpack.c.l.b16 %v545
        %v1057 = vunpack.c.l.b16 %v546
        %v1058 = vunpack.c.l.b16 %v547
        %v1059 = vpack.c.b16 %v916, %v915
        %v1060 = vpack.c.b16 %v918, %v917
        %v1061 = vpack.c.b16 %v920, %v919
        %v1062 = vpack.c.b16 %v922, %v921
        %v1063 = vpack.c.b16 %v924, %v923
        %v1064 = vpack.c.b16 %v926, %v925
        %v1065 = vpack.c.b16 %v928, %v927
        %v1066 = vpack.c.b16 %v930, %v929
        %v1067 = vpack.c.b16 %v932, %v931
        %v1068 = vpack.c.b16 %v934, %v933
        %v1069 = vpack.c.b16 %v936, %v935
        %v1070 = vpack.c.b16 %v938, %v937
        %v1071 = vpack.c.b16 %v940, %v939
        %v1072 = vpack.c.b16 %v942, %v941
        %v1073 = vpack.c.b16 %v944, %v943
        %v1074 = vpack.c.b16 %v946, %v945
        %v1075 = vpack.c.b16 %v948, %v947
        %v1076 = vpack.c.b16 %v950, %v949
        %v1077 = vpack.c.b16 %v952, %v951
        %v1078 = vpack.c.b16 %v954, %v953
        %v1079 = vpack.c.b16 %v956, %v955
        %v1080 = vpack.c.b16 %v958, %v957
        %v1081 = vpack.c.b16 %v960, %v959
        %v1082 = vpack.c.b16 %v962, %v961
        %v1083 = vpack.c.b16 %v964, %v963
        %v1084 = vpack.c.b16 %v966, %v965
        %v1085 = vpack.c.b16 %v968, %v967
        %v1086 = vpack.c.b16 %v970, %v969
        %v1087 = vpack.c.b16 %v972, %v971
        %v1088 = vpack.c.b16 %v974, %v973
        %v1089 = vpack.c.b16 %v976, %v975
        %v1090 = vpack.c.b16 %v978, %v977
        %v1091 = vpack.c.b16 %v980, %v979
        %v1092 = vpack.c.b16 %v982, %v981
        %v1093 = vpack.c.b16 %v984, %v983
        %v1094 = vpack.c.b16 %v986, %v985
        %v1095 = vpack.c.b16 %v988, %v987
        %v1096 = vpack.c.b16 %v990, %v989
        %v1097 = vpack.c.b16 %v992, %v991
        %v1098 = vpack.c.b16 %v994, %v993
        %v1099 = vpack.c.b16 %v996, %v995
        %v1100 = vpack.c.b16 %v998, %v997
        %v1101 = vpack.c.b16 %v1000, %v999
        %v1102 = vpack.c.b16 %v1002, %v1001
        %v1103 = vpack.c.b16 %v1004, %v1003
        %v1104 = vpack.c.b16 %v1006, %v1005
        %v1105 = vpack.c.b16 %v1008, %v1007
        %v1106 = vpack.c.b16 %v1010, %v1009
        %v1107 = vpack.c.b16 %v1012, %v1011
        %v1108 = vpack.c.b16 %v1014, %v1013
        %v1109 = vpack.c.b16 %v1016, %v1015
        %v1110 = vpack.c.b16 %v1018, %v1017
        %v1111 = vpack.c.b16 %v1020, %v1019
        %v1112 = vpack.c.b16 %v1022, %v1021
        %v1113 = vpack.c.b16 %v1024, %v1023
        %v1114 = vpack.c.b16 %v1026, %v1025
        %v1115 = vpack.c.b16 %v1028, %v1027
        %v1116 = vpack.c.b16 %v1030, %v1029
        %v1117 = vpack.c.b16 %v1032, %v1031
        %v1118 = vpack.c.b16 %v1034, %v1033
        %v1119 = vpack.c.b16 %v1036, %v1035
        %v1120 = vpack.c.b16 %v1038, %v1037
        %v1121 = vpack.c.b16 %v1040, %v1039
        %v1122 = vpack.c.b16 %v1042, %v1041
        %v1123 = vpack.c.b16 %v1044, %v1043
        %v1124 = vpack.c.b16 %v1046, %v1045
        %v1125 = vpack.c.b16 %v1048, %v1047
        %v1126 = vpack.c.b16 %v1050, %v1049
        %v1127 = vpack.c.b16 %v1052, %v1051
        %v1128 = vpack.c.b16 %v1054, %v1053
        %v1129 = vpack.c.b16 %v1056, %v1055
        %v1130 = vpack.c.b16 %v1058, %v1057
        %1203 = vmatprep.subr.bf16.mxu0 0
        %1204 = vmatpush1.bf16.msra.mxu0 %v1059
        %1205 = vmatprep.subr.bf16.mxu0 0
        %1206 = vmatpush1.bf16.msra.mxu0 %v1060
        %1207 = vmatprep.subr.bf16.mxu0 0
        %1208 = vmatpush1.bf16.msra.mxu0 %v1061
        %1209 = vmatprep.subr.bf16.mxu0 0
        %1210 = vmatpush1.bf16.msra.mxu0 %v1062
        %1211 = vmatprep.subr.bf16.mxu0 0
        %1212 = vmatpush1.bf16.msra.mxu0 %v1063
        %1213 = vmatprep.subr.bf16.mxu0 0
        %1214 = vmatpush1.bf16.msra.mxu0 %v1064
        %1215 = vmatprep.subr.bf16.mxu0 0
        %1216 = vmatpush1.bf16.msra.mxu0 %v1065
        %1217 = vmatprep.subr.bf16.mxu0 0
        %1218 = vmatpush1.bf16.msra.mxu0 %v1066
        %1219 = vmatprep.subr.bf16.mxu0 0
        %1220 = vmatpush1.bf16.msra.mxu0 %v1067
        %1221 = vmatprep.subr.bf16.mxu0 0
        %1222 = vmatpush1.bf16.msra.mxu0 %v1068
        %1223 = vmatprep.subr.bf16.mxu0 0
        %1224 = vmatpush1.bf16.msra.mxu0 %v1069
        %1225 = vmatprep.subr.bf16.mxu0 0
        %1226 = vmatpush1.bf16.msra.mxu0 %v1070
        %1227 = vmatprep.subr.bf16.mxu0 0
        %1228 = vmatpush1.bf16.msra.mxu0 %v1071
        %1229 = vmatprep.subr.bf16.mxu0 0
        %1230 = vmatpush1.bf16.msra.mxu0 %v1072
        %1231 = vmatprep.subr.bf16.mxu0 0
        %1232 = vmatpush1.bf16.msra.mxu0 %v1073
        %1233 = vmatprep.subr.bf16.mxu0 0
        %1234 = vmatpush1.bf16.msra.mxu0 %v1074
        %1235 = vmatprep.mubr.bf16.mxu0 %v682
        %1236 = vmatmul.mubr.bf16.gmra.mrb[0].mxu0 %v681
        %v1237 = vpop.f32.mrb[0].mxu0
        %v1238 = vadd.f32 %v553, %v1237
        %v1239 = vpop.f32.mrb[0].mxu0
        %v1240 = vpop.f32.mrb[0].mxu0
        %v1241 = vadd.f32 %v553, %v1240
        %v1242 = vpop.f32.mrb[0].mxu0
        %1243 = vmatprep.mubr.bf16.mxu0 %v691
        %1244 = vmatmul.mubr.bf16.gmra.mrb[0].mxu0 %v690
        %v1245 = vpop.f32.mrb[0].mxu0
        %v1246 = vadd.f32 %v553, %v1245
        %v1247 = vpop.f32.mrb[0].mxu0
        %v1248 = vpop.f32.mrb[0].mxu0
        %v1249 = vadd.f32 %v553, %v1248
        %v1250 = vpop.f32.mrb[0].mxu0
        %1251 = vmatprep.mubr.bf16.mxu0 %v700
        %1252 = vmatmul.mubr.bf16.gmra.mrb[0].mxu0 %v699
        %v1253 = vpop.f32.mrb[0].mxu0
        %v1254 = vadd.f32 %v553, %v1253
        %v1255 = vpop.f32.mrb[0].mxu0
        %v1256 = vpop.f32.mrb[0].mxu0
        %v1257 = vadd.f32 %v553, %v1256
        %v1258 = vpop.f32.mrb[0].mxu0
        %1259 = vmatprep.mubr.bf16.mxu0 %v709
        %1260 = vmatmul.mubr.bf16.gmra.mrb[0].mxu0 %v708
        %v1261 = vpop.f32.mrb[0].mxu0
        %v1262 = vadd.f32 %v553, %v1261
        %v1263 = vpop.f32.mrb[0].mxu0
        %v1264 = vpop.f32.mrb[0].mxu0
        %v1265 = vadd.f32 %v553, %v1264
        %v1266 = vpop.f32.mrb[0].mxu0
        %1267 = vmatprep.mubr.bf16.mxu0 %v718
        %1268 = vmatmul.mubr.bf16.gmra.mrb[0].mxu0 %v717
        %v1269 = vpop.f32.mrb[0].mxu0
        %v1270 = vadd.f32 %v553, %v1269
        %v1271 = vpop.f32.mrb[0].mxu0
        %v1272 = vpop.f32.mrb[0].mxu0
        %v1273 = vpop.f32.mrb[0].mxu0
        %1274 = vdwg.mxu0
        %1275 = vmatprep.subr.bf16.mxu0 0
        %1276 = vmatpush1.bf16.msra.mxu0 %v1075
        %1277 = vmatprep.subr.bf16.mxu0 0
        %1278 = vmatpush1.bf16.msra.mxu0 %v1076
        %1279 = vmatprep.subr.bf16.mxu0 0
        %1280 = vmatpush1.bf16.msra.mxu0 %v1077
        %1281 = vmatprep.subr.bf16.mxu0 0
        %1282 = vmatpush1.bf16.msra.mxu0 %v1078
        %1283 = vmatprep.subr.bf16.mxu0 0
        %1284 = vmatpush1.bf16.msra.mxu0 %v1079
        %1285 = vmatprep.subr.bf16.mxu0 0
        %1286 = vmatpush1.bf16.msra.mxu0 %v1080
        %1287 = vmatprep.subr.bf16.mxu0 0
        %1288 = vmatpush1.bf16.msra.mxu0 %v1081
        %1289 = vmatprep.subr.bf16.mxu0 0
        %1290 = vmatpush1.bf16.msra.mxu0 %v1082
        %1291 = vmatprep.subr.bf16.mxu0 0
        %1292 = vmatpush1.bf16.msra.mxu0 %v1083
        %1293 = vmatprep.subr.bf16.mxu0 0
        %1294 = vmatpush1.bf16.msra.mxu0 %v1084
        %1295 = vmatprep.subr.bf16.mxu0 0
        %1296 = vmatpush1.bf16.msra.mxu0 %v1085
        %1297 = vmatprep.subr.bf16.mxu0 0
        %1298 = vmatpush1.bf16.msra.mxu0 %v1086
        %1299 = vmatprep.subr.bf16.mxu0 0
        %1300 = vmatpush1.bf16.msra.mxu0 %v1087
        %1301 = vmatprep.subr.bf16.mxu0 0
        %1302 = vmatpush1.bf16.msra.mxu0 %v1088
        %1303 = vmatprep.subr.bf16.mxu0 0
        %1304 = vmatpush1.bf16.msra.mxu0 %v1089
        %1305 = vmatprep.subr.bf16.mxu0 0
        %1306 = vmatpush1.bf16.msra.mxu0 %v1090
        %1307 = vmatprep.mubr.bf16.mxu0 %v684
        %1308 = vmatmul.mubr.bf16.gmra.mrb[0].mxu0 %v683
        %v1309 = vpop.f32.mrb[0].mxu0
        %v1310 = vadd.f32 %v1238, %v1309
        %v1311 = vpop.f32.mrb[0].mxu0
        %v1312 = vpop.f32.mrb[0].mxu0
        %v1313 = vadd.f32 %v1241, %v1312
        %v1314 = vpop.f32.mrb[0].mxu0
        %1315 = vmatprep.mubr.bf16.mxu0 %v693
        %1316 = vmatmul.mubr.bf16.gmra.mrb[0].mxu0 %v692
        %v1317 = vpop.f32.mrb[0].mxu0
        %v1318 = vadd.f32 %v1246, %v1317
        %v1319 = vpop.f32.mrb[0].mxu0
        %v1320 = vpop.f32.mrb[0].mxu0
        %v1321 = vadd.f32 %v1249, %v1320
        %v1322 = vpop.f32.mrb[0].mxu0
        %1323 = vmatprep.mubr.bf16.mxu0 %v702
        %1324 = vmatmul.mubr.bf16.gmra.mrb[0].mxu0 %v701
        %v1325 = vpop.f32.mrb[0].mxu0
        %v1326 = vadd.f32 %v1254, %v1325
        %v1327 = vpop.f32.mrb[0].mxu0
        %v1328 = vpop.f32.mrb[0].mxu0
        %v1329 = vadd.f32 %v1257, %v1328
        %v1330 = vpop.f32.mrb[0].mxu0
        %1331 = vmatprep.mubr.bf16.mxu0 %v711
        %1332 = vmatmul.mubr.bf16.gmra.mrb[0].mxu0 %v710
        %v1333 = vpop.f32.mrb[0].mxu0
        %v1334 = vadd.f32 %v1262, %v1333
        %v1335 = vpop.f32.mrb[0].mxu0
        %v1336 = vpop.f32.mrb[0].mxu0
        %v1337 = vadd.f32 %v1265, %v1336
        %v1338 = vpop.f32.mrb[0].mxu0
        %1339 = vmatprep.mubr.bf16.mxu0 %v720
        %1340 = vmatmul.mubr.bf16.gmra.mrb[0].mxu0 %v719
        %v1341 = vpop.f32.mrb[0].mxu0
        %v1342 = vadd.f32 %v1270, %v1341
        %v1343 = vpop.f32.mrb[0].mxu0
        %v1344 = vpop.f32.mrb[0].mxu0
        %v1345 = vpop.f32.mrb[0].mxu0
        %1346 = vdwg.mxu0
        %1347 = vmatprep.subr.bf16.mxu0 0
        %1348 = vmatpush1.bf16.msra.mxu0 %v1091
        %1349 = vmatprep.subr.bf16.mxu0 0
        %1350 = vmatpush1.bf16.msra.mxu0 %v1092
        %1351 = vmatprep.subr.bf16.mxu0 0
        %1352 = vmatpush1.bf16.msra.mxu0 %v1093
        %1353 = vmatprep.subr.bf16.mxu0 0
        %1354 = vmatpush1.bf16.msra.mxu0 %v1094
        %1355 = vmatprep.subr.bf16.mxu0 0
        %1356 = vmatpush1.bf16.msra.mxu0 %v1095
        %1357 = vmatprep.subr.bf16.mxu0 0
        %1358 = vmatpush1.bf16.msra.mxu0 %v1096
        %1359 = vmatprep.subr.bf16.mxu0 0
        %1360 = vmatpush1.bf16.msra.mxu0 %v1097
        %1361 = vmatprep.subr.bf16.mxu0 0
        %1362 = vmatpush1.bf16.msra.mxu0 %v1098
        %1363 = vmatprep.subr.bf16.mxu0 0
        %1364 = vmatpush1.bf16.msra.mxu0 %v1099
        %1365 = vmatprep.subr.bf16.mxu0 0
        %1366 = vmatpush1.bf16.msra.mxu0 %v1100
        %1367 = vmatprep.subr.bf16.mxu0 0
        %1368 = vmatpush1.bf16.msra.mxu0 %v1101
        %1369 = vmatprep.subr.bf16.mxu0 0
        %1370 = vmatpush1.bf16.msra.mxu0 %v1102
        %1371 = vmatprep.subr.bf16.mxu0 0
        %1372 = vmatpush1.bf16.msra.mxu0 %v1103
        %1373 = vmatprep.subr.bf16.mxu0 0
        %1374 = vmatpush1.bf16.msra.mxu0 %v1104
        %1375 = vmatprep.subr.bf16.mxu0 0
        %1376 = vmatpush1.bf16.msra.mxu0 %v1105
        %1377 = vmatprep.subr.bf16.mxu0 0
        %1378 = vmatpush1.bf16.msra.mxu0 %v1106
        %1379 = vmatprep.mubr.bf16.mxu0 %v686
        %1380 = vmatmul.mubr.bf16.gmra.mrb[0].mxu0 %v685
        %v1381 = vpop.f32.mrb[0].mxu0
        %v1382 = vadd.f32 %v1310, %v1381
        %v1383 = vpop.f32.mrb[0].mxu0
        %v1384 = vpop.f32.mrb[0].mxu0
        %v1385 = vadd.f32 %v1313, %v1384
        %v1386 = vpop.f32.mrb[0].mxu0
        %1387 = vmatprep.mubr.bf16.mxu0 %v695
        %1388 = vmatmul.mubr.bf16.gmra.mrb[0].mxu0 %v694
        %v1389 = vpop.f32.mrb[0].mxu0
        %v1390 = vadd.f32 %v1318, %v1389
        %v1391 = vpop.f32.mrb[0].mxu0
        %v1392 = vpop.f32.mrb[0].mxu0
        %v1393 = vadd.f32 %v1321, %v1392
        %v1394 = vpop.f32.mrb[0].mxu0
        %1395 = vmatprep.mubr.bf16.mxu0 %v704
        %1396 = vmatmul.mubr.bf16.gmra.mrb[0].mxu0 %v703
        %v1397 = vpop.f32.mrb[0].mxu0
        %v1398 = vadd.f32 %v1326, %v1397
        %v1399 = vpop.f32.mrb[0].mxu0
        %v1400 = vpop.f32.mrb[0].mxu0
        %v1401 = vadd.f32 %v1329, %v1400
        %v1402 = vpop.f32.mrb[0].mxu0
        %1403 = vmatprep.mubr.bf16.mxu0 %v713
        %1404 = vmatmul.mubr.bf16.gmra.mrb[0].mxu0 %v712
        %v1405 = vpop.f32.mrb[0].mxu0
        %v1406 = vadd.f32 %v1334, %v1405
        %v1407 = vpop.f32.mrb[0].mxu0
        %v1408 = vpop.f32.mrb[0].mxu0
        %v1409 = vadd.f32 %v1337, %v1408
        %v1410 = vpop.f32.mrb[0].mxu0
        %1411 = vmatprep.mubr.bf16.mxu0 %v722
        %1412 = vmatmul.mubr.bf16.gmra.mrb[0].mxu0 %v721
        %v1413 = vpop.f32.mrb[0].mxu0
        %v1414 = vadd.f32 %v1342, %v1413
        %v1415 = vpop.f32.mrb[0].mxu0
        %v1416 = vpop.f32.mrb[0].mxu0
        %v1417 = vpop.f32.mrb[0].mxu0
        %1418 = vdwg.mxu0
        %1419 = vmatprep.subr.bf16.mxu0 0
        %1420 = vmatpush1.bf16.msra.mxu0 %v1107
        %1421 = vmatprep.subr.bf16.mxu0 0
        %1422 = vmatpush1.bf16.msra.mxu0 %v1108
        %1423 = vmatprep.subr.bf16.mxu0 0
        %1424 = vmatpush1.bf16.msra.mxu0 %v1109
        %1425 = vmatprep.subr.bf16.mxu0 0
        %1426 = vmatpush1.bf16.msra.mxu0 %v1110
        %1427 = vmatprep.subr.bf16.mxu0 0
        %1428 = vmatpush1.bf16.msra.mxu0 %v1111
        %1429 = vmatprep.subr.bf16.mxu0 0
        %1430 = vmatpush1.bf16.msra.mxu0 %v1112
        %1431 = vmatprep.subr.bf16.mxu0 0
        %1432 = vmatpush1.bf16.msra.mxu0 %v1113
        %1433 = vmatprep.subr.bf16.mxu0 0
        %1434 = vmatpush1.bf16.msra.mxu0 %v1114
        %1435 = vmatprep.subr.bf16.mxu0 0
        %1436 = vmatpush1.bf16.msra.mxu0 %v1115
        %1437 = vmatprep.subr.bf16.mxu0 0
        %1438 = vmatpush1.bf16.msra.mxu0 %v1116
        %1439 = vmatprep.subr.bf16.mxu0 0
        %1440 = vmatpush1.bf16.msra.mxu0 %v1117
        %1441 = vmatprep.subr.bf16.mxu0 0
        %1442 = vmatpush1.bf16.msra.mxu0 %v1118
        %1443 = vmatprep.subr.bf16.mxu0 0
        %1444 = vmatpush1.bf16.msra.mxu0 %v1119
        %1445 = vmatprep.subr.bf16.mxu0 0
        %1446 = vmatpush1.bf16.msra.mxu0 %v1120
        %1447 = vmatprep.subr.bf16.mxu0 0
        %1448 = vmatpush1.bf16.msra.mxu0 %v1121
        %1449 = vmatprep.subr.bf16.mxu0 0
        %1450 = vmatpush1.bf16.msra.mxu0 %v1122
        %1451 = vmatprep.mubr.bf16.mxu0 %v688
        %1452 = vmatmul.mubr.bf16.gmra.mrb[0].mxu0 %v687
        %v1453 = vpop.f32.mrb[0].mxu0
        %v1454 = vadd.f32 %v1382, %v1453
        %v1455 = vpop.f32.mrb[0].mxu0
        %v1456 = vpop.f32.mrb[0].mxu0
        %v1457 = vadd.f32 %v1385, %v1456
        %v1458 = vpop.f32.mrb[0].mxu0
        %1459 = vmatprep.mubr.bf16.mxu0 %v697
        %1460 = vmatmul.mubr.bf16.gmra.mrb[0].mxu0 %v696
        %v1461 = vpop.f32.mrb[0].mxu0
        %v1462 = vadd.f32 %v1390, %v1461
        %v1463 = vpop.f32.mrb[0].mxu0
        %v1464 = vpop.f32.mrb[0].mxu0
        %v1465 = vadd.f32 %v1393, %v1464
        %v1466 = vpop.f32.mrb[0].mxu0
        %1467 = vmatprep.mubr.bf16.mxu0 %v706
        %1468 = vmatmul.mubr.bf16.gmra.mrb[0].mxu0 %v705
        %v1469 = vpop.f32.mrb[0].mxu0
        %v1470 = vadd.f32 %v1398, %v1469
        %v1471 = vpop.f32.mrb[0].mxu0
        %v1472 = vpop.f32.mrb[0].mxu0
        %v1473 = vadd.f32 %v1401, %v1472
        %v1474 = vpop.f32.mrb[0].mxu0
        %1475 = vmatprep.mubr.bf16.mxu0 %v715
        %1476 = vmatmul.mubr.bf16.gmra.mrb[0].mxu0 %v714
        %v1477 = vpop.f32.mrb[0].mxu0
        %v1478 = vadd.f32 %v1406, %v1477
        %v1479 = vpop.f32.mrb[0].mxu0
        %v1480 = vpop.f32.mrb[0].mxu0
        %v1481 = vadd.f32 %v1409, %v1480
        %v1482 = vpop.f32.mrb[0].mxu0
        %1483 = vmatprep.mubr.bf16.mxu0 %v724
        %1484 = vmatmul.mubr.bf16.gmra.mrb[0].mxu0 %v723
        %v1485 = vpop.f32.mrb[0].mxu0
        %v1486 = vadd.f32 %v1414, %v1485
        %v1487 = vpop.f32.mrb[0].mxu0
        %v1488 = vpop.f32.mrb[0].mxu0
        %v1489 = vpop.f32.mrb[0].mxu0
        %1490 = vdwg.mxu0
        %1491 = vmatprep.subr.bf16.mxu0 0
        %1492 = vmatpush1.bf16.msra.mxu0 %v1123
        %1493 = vmatprep.subr.bf16.mxu0 0
        %1494 = vmatpush1.bf16.msra.mxu0 %v1124
        %1495 = vmatprep.subr.bf16.mxu0 0
        %1496 = vmatpush1.bf16.msra.mxu0 %v1125
        %1497 = vmatprep.subr.bf16.mxu0 0
        %1498 = vmatpush1.bf16.msra.mxu0 %v1126
        %1499 = vmatprep.subr.bf16.mxu0 0
        %1500 = vmatpush1.bf16.msra.mxu0 %v1127
        %1501 = vmatprep.subr.bf16.mxu0 0
        %1502 = vmatpush1.bf16.msra.mxu0 %v1128
        %1503 = vmatprep.subr.bf16.mxu0 0
        %1504 = vmatpush1.bf16.msra.mxu0 %v1129
        %1505 = vmatprep.subr.bf16.mxu0 0
        %1506 = vmatpush1.bf16.msra.mxu0 %v1130
        %1507 = vmatprep.subr.bf16.mxu0 0
        %1508 = vmatpush1.bf16.msra.mxu0 0
        %1509 = vmatprep.subr.bf16.mxu0 0
        %1510 = vmatpush1.bf16.msra.mxu0 0
        %1511 = vmatprep.subr.bf16.mxu0 0
        %1512 = vmatpush1.bf16.msra.mxu0 0
        %1513 = vmatprep.subr.bf16.mxu0 0
        %1514 = vmatpush1.bf16.msra.mxu0 0
        %1515 = vmatprep.subr.bf16.mxu0 0
        %1516 = vmatpush1.bf16.msra.mxu0 0
        %1517 = vmatprep.subr.bf16.mxu0 0
        %1518 = vmatpush1.bf16.msra.mxu0 0
        %1519 = vmatprep.subr.bf16.mxu0 0
        %1520 = vmatpush1.bf16.msra.mxu0 0
        %1521 = vmatprep.subr.bf16.mxu0 0
        %1522 = vmatpush1.bf16.msra.mxu0 0
        %1523 = vmatprep.mubr.bf16.mxu0 0
        %1524 = vmatmul.mubr.bf16.gmra.mrb[0].mxu0 %v689
        %v1525 = vpop.f32.mrb[0].mxu0
        %v1526 = vadd.f32 %v1454, %v1525
        %v1527 = vpop.f32.mrb[0].mxu0
        %v1528 = vpop.f32.mrb[0].mxu0
        %v1529 = vadd.f32 %v1457, %v1528
        %v1530 = vpop.f32.mrb[0].mxu0
        %1531 = vmatprep.mubr.bf16.mxu0 0
        %1532 = vmatmul.mubr.bf16.gmra.mrb[0].mxu0 %v698
        %v1533 = vpop.f32.mrb[0].mxu0
        %v1534 = vadd.f32 %v1462, %v1533
        %v1535 = vpop.f32.mrb[0].mxu0
        %v1536 = vpop.f32.mrb[0].mxu0
        %v1537 = vadd.f32 %v1465, %v1536
        %v1538 = vpop.f32.mrb[0].mxu0
        %1539 = vmatprep.mubr.bf16.mxu0 0
        %1540 = vmatmul.mubr.bf16.gmra.mrb[0].mxu0 %v707
        %v1541 = vpop.f32.mrb[0].mxu0
        %v1542 = vadd.f32 %v1470, %v1541
        %v1543 = vpop.f32.mrb[0].mxu0
        %v1544 = vpop.f32.mrb[0].mxu0
        %v1545 = vadd.f32 %v1473, %v1544
        %v1546 = vpop.f32.mrb[0].mxu0
        %1547 = vmatprep.mubr.bf16.mxu0 0
        %1548 = vmatmul.mubr.bf16.gmra.mrb[0].mxu0 %v716
        %v1549 = vpop.f32.mrb[0].mxu0
        %v1550 = vadd.f32 %v1478, %v1549
        %v1551 = vpop.f32.mrb[0].mxu0
        %v1552 = vpop.f32.mrb[0].mxu0
        %v1553 = vadd.f32 %v1481, %v1552
        %v1554 = vpop.f32.mrb[0].mxu0
        %1555 = vmatprep.mubr.bf16.mxu0 0
        %1556 = vmatmul.mubr.bf16.gmra.mrb[0].mxu0 %v725
        %v1557 = vpop.f32.mrb[0].mxu0
        %v1558 = vadd.f32 %v1486, %v1557
        %v1559 = vpop.f32.mrb[0].mxu0
        %v1560 = vpop.f32.mrb[0].mxu0
        %v1561 = vpop.f32.mrb[0].mxu0
        %1562 = vdwg.mxu0
        %v1563 = vmax.f32 %v1526, 0.0
        %v1564 = vmax.f32 %v1529, 0.0
        %v1565 = vmax.f32 %v1534, 0.0
        %v1566 = vmax.f32 %v1537, 0.0
        %v1567 = vmax.f32 %v1542, 0.0
        %v1568 = vmax.f32 %v1545, 0.0
        %v1569 = vmax.f32 %v1550, 0.0
        %v1570 = vmax.f32 %v1553, 0.0
        %v1571 = vmax.f32 %v1558, 0.0
        %vm1572 = vcmask 1040384
        %v1573 = vsel %vm1572, %v1563, 0.0
        %v1574 = vrot.slane %v1567, 3
        %vm1575 = vcmask 1041409
        %v1576 = vsel %vm1575, %v1574, %v1573
        %v1577 = vrot.slane %v1563, 1
        %v1578 = vsel %vm1572, %v1577, 0.0
        %v1579 = vrot.slane %v1567, 4
        %v1580 = vsel %vm1575, %v1579, %v1578
        %v1581 = vrot.slane %v1563, 2
        %v1582 = vsel %vm1572, %v1581, 0.0
        %v1583 = vrot.slane %v1567, 5
        %v1584 = vsel %vm1575, %v1583, %v1582
        %v1585 = vrot.slane %v1563, 3
        %v1586 = vsel %vm1572, %v1585, 0.0
        %v1587 = vrot.slane %v1567, 6
        %v1588 = vsel %vm1575, %v1587, %v1586
        %v1589 = vrot.slane %v1563, 4
        %v1590 = vsel %vm1572, %v1589, 0.0
        %v1591 = vrot.slane %v1568, 7
        %v1592 = vsel %vm1575, %v1591, %v1590
        %v1593 = vrot.slane %v1563, 5
        %v1594 = vsel %vm1572, %v1593, 0.0
        %v1595 = vsel %vm1575, %v1568, %v1594
        %v1596 = vrot.slane %v1563, 6
        %v1597 = vsel %vm1572, %v1596, 0.0
        %v1598 = vrot.slane %v1568, 1
        %v1599 = vsel %vm1575, %v1598, %v1597
        %v1600 = vrot.slane %v1563, 7
        %v1601 = vsel %vm1572, %v1600, 0.0
        %v1602 = vrot.slane %v1568, 2
        %v1603 = vsel %vm1575, %v1602, %v1601
        %v1604 = vsel %vm1572, %v1564, 0.0
        %v1605 = vrot.slane %v1568, 3
        %v1606 = vsel %vm1575, %v1605, %v1604
        %v1607 = vrot.slane %v1564, 1
        %v1608 = vsel %vm1572, %v1607, 0.0
        %v1609 = vrot.slane %v1568, 4
        %v1610 = vsel %vm1575, %v1609, %v1608
        %v1611 = vrot.slane %v1564, 2
        %v1612 = vsel %vm1572, %v1611, 0.0
        %v1613 = vrot.slane %v1568, 5
        %v1614 = vsel %vm1575, %v1613, %v1612
        %v1615 = vrot.slane %v1564, 3
        %v1616 = vsel %vm1572, %v1615, 0.0
        %v1617 = vrot.slane %v1568, 6
        %v1618 = vsel %vm1575, %v1617, %v1616
        %v1619 = vrot.slane %v1564, 4
        %v1620 = vsel %vm1572, %v1619, 0.0
        %v1621 = vrot.slane %v1569, 7
        %v1622 = vsel %vm1575, %v1621, %v1620
        %v1623 = vrot.slane %v1564, 5
        %v1624 = vsel %vm1572, %v1623, 0.0
        %v1625 = vsel %vm1575, %v1569, %v1624
        %v1626 = vrot.slane %v1564, 6
        %v1627 = vsel %vm1572, %v1626, 0.0
        %v1628 = vrot.slane %v1569, 1
        %v1629 = vsel %vm1575, %v1628, %v1627
        %v1630 = vrot.slane %v1564, 7
        %v1631 = vsel %vm1572, %v1630, 0.0
        %v1632 = vrot.slane %v1569, 2
        %v1633 = vsel %vm1575, %v1632, %v1631
        %v1634 = vsel %vm1572, %v1565, 0.0
        %v1635 = vrot.slane %v1569, 3
        %v1636 = vsel %vm1575, %v1635, %v1634
        %v1637 = vrot.slane %v1565, 1
        %v1638 = vsel %vm1572, %v1637, 0.0
        %v1639 = vrot.slane %v1569, 4
        %v1640 = vsel %vm1575, %v1639, %v1638
        %v1641 = vrot.slane %v1565, 2
        %v1642 = vsel %vm1572, %v1641, 0.0
        %v1643 = vrot.slane %v1569, 5
        %v1644 = vsel %vm1575, %v1643, %v1642
        %v1645 = vrot.slane %v1565, 3
        %v1646 = vsel %vm1572, %v1645, 0.0
        %v1647 = vrot.slane %v1569, 6
        %v1648 = vsel %vm1575, %v1647, %v1646
        %v1649 = vrot.slane %v1565, 4
        %v1650 = vsel %vm1572, %v1649, 0.0
        %v1651 = vrot.slane %v1570, 7
        %v1652 = vsel %vm1575, %v1651, %v1650
        %v1653 = vrot.slane %v1565, 5
        %v1654 = vsel %vm1572, %v1653, 0.0
        %v1655 = vsel %vm1575, %v1570, %v1654
        %v1656 = vrot.slane %v1565, 6
        %v1657 = vsel %vm1572, %v1656, 0.0
        %v1658 = vrot.slane %v1570, 1
        %v1659 = vsel %vm1575, %v1658, %v1657
        %v1660 = vrot.slane %v1565, 7
        %v1661 = vsel %vm1572, %v1660, 0.0
        %v1662 = vrot.slane %v1570, 2
        %v1663 = vsel %vm1575, %v1662, %v1661
        %v1664 = vsel %vm1572, %v1566, 0.0
        %v1665 = vrot.slane %v1570, 3
        %v1666 = vsel %vm1575, %v1665, %v1664
        %v1667 = vrot.slane %v1566, 1
        %v1668 = vsel %vm1572, %v1667, 0.0
        %v1669 = vrot.slane %v1570, 4
        %v1670 = vsel %vm1575, %v1669, %v1668
        %v1671 = vrot.slane %v1566, 2
        %v1672 = vsel %vm1572, %v1671, 0.0
        %v1673 = vrot.slane %v1570, 5
        %v1674 = vsel %vm1575, %v1673, %v1672
        %v1675 = vrot.slane %v1566, 3
        %v1676 = vsel %vm1572, %v1675, 0.0
        %v1677 = vrot.slane %v1570, 6
        %v1678 = vsel %vm1575, %v1677, %v1676
        %v1679 = vrot.slane %v1566, 4
        %v1680 = vsel %vm1572, %v1679, 0.0
        %v1681 = vrot.slane %v1571, 7
        %v1682 = vsel %vm1575, %v1681, %v1680
        %v1683 = vrot.slane %v1566, 5
        %v1684 = vsel %vm1572, %v1683, 0.0
        %v1685 = vsel %vm1575, %v1571, %v1684
        %v1686 = vrot.slane %v1566, 6
        %v1687 = vsel %vm1572, %v1686, 0.0
        %v1688 = vrot.slane %v1571, 1
        %v1689 = vsel %vm1575, %v1688, %v1687
        %v1690 = vrot.slane %v1566, 7
        %v1691 = vsel %vm1572, %v1690, 0.0
        %v1692 = vrot.slane %v1571, 2
        %v1693 = vsel %vm1575, %v1692, %v1691
        %v1694 = vsel %vm1572, %v1567, 0.0
        %v1695 = vrot.slane %v1571, 3
        %v1696 = vsel %vm1575, %v1695, %v1694
        %v1697 = vrot.slane %v1567, 1
        %v1698 = vsel %vm1572, %v1697, 0.0
        %v1699 = vrot.slane %v1571, 4
        %v1700 = vsel %vm1575, %v1699, %v1698
        %v1701 = vrot.slane %v1567, 2
        %v1702 = vsel %vm1572, %v1701, 0.0
        %v1703 = vrot.slane %v1571, 5
        %v1704 = vsel %vm1575, %v1703, %v1702
        %v1705 = vsel %vm1572, %v1574, 0.0
        %v1706 = vrot.slane %v1571, 6
        %v1707 = vsel %vm1575, %v1706, %v1705
        %v1708 = vpack.c.bf16 %v1576, %v1576
        %v1709 = vpack.c.bf16 %v1580, %v1580
        %v1710 = vpack.c.bf16 %v1584, %v1584
        %v1711 = vpack.c.bf16 %v1588, %v1588
        %v1712 = vpack.c.bf16 %v1592, %v1592
        %v1713 = vpack.c.bf16 %v1595, %v1595
        %v1714 = vpack.c.bf16 %v1599, %v1599
        %v1715 = vpack.c.bf16 %v1603, %v1603
        %v1716 = vpack.c.bf16 %v1606, %v1606
        %v1717 = vpack.c.bf16 %v1610, %v1610
        %v1718 = vpack.c.bf16 %v1614, %v1614
        %v1719 = vpack.c.bf16 %v1618, %v1618
        %v1720 = vpack.c.bf16 %v1622, %v1622
        %v1721 = vpack.c.bf16 %v1625, %v1625
        %v1722 = vpack.c.bf16 %v1629, %v1629
        %v1723 = vpack.c.bf16 %v1633, %v1633
        %v1724 = vpack.c.bf16 %v1636, %v1636
        %v1725 = vpack.c.bf16 %v1640, %v1640
        %v1726 = vpack.c.bf16 %v1644, %v1644
        %v1727 = vpack.c.bf16 %v1648, %v1648
        %v1728 = vpack.c.bf16 %v1652, %v1652
        %v1729 = vpack.c.bf16 %v1655, %v1655
        %v1730 = vpack.c.bf16 %v1659, %v1659
        %v1731 = vpack.c.bf16 %v1663, %v1663
        %v1732 = vpack.c.bf16 %v1666, %v1666
        %v1733 = vpack.c.bf16 %v1670, %v1670
        %v1734 = vpack.c.bf16 %v1674, %v1674
        %v1735 = vpack.c.bf16 %v1678, %v1678
        %v1736 = vpack.c.bf16 %v1682, %v1682
        %v1737 = vpack.c.bf16 %v1685, %v1685
        %v1738 = vpack.c.bf16 %v1689, %v1689
        %v1739 = vpack.c.bf16 %v1693, %v1693
        %v1740 = vpack.c.bf16 %v1696, %v1696
        %v1741 = vpack.c.bf16 %v1700, %v1700
        %v1742 = vpack.c.bf16 %v1704, %v1704
        %v1743 = vpack.c.bf16 %v1707, %v1707
        %v1744 = vld [vmem:[%s343] sm:$0xff]
        %v1745 = vld [vmem:[%s343 + $0x8] sm:$0xff]
        %v1746 = vld [vmem:[%s343 + $0x10] sm:$0xff]
        %v1747 = vld [vmem:[%s343 + $0x18] sm:$0xff]
        %v1748 = vld [vmem:[%s343 + $0x20] sm:$0xff]
        %v1749 = vld [vmem:[%s343 + $0x28] sm:$0xff]
        %v1750 = vld [vmem:[%s343 + $0x30] sm:$0xff]
        %v1751 = vld [vmem:[%s343 + $0x38] sm:$0xff]
        %v1752 = vld [vmem:[%s343 + $0x40] sm:$0xff]
        %v1753 = vld [vmem:[%s343 + $0x48] sm:$0xff]
        %v1754 = vld [vmem:[%s343 + $0x50] sm:$0xff]
        %v1755 = vld [vmem:[%s343 + $0x58] sm:$0xff]
        %v1756 = vld [vmem:[%s343 + $0x60] sm:$0xff]
        %v1757 = vld [vmem:[%s343 + $0x68] sm:$0xff]
        %v1758 = vld [vmem:[%s343 + $0x70] sm:$0xff]
        %v1759 = vld [vmem:[%s343 + $0x78] sm:$0xff]
        %v1760 = vld [vmem:[%s343 + $0x80] sm:$0xff]
        %v1761 = vld [vmem:[%s343 + $0x88] sm:$0xff]
        %v1762 = vld [vmem:[%s343 + $0x90] sm:$0xff]
        %v1763 = vld [vmem:[%s343 + $0x98] sm:$0xff]
        %v1764 = vld [vmem:[%s343 + $0xa0] sm:$0xff]
        %v1765 = vld [vmem:[%s343 + $0xa8] sm:$0xff]
        %v1766 = vld [vmem:[%s343 + $0xb0] sm:$0xff]
        %v1767 = vld [vmem:[%s343 + $0xb8] sm:$0xff]
        %v1768 = vld [vmem:[%s343 + $0xc0] sm:$0xff]
        %v1769 = vld [vmem:[%s343 + $0xc8] sm:$0xff]
        %v1770 = vld [vmem:[%s343 + $0xd0] sm:$0xff]
        %v1771 = vld [vmem:[%s343 + $0xd8] sm:$0xff]
        %v1772 = vld [vmem:[%s343 + $0xe0] sm:$0xff]
        %v1773 = vld [vmem:[%s343 + $0xe8] sm:$0xff]
        %v1774 = vld [vmem:[%s343 + $0xf0] sm:$0xff]
        %v1775 = vld [vmem:[%s343 + $0xf8] sm:$0xff]
        %v1776 = vld [vmem:[%s343 + $0x100] sm:$0xff]
        %v1777 = vld [vmem:[%s343 + $0x108] sm:$0xff]
        %v1778 = vld [vmem:[%s343 + $0x110] sm:$0xff]
        %v1779 = vld [vmem:[%s343 + $0x118] sm:$0xff]
        %v1780 = vld [vmem:[%s343 + $0x120] sm:$0xff]
        %v1781 = vld [vmem:[%s343 + $0x128] sm:$0xff]
        %v1782 = vld [vmem:[%s343 + $0x130] sm:$0xff]
        %v1783 = vld [vmem:[%s343 + $0x138] sm:$0xff]
        %v1784 = vld [vmem:[%s343 + $0x140] sm:$0xff]
        %v1785 = vld [vmem:[%s343 + $0x148] sm:$0xff]
        %v1786 = vld [vmem:[%s343 + $0x150] sm:$0xff]
        %v1787 = vld [vmem:[%s343 + $0x158] sm:$0xff]
        %v1788 = vld [vmem:[%s343 + $0x160] sm:$0xff]
        %v1789 = vld [vmem:[%s343 + $0x168] sm:$0xff]
        %v1790 = vld [vmem:[%s343 + $0x170] sm:$0xff]
        %v1791 = vld [vmem:[%s343 + $0x178] sm:$0xff]
        %v1792 = vld [vmem:[%s343 + $0x180] sm:$0xff]
        %v1793 = vld [vmem:[%s343 + $0x188] sm:$0xff]
        %v1794 = vld [vmem:[%s343 + $0x190] sm:$0xff]
        %v1795 = vld [vmem:[%s343 + $0x198] sm:$0xff]
        %v1796 = vld [vmem:[%s343 + $0x1a0] sm:$0xff]
        %v1797 = vld [vmem:[%s343 + $0x1a8] sm:$0xff]
        %v1798 = vld [vmem:[%s343 + $0x1b0] sm:$0xff]
        %v1799 = vld [vmem:[%s343 + $0x1b8] sm:$0xff]
        %v1800 = vld [vmem:[%s343 + $0x1c0] sm:$0xff]
        %v1801 = vld [vmem:[%s343 + $0x1c8] sm:$0xff]
        %v1802 = vld [vmem:[%s343 + $0x1d0] sm:$0xff]
        %v1803 = vld [vmem:[%s343 + $0x1d8] sm:$0xff]
        %v1804 = vld [vmem:[%s343 + $0x1e0] sm:$0xff]
        %v1805 = vld [vmem:[%s343 + $0x1e8] sm:$0xff]
        %v1806 = vld [vmem:[%s343 + $0x1f0] sm:$0xff]
        %v1807 = vld [vmem:[%s343 + $0x1f8] sm:$0xff]
        %v1808 = vld [vmem:[%s343 + $0x200] sm:$0xff]
        %v1809 = vld [vmem:[%s343 + $0x208] sm:$0xff]
        %v1810 = vld [vmem:[%s343 + $0x210] sm:$0xff]
        %v1811 = vld [vmem:[%s343 + $0x218] sm:$0xff]
        %v1812 = vld [vmem:[%s343 + $0x220] sm:$0xff]
        %v1813 = vld [vmem:[%s343 + $0x228] sm:$0xff]
        %v1814 = vld [vmem:[%s343 + $0x230] sm:$0xff]
        %v1815 = vld [vmem:[%s343 + $0x238] sm:$0xff]
        %v1816 = vld [vmem:[%s343 + $0x240] sm:$0xff]
        %v1817 = vld [vmem:[%s343 + $0x248] sm:$0xff]
        %v1818 = vld [vmem:[%s343 + $0x250] sm:$0xff]
        %v1819 = vld [vmem:[%s343 + $0x258] sm:$0xff]
        %v1820 = vld [vmem:[%s343 + $0x260] sm:$0xff]
        %v1821 = vld [vmem:[%s343 + $0x268] sm:$0xff]
        %v1822 = vld [vmem:[%s343 + $0x270] sm:$0xff]
        %v1823 = vld [vmem:[%s343 + $0x278] sm:$0xff]
        %v1824 = vld [vmem:[%s343 + $0x280] sm:$0xff]
        %v1825 = vld [vmem:[%s343 + $0x288] sm:$0xff]
        %v1826 = vld [vmem:[%s343 + $0x290] sm:$0xff]
        %v1827 = vld [vmem:[%s343 + $0x298] sm:$0xff]
        %v1828 = vld [vmem:[%s343 + $0x2a0] sm:$0xff]
        %v1829 = vld [vmem:[%s343 + $0x2a8] sm:$0xff]
        %v1830 = vld [vmem:[%s343 + $0x2b0] sm:$0xff]
        %v1831 = vld [vmem:[%s343 + $0x2b8] sm:$0xff]
        %v1832 = vld [vmem:[%s343 + $0x2c0] sm:$0xff]
        %v1833 = vld [vmem:[%s343 + $0x2c8] sm:$0xff]
        %v1834 = vld [vmem:[%s343 + $0x2d0] sm:$0xff]
        %v1835 = vld [vmem:[%s343 + $0x2d8] sm:$0xff]
        %v1836 = vld [vmem:[%s343 + $0x2e0] sm:$0xff]
        %v1837 = vld [vmem:[%s343 + $0x2e8] sm:$0xff]
        %v1838 = vld [vmem:[%s343 + $0x2f0] sm:$0xff]
        %v1839 = vld [vmem:[%s343 + $0x2f8] sm:$0xff]
        %v1840 = vld [vmem:[%s343 + $0x300] sm:$0xff]
        %v1841 = vld [vmem:[%s343 + $0x308] sm:$0xff]
        %v1842 = vld [vmem:[%s343 + $0x310] sm:$0xff]
        %v1843 = vld [vmem:[%s343 + $0x318] sm:$0xff]
        %v1844 = vld [vmem:[%s343 + $0x320] sm:$0xff]
        %v1845 = vld [vmem:[%s343 + $0x328] sm:$0xff]
        %v1846 = vld [vmem:[%s343 + $0x330] sm:$0xff]
        %v1847 = vld [vmem:[%s343 + $0x338] sm:$0xff]
        %v1848 = vld [vmem:[%s343 + $0x340] sm:$0xff]
        %v1849 = vld [vmem:[%s343 + $0x348] sm:$0xff]
        %v1850 = vld [vmem:[%s343 + $0x350] sm:$0xff]
        %v1851 = vld [vmem:[%s343 + $0x358] sm:$0xff]
        %v1852 = vld [vmem:[%s343 + $0x360] sm:$0xff]
        %v1853 = vld [vmem:[%s343 + $0x368] sm:$0xff]
        %v1854 = vld [vmem:[%s343 + $0x370] sm:$0xff]
        %v1855 = vld [vmem:[%s343 + $0x378] sm:$0xff]
        %v1856 = vld [vmem:[%s343 + $0x380] sm:$0xff]
        %v1857 = vld [vmem:[%s343 + $0x388] sm:$0xff]
        %v1858 = vld [vmem:[%s343 + $0x390] sm:$0xff]
        %v1859 = vld [vmem:[%s343 + $0x398] sm:$0xff]
        %v1860 = vld [vmem:[%s343 + $0x3a0] sm:$0xff]
        %v1861 = vld [vmem:[%s343 + $0x3a8] sm:$0xff]
        %v1862 = vld [vmem:[%s343 + $0x3b0] sm:$0xff]
        %v1863 = vld [vmem:[%s343 + $0x3b8] sm:$0xff]
        %v1864 = vld [vmem:[%s343 + $0x3c0] sm:$0xff]
        %v1865 = vld [vmem:[%s343 + $0x3c8] sm:$0xff]
        %v1866 = vld [vmem:[%s343 + $0x3d0] sm:$0xff]
        %v1867 = vld [vmem:[%s343 + $0x3d8] sm:$0xff]
        %v1868 = vld [vmem:[%s343 + $0x3e0] sm:$0xff]
        %v1869 = vld [vmem:[%s343 + $0x3e8] sm:$0xff]
        %v1870 = vld [vmem:[%s343 + $0x3f0] sm:$0xff]
        %v1871 = vld [vmem:[%s343 + $0x3f8] sm:$0xff]
        %v1872 = vld [vmem:[%s343 + $0x400] sm:$0xff]
        %v1873 = vld [vmem:[%s343 + $0x408] sm:$0xff]
        %v1874 = vld [vmem:[%s343 + $0x410] sm:$0xff]
        %v1875 = vld [vmem:[%s343 + $0x418] sm:$0xff]
        %v1876 = vld [vmem:[%s343 + $0x420] sm:$0xff]
        %v1877 = vld [vmem:[%s343 + $0x428] sm:$0xff]
        %v1878 = vld [vmem:[%s343 + $0x430] sm:$0xff]
        %v1879 = vld [vmem:[%s343 + $0x438] sm:$0xff]
        %v1880 = vld [vmem:[%s343 + $0x440] sm:$0xff]
        %v1881 = vld [vmem:[%s343 + $0x448] sm:$0xff]
        %v1882 = vld [vmem:[%s343 + $0x450] sm:$0xff]
        %v1883 = vld [vmem:[%s343 + $0x458] sm:$0xff]
        %v1884 = vld [vmem:[%s343 + $0x460] sm:$0xff]
        %v1885 = vld [vmem:[%s343 + $0x468] sm:$0xff]
        %v1886 = vld [vmem:[%s343 + $0x470] sm:$0xff]
        %v1887 = vld [vmem:[%s343 + $0x478] sm:$0xff]
        %v1888 = vld [vmem:[%s343 + $0x480] sm:$0xff]
        %v1889 = vld [vmem:[%s343 + $0x488] sm:$0xff]
        %v1890 = vld [vmem:[%s343 + $0x490] sm:$0xff]
        %v1891 = vld [vmem:[%s343 + $0x498] sm:$0xff]
        %v1892 = vld [vmem:[%s343 + $0x4a0] sm:$0xff]
        %v1893 = vld [vmem:[%s343 + $0x4a8] sm:$0xff]
        %v1894 = vld [vmem:[%s343 + $0x4b0] sm:$0xff]
        %v1895 = vld [vmem:[%s343 + $0x4b8] sm:$0xff]
        %v1896 = vld [vmem:[%s343 + $0x4c0] sm:$0xff]
        %v1897 = vld [vmem:[%s343 + $0x4c8] sm:$0xff]
        %v1898 = vld [vmem:[%s343 + $0x4d0] sm:$0xff]
        %v1899 = vld [vmem:[%s343 + $0x4d8] sm:$0xff]
        %v1900 = vld [vmem:[%s343 + $0x4e0] sm:$0xff]
        %v1901 = vld [vmem:[%s343 + $0x4e8] sm:$0xff]
        %v1902 = vld [vmem:[%s343 + $0x4f0] sm:$0xff]
        %v1903 = vld [vmem:[%s343 + $0x4f8] sm:$0xff]
        %v1904 = vld [vmem:[%s343 + $0x500] sm:$0xff]
        %v1905 = vld [vmem:[%s343 + $0x508] sm:$0xff]
        %v1906 = vld [vmem:[%s343 + $0x510] sm:$0xff]
        %v1907 = vld [vmem:[%s343 + $0x518] sm:$0xff]
        %v1908 = vld [vmem:[%s343 + $0x520] sm:$0xff]
        %v1909 = vld [vmem:[%s343 + $0x528] sm:$0xff]
        %v1910 = vld [vmem:[%s343 + $0x530] sm:$0xff]
        %v1911 = vld [vmem:[%s343 + $0x538] sm:$0xff]
        %v1912 = vld [vmem:[%s343 + $0x540] sm:$0xff]
        %v1913 = vld [vmem:[%s343 + $0x548] sm:$0xff]
        %v1914 = vld [vmem:[%s343 + $0x550] sm:$0xff]
        %v1915 = vld [vmem:[%s343 + $0x558] sm:$0xff]
        %v1916 = vld [vmem:[%s343 + $0x560] sm:$0xff]
        %v1917 = vld [vmem:[%s343 + $0x568] sm:$0xff]
        %v1918 = vld [vmem:[%s343 + $0x570] sm:$0xff]
        %v1919 = vld [vmem:[%s343 + $0x578] sm:$0xff]
        %v1920 = vld [vmem:[%s343 + $0x580] sm:$0xff]
        %v1921 = vld [vmem:[%s343 + $0x588] sm:$0xff]
        %v1922 = vld [vmem:[%s343 + $0x590] sm:$0xff]
        %v1923 = vld [vmem:[%s343 + $0x598] sm:$0xff]
        %v1924 = vld [vmem:[%s343 + $0x5a0] sm:$0xff]
        %v1925 = vld [vmem:[%s343 + $0x5a8] sm:$0xff]
        %v1926 = vld [vmem:[%s343 + $0x5b0] sm:$0xff]
        %v1927 = vld [vmem:[%s343 + $0x5b8] sm:$0xff]
        %v1928 = vld [vmem:[%s343 + $0x5c0] sm:$0xff]
        %v1929 = vld [vmem:[%s343 + $0x5c8] sm:$0xff]
        %v1930 = vld [vmem:[%s343 + $0x5d0] sm:$0xff]
        %v1931 = vld [vmem:[%s343 + $0x5d8] sm:$0xff]
        %v1932 = vld [vmem:[%s343 + $0x5e0] sm:$0xff]
        %v1933 = vld [vmem:[%s343 + $0x5e8] sm:$0xff]
        %v1934 = vld [vmem:[%s343 + $0x5f0] sm:$0xff]
        %v1935 = vld [vmem:[%s343 + $0x5f8] sm:$0xff]
        %v1936 = vld [vmem:[%s343 + $0x600] sm:$0xff]
        %v1937 = vld [vmem:[%s343 + $0x608] sm:$0xff]
        %v1938 = vld [vmem:[%s343 + $0x610] sm:$0xff]
        %v1939 = vld [vmem:[%s343 + $0x618] sm:$0xff]
        %v1940 = vld [vmem:[%s343 + $0x620] sm:$0xff]
        %v1941 = vld [vmem:[%s343 + $0x628] sm:$0xff]
        %v1942 = vld [vmem:[%s343 + $0x630] sm:$0xff]
        %v1943 = vld [vmem:[%s343 + $0x638] sm:$0xff]
        %v1944 = vld [vmem:[%s343 + $0x640] sm:$0xff]
        %v1945 = vld [vmem:[%s343 + $0x648] sm:$0xff]
        %v1946 = vld [vmem:[%s343 + $0x650] sm:$0xff]
        %v1947 = vld [vmem:[%s343 + $0x658] sm:$0xff]
        %v1948 = vld [vmem:[%s343 + $0x660] sm:$0xff]
        %v1949 = vld [vmem:[%s343 + $0x668] sm:$0xff]
        %v1950 = vld [vmem:[%s343 + $0x670] sm:$0xff]
        %v1951 = vld [vmem:[%s343 + $0x678] sm:$0xff]
        %v1952 = vld [vmem:[%s343 + $0x680] sm:$0xff]
        %v1953 = vld [vmem:[%s343 + $0x688] sm:$0xff]
        %v1954 = vld [vmem:[%s343 + $0x690] sm:$0xff]
        %v1955 = vld [vmem:[%s343 + $0x698] sm:$0xff]
        %v1956 = vld [vmem:[%s343 + $0x6a0] sm:$0xff]
        %v1957 = vld [vmem:[%s343 + $0x6a8] sm:$0xff]
        %v1958 = vld [vmem:[%s343 + $0x6b0] sm:$0xff]
        %v1959 = vld [vmem:[%s343 + $0x6b8] sm:$0xff]
        %v1960 = vld [vmem:[%s343 + $0x6c0] sm:$0xff]
        %v1961 = vld [vmem:[%s343 + $0x6c8] sm:$0xff]
        %v1962 = vld [vmem:[%s343 + $0x6d0] sm:$0xff]
        %v1963 = vld [vmem:[%s343 + $0x6d8] sm:$0xff]
        %v1964 = vld [vmem:[%s343 + $0x6e0] sm:$0xff]
        %v1965 = vld [vmem:[%s343 + $0x6e8] sm:$0xff]
        %v1966 = vld [vmem:[%s343 + $0x6f0] sm:$0xff]
        %v1967 = vld [vmem:[%s343 + $0x6f8] sm:$0xff]
        %v1968 = vld [vmem:[%s343 + $0x700] sm:$0xff]
        %v1969 = vld [vmem:[%s343 + $0x708] sm:$0xff]
        %v1970 = vld [vmem:[%s343 + $0x710] sm:$0xff]
        %v1971 = vld [vmem:[%s343 + $0x718] sm:$0xff]
        %v1972 = vld [vmem:[%s343 + $0x720] sm:$0xff]
        %v1973 = vld [vmem:[%s343 + $0x728] sm:$0xff]
        %v1974 = vld [vmem:[%s343 + $0x730] sm:$0xff]
        %v1975 = vld [vmem:[%s343 + $0x738] sm:$0xff]
        %v1976 = vld [vmem:[%s343 + $0x740] sm:$0xff]
        %v1977 = vld [vmem:[%s343 + $0x748] sm:$0xff]
        %v1978 = vld [vmem:[%s343 + $0x750] sm:$0xff]
        %v1979 = vld [vmem:[%s343 + $0x758] sm:$0xff]
        %v1980 = vld [vmem:[%s343 + $0x760] sm:$0xff]
        %v1981 = vld [vmem:[%s343 + $0x768] sm:$0xff]
        %v1982 = vld [vmem:[%s343 + $0x770] sm:$0xff]
        %v1983 = vld [vmem:[%s343 + $0x778] sm:$0xff]
        %v1984 = vld [vmem:[%s343 + $0x780] sm:$0xff]
        %v1985 = vld [vmem:[%s343 + $0x788] sm:$0xff]
        %v1986 = vld [vmem:[%s343 + $0x790] sm:$0xff]
        %v1987 = vld [vmem:[%s343 + $0x798] sm:$0xff]
        %v1988 = vld [vmem:[%s343 + $0x7a0] sm:$0xff]
        %v1989 = vld [vmem:[%s343 + $0x7a8] sm:$0xff]
        %v1990 = vld [vmem:[%s343 + $0x7b0] sm:$0xff]
        %v1991 = vld [vmem:[%s343 + $0x7b8] sm:$0xff]
        %v1992 = vld [vmem:[%s343 + $0x7c0] sm:$0xff]
        %v1993 = vld [vmem:[%s343 + $0x7c8] sm:$0xff]
        %v1994 = vld [vmem:[%s343 + $0x7d0] sm:$0xff]
        %v1995 = vld [vmem:[%s343 + $0x7d8] sm:$0xff]
        %v1996 = vld [vmem:[%s343 + $0x7e0] sm:$0xff]
        %v1997 = vld [vmem:[%s343 + $0x7e8] sm:$0xff]
        %v1998 = vld [vmem:[%s343 + $0x7f0] sm:$0xff]
        %v1999 = vld [vmem:[%s343 + $0x7f8] sm:$0xff]
        %v2000 = vld [vmem:[%s343 + $0x800] sm:$0xff]
        %v2001 = vld [vmem:[%s343 + $0x808] sm:$0xff]
        %v2002 = vld [vmem:[%s343 + $0x810] sm:$0xff]
        %v2003 = vld [vmem:[%s343 + $0x818] sm:$0xff]
        %v2004 = vld [vmem:[%s343 + $0x820] sm:$0xff]
        %v2005 = vld [vmem:[%s343 + $0x828] sm:$0xff]
        %v2006 = vld [vmem:[%s343 + $0x830] sm:$0xff]
        %v2007 = vld [vmem:[%s343 + $0x838] sm:$0xff]
        %v2008 = vld [vmem:[%s343 + $0x840] sm:$0xff]
        %v2009 = vld [vmem:[%s343 + $0x848] sm:$0xff]
        %v2010 = vld [vmem:[%s343 + $0x850] sm:$0xff]
        %v2011 = vld [vmem:[%s343 + $0x858] sm:$0xff]
        %v2012 = vld [vmem:[%s343 + $0x860] sm:$0xff]
        %v2013 = vld [vmem:[%s343 + $0x868] sm:$0xff]
        %v2014 = vld [vmem:[%s343 + $0x870] sm:$0xff]
        %v2015 = vld [vmem:[%s343 + $0x878] sm:$0xff]
        %v2016 = vld [vmem:[%s343 + $0x880] sm:$0xff]
        %v2017 = vld [vmem:[%s343 + $0x888] sm:$0xff]
        %v2018 = vld [vmem:[%s343 + $0x890] sm:$0xff]
        %v2019 = vld [vmem:[%s343 + $0x898] sm:$0xff]
        %v2020 = vld [vmem:[%s343 + $0x8a0] sm:$0xff]
        %v2021 = vld [vmem:[%s343 + $0x8a8] sm:$0xff]
        %v2022 = vld [vmem:[%s343 + $0x8b0] sm:$0xff]
        %v2023 = vld [vmem:[%s343 + $0x8b8] sm:$0xff]
        %v2024 = vld [vmem:[%s343 + $0x8c0] sm:$0xff]
        %v2025 = vld [vmem:[%s343 + $0x8c8] sm:$0xff]
        %v2026 = vld [vmem:[%s343 + $0x8d0] sm:$0xff]
        %v2027 = vld [vmem:[%s343 + $0x8d8] sm:$0xff]
        %v2028 = vld [vmem:[%s343 + $0x8e0] sm:$0xff]
        %v2029 = vld [vmem:[%s343 + $0x8e8] sm:$0xff]
        %v2030 = vld [vmem:[%s343 + $0x8f0] sm:$0xff]
        %v2031 = vld [vmem:[%s343 + $0x8f8] sm:$0xff]
        %v2032 = vld [vmem:[%s343 + $0x900] sm:$0xff]
        %v2033 = vld [vmem:[%s343 + $0x908] sm:$0xff]
        %v2034 = vld [vmem:[%s343 + $0x910] sm:$0xff]
        %v2035 = vld [vmem:[%s343 + $0x918] sm:$0xff]
        %v2036 = vld [vmem:[%s343 + $0x920] sm:$0xff]
        %v2037 = vld [vmem:[%s343 + $0x928] sm:$0xff]
        %v2038 = vld [vmem:[%s343 + $0x930] sm:$0xff]
        %v2039 = vld [vmem:[%s343 + $0x938] sm:$0xff]
        %v2040 = vld [vmem:[%s343 + $0x940] sm:$0xff]
        %v2041 = vld [vmem:[%s343 + $0x948] sm:$0xff]
        %v2042 = vld [vmem:[%s343 + $0x950] sm:$0xff]
        %v2043 = vld [vmem:[%s343 + $0x958] sm:$0xff]
        %v2044 = vld [vmem:[%s343 + $0x960] sm:$0xff]
        %v2045 = vld [vmem:[%s343 + $0x968] sm:$0xff]
        %v2046 = vld [vmem:[%s343 + $0x970] sm:$0xff]
        %v2047 = vld [vmem:[%s343 + $0x978] sm:$0xff]
        %v2048 = vld [vmem:[%s343 + $0x980] sm:$0xff]
        %v2049 = vld [vmem:[%s343 + $0x988] sm:$0xff]
        %v2050 = vld [vmem:[%s343 + $0x990] sm:$0xff]
        %v2051 = vld [vmem:[%s343 + $0x998] sm:$0xff]
        %v2052 = vld [vmem:[%s343 + $0x9a0] sm:$0xff]
        %v2053 = vld [vmem:[%s343 + $0x9a8] sm:$0xff]
        %v2054 = vld [vmem:[%s343 + $0x9b0] sm:$0xff]
        %v2055 = vld [vmem:[%s343 + $0x9b8] sm:$0xff]
        %v2056 = vld [vmem:[%s343 + $0x9c0] sm:$0xff]
        %v2057 = vld [vmem:[%s343 + $0x9c8] sm:$0xff]
        %v2058 = vld [vmem:[%s343 + $0x9d0] sm:$0xff]
        %v2059 = vld [vmem:[%s343 + $0x9d8] sm:$0xff]
        %v2060 = vld [vmem:[%s343 + $0x9e0] sm:$0xff]
        %v2061 = vld [vmem:[%s343 + $0x9e8] sm:$0xff]
        %v2062 = vld [vmem:[%s343 + $0x9f0] sm:$0xff]
        %v2063 = vld [vmem:[%s343 + $0x9f8] sm:$0xff]
        %v2064 = vld [vmem:[%s343 + $0xa00] sm:$0xff]
        %v2065 = vld [vmem:[%s343 + $0xa08] sm:$0xff]
        %v2066 = vld [vmem:[%s343 + $0xa10] sm:$0xff]
        %v2067 = vld [vmem:[%s343 + $0xa18] sm:$0xff]
        %v2068 = vld [vmem:[%s343 + $0xa20] sm:$0x77]
        %v2069 = vld [vmem:[%s343 + $0xa28] sm:$0x77]
        %v2070 = vld [vmem:[%s343 + $0xa30] sm:$0x77]
        %v2071 = vld [vmem:[%s343 + $0xa38] sm:$0x77]
        %v2072 = vld [vmem:[%s343 + $0xa40] sm:$0x77]
        %v2073 = vld [vmem:[%s343 + $0xa48] sm:$0x77]
        %v2074 = vld [vmem:[%s343 + $0xa50] sm:$0x77]
        %v2075 = vld [vmem:[%s343 + $0xa58] sm:$0x77]
        %v2076 = vld [vmem:[%s343 + $0xa60] sm:$0x77]
        %v2077 = vld [vmem:[%s343 + $0xa68] sm:$0x77]
        %v2078 = vld [vmem:[%s343 + $0xa70] sm:$0x77]
        %v2079 = vld [vmem:[%s343 + $0xa78] sm:$0x77]
        %v2080 = vld [vmem:[%s343 + $0xa80] sm:$0x77]
        %v2081 = vld [vmem:[%s343 + $0xa88] sm:$0x77]
        %v2082 = vld [vmem:[%s343 + $0xa90] sm:$0x77]
        %v2083 = vld [vmem:[%s343 + $0xa98] sm:$0x77]
        %v2084 = vld [vmem:[%s343 + $0xaa0] sm:$0x77]
        %v2085 = vld [vmem:[%s343 + $0xaa8] sm:$0x77]
        %v2086 = vld [vmem:[%s349] sm:$0x3]
        %v2088 = vlaneseq
        %v2089 = vshrl.u32 %v2088, 7
        %v2090 = vsub.s32 0, %v2089
        %v2091 = vrot.slane %v2086, %v2090
        %v2092 = vlaneseq
        %v2093 = vshrl.u32 %v2092, 7
        %v2094 = vsub.s32 1, %v2093
        %v2095 = vrot.slane %v2086, %v2094
        %v2440 = vunpack.c.l.b16 %v1744
        %v2441 = vunpack.c.h.b16 %v1744
        %v2442 = vunpack.c.l.b16 %v1745
        %v2443 = vunpack.c.h.b16 %v1745
        %v2444 = vunpack.c.l.b16 %v1746
        %v2445 = vunpack.c.h.b16 %v1746
        %v2446 = vunpack.c.l.b16 %v1747
        %v2447 = vunpack.c.h.b16 %v1747
        %v2448 = vunpack.c.l.b16 %v1748
        %v2449 = vunpack.c.h.b16 %v1748
        %v2450 = vunpack.c.l.b16 %v1749
        %v2451 = vunpack.c.h.b16 %v1749
        %v2452 = vunpack.c.l.b16 %v1750
        %v2453 = vunpack.c.h.b16 %v1750
        %v2454 = vunpack.c.l.b16 %v1751
        %v2455 = vunpack.c.h.b16 %v1751
        %v2456 = vunpack.c.l.b16 %v1752
        %v2457 = vunpack.c.h.b16 %v1752
        %v2458 = vunpack.c.l.b16 %v1753
        %v2459 = vunpack.c.h.b16 %v1753
        %v2460 = vunpack.c.l.b16 %v1754
        %v2461 = vunpack.c.h.b16 %v1754
        %v2462 = vunpack.c.l.b16 %v1755
        %v2463 = vunpack.c.h.b16 %v1755
        %v2464 = vunpack.c.l.b16 %v1756
        %v2465 = vunpack.c.h.b16 %v1756
        %v2466 = vunpack.c.l.b16 %v1757
        %v2467 = vunpack.c.h.b16 %v1757
        %v2468 = vunpack.c.l.b16 %v1758
        %v2469 = vunpack.c.h.b16 %v1758
        %v2470 = vunpack.c.l.b16 %v1759
        %v2471 = vunpack.c.h.b16 %v1759
        %v2472 = vunpack.c.l.b16 %v1760
        %v2473 = vunpack.c.h.b16 %v1760
        %v2474 = vunpack.c.l.b16 %v1761
        %v2475 = vunpack.c.h.b16 %v1761
        %v2476 = vunpack.c.l.b16 %v1762
        %v2477 = vunpack.c.h.b16 %v1762
        %v2478 = vunpack.c.l.b16 %v1763
        %v2479 = vunpack.c.h.b16 %v1763
        %v2480 = vunpack.c.l.b16 %v1764
        %v2481 = vunpack.c.h.b16 %v1764
        %v2482 = vunpack.c.l.b16 %v1765
        %v2483 = vunpack.c.h.b16 %v1765
        %v2484 = vunpack.c.l.b16 %v1766
        %v2485 = vunpack.c.h.b16 %v1766
        %v2486 = vunpack.c.l.b16 %v1767
        %v2487 = vunpack.c.h.b16 %v1767
        %v2488 = vunpack.c.l.b16 %v1768
        %v2489 = vunpack.c.h.b16 %v1768
        %v2490 = vunpack.c.l.b16 %v1769
        %v2491 = vunpack.c.h.b16 %v1769
        %v2492 = vunpack.c.l.b16 %v1770
        %v2493 = vunpack.c.h.b16 %v1770
        %v2494 = vunpack.c.l.b16 %v1771
        %v2495 = vunpack.c.h.b16 %v1771
        %v2496 = vunpack.c.l.b16 %v1772
        %v2497 = vunpack.c.h.b16 %v1772
        %v2498 = vunpack.c.l.b16 %v1773
        %v2499 = vunpack.c.h.b16 %v1773
        %v2500 = vunpack.c.l.b16 %v1774
        %v2501 = vunpack.c.h.b16 %v1774
        %v2502 = vunpack.c.l.b16 %v1775
        %v2503 = vunpack.c.h.b16 %v1775
        %v2504 = vunpack.c.l.b16 %v1776
        %v2505 = vunpack.c.h.b16 %v1776
        %v2506 = vunpack.c.l.b16 %v1777
        %v2507 = vunpack.c.h.b16 %v1777
        %v2508 = vunpack.c.l.b16 %v1778
        %v2509 = vunpack.c.h.b16 %v1778
        %v2510 = vunpack.c.l.b16 %v1779
        %v2511 = vunpack.c.h.b16 %v1779
        %v2512 = vunpack.c.l.b16 %v1780
        %v2513 = vunpack.c.h.b16 %v1780
        %v2514 = vunpack.c.l.b16 %v1781
        %v2515 = vunpack.c.h.b16 %v1781
        %v2516 = vunpack.c.l.b16 %v1782
        %v2517 = vunpack.c.h.b16 %v1782
        %v2518 = vunpack.c.l.b16 %v1783
        %v2519 = vunpack.c.h.b16 %v1783
        %v2520 = vunpack.c.l.b16 %v1784
        %v2521 = vunpack.c.h.b16 %v1784
        %v2522 = vunpack.c.l.b16 %v1785
        %v2523 = vunpack.c.h.b16 %v1785
        %v2524 = vunpack.c.l.b16 %v1786
        %v2525 = vunpack.c.h.b16 %v1786
        %v2526 = vunpack.c.l.b16 %v1787
        %v2527 = vunpack.c.h.b16 %v1787
        %v2528 = vunpack.c.l.b16 %v1788
        %v2529 = vunpack.c.h.b16 %v1788
        %v2530 = vunpack.c.l.b16 %v1789
        %v2531 = vunpack.c.h.b16 %v1789
        %v2532 = vunpack.c.l.b16 %v1790
        %v2533 = vunpack.c.h.b16 %v1790
        %v2534 = vunpack.c.l.b16 %v1791
        %v2535 = vunpack.c.h.b16 %v1791
        %v2536 = vunpack.c.l.b16 %v1792
        %v2537 = vunpack.c.h.b16 %v1792
        %v2538 = vunpack.c.l.b16 %v1793
        %v2539 = vunpack.c.h.b16 %v1793
        %v2540 = vunpack.c.l.b16 %v1794
        %v2541 = vunpack.c.h.b16 %v1794
        %v2542 = vunpack.c.l.b16 %v1795
        %v2543 = vunpack.c.h.b16 %v1795
        %v2544 = vunpack.c.l.b16 %v1796
        %v2545 = vunpack.c.h.b16 %v1796
        %v2546 = vunpack.c.l.b16 %v1797
        %v2547 = vunpack.c.h.b16 %v1797
        %v2548 = vunpack.c.l.b16 %v1798
        %v2549 = vunpack.c.h.b16 %v1798
        %v2550 = vunpack.c.l.b16 %v1799
        %v2551 = vunpack.c.h.b16 %v1799
        %v2552 = vunpack.c.l.b16 %v1800
        %v2553 = vunpack.c.h.b16 %v1800
        %v2554 = vunpack.c.l.b16 %v1801
        %v2555 = vunpack.c.h.b16 %v1801
        %v2556 = vunpack.c.l.b16 %v1802
        %v2557 = vunpack.c.h.b16 %v1802
        %v2558 = vunpack.c.l.b16 %v1803
        %v2559 = vunpack.c.h.b16 %v1803
        %v2560 = vunpack.c.l.b16 %v1804
        %v2561 = vunpack.c.h.b16 %v1804
        %v2562 = vunpack.c.l.b16 %v1805
        %v2563 = vunpack.c.h.b16 %v1805
        %v2564 = vunpack.c.l.b16 %v1806
        %v2565 = vunpack.c.h.b16 %v1806
        %v2566 = vunpack.c.l.b16 %v1807
        %v2567 = vunpack.c.h.b16 %v1807
        %v2568 = vunpack.c.l.b16 %v1808
        %v2569 = vunpack.c.h.b16 %v1808
        %v2570 = vunpack.c.l.b16 %v1809
        %v2571 = vunpack.c.h.b16 %v1809
        %v2572 = vunpack.c.l.b16 %v1810
        %v2573 = vunpack.c.h.b16 %v1810
        %v2574 = vunpack.c.l.b16 %v1811
        %v2575 = vunpack.c.h.b16 %v1811
        %v2576 = vunpack.c.l.b16 %v1812
        %v2577 = vunpack.c.h.b16 %v1812
        %v2578 = vunpack.c.l.b16 %v1813
        %v2579 = vunpack.c.h.b16 %v1813
        %v2580 = vunpack.c.l.b16 %v1814
        %v2581 = vunpack.c.h.b16 %v1814
        %v2582 = vunpack.c.l.b16 %v1815
        %v2583 = vunpack.c.h.b16 %v1815
        %v2584 = vunpack.c.l.b16 %v1816
        %v2585 = vunpack.c.h.b16 %v1816
        %v2586 = vunpack.c.l.b16 %v1817
        %v2587 = vunpack.c.h.b16 %v1817
        %v2588 = vunpack.c.l.b16 %v1818
        %v2589 = vunpack.c.h.b16 %v1818
        %v2590 = vunpack.c.l.b16 %v1819
        %v2591 = vunpack.c.h.b16 %v1819
        %v2592 = vunpack.c.l.b16 %v1820
        %v2593 = vunpack.c.h.b16 %v1820
        %v2594 = vunpack.c.l.b16 %v1821
        %v2595 = vunpack.c.h.b16 %v1821
        %v2596 = vunpack.c.l.b16 %v1822
        %v2597 = vunpack.c.h.b16 %v1822
        %v2598 = vunpack.c.l.b16 %v1823
        %v2599 = vunpack.c.h.b16 %v1823
        %v2600 = vunpack.c.l.b16 %v1824
        %v2601 = vunpack.c.h.b16 %v1824
        %v2602 = vunpack.c.l.b16 %v1825
        %v2603 = vunpack.c.h.b16 %v1825
        %v2604 = vunpack.c.l.b16 %v1826
        %v2605 = vunpack.c.h.b16 %v1826
        %v2606 = vunpack.c.l.b16 %v1827
        %v2607 = vunpack.c.h.b16 %v1827
        %v2608 = vunpack.c.l.b16 %v1828
        %v2609 = vunpack.c.h.b16 %v1828
        %v2610 = vunpack.c.l.b16 %v1829
        %v2611 = vunpack.c.h.b16 %v1829
        %v2612 = vunpack.c.l.b16 %v1830
        %v2613 = vunpack.c.h.b16 %v1830
        %v2614 = vunpack.c.l.b16 %v1831
        %v2615 = vunpack.c.h.b16 %v1831
        %v2616 = vunpack.c.l.b16 %v1832
        %v2617 = vunpack.c.h.b16 %v1832
        %v2618 = vunpack.c.l.b16 %v1833
        %v2619 = vunpack.c.h.b16 %v1833
        %v2620 = vunpack.c.l.b16 %v1834
        %v2621 = vunpack.c.h.b16 %v1834
        %v2622 = vunpack.c.l.b16 %v1835
        %v2623 = vunpack.c.h.b16 %v1835
        %v2624 = vunpack.c.l.b16 %v1836
        %v2625 = vunpack.c.h.b16 %v1836
        %v2626 = vunpack.c.l.b16 %v1837
        %v2627 = vunpack.c.h.b16 %v1837
        %v2628 = vunpack.c.l.b16 %v1838
        %v2629 = vunpack.c.h.b16 %v1838
        %v2630 = vunpack.c.l.b16 %v1839
        %v2631 = vunpack.c.h.b16 %v1839
        %v2632 = vunpack.c.l.b16 %v1840
        %v2633 = vunpack.c.h.b16 %v1840
        %v2634 = vunpack.c.l.b16 %v1841
        %v2635 = vunpack.c.h.b16 %v1841
        %v2636 = vunpack.c.l.b16 %v1842
        %v2637 = vunpack.c.h.b16 %v1842
        %v2638 = vunpack.c.l.b16 %v1843
        %v2639 = vunpack.c.h.b16 %v1843
        %v2640 = vunpack.c.l.b16 %v1844
        %v2641 = vunpack.c.h.b16 %v1844
        %v2642 = vunpack.c.l.b16 %v1845
        %v2643 = vunpack.c.h.b16 %v1845
        %v2644 = vunpack.c.l.b16 %v1846
        %v2645 = vunpack.c.h.b16 %v1846
        %v2646 = vunpack.c.l.b16 %v1847
        %v2647 = vunpack.c.h.b16 %v1847
        %v2648 = vunpack.c.l.b16 %v1848
        %v2649 = vunpack.c.h.b16 %v1848
        %v2650 = vunpack.c.l.b16 %v1849
        %v2651 = vunpack.c.h.b16 %v1849
        %v2652 = vunpack.c.l.b16 %v1850
        %v2653 = vunpack.c.h.b16 %v1850
        %v2654 = vunpack.c.l.b16 %v1851
        %v2655 = vunpack.c.h.b16 %v1851
        %v2656 = vunpack.c.l.b16 %v1852
        %v2657 = vunpack.c.h.b16 %v1852
        %v2658 = vunpack.c.l.b16 %v1853
        %v2659 = vunpack.c.h.b16 %v1853
        %v2660 = vunpack.c.l.b16 %v1854
        %v2661 = vunpack.c.h.b16 %v1854
        %v2662 = vunpack.c.l.b16 %v1855
        %v2663 = vunpack.c.h.b16 %v1855
        %v2664 = vunpack.c.l.b16 %v1856
        %v2665 = vunpack.c.h.b16 %v1856
        %v2666 = vunpack.c.l.b16 %v1857
        %v2667 = vunpack.c.h.b16 %v1857
        %v2668 = vunpack.c.l.b16 %v1858
        %v2669 = vunpack.c.h.b16 %v1858
        %v2670 = vunpack.c.l.b16 %v1859
        %v2671 = vunpack.c.h.b16 %v1859
        %v2672 = vunpack.c.l.b16 %v1860
        %v2673 = vunpack.c.h.b16 %v1860
        %v2674 = vunpack.c.l.b16 %v1861
        %v2675 = vunpack.c.h.b16 %v1861
        %v2676 = vunpack.c.l.b16 %v1862
        %v2677 = vunpack.c.h.b16 %v1862
        %v2678 = vunpack.c.l.b16 %v1863
        %v2679 = vunpack.c.h.b16 %v1863
        %v2680 = vunpack.c.l.b16 %v1864
        %v2681 = vunpack.c.h.b16 %v1864
        %v2682 = vunpack.c.l.b16 %v1865
        %v2683 = vunpack.c.h.b16 %v1865
        %v2684 = vunpack.c.l.b16 %v1866
        %v2685 = vunpack.c.h.b16 %v1866
        %v2686 = vunpack.c.l.b16 %v1867
        %v2687 = vunpack.c.h.b16 %v1867
        %v2688 = vunpack.c.l.b16 %v1868
        %v2689 = vunpack.c.h.b16 %v1868
        %v2690 = vunpack.c.l.b16 %v1869
        %v2691 = vunpack.c.h.b16 %v1869
        %v2692 = vunpack.c.l.b16 %v1870
        %v2693 = vunpack.c.h.b16 %v1870
        %v2694 = vunpack.c.l.b16 %v1871
        %v2695 = vunpack.c.h.b16 %v1871
        %v2696 = vunpack.c.l.b16 %v1872
        %v2697 = vunpack.c.h.b16 %v1872
        %v2698 = vunpack.c.l.b16 %v1873
        %v2699 = vunpack.c.h.b16 %v1873
        %v2700 = vunpack.c.l.b16 %v1874
        %v2701 = vunpack.c.h.b16 %v1874
        %v2702 = vunpack.c.l.b16 %v1875
        %v2703 = vunpack.c.h.b16 %v1875
        %v2704 = vunpack.c.l.b16 %v1876
        %v2705 = vunpack.c.h.b16 %v1876
        %v2706 = vunpack.c.l.b16 %v1877
        %v2707 = vunpack.c.h.b16 %v1877
        %v2708 = vunpack.c.l.b16 %v1878
        %v2709 = vunpack.c.h.b16 %v1878
        %v2710 = vunpack.c.l.b16 %v1879
        %v2711 = vunpack.c.h.b16 %v1879
        %v2712 = vunpack.c.l.b16 %v1880
        %v2713 = vunpack.c.h.b16 %v1880
        %v2714 = vunpack.c.l.b16 %v1881
        %v2715 = vunpack.c.h.b16 %v1881
        %v2716 = vunpack.c.l.b16 %v1882
        %v2717 = vunpack.c.h.b16 %v1882
        %v2718 = vunpack.c.l.b16 %v1883
        %v2719 = vunpack.c.h.b16 %v1883
        %v2720 = vunpack.c.l.b16 %v1884
        %v2721 = vunpack.c.h.b16 %v1884
        %v2722 = vunpack.c.l.b16 %v1885
        %v2723 = vunpack.c.h.b16 %v1885
        %v2724 = vunpack.c.l.b16 %v1886
        %v2725 = vunpack.c.h.b16 %v1886
        %v2726 = vunpack.c.l.b16 %v1887
        %v2727 = vunpack.c.h.b16 %v1887
        %v2728 = vunpack.c.l.b16 %v1888
        %v2729 = vunpack.c.h.b16 %v1888
        %v2730 = vunpack.c.l.b16 %v1889
        %v2731 = vunpack.c.h.b16 %v1889
        %v2732 = vunpack.c.l.b16 %v1890
        %v2733 = vunpack.c.h.b16 %v1890
        %v2734 = vunpack.c.l.b16 %v1891
        %v2735 = vunpack.c.h.b16 %v1891
        %v2736 = vunpack.c.l.b16 %v1892
        %v2737 = vunpack.c.h.b16 %v1892
        %v2738 = vunpack.c.l.b16 %v1893
        %v2739 = vunpack.c.h.b16 %v1893
        %v2740 = vunpack.c.l.b16 %v1894
        %v2741 = vunpack.c.h.b16 %v1894
        %v2742 = vunpack.c.l.b16 %v1895
        %v2743 = vunpack.c.h.b16 %v1895
        %v2744 = vunpack.c.l.b16 %v1896
        %v2745 = vunpack.c.h.b16 %v1896
        %v2746 = vunpack.c.l.b16 %v1897
        %v2747 = vunpack.c.h.b16 %v1897
        %v2748 = vunpack.c.l.b16 %v1898
        %v2749 = vunpack.c.h.b16 %v1898
        %v2750 = vunpack.c.l.b16 %v1899
        %v2751 = vunpack.c.h.b16 %v1899
        %v2752 = vunpack.c.l.b16 %v1900
        %v2753 = vunpack.c.h.b16 %v1900
        %v2754 = vunpack.c.l.b16 %v1901
        %v2755 = vunpack.c.h.b16 %v1901
        %v2756 = vunpack.c.l.b16 %v1902
        %v2757 = vunpack.c.h.b16 %v1902
        %v2758 = vunpack.c.l.b16 %v1903
        %v2759 = vunpack.c.h.b16 %v1903
        %v2760 = vunpack.c.l.b16 %v1904
        %v2761 = vunpack.c.h.b16 %v1904
        %v2762 = vunpack.c.l.b16 %v1905
        %v2763 = vunpack.c.h.b16 %v1905
        %v2764 = vunpack.c.l.b16 %v1906
        %v2765 = vunpack.c.h.b16 %v1906
        %v2766 = vunpack.c.l.b16 %v1907
        %v2767 = vunpack.c.h.b16 %v1907
        %v2768 = vunpack.c.l.b16 %v1908
        %v2769 = vunpack.c.h.b16 %v1908
        %v2770 = vunpack.c.l.b16 %v1909
        %v2771 = vunpack.c.h.b16 %v1909
        %v2772 = vunpack.c.l.b16 %v1910
        %v2773 = vunpack.c.h.b16 %v1910
        %v2774 = vunpack.c.l.b16 %v1911
        %v2775 = vunpack.c.h.b16 %v1911
        %v2776 = vunpack.c.l.b16 %v1912
        %v2777 = vunpack.c.h.b16 %v1912
        %v2778 = vunpack.c.l.b16 %v1913
        %v2779 = vunpack.c.h.b16 %v1913
        %v2780 = vunpack.c.l.b16 %v1914
        %v2781 = vunpack.c.h.b16 %v1914
        %v2782 = vunpack.c.l.b16 %v1915
        %v2783 = vunpack.c.h.b16 %v1915
        %v2784 = vunpack.c.l.b16 %v1916
        %v2785 = vunpack.c.h.b16 %v1916
        %v2786 = vunpack.c.l.b16 %v1917
        %v2787 = vunpack.c.h.b16 %v1917
        %v2788 = vunpack.c.l.b16 %v1918
        %v2789 = vunpack.c.h.b16 %v1918
        %v2790 = vunpack.c.l.b16 %v1919
        %v2791 = vunpack.c.h.b16 %v1919
        %v2792 = vunpack.c.l.b16 %v1920
        %v2793 = vunpack.c.h.b16 %v1920
        %v2794 = vunpack.c.l.b16 %v1921
        %v2795 = vunpack.c.h.b16 %v1921
        %v2796 = vunpack.c.l.b16 %v1922
        %v2797 = vunpack.c.h.b16 %v1922
        %v2798 = vunpack.c.l.b16 %v1923
        %v2799 = vunpack.c.h.b16 %v1923
        %v2800 = vunpack.c.l.b16 %v1924
        %v2801 = vunpack.c.h.b16 %v1924
        %v2802 = vunpack.c.l.b16 %v1925
        %v2803 = vunpack.c.h.b16 %v1925
        %v2804 = vunpack.c.l.b16 %v1926
        %v2805 = vunpack.c.h.b16 %v1926
        %v2806 = vunpack.c.l.b16 %v1927
        %v2807 = vunpack.c.h.b16 %v1927
        %v2808 = vunpack.c.l.b16 %v1928
        %v2809 = vunpack.c.h.b16 %v1928
        %v2810 = vunpack.c.l.b16 %v1929
        %v2811 = vunpack.c.h.b16 %v1929
        %v2812 = vunpack.c.l.b16 %v1930
        %v2813 = vunpack.c.h.b16 %v1930
        %v2814 = vunpack.c.l.b16 %v1931
        %v2815 = vunpack.c.h.b16 %v1931
        %v2816 = vunpack.c.l.b16 %v1932
        %v2817 = vunpack.c.h.b16 %v1932
        %v2818 = vunpack.c.l.b16 %v1933
        %v2819 = vunpack.c.h.b16 %v1933
        %v2820 = vunpack.c.l.b16 %v1934
        %v2821 = vunpack.c.h.b16 %v1934
        %v2822 = vunpack.c.l.b16 %v1935
        %v2823 = vunpack.c.h.b16 %v1935
        %v2824 = vunpack.c.l.b16 %v1936
        %v2825 = vunpack.c.h.b16 %v1936
        %v2826 = vunpack.c.l.b16 %v1937
        %v2827 = vunpack.c.h.b16 %v1937
        %v2828 = vunpack.c.l.b16 %v1938
        %v2829 = vunpack.c.h.b16 %v1938
        %v2830 = vunpack.c.l.b16 %v1939
        %v2831 = vunpack.c.h.b16 %v1939
        %v2832 = vunpack.c.l.b16 %v1940
        %v2833 = vunpack.c.h.b16 %v1940
        %v2834 = vunpack.c.l.b16 %v1941
        %v2835 = vunpack.c.h.b16 %v1941
        %v2836 = vunpack.c.l.b16 %v1942
        %v2837 = vunpack.c.h.b16 %v1942
        %v2838 = vunpack.c.l.b16 %v1943
        %v2839 = vunpack.c.h.b16 %v1943
        %v2840 = vunpack.c.l.b16 %v1944
        %v2841 = vunpack.c.h.b16 %v1944
        %v2842 = vunpack.c.l.b16 %v1945
        %v2843 = vunpack.c.h.b16 %v1945
        %v2844 = vunpack.c.l.b16 %v1946
        %v2845 = vunpack.c.h.b16 %v1946
        %v2846 = vunpack.c.l.b16 %v1947
        %v2847 = vunpack.c.h.b16 %v1947
        %v2848 = vunpack.c.l.b16 %v1948
        %v2849 = vunpack.c.h.b16 %v1948
        %v2850 = vunpack.c.l.b16 %v1949
        %v2851 = vunpack.c.h.b16 %v1949
        %v2852 = vunpack.c.l.b16 %v1950
        %v2853 = vunpack.c.h.b16 %v1950
        %v2854 = vunpack.c.l.b16 %v1951
        %v2855 = vunpack.c.h.b16 %v1951
        %v2856 = vunpack.c.l.b16 %v1952
        %v2857 = vunpack.c.h.b16 %v1952
        %v2858 = vunpack.c.l.b16 %v1953
        %v2859 = vunpack.c.h.b16 %v1953
        %v2860 = vunpack.c.l.b16 %v1954
        %v2861 = vunpack.c.h.b16 %v1954
        %v2862 = vunpack.c.l.b16 %v1955
        %v2863 = vunpack.c.h.b16 %v1955
        %v2864 = vunpack.c.l.b16 %v1956
        %v2865 = vunpack.c.h.b16 %v1956
        %v2866 = vunpack.c.l.b16 %v1957
        %v2867 = vunpack.c.h.b16 %v1957
        %v2868 = vunpack.c.l.b16 %v1958
        %v2869 = vunpack.c.h.b16 %v1958
        %v2870 = vunpack.c.l.b16 %v1959
        %v2871 = vunpack.c.h.b16 %v1959
        %v2872 = vunpack.c.l.b16 %v1960
        %v2873 = vunpack.c.h.b16 %v1960
        %v2874 = vunpack.c.l.b16 %v1961
        %v2875 = vunpack.c.h.b16 %v1961
        %v2876 = vunpack.c.l.b16 %v1962
        %v2877 = vunpack.c.h.b16 %v1962
        %v2878 = vunpack.c.l.b16 %v1963
        %v2879 = vunpack.c.h.b16 %v1963
        %v2880 = vunpack.c.l.b16 %v1964
        %v2881 = vunpack.c.h.b16 %v1964
        %v2882 = vunpack.c.l.b16 %v1965
        %v2883 = vunpack.c.h.b16 %v1965
        %v2884 = vunpack.c.l.b16 %v1966
        %v2885 = vunpack.c.h.b16 %v1966
        %v2886 = vunpack.c.l.b16 %v1967
        %v2887 = vunpack.c.h.b16 %v1967
        %v2888 = vunpack.c.l.b16 %v1968
        %v2889 = vunpack.c.h.b16 %v1968
        %v2890 = vunpack.c.l.b16 %v1969
        %v2891 = vunpack.c.h.b16 %v1969
        %v2892 = vunpack.c.l.b16 %v1970
        %v2893 = vunpack.c.h.b16 %v1970
        %v2894 = vunpack.c.l.b16 %v1971
        %v2895 = vunpack.c.h.b16 %v1971
        %v2896 = vunpack.c.l.b16 %v1972
        %v2897 = vunpack.c.h.b16 %v1972
        %v2898 = vunpack.c.l.b16 %v1973
        %v2899 = vunpack.c.h.b16 %v1973
        %v2900 = vunpack.c.l.b16 %v1974
        %v2901 = vunpack.c.h.b16 %v1974
        %v2902 = vunpack.c.l.b16 %v1975
        %v2903 = vunpack.c.h.b16 %v1975
        %v2904 = vunpack.c.l.b16 %v1976
        %v2905 = vunpack.c.h.b16 %v1976
        %v2906 = vunpack.c.l.b16 %v1977
        %v2907 = vunpack.c.h.b16 %v1977
        %v2908 = vunpack.c.l.b16 %v1978
        %v2909 = vunpack.c.h.b16 %v1978
        %v2910 = vunpack.c.l.b16 %v1979
        %v2911 = vunpack.c.h.b16 %v1979
        %v2912 = vunpack.c.l.b16 %v1980
        %v2913 = vunpack.c.h.b16 %v1980
        %v2914 = vunpack.c.l.b16 %v1981
        %v2915 = vunpack.c.h.b16 %v1981
        %v2916 = vunpack.c.l.b16 %v1982
        %v2917 = vunpack.c.h.b16 %v1982
        %v2918 = vunpack.c.l.b16 %v1983
        %v2919 = vunpack.c.h.b16 %v1983
        %v2920 = vunpack.c.l.b16 %v1984
        %v2921 = vunpack.c.h.b16 %v1984
        %v2922 = vunpack.c.l.b16 %v1985
        %v2923 = vunpack.c.h.b16 %v1985
        %v2924 = vunpack.c.l.b16 %v1986
        %v2925 = vunpack.c.h.b16 %v1986
        %v2926 = vunpack.c.l.b16 %v1987
        %v2927 = vunpack.c.h.b16 %v1987
        %v2928 = vunpack.c.l.b16 %v1988
        %v2929 = vunpack.c.h.b16 %v1988
        %v2930 = vunpack.c.l.b16 %v1989
        %v2931 = vunpack.c.h.b16 %v1989
        %v2932 = vunpack.c.l.b16 %v1990
        %v2933 = vunpack.c.h.b16 %v1990
        %v2934 = vunpack.c.l.b16 %v1991
        %v2935 = vunpack.c.h.b16 %v1991
        %v2936 = vunpack.c.l.b16 %v1992
        %v2937 = vunpack.c.h.b16 %v1992
        %v2938 = vunpack.c.l.b16 %v1993
        %v2939 = vunpack.c.h.b16 %v1993
        %v2940 = vunpack.c.l.b16 %v1994
        %v2941 = vunpack.c.h.b16 %v1994
        %v2942 = vunpack.c.l.b16 %v1995
        %v2943 = vunpack.c.h.b16 %v1995
        %v2944 = vunpack.c.l.b16 %v1996
        %v2945 = vunpack.c.h.b16 %v1996
        %v2946 = vunpack.c.l.b16 %v1997
        %v2947 = vunpack.c.h.b16 %v1997
        %v2948 = vunpack.c.l.b16 %v1998
        %v2949 = vunpack.c.h.b16 %v1998
        %v2950 = vunpack.c.l.b16 %v1999
        %v2951 = vunpack.c.h.b16 %v1999
        %v2952 = vunpack.c.l.b16 %v2000
        %v2953 = vunpack.c.h.b16 %v2000
        %v2954 = vunpack.c.l.b16 %v2001
        %v2955 = vunpack.c.h.b16 %v2001
        %v2956 = vunpack.c.l.b16 %v2002
        %v2957 = vunpack.c.h.b16 %v2002
        %v2958 = vunpack.c.l.b16 %v2003
        %v2959 = vunpack.c.h.b16 %v2003
        %v2960 = vunpack.c.l.b16 %v2004
        %v2961 = vunpack.c.h.b16 %v2004
        %v2962 = vunpack.c.l.b16 %v2005
        %v2963 = vunpack.c.h.b16 %v2005
        %v2964 = vunpack.c.l.b16 %v2006
        %v2965 = vunpack.c.h.b16 %v2006
        %v2966 = vunpack.c.l.b16 %v2007
        %v2967 = vunpack.c.h.b16 %v2007
        %v2968 = vunpack.c.l.b16 %v2008
        %v2969 = vunpack.c.h.b16 %v2008
        %v2970 = vunpack.c.l.b16 %v2009
        %v2971 = vunpack.c.h.b16 %v2009
        %v2972 = vunpack.c.l.b16 %v2010
        %v2973 = vunpack.c.h.b16 %v2010
        %v2974 = vunpack.c.l.b16 %v2011
        %v2975 = vunpack.c.h.b16 %v2011
        %v2976 = vunpack.c.l.b16 %v2012
        %v2977 = vunpack.c.h.b16 %v2012
        %v2978 = vunpack.c.l.b16 %v2013
        %v2979 = vunpack.c.h.b16 %v2013
        %v2980 = vunpack.c.l.b16 %v2014
        %v2981 = vunpack.c.h.b16 %v2014
        %v2982 = vunpack.c.l.b16 %v2015
        %v2983 = vunpack.c.h.b16 %v2015
        %v2984 = vunpack.c.l.b16 %v2016
        %v2985 = vunpack.c.h.b16 %v2016
        %v2986 = vunpack.c.l.b16 %v2017
        %v2987 = vunpack.c.h.b16 %v2017
        %v2988 = vunpack.c.l.b16 %v2018
        %v2989 = vunpack.c.h.b16 %v2018
        %v2990 = vunpack.c.l.b16 %v2019
        %v2991 = vunpack.c.h.b16 %v2019
        %v2992 = vunpack.c.l.b16 %v2020
        %v2993 = vunpack.c.h.b16 %v2020
        %v2994 = vunpack.c.l.b16 %v2021
        %v2995 = vunpack.c.h.b16 %v2021
        %v2996 = vunpack.c.l.b16 %v2022
        %v2997 = vunpack.c.h.b16 %v2022
        %v2998 = vunpack.c.l.b16 %v2023
        %v2999 = vunpack.c.h.b16 %v2023
        %v3000 = vunpack.c.l.b16 %v2024
        %v3001 = vunpack.c.h.b16 %v2024
        %v3002 = vunpack.c.l.b16 %v2025
        %v3003 = vunpack.c.h.b16 %v2025
        %v3004 = vunpack.c.l.b16 %v2026
        %v3005 = vunpack.c.h.b16 %v2026
        %v3006 = vunpack.c.l.b16 %v2027
        %v3007 = vunpack.c.h.b16 %v2027
        %v3008 = vunpack.c.l.b16 %v2028
        %v3009 = vunpack.c.h.b16 %v2028
        %v3010 = vunpack.c.l.b16 %v2029
        %v3011 = vunpack.c.h.b16 %v2029
        %v3012 = vunpack.c.l.b16 %v2030
        %v3013 = vunpack.c.h.b16 %v2030
        %v3014 = vunpack.c.l.b16 %v2031
        %v3015 = vunpack.c.h.b16 %v2031
        %v3016 = vunpack.c.l.b16 %v2032
        %v3017 = vunpack.c.h.b16 %v2032
        %v3018 = vunpack.c.l.b16 %v2033
        %v3019 = vunpack.c.h.b16 %v2033
        %v3020 = vunpack.c.l.b16 %v2034
        %v3021 = vunpack.c.h.b16 %v2034
        %v3022 = vunpack.c.l.b16 %v2035
        %v3023 = vunpack.c.h.b16 %v2035
        %v3024 = vunpack.c.l.b16 %v2036
        %v3025 = vunpack.c.h.b16 %v2036
        %v3026 = vunpack.c.l.b16 %v2037
        %v3027 = vunpack.c.h.b16 %v2037
        %v3028 = vunpack.c.l.b16 %v2038
        %v3029 = vunpack.c.h.b16 %v2038
        %v3030 = vunpack.c.l.b16 %v2039
        %v3031 = vunpack.c.h.b16 %v2039
        %v3032 = vunpack.c.l.b16 %v2040
        %v3033 = vunpack.c.h.b16 %v2040
        %v3034 = vunpack.c.l.b16 %v2041
        %v3035 = vunpack.c.h.b16 %v2041
        %v3036 = vunpack.c.l.b16 %v2042
        %v3037 = vunpack.c.h.b16 %v2042
        %v3038 = vunpack.c.l.b16 %v2043
        %v3039 = vunpack.c.h.b16 %v2043
        %v3040 = vunpack.c.l.b16 %v2044
        %v3041 = vunpack.c.h.b16 %v2044
        %v3042 = vunpack.c.l.b16 %v2045
        %v3043 = vunpack.c.h.b16 %v2045
        %v3044 = vunpack.c.l.b16 %v2046
        %v3045 = vunpack.c.h.b16 %v2046
        %v3046 = vunpack.c.l.b16 %v2047
        %v3047 = vunpack.c.h.b16 %v2047
        %v3048 = vunpack.c.l.b16 %v2048
        %v3049 = vunpack.c.h.b16 %v2048
        %v3050 = vunpack.c.l.b16 %v2049
        %v3051 = vunpack.c.h.b16 %v2049
        %v3052 = vunpack.c.l.b16 %v2050
        %v3053 = vunpack.c.h.b16 %v2050
        %v3054 = vunpack.c.l.b16 %v2051
        %v3055 = vunpack.c.h.b16 %v2051
        %v3056 = vunpack.c.l.b16 %v2052
        %v3057 = vunpack.c.h.b16 %v2052
        %v3058 = vunpack.c.l.b16 %v2053
        %v3059 = vunpack.c.h.b16 %v2053
        %v3060 = vunpack.c.l.b16 %v2054
        %v3061 = vunpack.c.h.b16 %v2054
        %v3062 = vunpack.c.l.b16 %v2055
        %v3063 = vunpack.c.h.b16 %v2055
        %v3064 = vunpack.c.l.b16 %v2056
        %v3065 = vunpack.c.h.b16 %v2056
        %v3066 = vunpack.c.l.b16 %v2057
        %v3067 = vunpack.c.h.b16 %v2057
        %v3068 = vunpack.c.l.b16 %v2058
        %v3069 = vunpack.c.h.b16 %v2058
        %v3070 = vunpack.c.l.b16 %v2059
        %v3071 = vunpack.c.h.b16 %v2059
        %v3072 = vunpack.c.l.b16 %v2060
        %v3073 = vunpack.c.h.b16 %v2060
        %v3074 = vunpack.c.l.b16 %v2061
        %v3075 = vunpack.c.h.b16 %v2061
        %v3076 = vunpack.c.l.b16 %v2062
        %v3077 = vunpack.c.h.b16 %v2062
        %v3078 = vunpack.c.l.b16 %v2063
        %v3079 = vunpack.c.h.b16 %v2063
        %v3080 = vunpack.c.l.b16 %v2064
        %v3081 = vunpack.c.h.b16 %v2064
        %v3082 = vunpack.c.l.b16 %v2065
        %v3083 = vunpack.c.h.b16 %v2065
        %v3084 = vunpack.c.l.b16 %v2066
        %v3085 = vunpack.c.h.b16 %v2066
        %v3086 = vunpack.c.l.b16 %v2067
        %v3087 = vunpack.c.h.b16 %v2067
        %v3088 = vunpack.c.l.b16 %v2068
        %v3089 = vunpack.c.h.b16 %v2068
        %v3090 = vunpack.c.l.b16 %v2069
        %v3091 = vunpack.c.h.b16 %v2069
        %v3092 = vunpack.c.l.b16 %v2070
        %v3093 = vunpack.c.h.b16 %v2070
        %v3094 = vunpack.c.l.b16 %v2071
        %v3095 = vunpack.c.h.b16 %v2071
        %v3096 = vunpack.c.l.b16 %v2072
        %v3097 = vunpack.c.h.b16 %v2072
        %v3098 = vunpack.c.l.b16 %v2073
        %v3099 = vunpack.c.h.b16 %v2073
        %v3100 = vunpack.c.l.b16 %v2074
        %v3101 = vunpack.c.h.b16 %v2074
        %v3102 = vunpack.c.l.b16 %v2075
        %v3103 = vunpack.c.h.b16 %v2075
        %v3104 = vunpack.c.l.b16 %v2076
        %v3105 = vunpack.c.h.b16 %v2076
        %v3106 = vunpack.c.l.b16 %v2077
        %v3107 = vunpack.c.h.b16 %v2077
        %v3108 = vunpack.c.l.b16 %v2078
        %v3109 = vunpack.c.h.b16 %v2078
        %v3110 = vunpack.c.l.b16 %v2079
        %v3111 = vunpack.c.h.b16 %v2079
        %v3112 = vunpack.c.l.b16 %v2080
        %v3113 = vunpack.c.h.b16 %v2080
        %v3114 = vunpack.c.l.b16 %v2081
        %v3115 = vunpack.c.h.b16 %v2081
        %v3116 = vunpack.c.l.b16 %v2082
        %v3117 = vunpack.c.h.b16 %v2082
        %v3118 = vunpack.c.l.b16 %v2083
        %v3119 = vunpack.c.h.b16 %v2083
        %v3120 = vunpack.c.l.b16 %v2084
        %v3121 = vunpack.c.h.b16 %v2084
        %v3122 = vunpack.c.l.b16 %v2085
        %v3123 = vunpack.c.h.b16 %v2085
        %v3124 = vpack.c.b16 %v2476, %v2440
        %v3125 = vpack.c.b16 %v2477, %v2441
        %v3126 = vpack.c.b16 %v2478, %v2442
        %v3127 = vpack.c.b16 %v2479, %v2443
        %v3128 = vpack.c.b16 %v2480, %v2444
        %v3129 = vpack.c.b16 %v2481, %v2445
        %v3130 = vpack.c.b16 %v2482, %v2446
        %v3131 = vpack.c.b16 %v2483, %v2447
        %v3132 = vpack.c.b16 %v2484, %v2448
        %v3133 = vpack.c.b16 %v2485, %v2449
        %v3134 = vpack.c.b16 %v2486, %v2450
        %v3135 = vpack.c.b16 %v2487, %v2451
        %v3136 = vpack.c.b16 %v2488, %v2452
        %v3137 = vpack.c.b16 %v2489, %v2453
        %v3138 = vpack.c.b16 %v2490, %v2454
        %v3139 = vpack.c.b16 %v2491, %v2455
        %v3140 = vpack.c.b16 %v2492, %v2456
        %v3141 = vpack.c.b16 %v2493, %v2457
        %v3142 = vpack.c.b16 %v2494, %v2458
        %v3143 = vpack.c.b16 %v2495, %v2459
        %v3144 = vpack.c.b16 %v2496, %v2460
        %v3145 = vpack.c.b16 %v2497, %v2461
        %v3146 = vpack.c.b16 %v2498, %v2462
        %v3147 = vpack.c.b16 %v2499, %v2463
        %v3148 = vpack.c.b16 %v2500, %v2464
        %v3149 = vpack.c.b16 %v2501, %v2465
        %v3150 = vpack.c.b16 %v2502, %v2466
        %v3151 = vpack.c.b16 %v2503, %v2467
        %v3152 = vpack.c.b16 %v2504, %v2468
        %v3153 = vpack.c.b16 %v2505, %v2469
        %v3154 = vpack.c.b16 %v2506, %v2470
        %v3155 = vpack.c.b16 %v2507, %v2471
        %v3156 = vpack.c.b16 %v2508, %v2472
        %v3157 = vpack.c.b16 %v2509, %v2473
        %v3158 = vpack.c.b16 %v2510, %v2474
        %v3159 = vpack.c.b16 %v2511, %v2475
        %v3160 = vpack.c.b16 %v2548, %v2512
        %v3161 = vpack.c.b16 %v2549, %v2513
        %v3162 = vpack.c.b16 %v2550, %v2514
        %v3163 = vpack.c.b16 %v2551, %v2515
        %v3164 = vpack.c.b16 %v2552, %v2516
        %v3165 = vpack.c.b16 %v2553, %v2517
        %v3166 = vpack.c.b16 %v2554, %v2518
        %v3167 = vpack.c.b16 %v2555, %v2519
        %v3168 = vpack.c.b16 %v2556, %v2520
        %v3169 = vpack.c.b16 %v2557, %v2521
        %v3170 = vpack.c.b16 %v2558, %v2522
        %v3171 = vpack.c.b16 %v2559, %v2523
        %v3172 = vpack.c.b16 %v2560, %v2524
        %v3173 = vpack.c.b16 %v2561, %v2525
        %v3174 = vpack.c.b16 %v2562, %v2526
        %v3175 = vpack.c.b16 %v2563, %v2527
        %v3176 = vpack.c.b16 %v2564, %v2528
        %v3177 = vpack.c.b16 %v2565, %v2529
        %v3178 = vpack.c.b16 %v2566, %v2530
        %v3179 = vpack.c.b16 %v2567, %v2531
        %v3180 = vpack.c.b16 %v2568, %v2532
        %v3181 = vpack.c.b16 %v2569, %v2533
        %v3182 = vpack.c.b16 %v2570, %v2534
        %v3183 = vpack.c.b16 %v2571, %v2535
        %v3184 = vpack.c.b16 %v2572, %v2536
        %v3185 = vpack.c.b16 %v2573, %v2537
        %v3186 = vpack.c.b16 %v2574, %v2538
        %v3187 = vpack.c.b16 %v2575, %v2539
        %v3188 = vpack.c.b16 %v2576, %v2540
        %v3189 = vpack.c.b16 %v2577, %v2541
        %v3190 = vpack.c.b16 %v2578, %v2542
        %v3191 = vpack.c.b16 %v2579, %v2543
        %v3192 = vpack.c.b16 %v2580, %v2544
        %v3193 = vpack.c.b16 %v2581, %v2545
        %v3194 = vpack.c.b16 %v2582, %v2546
        %v3195 = vpack.c.b16 %v2583, %v2547
        %v3196 = vpack.c.b16 %v2620, %v2584
        %v3197 = vpack.c.b16 %v2621, %v2585
        %v3198 = vpack.c.b16 %v2622, %v2586
        %v3199 = vpack.c.b16 %v2623, %v2587
        %v3200 = vpack.c.b16 %v2624, %v2588
        %v3201 = vpack.c.b16 %v2625, %v2589
        %v3202 = vpack.c.b16 %v2626, %v2590
        %v3203 = vpack.c.b16 %v2627, %v2591
        %v3204 = vpack.c.b16 %v2628, %v2592
        %v3205 = vpack.c.b16 %v2629, %v2593
        %v3206 = vpack.c.b16 %v2630, %v2594
        %v3207 = vpack.c.b16 %v2631, %v2595
        %v3208 = vpack.c.b16 %v2632, %v2596
        %v3209 = vpack.c.b16 %v2633, %v2597
        %v3210 = vpack.c.b16 %v2634, %v2598
        %v3211 = vpack.c.b16 %v2635, %v2599
        %v3212 = vpack.c.b16 %v2636, %v2600
        %v3213 = vpack.c.b16 %v2637, %v2601
        %v3214 = vpack.c.b16 %v2638, %v2602
        %v3215 = vpack.c.b16 %v2639, %v2603
        %v3216 = vpack.c.b16 %v2640, %v2604
        %v3217 = vpack.c.b16 %v2641, %v2605
        %v3218 = vpack.c.b16 %v2642, %v2606
        %v3219 = vpack.c.b16 %v2643, %v2607
        %v3220 = vpack.c.b16 %v2644, %v2608
        %v3221 = vpack.c.b16 %v2645, %v2609
        %v3222 = vpack.c.b16 %v2646, %v2610
        %v3223 = vpack.c.b16 %v2647, %v2611
        %v3224 = vpack.c.b16 %v2648, %v2612
        %v3225 = vpack.c.b16 %v2649, %v2613
        %v3226 = vpack.c.b16 %v2650, %v2614
        %v3227 = vpack.c.b16 %v2651, %v2615
        %v3228 = vpack.c.b16 %v2652, %v2616
        %v3229 = vpack.c.b16 %v2653, %v2617
        %v3230 = vpack.c.b16 %v2654, %v2618
        %v3231 = vpack.c.b16 %v2655, %v2619
        %v3232 = vpack.c.b16 %v2692, %v2656
        %v3233 = vpack.c.b16 %v2693, %v2657
        %v3234 = vpack.c.b16 %v2694, %v2658
        %v3235 = vpack.c.b16 %v2695, %v2659
        %v3236 = vpack.c.b16 %v2696, %v2660
        %v3237 = vpack.c.b16 %v2697, %v2661
        %v3238 = vpack.c.b16 %v2698, %v2662
        %v3239 = vpack.c.b16 %v2699, %v2663
        %v3240 = vpack.c.b16 %v2700, %v2664
        %v3241 = vpack.c.b16 %v2701, %v2665
        %v3242 = vpack.c.b16 %v2702, %v2666
        %v3243 = vpack.c.b16 %v2703, %v2667
        %v3244 = vpack.c.b16 %v2704, %v2668
        %v3245 = vpack.c.b16 %v2705, %v2669
        %v3246 = vpack.c.b16 %v2706, %v2670
        %v3247 = vpack.c.b16 %v2707, %v2671
        %v3248 = vpack.c.b16 %v2708, %v2672
        %v3249 = vpack.c.b16 %v2709, %v2673
        %v3250 = vpack.c.b16 %v2710, %v2674
        %v3251 = vpack.c.b16 %v2711, %v2675
        %v3252 = vpack.c.b16 %v2712, %v2676
        %v3253 = vpack.c.b16 %v2713, %v2677
        %v3254 = vpack.c.b16 %v2714, %v2678
        %v3255 = vpack.c.b16 %v2715, %v2679
        %v3256 = vpack.c.b16 %v2716, %v2680
        %v3257 = vpack.c.b16 %v2717, %v2681
        %v3258 = vpack.c.b16 %v2718, %v2682
        %v3259 = vpack.c.b16 %v2719, %v2683
        %v3260 = vpack.c.b16 %v2720, %v2684
        %v3261 = vpack.c.b16 %v2721, %v2685
        %v3262 = vpack.c.b16 %v2722, %v2686
        %v3263 = vpack.c.b16 %v2723, %v2687
        %v3264 = vpack.c.b16 %v2724, %v2688
        %v3265 = vpack.c.b16 %v2725, %v2689
        %v3266 = vpack.c.b16 %v2726, %v2690
        %v3267 = vpack.c.b16 %v2727, %v2691
        %v3268 = vpack.c.b16 %v2764, %v2728
        %v3269 = vpack.c.b16 %v2765, %v2729
        %v3270 = vpack.c.b16 %v2766, %v2730
        %v3271 = vpack.c.b16 %v2767, %v2731
        %v3272 = vpack.c.b16 %v2768, %v2732
        %v3273 = vpack.c.b16 %v2769, %v2733
        %v3274 = vpack.c.b16 %v2770, %v2734
        %v3275 = vpack.c.b16 %v2771, %v2735
        %v3276 = vpack.c.b16 %v2772, %v2736
        %v3277 = vpack.c.b16 %v2773, %v2737
        %v3278 = vpack.c.b16 %v2774, %v2738
        %v3279 = vpack.c.b16 %v2775, %v2739
        %v3280 = vpack.c.b16 %v2776, %v2740
        %v3281 = vpack.c.b16 %v2777, %v2741
        %v3282 = vpack.c.b16 %v2778, %v2742
        %v3283 = vpack.c.b16 %v2779, %v2743
        %v3284 = vpack.c.b16 %v2780, %v2744
        %v3285 = vpack.c.b16 %v2781, %v2745
        %v3286 = vpack.c.b16 %v2782, %v2746
        %v3287 = vpack.c.b16 %v2783, %v2747
        %v3288 = vpack.c.b16 %v2784, %v2748
        %v3289 = vpack.c.b16 %v2785, %v2749
        %v3290 = vpack.c.b16 %v2786, %v2750
        %v3291 = vpack.c.b16 %v2787, %v2751
        %v3292 = vpack.c.b16 %v2788, %v2752
        %v3293 = vpack.c.b16 %v2789, %v2753
        %v3294 = vpack.c.b16 %v2790, %v2754
        %v3295 = vpack.c.b16 %v2791, %v2755
        %v3296 = vpack.c.b16 %v2792, %v2756
        %v3297 = vpack.c.b16 %v2793, %v2757
        %v3298 = vpack.c.b16 %v2794, %v2758
        %v3299 = vpack.c.b16 %v2795, %v2759
        %v3300 = vpack.c.b16 %v2796, %v2760
        %v3301 = vpack.c.b16 %v2797, %v2761
        %v3302 = vpack.c.b16 %v2798, %v2762
        %v3303 = vpack.c.b16 %v2799, %v2763
        %v3304 = vpack.c.b16 %v2836, %v2800
        %v3305 = vpack.c.b16 %v2837, %v2801
        %v3306 = vpack.c.b16 %v2838, %v2802
        %v3307 = vpack.c.b16 %v2839, %v2803
        %v3308 = vpack.c.b16 %v2840, %v2804
        %v3309 = vpack.c.b16 %v2841, %v2805
        %v3310 = vpack.c.b16 %v2842, %v2806
        %v3311 = vpack.c.b16 %v2843, %v2807
        %v3312 = vpack.c.b16 %v2844, %v2808
        %v3313 = vpack.c.b16 %v2845, %v2809
        %v3314 = vpack.c.b16 %v2846, %v2810
        %v3315 = vpack.c.b16 %v2847, %v2811
        %v3316 = vpack.c.b16 %v2848, %v2812
        %v3317 = vpack.c.b16 %v2849, %v2813
        %v3318 = vpack.c.b16 %v2850, %v2814
        %v3319 = vpack.c.b16 %v2851, %v2815
        %v3320 = vpack.c.b16 %v2852, %v2816
        %v3321 = vpack.c.b16 %v2853, %v2817
        %v3322 = vpack.c.b16 %v2854, %v2818
        %v3323 = vpack.c.b16 %v2855, %v2819
        %v3324 = vpack.c.b16 %v2856, %v2820
        %v3325 = vpack.c.b16 %v2857, %v2821
        %v3326 = vpack.c.b16 %v2858, %v2822
        %v3327 = vpack.c.b16 %v2859, %v2823
        %v3328 = vpack.c.b16 %v2860, %v2824
        %v3329 = vpack.c.b16 %v2861, %v2825
        %v3330 = vpack.c.b16 %v2862, %v2826
        %v3331 = vpack.c.b16 %v2863, %v2827
        %v3332 = vpack.c.b16 %v2864, %v2828
        %v3333 = vpack.c.b16 %v2865, %v2829
        %v3334 = vpack.c.b16 %v2866, %v2830
        %v3335 = vpack.c.b16 %v2867, %v2831
        %v3336 = vpack.c.b16 %v2868, %v2832
        %v3337 = vpack.c.b16 %v2869, %v2833
        %v3338 = vpack.c.b16 %v2870, %v2834
        %v3339 = vpack.c.b16 %v2871, %v2835
        %v3340 = vpack.c.b16 %v2908, %v2872
        %v3341 = vpack.c.b16 %v2909, %v2873
        %v3342 = vpack.c.b16 %v2910, %v2874
        %v3343 = vpack.c.b16 %v2911, %v2875
        %v3344 = vpack.c.b16 %v2912, %v2876
        %v3345 = vpack.c.b16 %v2913, %v2877
        %v3346 = vpack.c.b16 %v2914, %v2878
        %v3347 = vpack.c.b16 %v2915, %v2879
        %v3348 = vpack.c.b16 %v2916, %v2880
        %v3349 = vpack.c.b16 %v2917, %v2881
        %v3350 = vpack.c.b16 %v2918, %v2882
        %v3351 = vpack.c.b16 %v2919, %v2883
        %v3352 = vpack.c.b16 %v2920, %v2884
        %v3353 = vpack.c.b16 %v2921, %v2885
        %v3354 = vpack.c.b16 %v2922, %v2886
        %v3355 = vpack.c.b16 %v2923, %v2887
        %v3356 = vpack.c.b16 %v2924, %v2888
        %v3357 = vpack.c.b16 %v2925, %v2889
        %v3358 = vpack.c.b16 %v2926, %v2890
        %v3359 = vpack.c.b16 %v2927, %v2891
        %v3360 = vpack.c.b16 %v2928, %v2892
        %v3361 = vpack.c.b16 %v2929, %v2893
        %v3362 = vpack.c.b16 %v2930, %v2894
        %v3363 = vpack.c.b16 %v2931, %v2895
        %v3364 = vpack.c.b16 %v2932, %v2896
        %v3365 = vpack.c.b16 %v2933, %v2897
        %v3366 = vpack.c.b16 %v2934, %v2898
        %v3367 = vpack.c.b16 %v2935, %v2899
        %v3368 = vpack.c.b16 %v2936, %v2900
        %v3369 = vpack.c.b16 %v2937, %v2901
        %v3370 = vpack.c.b16 %v2938, %v2902
        %v3371 = vpack.c.b16 %v2939, %v2903
        %v3372 = vpack.c.b16 %v2940, %v2904
        %v3373 = vpack.c.b16 %v2941, %v2905
        %v3374 = vpack.c.b16 %v2942, %v2906
        %v3375 = vpack.c.b16 %v2943, %v2907
        %v3376 = vpack.c.b16 %v2980, %v2944
        %v3377 = vpack.c.b16 %v2981, %v2945
        %v3378 = vpack.c.b16 %v2982, %v2946
        %v3379 = vpack.c.b16 %v2983, %v2947
        %v3380 = vpack.c.b16 %v2984, %v2948
        %v3381 = vpack.c.b16 %v2985, %v2949
        %v3382 = vpack.c.b16 %v2986, %v2950
        %v3383 = vpack.c.b16 %v2987, %v2951
        %v3384 = vpack.c.b16 %v2988, %v2952
        %v3385 = vpack.c.b16 %v2989, %v2953
        %v3386 = vpack.c.b16 %v2990, %v2954
        %v3387 = vpack.c.b16 %v2991, %v2955
        %v3388 = vpack.c.b16 %v2992, %v2956
        %v3389 = vpack.c.b16 %v2993, %v2957
        %v3390 = vpack.c.b16 %v2994, %v2958
        %v3391 = vpack.c.b16 %v2995, %v2959
        %v3392 = vpack.c.b16 %v2996, %v2960
        %v3393 = vpack.c.b16 %v2997, %v2961
        %v3394 = vpack.c.b16 %v2998, %v2962
        %v3395 = vpack.c.b16 %v2999, %v2963
        %v3396 = vpack.c.b16 %v3000, %v2964
        %v3397 = vpack.c.b16 %v3001, %v2965
        %v3398 = vpack.c.b16 %v3002, %v2966
        %v3399 = vpack.c.b16 %v3003, %v2967
        %v3400 = vpack.c.b16 %v3004, %v2968
        %v3401 = vpack.c.b16 %v3005, %v2969
        %v3402 = vpack.c.b16 %v3006, %v2970
        %v3403 = vpack.c.b16 %v3007, %v2971
        %v3404 = vpack.c.b16 %v3008, %v2972
        %v3405 = vpack.c.b16 %v3009, %v2973
        %v3406 = vpack.c.b16 %v3010, %v2974
        %v3407 = vpack.c.b16 %v3011, %v2975
        %v3408 = vpack.c.b16 %v3012, %v2976
        %v3409 = vpack.c.b16 %v3013, %v2977
        %v3410 = vpack.c.b16 %v3014, %v2978
        %v3411 = vpack.c.b16 %v3015, %v2979
        %v3412 = vpack.c.b16 %v3052, %v3016
        %v3413 = vpack.c.b16 %v3053, %v3017
        %v3414 = vpack.c.b16 %v3054, %v3018
        %v3415 = vpack.c.b16 %v3055, %v3019
        %v3416 = vpack.c.b16 %v3056, %v3020
        %v3417 = vpack.c.b16 %v3057, %v3021
        %v3418 = vpack.c.b16 %v3058, %v3022
        %v3419 = vpack.c.b16 %v3059, %v3023
        %v3420 = vpack.c.b16 %v3060, %v3024
        %v3421 = vpack.c.b16 %v3061, %v3025
        %v3422 = vpack.c.b16 %v3062, %v3026
        %v3423 = vpack.c.b16 %v3063, %v3027
        %v3424 = vpack.c.b16 %v3064, %v3028
        %v3425 = vpack.c.b16 %v3065, %v3029
        %v3426 = vpack.c.b16 %v3066, %v3030
        %v3427 = vpack.c.b16 %v3067, %v3031
        %v3428 = vpack.c.b16 %v3068, %v3032
        %v3429 = vpack.c.b16 %v3069, %v3033
        %v3430 = vpack.c.b16 %v3070, %v3034
        %v3431 = vpack.c.b16 %v3071, %v3035
        %v3432 = vpack.c.b16 %v3072, %v3036
        %v3433 = vpack.c.b16 %v3073, %v3037
        %v3434 = vpack.c.b16 %v3074, %v3038
        %v3435 = vpack.c.b16 %v3075, %v3039
        %v3436 = vpack.c.b16 %v3076, %v3040
        %v3437 = vpack.c.b16 %v3077, %v3041
        %v3438 = vpack.c.b16 %v3078, %v3042
        %v3439 = vpack.c.b16 %v3079, %v3043
        %v3440 = vpack.c.b16 %v3080, %v3044
        %v3441 = vpack.c.b16 %v3081, %v3045
        %v3442 = vpack.c.b16 %v3082, %v3046
        %v3443 = vpack.c.b16 %v3083, %v3047
        %v3444 = vpack.c.b16 %v3084, %v3048
        %v3445 = vpack.c.b16 %v3085, %v3049
        %v3446 = vpack.c.b16 %v3086, %v3050
        %v3447 = vpack.c.b16 %v3087, %v3051
        %v3448 = vpack.c.b16 %v3088, %v3088
        %v3449 = vpack.c.b16 %v3089, %v3089
        %v3450 = vpack.c.b16 %v3090, %v3090
        %v3451 = vpack.c.b16 %v3091, %v3091
        %v3452 = vpack.c.b16 %v3092, %v3092
        %v3453 = vpack.c.b16 %v3093, %v3093
        %v3454 = vpack.c.b16 %v3094, %v3094
        %v3455 = vpack.c.b16 %v3095, %v3095
        %v3456 = vpack.c.b16 %v3096, %v3096
        %v3457 = vpack.c.b16 %v3097, %v3097
        %v3458 = vpack.c.b16 %v3098, %v3098
        %v3459 = vpack.c.b16 %v3099, %v3099
        %v3460 = vpack.c.b16 %v3100, %v3100
        %v3461 = vpack.c.b16 %v3101, %v3101
        %v3462 = vpack.c.b16 %v3102, %v3102
        %v3463 = vpack.c.b16 %v3103, %v3103
        %v3464 = vpack.c.b16 %v3104, %v3104
        %v3465 = vpack.c.b16 %v3105, %v3105
        %v3466 = vpack.c.b16 %v3106, %v3106
        %v3467 = vpack.c.b16 %v3107, %v3107
        %v3468 = vpack.c.b16 %v3108, %v3108
        %v3469 = vpack.c.b16 %v3109, %v3109
        %v3470 = vpack.c.b16 %v3110, %v3110
        %v3471 = vpack.c.b16 %v3111, %v3111
        %v3472 = vpack.c.b16 %v3112, %v3112
        %v3473 = vpack.c.b16 %v3113, %v3113
        %v3474 = vpack.c.b16 %v3114, %v3114
        %v3475 = vpack.c.b16 %v3115, %v3115
        %v3476 = vpack.c.b16 %v3116, %v3116
        %v3477 = vpack.c.b16 %v3117, %v3117
        %v3478 = vpack.c.b16 %v3118, %v3118
        %v3479 = vpack.c.b16 %v3119, %v3119
        %v3480 = vpack.c.b16 %v3120, %v3120
        %v3481 = vpack.c.b16 %v3121, %v3121
        %v3482 = vpack.c.b16 %v3122, %v3122
        %v3483 = vpack.c.b16 %v3123, %v3123
        %3844 = vmatprep.subr.bf16.mxu0 %v3125
        %3845 = vmatpush1.bf16.xpose.msra.mxu0 %v3124
        %3846 = vmatprep.subr.bf16.mxu0 %v3161
        %3847 = vmatpush1.bf16.xpose.msra.mxu0 %v3160
        %3848 = vmatprep.subr.bf16.mxu0 %v3197
        %3849 = vmatpush1.bf16.xpose.msra.mxu0 %v3196
        %3850 = vmatprep.subr.bf16.mxu0 %v3233
        %3851 = vmatpush1.bf16.xpose.msra.mxu0 %v3232
        %3852 = vmatprep.subr.bf16.mxu0 %v3269
        %3853 = vmatpush1.bf16.xpose.msra.mxu0 %v3268
        %3854 = vmatprep.subr.bf16.mxu0 %v3305
        %3855 = vmatpush1.bf16.xpose.msra.mxu0 %v3304
        %3856 = vmatprep.subr.bf16.mxu0 %v3341
        %3857 = vmatpush1.bf16.xpose.msra.mxu0 %v3340
        %3858 = vmatprep.subr.bf16.mxu0 %v3377
        %3859 = vmatpush1.bf16.xpose.msra.mxu0 %v3376
        %3860 = vmatprep.subr.bf16.mxu0 %v3413
        %3861 = vmatpush1.bf16.xpose.msra.mxu0 %v3412
        %3862 = vmatprep.subr.bf16.mxu0 %v3449
        %3863 = vmatpush1.bf16.xpose.msra.mxu0 %v3448
        %3864 = vmatprep.subr.bf16.mxu0 0
        %3865 = vmatpush1.bf16.xpose.msra.mxu0 0
        %3866 = vmatprep.subr.bf16.mxu0 0
        %3867 = vmatpush1.bf16.xpose.msra.mxu0 0
        %3868 = vmatprep.subr.bf16.mxu0 0
        %3869 = vmatpush1.bf16.xpose.msra.mxu0 0
        %3870 = vmatprep.subr.bf16.mxu0 0
        %3871 = vmatpush1.bf16.xpose.msra.mxu0 0
        %3872 = vmatprep.subr.bf16.mxu0 0
        %3873 = vmatpush1.bf16.xpose.msra.mxu0 0
        %3874 = vmatprep.subr.bf16.mxu0 0
        %3875 = vmatpush1.bf16.xpose.msra.mxu0 0
        %3876 = vmatprep.mubr.bf16.mxu0 %v1709
        %3877 = vmatmul.mubr.bf16.gmra.mrb[0].mxu0 %v1708
        %v3878 = vpop.f32.mrb[0].mxu0
        %v3879 = vadd.f32 %v2091, %v3878
        %v3880 = vpop.f32.mrb[0].mxu0
        %v3881 = vadd.f32 %v2095, %v3880
        %v3882 = vpop.f32.mrb[0].mxu0
        %v3883 = vpop.f32.mrb[0].mxu0
        %3884 = vdwg.mxu0
        %3885 = vmatprep.subr.bf16.mxu0 %v3127
        %3886 = vmatpush1.bf16.xpose.msra.mxu0 %v3126
        %3887 = vmatprep.subr.bf16.mxu0 %v3163
        %3888 = vmatpush1.bf16.xpose.msra.mxu0 %v3162
        %3889 = vmatprep.subr.bf16.mxu0 %v3199
        %3890 = vmatpush1.bf16.xpose.msra.mxu0 %v3198
        %3891 = vmatprep.subr.bf16.mxu0 %v3235
        %3892 = vmatpush1.bf16.xpose.msra.mxu0 %v3234
        %3893 = vmatprep.subr.bf16.mxu0 %v3271
        %3894 = vmatpush1.bf16.xpose.msra.mxu0 %v3270
        %3895 = vmatprep.subr.bf16.mxu0 %v3307
        %3896 = vmatpush1.bf16.xpose.msra.mxu0 %v3306
        %3897 = vmatprep.subr.bf16.mxu0 %v3343
        %3898 = vmatpush1.bf16.xpose.msra.mxu0 %v3342
        %3899 = vmatprep.subr.bf16.mxu0 %v3379
        %3900 = vmatpush1.bf16.xpose.msra.mxu0 %v3378
        %3901 = vmatprep.subr.bf16.mxu0 %v3415
        %3902 = vmatpush1.bf16.xpose.msra.mxu0 %v3414
        %3903 = vmatprep.subr.bf16.mxu0 %v3451
        %3904 = vmatpush1.bf16.xpose.msra.mxu0 %v3450
        %3905 = vmatprep.subr.bf16.mxu0 0
        %3906 = vmatpush1.bf16.xpose.msra.mxu0 0
        %3907 = vmatprep.subr.bf16.mxu0 0
        %3908 = vmatpush1.bf16.xpose.msra.mxu0 0
        %3909 = vmatprep.subr.bf16.mxu0 0
        %3910 = vmatpush1.bf16.xpose.msra.mxu0 0
        %3911 = vmatprep.subr.bf16.mxu0 0
        %3912 = vmatpush1.bf16.xpose.msra.mxu0 0
        %3913 = vmatprep.subr.bf16.mxu0 0
        %3914 = vmatpush1.bf16.xpose.msra.mxu0 0
        %3915 = vmatprep.subr.bf16.mxu0 0
        %3916 = vmatpush1.bf16.xpose.msra.mxu0 0
        %3917 = vmatprep.mubr.bf16.mxu0 %v1711
        %3918 = vmatmul.mubr.bf16.gmra.mrb[0].mxu0 %v1710
        %v3919 = vpop.f32.mrb[0].mxu0
        %v3920 = vadd.f32 %v3879, %v3919
        %v3921 = vpop.f32.mrb[0].mxu0
        %v3922 = vadd.f32 %v3881, %v3921
        %v3923 = vpop.f32.mrb[0].mxu0
        %v3924 = vpop.f32.mrb[0].mxu0
        %3925 = vdwg.mxu0
        %3926 = vmatprep.subr.bf16.mxu0 %v3129
        %3927 = vmatpush1.bf16.xpose.msra.mxu0 %v3128
        %3928 = vmatprep.subr.bf16.mxu0 %v3165
        %3929 = vmatpush1.bf16.xpose.msra.mxu0 %v3164
        %3930 = vmatprep.subr.bf16.mxu0 %v3201
        %3931 = vmatpush1.bf16.xpose.msra.mxu0 %v3200
        %3932 = vmatprep.subr.bf16.mxu0 %v3237
        %3933 = vmatpush1.bf16.xpose.msra.mxu0 %v3236
        %3934 = vmatprep.subr.bf16.mxu0 %v3273
        %3935 = vmatpush1.bf16.xpose.msra.mxu0 %v3272
        %3936 = vmatprep.subr.bf16.mxu0 %v3309
        %3937 = vmatpush1.bf16.xpose.msra.mxu0 %v3308
        %3938 = vmatprep.subr.bf16.mxu0 %v3345
        %3939 = vmatpush1.bf16.xpose.msra.mxu0 %v3344
        %3940 = vmatprep.subr.bf16.mxu0 %v3381
        %3941 = vmatpush1.bf16.xpose.msra.mxu0 %v3380
        %3942 = vmatprep.subr.bf16.mxu0 %v3417
        %3943 = vmatpush1.bf16.xpose.msra.mxu0 %v3416
        %3944 = vmatprep.subr.bf16.mxu0 %v3453
        %3945 = vmatpush1.bf16.xpose.msra.mxu0 %v3452
        %3946 = vmatprep.subr.bf16.mxu0 0
        %3947 = vmatpush1.bf16.xpose.msra.mxu0 0
        %3948 = vmatprep.subr.bf16.mxu0 0
        %3949 = vmatpush1.bf16.xpose.msra.mxu0 0
        %3950 = vmatprep.subr.bf16.mxu0 0
        %3951 = vmatpush1.bf16.xpose.msra.mxu0 0
        %3952 = vmatprep.subr.bf16.mxu0 0
        %3953 = vmatpush1.bf16.xpose.msra.mxu0 0
        %3954 = vmatprep.subr.bf16.mxu0 0
        %3955 = vmatpush1.bf16.xpose.msra.mxu0 0
        %3956 = vmatprep.subr.bf16.mxu0 0
        %3957 = vmatpush1.bf16.xpose.msra.mxu0 0
        %3958 = vmatprep.mubr.bf16.mxu0 %v1713
        %3959 = vmatmul.mubr.bf16.gmra.mrb[0].mxu0 %v1712
        %v3960 = vpop.f32.mrb[0].mxu0
        %v3961 = vadd.f32 %v3920, %v3960
        %v3962 = vpop.f32.mrb[0].mxu0
        %v3963 = vadd.f32 %v3922, %v3962
        %v3964 = vpop.f32.mrb[0].mxu0
        %v3965 = vpop.f32.mrb[0].mxu0
        %3966 = vdwg.mxu0
        %3967 = vmatprep.subr.bf16.mxu0 %v3131
        %3968 = vmatpush1.bf16.xpose.msra.mxu0 %v3130
        %3969 = vmatprep.subr.bf16.mxu0 %v3167
        %3970 = vmatpush1.bf16.xpose.msra.mxu0 %v3166
        %3971 = vmatprep.subr.bf16.mxu0 %v3203
        %3972 = vmatpush1.bf16.xpose.msra.mxu0 %v3202
        %3973 = vmatprep.subr.bf16.mxu0 %v3239
        %3974 = vmatpush1.bf16.xpose.msra.mxu0 %v3238
        %3975 = vmatprep.subr.bf16.mxu0 %v3275
        %3976 = vmatpush1.bf16.xpose.msra.mxu0 %v3274
        %3977 = vmatprep.subr.bf16.mxu0 %v3311
        %3978 = vmatpush1.bf16.xpose.msra.mxu0 %v3310
        %3979 = vmatprep.subr.bf16.mxu0 %v3347
        %3980 = vmatpush1.bf16.xpose.msra.mxu0 %v3346
        %3981 = vmatprep.subr.bf16.mxu0 %v3383
        %3982 = vmatpush1.bf16.xpose.msra.mxu0 %v3382
        %3983 = vmatprep.subr.bf16.mxu0 %v3419
        %3984 = vmatpush1.bf16.xpose.msra.mxu0 %v3418
        %3985 = vmatprep.subr.bf16.mxu0 %v3455
        %3986 = vmatpush1.bf16.xpose.msra.mxu0 %v3454
        %3987 = vmatprep.subr.bf16.mxu0 0
        %3988 = vmatpush1.bf16.xpose.msra.mxu0 0
        %3989 = vmatprep.subr.bf16.mxu0 0
        %3990 = vmatpush1.bf16.xpose.msra.mxu0 0
        %3991 = vmatprep.subr.bf16.mxu0 0
        %3992 = vmatpush1.bf16.xpose.msra.mxu0 0
        %3993 = vmatprep.subr.bf16.mxu0 0
        %3994 = vmatpush1.bf16.xpose.msra.mxu0 0
        %3995 = vmatprep.subr.bf16.mxu0 0
        %3996 = vmatpush1.bf16.xpose.msra.mxu0 0
        %3997 = vmatprep.subr.bf16.mxu0 0
        %3998 = vmatpush1.bf16.xpose.msra.mxu0 0
        %3999 = vmatprep.mubr.bf16.mxu0 %v1715
        %4000 = vmatmul.mubr.bf16.gmra.mrb[0].mxu0 %v1714
        %v4001 = vpop.f32.mrb[0].mxu0
        %v4002 = vadd.f32 %v3961, %v4001
        %v4003 = vpop.f32.mrb[0].mxu0
        %v4004 = vadd.f32 %v3963, %v4003
        %v4005 = vpop.f32.mrb[0].mxu0
        %v4006 = vpop.f32.mrb[0].mxu0
        %4007 = vdwg.mxu0
        %4008 = vmatprep.subr.bf16.mxu0 %v3133
        %4009 = vmatpush1.bf16.xpose.msra.mxu0 %v3132
        %4010 = vmatprep.subr.bf16.mxu0 %v3169
        %4011 = vmatpush1.bf16.xpose.msra.mxu0 %v3168
        %4012 = vmatprep.subr.bf16.mxu0 %v3205
        %4013 = vmatpush1.bf16.xpose.msra.mxu0 %v3204
        %4014 = vmatprep.subr.bf16.mxu0 %v3241
        %4015 = vmatpush1.bf16.xpose.msra.mxu0 %v3240
        %4016 = vmatprep.subr.bf16.mxu0 %v3277
        %4017 = vmatpush1.bf16.xpose.msra.mxu0 %v3276
        %4018 = vmatprep.subr.bf16.mxu0 %v3313
        %4019 = vmatpush1.bf16.xpose.msra.mxu0 %v3312
        %4020 = vmatprep.subr.bf16.mxu0 %v3349
        %4021 = vmatpush1.bf16.xpose.msra.mxu0 %v3348
        %4022 = vmatprep.subr.bf16.mxu0 %v3385
        %4023 = vmatpush1.bf16.xpose.msra.mxu0 %v3384
        %4024 = vmatprep.subr.bf16.mxu0 %v3421
        %4025 = vmatpush1.bf16.xpose.msra.mxu0 %v3420
        %4026 = vmatprep.subr.bf16.mxu0 %v3457
        %4027 = vmatpush1.bf16.xpose.msra.mxu0 %v3456
        %4028 = vmatprep.subr.bf16.mxu0 0
        %4029 = vmatpush1.bf16.xpose.msra.mxu0 0
        %4030 = vmatprep.subr.bf16.mxu0 0
        %4031 = vmatpush1.bf16.xpose.msra.mxu0 0
        %4032 = vmatprep.subr.bf16.mxu0 0
        %4033 = vmatpush1.bf16.xpose.msra.mxu0 0
        %4034 = vmatprep.subr.bf16.mxu0 0
        %4035 = vmatpush1.bf16.xpose.msra.mxu0 0
        %4036 = vmatprep.subr.bf16.mxu0 0
        %4037 = vmatpush1.bf16.xpose.msra.mxu0 0
        %4038 = vmatprep.subr.bf16.mxu0 0
        %4039 = vmatpush1.bf16.xpose.msra.mxu0 0
        %4040 = vmatprep.mubr.bf16.mxu0 %v1717
        %4041 = vmatmul.mubr.bf16.gmra.mrb[0].mxu0 %v1716
        %v4042 = vpop.f32.mrb[0].mxu0
        %v4043 = vadd.f32 %v4002, %v4042
        %v4044 = vpop.f32.mrb[0].mxu0
        %v4045 = vadd.f32 %v4004, %v4044
        %v4046 = vpop.f32.mrb[0].mxu0
        %v4047 = vpop.f32.mrb[0].mxu0
        %4048 = vdwg.mxu0
        %4049 = vmatprep.subr.bf16.mxu0 %v3135
        %4050 = vmatpush1.bf16.xpose.msra.mxu0 %v3134
        %4051 = vmatprep.subr.bf16.mxu0 %v3171
        %4052 = vmatpush1.bf16.xpose.msra.mxu0 %v3170
        %4053 = vmatprep.subr.bf16.mxu0 %v3207
        %4054 = vmatpush1.bf16.xpose.msra.mxu0 %v3206
        %4055 = vmatprep.subr.bf16.mxu0 %v3243
        %4056 = vmatpush1.bf16.xpose.msra.mxu0 %v3242
        %4057 = vmatprep.subr.bf16.mxu0 %v3279
        %4058 = vmatpush1.bf16.xpose.msra.mxu0 %v3278
        %4059 = vmatprep.subr.bf16.mxu0 %v3315
        %4060 = vmatpush1.bf16.xpose.msra.mxu0 %v3314
        %4061 = vmatprep.subr.bf16.mxu0 %v3351
        %4062 = vmatpush1.bf16.xpose.msra.mxu0 %v3350
        %4063 = vmatprep.subr.bf16.mxu0 %v3387
        %4064 = vmatpush1.bf16.xpose.msra.mxu0 %v3386
        %4065 = vmatprep.subr.bf16.mxu0 %v3423
        %4066 = vmatpush1.bf16.xpose.msra.mxu0 %v3422
        %4067 = vmatprep.subr.bf16.mxu0 %v3459
        %4068 = vmatpush1.bf16.xpose.msra.mxu0 %v3458
        %4069 = vmatprep.subr.bf16.mxu0 0
        %4070 = vmatpush1.bf16.xpose.msra.mxu0 0
        %4071 = vmatprep.subr.bf16.mxu0 0
        %4072 = vmatpush1.bf16.xpose.msra.mxu0 0
        %4073 = vmatprep.subr.bf16.mxu0 0
        %4074 = vmatpush1.bf16.xpose.msra.mxu0 0
        %4075 = vmatprep.subr.bf16.mxu0 0
        %4076 = vmatpush1.bf16.xpose.msra.mxu0 0
        %4077 = vmatprep.subr.bf16.mxu0 0
        %4078 = vmatpush1.bf16.xpose.msra.mxu0 0
        %4079 = vmatprep.subr.bf16.mxu0 0
        %4080 = vmatpush1.bf16.xpose.msra.mxu0 0
        %4081 = vmatprep.mubr.bf16.mxu0 %v1719
        %4082 = vmatmul.mubr.bf16.gmra.mrb[0].mxu0 %v1718
        %v4083 = vpop.f32.mrb[0].mxu0
        %v4084 = vadd.f32 %v4043, %v4083
        %v4085 = vpop.f32.mrb[0].mxu0
        %v4086 = vadd.f32 %v4045, %v4085
        %v4087 = vpop.f32.mrb[0].mxu0
        %v4088 = vpop.f32.mrb[0].mxu0
        %4089 = vdwg.mxu0
        %4090 = vmatprep.subr.bf16.mxu0 %v3137
        %4091 = vmatpush1.bf16.xpose.msra.mxu0 %v3136
        %4092 = vmatprep.subr.bf16.mxu0 %v3173
        %4093 = vmatpush1.bf16.xpose.msra.mxu0 %v3172
        %4094 = vmatprep.subr.bf16.mxu0 %v3209
        %4095 = vmatpush1.bf16.xpose.msra.mxu0 %v3208
        %4096 = vmatprep.subr.bf16.mxu0 %v3245
        %4097 = vmatpush1.bf16.xpose.msra.mxu0 %v3244
        %4098 = vmatprep.subr.bf16.mxu0 %v3281
        %4099 = vmatpush1.bf16.xpose.msra.mxu0 %v3280
        %4100 = vmatprep.subr.bf16.mxu0 %v3317
        %4101 = vmatpush1.bf16.xpose.msra.mxu0 %v3316
        %4102 = vmatprep.subr.bf16.mxu0 %v3353
        %4103 = vmatpush1.bf16.xpose.msra.mxu0 %v3352
        %4104 = vmatprep.subr.bf16.mxu0 %v3389
        %4105 = vmatpush1.bf16.xpose.msra.mxu0 %v3388
        %4106 = vmatprep.subr.bf16.mxu0 %v3425
        %4107 = vmatpush1.bf16.xpose.msra.mxu0 %v3424
        %4108 = vmatprep.subr.bf16.mxu0 %v3461
        %4109 = vmatpush1.bf16.xpose.msra.mxu0 %v3460
        %4110 = vmatprep.subr.bf16.mxu0 0
        %4111 = vmatpush1.bf16.xpose.msra.mxu0 0
        %4112 = vmatprep.subr.bf16.mxu0 0
        %4113 = vmatpush1.bf16.xpose.msra.mxu0 0
        %4114 = vmatprep.subr.bf16.mxu0 0
        %4115 = vmatpush1.bf16.xpose.msra.mxu0 0
        %4116 = vmatprep.subr.bf16.mxu0 0
        %4117 = vmatpush1.bf16.xpose.msra.mxu0 0
        %4118 = vmatprep.subr.bf16.mxu0 0
        %4119 = vmatpush1.bf16.xpose.msra.mxu0 0
        %4120 = vmatprep.subr.bf16.mxu0 0
        %4121 = vmatpush1.bf16.xpose.msra.mxu0 0
        %4122 = vmatprep.mubr.bf16.mxu0 %v1721
        %4123 = vmatmul.mubr.bf16.gmra.mrb[0].mxu0 %v1720
        %v4124 = vpop.f32.mrb[0].mxu0
        %v4125 = vadd.f32 %v4084, %v4124
        %v4126 = vpop.f32.mrb[0].mxu0
        %v4127 = vadd.f32 %v4086, %v4126
        %v4128 = vpop.f32.mrb[0].mxu0
        %v4129 = vpop.f32.mrb[0].mxu0
        %4130 = vdwg.mxu0
        %4131 = vmatprep.subr.bf16.mxu0 %v3139
        %4132 = vmatpush1.bf16.xpose.msra.mxu0 %v3138
        %4133 = vmatprep.subr.bf16.mxu0 %v3175
        %4134 = vmatpush1.bf16.xpose.msra.mxu0 %v3174
        %4135 = vmatprep.subr.bf16.mxu0 %v3211
        %4136 = vmatpush1.bf16.xpose.msra.mxu0 %v3210
        %4137 = vmatprep.subr.bf16.mxu0 %v3247
        %4138 = vmatpush1.bf16.xpose.msra.mxu0 %v3246
        %4139 = vmatprep.subr.bf16.mxu0 %v3283
        %4140 = vmatpush1.bf16.xpose.msra.mxu0 %v3282
        %4141 = vmatprep.subr.bf16.mxu0 %v3319
        %4142 = vmatpush1.bf16.xpose.msra.mxu0 %v3318
        %4143 = vmatprep.subr.bf16.mxu0 %v3355
        %4144 = vmatpush1.bf16.xpose.msra.mxu0 %v3354
        %4145 = vmatprep.subr.bf16.mxu0 %v3391
        %4146 = vmatpush1.bf16.xpose.msra.mxu0 %v3390
        %4147 = vmatprep.subr.bf16.mxu0 %v3427
        %4148 = vmatpush1.bf16.xpose.msra.mxu0 %v3426
        %4149 = vmatprep.subr.bf16.mxu0 %v3463
        %4150 = vmatpush1.bf16.xpose.msra.mxu0 %v3462
        %4151 = vmatprep.subr.bf16.mxu0 0
        %4152 = vmatpush1.bf16.xpose.msra.mxu0 0
        %4153 = vmatprep.subr.bf16.mxu0 0
        %4154 = vmatpush1.bf16.xpose.msra.mxu0 0
        %4155 = vmatprep.subr.bf16.mxu0 0
        %4156 = vmatpush1.bf16.xpose.msra.mxu0 0
        %4157 = vmatprep.subr.bf16.mxu0 0
        %4158 = vmatpush1.bf16.xpose.msra.mxu0 0
        %4159 = vmatprep.subr.bf16.mxu0 0
        %4160 = vmatpush1.bf16.xpose.msra.mxu0 0
        %4161 = vmatprep.subr.bf16.mxu0 0
        %4162 = vmatpush1.bf16.xpose.msra.mxu0 0
        %4163 = vmatprep.mubr.bf16.mxu0 %v1723
        %4164 = vmatmul.mubr.bf16.gmra.mrb[0].mxu0 %v1722
        %v4165 = vpop.f32.mrb[0].mxu0
        %v4166 = vadd.f32 %v4125, %v4165
        %v4167 = vpop.f32.mrb[0].mxu0
        %v4168 = vadd.f32 %v4127, %v4167
        %v4169 = vpop.f32.mrb[0].mxu0
        %v4170 = vpop.f32.mrb[0].mxu0
        %4171 = vdwg.mxu0
        %4172 = vmatprep.subr.bf16.mxu0 %v3141
        %4173 = vmatpush1.bf16.xpose.msra.mxu0 %v3140
        %4174 = vmatprep.subr.bf16.mxu0 %v3177
        %4175 = vmatpush1.bf16.xpose.msra.mxu0 %v3176
        %4176 = vmatprep.subr.bf16.mxu0 %v3213
        %4177 = vmatpush1.bf16.xpose.msra.mxu0 %v3212
        %4178 = vmatprep.subr.bf16.mxu0 %v3249
        %4179 = vmatpush1.bf16.xpose.msra.mxu0 %v3248
        %4180 = vmatprep.subr.bf16.mxu0 %v3285
        %4181 = vmatpush1.bf16.xpose.msra.mxu0 %v3284
        %4182 = vmatprep.subr.bf16.mxu0 %v3321
        %4183 = vmatpush1.bf16.xpose.msra.mxu0 %v3320
        %4184 = vmatprep.subr.bf16.mxu0 %v3357
        %4185 = vmatpush1.bf16.xpose.msra.mxu0 %v3356
        %4186 = vmatprep.subr.bf16.mxu0 %v3393
        %4187 = vmatpush1.bf16.xpose.msra.mxu0 %v3392
        %4188 = vmatprep.subr.bf16.mxu0 %v3429
        %4189 = vmatpush1.bf16.xpose.msra.mxu0 %v3428
        %4190 = vmatprep.subr.bf16.mxu0 %v3465
        %4191 = vmatpush1.bf16.xpose.msra.mxu0 %v3464
        %4192 = vmatprep.subr.bf16.mxu0 0
        %4193 = vmatpush1.bf16.xpose.msra.mxu0 0
        %4194 = vmatprep.subr.bf16.mxu0 0
        %4195 = vmatpush1.bf16.xpose.msra.mxu0 0
        %4196 = vmatprep.subr.bf16.mxu0 0
        %4197 = vmatpush1.bf16.xpose.msra.mxu0 0
        %4198 = vmatprep.subr.bf16.mxu0 0
        %4199 = vmatpush1.bf16.xpose.msra.mxu0 0
        %4200 = vmatprep.subr.bf16.mxu0 0
        %4201 = vmatpush1.bf16.xpose.msra.mxu0 0
        %4202 = vmatprep.subr.bf16.mxu0 0
        %4203 = vmatpush1.bf16.xpose.msra.mxu0 0
        %4204 = vmatprep.mubr.bf16.mxu0 %v1725
        %4205 = vmatmul.mubr.bf16.gmra.mrb[0].mxu0 %v1724
        %v4206 = vpop.f32.mrb[0].mxu0
        %v4207 = vadd.f32 %v4166, %v4206
        %v4208 = vpop.f32.mrb[0].mxu0
        %v4209 = vadd.f32 %v4168, %v4208
        %v4210 = vpop.f32.mrb[0].mxu0
        %v4211 = vpop.f32.mrb[0].mxu0
        %4212 = vdwg.mxu0
        %4213 = vmatprep.subr.bf16.mxu0 %v3143
        %4214 = vmatpush1.bf16.xpose.msra.mxu0 %v3142
        %4215 = vmatprep.subr.bf16.mxu0 %v3179
        %4216 = vmatpush1.bf16.xpose.msra.mxu0 %v3178
        %4217 = vmatprep.subr.bf16.mxu0 %v3215
        %4218 = vmatpush1.bf16.xpose.msra.mxu0 %v3214
        %4219 = vmatprep.subr.bf16.mxu0 %v3251
        %4220 = vmatpush1.bf16.xpose.msra.mxu0 %v3250
        %4221 = vmatprep.subr.bf16.mxu0 %v3287
        %4222 = vmatpush1.bf16.xpose.msra.mxu0 %v3286
        %4223 = vmatprep.subr.bf16.mxu0 %v3323
        %4224 = vmatpush1.bf16.xpose.msra.mxu0 %v3322
        %4225 = vmatprep.subr.bf16.mxu0 %v3359
        %4226 = vmatpush1.bf16.xpose.msra.mxu0 %v3358
        %4227 = vmatprep.subr.bf16.mxu0 %v3395
        %4228 = vmatpush1.bf16.xpose.msra.mxu0 %v3394
        %4229 = vmatprep.subr.bf16.mxu0 %v3431
        %4230 = vmatpush1.bf16.xpose.msra.mxu0 %v3430
        %4231 = vmatprep.subr.bf16.mxu0 %v3467
        %4232 = vmatpush1.bf16.xpose.msra.mxu0 %v3466
        %4233 = vmatprep.subr.bf16.mxu0 0
        %4234 = vmatpush1.bf16.xpose.msra.mxu0 0
        %4235 = vmatprep.subr.bf16.mxu0 0
        %4236 = vmatpush1.bf16.xpose.msra.mxu0 0
        %4237 = vmatprep.subr.bf16.mxu0 0
        %4238 = vmatpush1.bf16.xpose.msra.mxu0 0
        %4239 = vmatprep.subr.bf16.mxu0 0
        %4240 = vmatpush1.bf16.xpose.msra.mxu0 0
        %4241 = vmatprep.subr.bf16.mxu0 0
        %4242 = vmatpush1.bf16.xpose.msra.mxu0 0
        %4243 = vmatprep.subr.bf16.mxu0 0
        %4244 = vmatpush1.bf16.xpose.msra.mxu0 0
        %4245 = vmatprep.mubr.bf16.mxu0 %v1727
        %4246 = vmatmul.mubr.bf16.gmra.mrb[0].mxu0 %v1726
        %v4247 = vpop.f32.mrb[0].mxu0
        %v4248 = vadd.f32 %v4207, %v4247
        %v4249 = vpop.f32.mrb[0].mxu0
        %v4250 = vadd.f32 %v4209, %v4249
        %v4251 = vpop.f32.mrb[0].mxu0
        %v4252 = vpop.f32.mrb[0].mxu0
        %4253 = vdwg.mxu0
        %4254 = vmatprep.subr.bf16.mxu0 %v3145
        %4255 = vmatpush1.bf16.xpose.msra.mxu0 %v3144
        %4256 = vmatprep.subr.bf16.mxu0 %v3181
        %4257 = vmatpush1.bf16.xpose.msra.mxu0 %v3180
        %4258 = vmatprep.subr.bf16.mxu0 %v3217
        %4259 = vmatpush1.bf16.xpose.msra.mxu0 %v3216
        %4260 = vmatprep.subr.bf16.mxu0 %v3253
        %4261 = vmatpush1.bf16.xpose.msra.mxu0 %v3252
        %4262 = vmatprep.subr.bf16.mxu0 %v3289
        %4263 = vmatpush1.bf16.xpose.msra.mxu0 %v3288
        %4264 = vmatprep.subr.bf16.mxu0 %v3325
        %4265 = vmatpush1.bf16.xpose.msra.mxu0 %v3324
        %4266 = vmatprep.subr.bf16.mxu0 %v3361
        %4267 = vmatpush1.bf16.xpose.msra.mxu0 %v3360
        %4268 = vmatprep.subr.bf16.mxu0 %v3397
        %4269 = vmatpush1.bf16.xpose.msra.mxu0 %v3396
        %4270 = vmatprep.subr.bf16.mxu0 %v3433
        %4271 = vmatpush1.bf16.xpose.msra.mxu0 %v3432
        %4272 = vmatprep.subr.bf16.mxu0 %v3469
        %4273 = vmatpush1.bf16.xpose.msra.mxu0 %v3468
        %4274 = vmatprep.subr.bf16.mxu0 0
        %4275 = vmatpush1.bf16.xpose.msra.mxu0 0
        %4276 = vmatprep.subr.bf16.mxu0 0
        %4277 = vmatpush1.bf16.xpose.msra.mxu0 0
        %4278 = vmatprep.subr.bf16.mxu0 0
        %4279 = vmatpush1.bf16.xpose.msra.mxu0 0
        %4280 = vmatprep.subr.bf16.mxu0 0
        %4281 = vmatpush1.bf16.xpose.msra.mxu0 0
        %4282 = vmatprep.subr.bf16.mxu0 0
        %4283 = vmatpush1.bf16.xpose.msra.mxu0 0
        %4284 = vmatprep.subr.bf16.mxu0 0
        %4285 = vmatpush1.bf16.xpose.msra.mxu0 0
        %4286 = vmatprep.mubr.bf16.mxu0 %v1729
        %4287 = vmatmul.mubr.bf16.gmra.mrb[0].mxu0 %v1728
        %v4288 = vpop.f32.mrb[0].mxu0
        %v4289 = vadd.f32 %v4248, %v4288
        %v4290 = vpop.f32.mrb[0].mxu0
        %v4291 = vadd.f32 %v4250, %v4290
        %v4292 = vpop.f32.mrb[0].mxu0
        %v4293 = vpop.f32.mrb[0].mxu0
        %4294 = vdwg.mxu0
        %4295 = vmatprep.subr.bf16.mxu0 %v3147
        %4296 = vmatpush1.bf16.xpose.msra.mxu0 %v3146
        %4297 = vmatprep.subr.bf16.mxu0 %v3183
        %4298 = vmatpush1.bf16.xpose.msra.mxu0 %v3182
        %4299 = vmatprep.subr.bf16.mxu0 %v3219
        %4300 = vmatpush1.bf16.xpose.msra.mxu0 %v3218
        %4301 = vmatprep.subr.bf16.mxu0 %v3255
        %4302 = vmatpush1.bf16.xpose.msra.mxu0 %v3254
        %4303 = vmatprep.subr.bf16.mxu0 %v3291
        %4304 = vmatpush1.bf16.xpose.msra.mxu0 %v3290
        %4305 = vmatprep.subr.bf16.mxu0 %v3327
        %4306 = vmatpush1.bf16.xpose.msra.mxu0 %v3326
        %4307 = vmatprep.subr.bf16.mxu0 %v3363
        %4308 = vmatpush1.bf16.xpose.msra.mxu0 %v3362
        %4309 = vmatprep.subr.bf16.mxu0 %v3399
        %4310 = vmatpush1.bf16.xpose.msra.mxu0 %v3398
        %4311 = vmatprep.subr.bf16.mxu0 %v3435
        %4312 = vmatpush1.bf16.xpose.msra.mxu0 %v3434
        %4313 = vmatprep.subr.bf16.mxu0 %v3471
        %4314 = vmatpush1.bf16.xpose.msra.mxu0 %v3470
        %4315 = vmatprep.subr.bf16.mxu0 0
        %4316 = vmatpush1.bf16.xpose.msra.mxu0 0
        %4317 = vmatprep.subr.bf16.mxu0 0
        %4318 = vmatpush1.bf16.xpose.msra.mxu0 0
        %4319 = vmatprep.subr.bf16.mxu0 0
        %4320 = vmatpush1.bf16.xpose.msra.mxu0 0
        %4321 = vmatprep.subr.bf16.mxu0 0
        %4322 = vmatpush1.bf16.xpose.msra.mxu0 0
        %4323 = vmatprep.subr.bf16.mxu0 0
        %4324 = vmatpush1.bf16.xpose.msra.mxu0 0
        %4325 = vmatprep.subr.bf16.mxu0 0
        %4326 = vmatpush1.bf16.xpose.msra.mxu0 0
        %4327 = vmatprep.mubr.bf16.mxu0 %v1731
        %4328 = vmatmul.mubr.bf16.gmra.mrb[0].mxu0 %v1730
        %v4329 = vpop.f32.mrb[0].mxu0
        %v4330 = vadd.f32 %v4289, %v4329
        %v4331 = vpop.f32.mrb[0].mxu0
        %v4332 = vadd.f32 %v4291, %v4331
        %v4333 = vpop.f32.mrb[0].mxu0
        %v4334 = vpop.f32.mrb[0].mxu0
        %4335 = vdwg.mxu0
        %4336 = vmatprep.subr.bf16.mxu0 %v3149
        %4337 = vmatpush1.bf16.xpose.msra.mxu0 %v3148
        %4338 = vmatprep.subr.bf16.mxu0 %v3185
        %4339 = vmatpush1.bf16.xpose.msra.mxu0 %v3184
        %4340 = vmatprep.subr.bf16.mxu0 %v3221
        %4341 = vmatpush1.bf16.xpose.msra.mxu0 %v3220
        %4342 = vmatprep.subr.bf16.mxu0 %v3257
        %4343 = vmatpush1.bf16.xpose.msra.mxu0 %v3256
        %4344 = vmatprep.subr.bf16.mxu0 %v3293
        %4345 = vmatpush1.bf16.xpose.msra.mxu0 %v3292
        %4346 = vmatprep.subr.bf16.mxu0 %v3329
        %4347 = vmatpush1.bf16.xpose.msra.mxu0 %v3328
        %4348 = vmatprep.subr.bf16.mxu0 %v3365
        %4349 = vmatpush1.bf16.xpose.msra.mxu0 %v3364
        %4350 = vmatprep.subr.bf16.mxu0 %v3401
        %4351 = vmatpush1.bf16.xpose.msra.mxu0 %v3400
        %4352 = vmatprep.subr.bf16.mxu0 %v3437
        %4353 = vmatpush1.bf16.xpose.msra.mxu0 %v3436
        %4354 = vmatprep.subr.bf16.mxu0 %v3473
        %4355 = vmatpush1.bf16.xpose.msra.mxu0 %v3472
        %4356 = vmatprep.subr.bf16.mxu0 0
        %4357 = vmatpush1.bf16.xpose.msra.mxu0 0
        %4358 = vmatprep.subr.bf16.mxu0 0
        %4359 = vmatpush1.bf16.xpose.msra.mxu0 0
        %4360 = vmatprep.subr.bf16.mxu0 0
        %4361 = vmatpush1.bf16.xpose.msra.mxu0 0
        %4362 = vmatprep.subr.bf16.mxu0 0
        %4363 = vmatpush1.bf16.xpose.msra.mxu0 0
        %4364 = vmatprep.subr.bf16.mxu0 0
        %4365 = vmatpush1.bf16.xpose.msra.mxu0 0
        %4366 = vmatprep.subr.bf16.mxu0 0
        %4367 = vmatpush1.bf16.xpose.msra.mxu0 0
        %4368 = vmatprep.mubr.bf16.mxu0 %v1733
        %4369 = vmatmul.mubr.bf16.gmra.mrb[0].mxu0 %v1732
        %v4370 = vpop.f32.mrb[0].mxu0
        %v4371 = vadd.f32 %v4330, %v4370
        %v4372 = vpop.f32.mrb[0].mxu0
        %v4373 = vadd.f32 %v4332, %v4372
        %v4374 = vpop.f32.mrb[0].mxu0
        %v4375 = vpop.f32.mrb[0].mxu0
        %4376 = vdwg.mxu0
        %4377 = vmatprep.subr.bf16.mxu0 %v3151
        %4378 = vmatpush1.bf16.xpose.msra.mxu0 %v3150
        %4379 = vmatprep.subr.bf16.mxu0 %v3187
        %4380 = vmatpush1.bf16.xpose.msra.mxu0 %v3186
        %4381 = vmatprep.subr.bf16.mxu0 %v3223
        %4382 = vmatpush1.bf16.xpose.msra.mxu0 %v3222
        %4383 = vmatprep.subr.bf16.mxu0 %v3259
        %4384 = vmatpush1.bf16.xpose.msra.mxu0 %v3258
        %4385 = vmatprep.subr.bf16.mxu0 %v3295
        %4386 = vmatpush1.bf16.xpose.msra.mxu0 %v3294
        %4387 = vmatprep.subr.bf16.mxu0 %v3331
        %4388 = vmatpush1.bf16.xpose.msra.mxu0 %v3330
        %4389 = vmatprep.subr.bf16.mxu0 %v3367
        %4390 = vmatpush1.bf16.xpose.msra.mxu0 %v3366
        %4391 = vmatprep.subr.bf16.mxu0 %v3403
        %4392 = vmatpush1.bf16.xpose.msra.mxu0 %v3402
        %4393 = vmatprep.subr.bf16.mxu0 %v3439
        %4394 = vmatpush1.bf16.xpose.msra.mxu0 %v3438
        %4395 = vmatprep.subr.bf16.mxu0 %v3475
        %4396 = vmatpush1.bf16.xpose.msra.mxu0 %v3474
        %4397 = vmatprep.subr.bf16.mxu0 0
        %4398 = vmatpush1.bf16.xpose.msra.mxu0 0
        %4399 = vmatprep.subr.bf16.mxu0 0
        %4400 = vmatpush1.bf16.xpose.msra.mxu0 0
        %4401 = vmatprep.subr.bf16.mxu0 0
        %4402 = vmatpush1.bf16.xpose.msra.mxu0 0
        %4403 = vmatprep.subr.bf16.mxu0 0
        %4404 = vmatpush1.bf16.xpose.msra.mxu0 0
        %4405 = vmatprep.subr.bf16.mxu0 0
        %4406 = vmatpush1.bf16.xpose.msra.mxu0 0
        %4407 = vmatprep.subr.bf16.mxu0 0
        %4408 = vmatpush1.bf16.xpose.msra.mxu0 0
        %4409 = vmatprep.mubr.bf16.mxu0 %v1735
        %4410 = vmatmul.mubr.bf16.gmra.mrb[0].mxu0 %v1734
        %v4411 = vpop.f32.mrb[0].mxu0
        %v4412 = vadd.f32 %v4371, %v4411
        %v4413 = vpop.f32.mrb[0].mxu0
        %v4414 = vadd.f32 %v4373, %v4413
        %v4415 = vpop.f32.mrb[0].mxu0
        %v4416 = vpop.f32.mrb[0].mxu0
        %4417 = vdwg.mxu0
        %4418 = vmatprep.subr.bf16.mxu0 %v3153
        %4419 = vmatpush1.bf16.xpose.msra.mxu0 %v3152
        %4420 = vmatprep.subr.bf16.mxu0 %v3189
        %4421 = vmatpush1.bf16.xpose.msra.mxu0 %v3188
        %4422 = vmatprep.subr.bf16.mxu0 %v3225
        %4423 = vmatpush1.bf16.xpose.msra.mxu0 %v3224
        %4424 = vmatprep.subr.bf16.mxu0 %v3261
        %4425 = vmatpush1.bf16.xpose.msra.mxu0 %v3260
        %4426 = vmatprep.subr.bf16.mxu0 %v3297
        %4427 = vmatpush1.bf16.xpose.msra.mxu0 %v3296
        %4428 = vmatprep.subr.bf16.mxu0 %v3333
        %4429 = vmatpush1.bf16.xpose.msra.mxu0 %v3332
        %4430 = vmatprep.subr.bf16.mxu0 %v3369
        %4431 = vmatpush1.bf16.xpose.msra.mxu0 %v3368
        %4432 = vmatprep.subr.bf16.mxu0 %v3405
        %4433 = vmatpush1.bf16.xpose.msra.mxu0 %v3404
        %4434 = vmatprep.subr.bf16.mxu0 %v3441
        %4435 = vmatpush1.bf16.xpose.msra.mxu0 %v3440
        %4436 = vmatprep.subr.bf16.mxu0 %v3477
        %4437 = vmatpush1.bf16.xpose.msra.mxu0 %v3476
        %4438 = vmatprep.subr.bf16.mxu0 0
        %4439 = vmatpush1.bf16.xpose.msra.mxu0 0
        %4440 = vmatprep.subr.bf16.mxu0 0
        %4441 = vmatpush1.bf16.xpose.msra.mxu0 0
        %4442 = vmatprep.subr.bf16.mxu0 0
        %4443 = vmatpush1.bf16.xpose.msra.mxu0 0
        %4444 = vmatprep.subr.bf16.mxu0 0
        %4445 = vmatpush1.bf16.xpose.msra.mxu0 0
        %4446 = vmatprep.subr.bf16.mxu0 0
        %4447 = vmatpush1.bf16.xpose.msra.mxu0 0
        %4448 = vmatprep.subr.bf16.mxu0 0
        %4449 = vmatpush1.bf16.xpose.msra.mxu0 0
        %4450 = vmatprep.mubr.bf16.mxu0 %v1737
        %4451 = vmatmul.mubr.bf16.gmra.mrb[0].mxu0 %v1736
        %v4452 = vpop.f32.mrb[0].mxu0
        %v4453 = vadd.f32 %v4412, %v4452
        %v4454 = vpop.f32.mrb[0].mxu0
        %v4455 = vadd.f32 %v4414, %v4454
        %v4456 = vpop.f32.mrb[0].mxu0
        %v4457 = vpop.f32.mrb[0].mxu0
        %4458 = vdwg.mxu0
        %4459 = vmatprep.subr.bf16.mxu0 %v3155
        %4460 = vmatpush1.bf16.xpose.msra.mxu0 %v3154
        %4461 = vmatprep.subr.bf16.mxu0 %v3191
        %4462 = vmatpush1.bf16.xpose.msra.mxu0 %v3190
        %4463 = vmatprep.subr.bf16.mxu0 %v3227
        %4464 = vmatpush1.bf16.xpose.msra.mxu0 %v3226
        %4465 = vmatprep.subr.bf16.mxu0 %v3263
        %4466 = vmatpush1.bf16.xpose.msra.mxu0 %v3262
        %4467 = vmatprep.subr.bf16.mxu0 %v3299
        %4468 = vmatpush1.bf16.xpose.msra.mxu0 %v3298
        %4469 = vmatprep.subr.bf16.mxu0 %v3335
        %4470 = vmatpush1.bf16.xpose.msra.mxu0 %v3334
        %4471 = vmatprep.subr.bf16.mxu0 %v3371
        %4472 = vmatpush1.bf16.xpose.msra.mxu0 %v3370
        %4473 = vmatprep.subr.bf16.mxu0 %v3407
        %4474 = vmatpush1.bf16.xpose.msra.mxu0 %v3406
        %4475 = vmatprep.subr.bf16.mxu0 %v3443
        %4476 = vmatpush1.bf16.xpose.msra.mxu0 %v3442
        %4477 = vmatprep.subr.bf16.mxu0 %v3479
        %4478 = vmatpush1.bf16.xpose.msra.mxu0 %v3478
        %4479 = vmatprep.subr.bf16.mxu0 0
        %4480 = vmatpush1.bf16.xpose.msra.mxu0 0
        %4481 = vmatprep.subr.bf16.mxu0 0
        %4482 = vmatpush1.bf16.xpose.msra.mxu0 0
        %4483 = vmatprep.subr.bf16.mxu0 0
        %4484 = vmatpush1.bf16.xpose.msra.mxu0 0
        %4485 = vmatprep.subr.bf16.mxu0 0
        %4486 = vmatpush1.bf16.xpose.msra.mxu0 0
        %4487 = vmatprep.subr.bf16.mxu0 0
        %4488 = vmatpush1.bf16.xpose.msra.mxu0 0
        %4489 = vmatprep.subr.bf16.mxu0 0
        %4490 = vmatpush1.bf16.xpose.msra.mxu0 0
        %4491 = vmatprep.mubr.bf16.mxu0 %v1739
        %4492 = vmatmul.mubr.bf16.gmra.mrb[0].mxu0 %v1738
        %v4493 = vpop.f32.mrb[0].mxu0
        %v4494 = vadd.f32 %v4453, %v4493
        %v4495 = vpop.f32.mrb[0].mxu0
        %v4496 = vadd.f32 %v4455, %v4495
        %v4497 = vpop.f32.mrb[0].mxu0
        %v4498 = vpop.f32.mrb[0].mxu0
        %4499 = vdwg.mxu0
        %4500 = vmatprep.subr.bf16.mxu0 %v3157
        %4501 = vmatpush1.bf16.xpose.msra.mxu0 %v3156
        %4502 = vmatprep.subr.bf16.mxu0 %v3193
        %4503 = vmatpush1.bf16.xpose.msra.mxu0 %v3192
        %4504 = vmatprep.subr.bf16.mxu0 %v3229
        %4505 = vmatpush1.bf16.xpose.msra.mxu0 %v3228
        %4506 = vmatprep.subr.bf16.mxu0 %v3265
        %4507 = vmatpush1.bf16.xpose.msra.mxu0 %v3264
        %4508 = vmatprep.subr.bf16.mxu0 %v3301
        %4509 = vmatpush1.bf16.xpose.msra.mxu0 %v3300
        %4510 = vmatprep.subr.bf16.mxu0 %v3337
        %4511 = vmatpush1.bf16.xpose.msra.mxu0 %v3336
        %4512 = vmatprep.subr.bf16.mxu0 %v3373
        %4513 = vmatpush1.bf16.xpose.msra.mxu0 %v3372
        %4514 = vmatprep.subr.bf16.mxu0 %v3409
        %4515 = vmatpush1.bf16.xpose.msra.mxu0 %v3408
        %4516 = vmatprep.subr.bf16.mxu0 %v3445
        %4517 = vmatpush1.bf16.xpose.msra.mxu0 %v3444
        %4518 = vmatprep.subr.bf16.mxu0 %v3481
        %4519 = vmatpush1.bf16.xpose.msra.mxu0 %v3480
        %4520 = vmatprep.subr.bf16.mxu0 0
        %4521 = vmatpush1.bf16.xpose.msra.mxu0 0
        %4522 = vmatprep.subr.bf16.mxu0 0
        %4523 = vmatpush1.bf16.xpose.msra.mxu0 0
        %4524 = vmatprep.subr.bf16.mxu0 0
        %4525 = vmatpush1.bf16.xpose.msra.mxu0 0
        %4526 = vmatprep.subr.bf16.mxu0 0
        %4527 = vmatpush1.bf16.xpose.msra.mxu0 0
        %4528 = vmatprep.subr.bf16.mxu0 0
        %4529 = vmatpush1.bf16.xpose.msra.mxu0 0
        %4530 = vmatprep.subr.bf16.mxu0 0
        %4531 = vmatpush1.bf16.xpose.msra.mxu0 0
        %4532 = vmatprep.mubr.bf16.mxu0 %v1741
        %4533 = vmatmul.mubr.bf16.gmra.mrb[0].mxu0 %v1740
        %v4534 = vpop.f32.mrb[0].mxu0
        %v4535 = vadd.f32 %v4494, %v4534
        %v4536 = vpop.f32.mrb[0].mxu0
        %v4537 = vadd.f32 %v4496, %v4536
        %v4538 = vpop.f32.mrb[0].mxu0
        %v4539 = vpop.f32.mrb[0].mxu0
        %4540 = vdwg.mxu0
        %4541 = vmatprep.subr.bf16.mxu0 %v3159
        %4542 = vmatpush1.bf16.xpose.msra.mxu0 %v3158
        %4543 = vmatprep.subr.bf16.mxu0 %v3195
        %4544 = vmatpush1.bf16.xpose.msra.mxu0 %v3194
        %4545 = vmatprep.subr.bf16.mxu0 %v3231
        %4546 = vmatpush1.bf16.xpose.msra.mxu0 %v3230
        %4547 = vmatprep.subr.bf16.mxu0 %v3267
        %4548 = vmatpush1.bf16.xpose.msra.mxu0 %v3266
        %4549 = vmatprep.subr.bf16.mxu0 %v3303
        %4550 = vmatpush1.bf16.xpose.msra.mxu0 %v3302
        %4551 = vmatprep.subr.bf16.mxu0 %v3339
        %4552 = vmatpush1.bf16.xpose.msra.mxu0 %v3338
        %4553 = vmatprep.subr.bf16.mxu0 %v3375
        %4554 = vmatpush1.bf16.xpose.msra.mxu0 %v3374
        %4555 = vmatprep.subr.bf16.mxu0 %v3411
        %4556 = vmatpush1.bf16.xpose.msra.mxu0 %v3410
        %4557 = vmatprep.subr.bf16.mxu0 %v3447
        %4558 = vmatpush1.bf16.xpose.msra.mxu0 %v3446
        %4559 = vmatprep.subr.bf16.mxu0 %v3483
        %4560 = vmatpush1.bf16.xpose.msra.mxu0 %v3482
        %4561 = vmatprep.subr.bf16.mxu0 0
        %4562 = vmatpush1.bf16.xpose.msra.mxu0 0
        %4563 = vmatprep.subr.bf16.mxu0 0
        %4564 = vmatpush1.bf16.xpose.msra.mxu0 0
        %4565 = vmatprep.subr.bf16.mxu0 0
        %4566 = vmatpush1.bf16.xpose.msra.mxu0 0
        %4567 = vmatprep.subr.bf16.mxu0 0
        %4568 = vmatpush1.bf16.xpose.msra.mxu0 0
        %4569 = vmatprep.subr.bf16.mxu0 0
        %4570 = vmatpush1.bf16.xpose.msra.mxu0 0
        %4571 = vmatprep.subr.bf16.mxu0 0
        %4572 = vmatpush1.bf16.xpose.msra.mxu0 0
        %4573 = vmatprep.mubr.bf16.mxu0 %v1743
        %4574 = vmatmul.mubr.bf16.gmra.mrb[0].mxu0 %v1742
        %v4575 = vpop.f32.mrb[0].mxu0
        %v4576 = vadd.f32 %v4535, %v4575
        %v4577 = vpop.f32.mrb[0].mxu0
        %v4578 = vadd.f32 %v4537, %v4577
        %v4579 = vpop.f32.mrb[0].mxu0
        %v4580 = vpop.f32.mrb[0].mxu0
        %4581 = vdwg.mxu0
        %v4582 = vmax.f32 %v4576, 0.0
        %v4583 = vmax.f32 %v4578, 0.0
        %v4586 = vcombine.low %v4582, %v4583
        %v4588 = vunpack.c.l.s4 1983009808
        %v4589 = vunpack.c.0.s8 %v4588
        %v4590 = vlaneseq
        %v4591 = vshrl.u32 %v4590, 7
        %v4592 = vsub.s32 %v4589, %v4591
        %v4593 = vrot.slane %v4586, %v4592
        %vm4595 = vcmask 1041408
        %vm4596 = vcmask 175106
        %vm4597 = vmor %vm4596, %vm4595
        %4598 = vst.msk [vmem:[%s356] sm:$0xf] %vm4597, %v4593
        %s4599 = scalar_lea.vmem %s274, 324 [#allocation2]
        %v4600 = vld [vmem:[%s4599] sm:$0xff]
        %v4601 = vld [vmem:[%s4599 + $0x8] sm:$0xff]
        %v4602 = vld [vmem:[%s4599 + $0x10] sm:$0xff]
        %v4603 = vld [vmem:[%s4599 + $0x18] sm:$0xff]
        %v4604 = vld [vmem:[%s4599 + $0x20] sm:$0xf]
        %v4605 = vld [vmem:[%s4599 + $0x24] sm:$0xff]
        %v4606 = vld [vmem:[%s4599 + $0x2c] sm:$0xff]
        %v4607 = vld [vmem:[%s4599 + $0x34] sm:$0xff]
        %v4608 = vld [vmem:[%s4599 + $0x3c] sm:$0xff]
        %v4609 = vld [vmem:[%s4599 + $0x44] sm:$0xf]
        %v4610 = vld [vmem:[%s4599 + $0x48] sm:$0xff]
        %v4611 = vld [vmem:[%s4599 + $0x50] sm:$0xff]
        %v4612 = vld [vmem:[%s4599 + $0x58] sm:$0xff]
        %v4613 = vld [vmem:[%s4599 + $0x60] sm:$0xff]
        %v4614 = vld [vmem:[%s4599 + $0x68] sm:$0xf]
        %v4615 = vld [vmem:[%s4599 + $0x6c] sm:$0xff]
        %v4616 = vld [vmem:[%s4599 + $0x74] sm:$0xff]
        %v4617 = vld [vmem:[%s4599 + $0x7c] sm:$0xff]
        %v4618 = vld [vmem:[%s4599 + $0x84] sm:$0xff]
        %v4619 = vld [vmem:[%s4599 + $0x8c] sm:$0xf]
        %v4620 = vld [vmem:[%s4599 + $0x90] sm:$0xff]
        %v4621 = vld [vmem:[%s4599 + $0x98] sm:$0xff]
        %v4622 = vld [vmem:[%s4599 + $0xa0] sm:$0xff]
        %v4623 = vld [vmem:[%s4599 + $0xa8] sm:$0xff]
        %v4624 = vld [vmem:[%s4599 + $0xb0] sm:$0xf]
        %v4625 = vld [vmem:[%s4599 + $0xb4] sm:$0xff]
        %v4626 = vld [vmem:[%s4599 + $0xbc] sm:$0xff]
        %v4627 = vld [vmem:[%s4599 + $0xc4] sm:$0xff]
        %v4628 = vld [vmem:[%s4599 + $0xcc] sm:$0xff]
        %v4629 = vld [vmem:[%s4599 + $0xd4] sm:$0xf]
        %v4630 = vld [vmem:[%s4599 + $0xd8] sm:$0xff]
        %v4631 = vld [vmem:[%s4599 + $0xe0] sm:$0xff]
        %v4632 = vld [vmem:[%s4599 + $0xe8] sm:$0xff]
        %v4633 = vld [vmem:[%s4599 + $0xf0] sm:$0xff]
        %v4634 = vld [vmem:[%s4599 + $0xf8] sm:$0xf]
        %v4635 = vld [vmem:[%s4599 + $0xfc] sm:$0xff]
        %v4636 = vld [vmem:[%s4599 + $0x104] sm:$0xff]
        %v4637 = vld [vmem:[%s4599 + $0x10c] sm:$0xff]
        %v4638 = vld [vmem:[%s4599 + $0x114] sm:$0xff]
        %v4639 = vld [vmem:[%s4599 + $0x11c] sm:$0xf]
        %v4640 = vld [vmem:[%s4599 + $0x120] sm:$0xff]
        %v4641 = vld [vmem:[%s4599 + $0x128] sm:$0xff]
        %v4642 = vld [vmem:[%s4599 + $0x130] sm:$0xff]
        %v4643 = vld [vmem:[%s4599 + $0x138] sm:$0xff]
        %v4644 = vld [vmem:[%s4599 + $0x140] sm:$0xf]
        %s4645 = scalar_lea.vmem %s283, 576 [#allocation4]
        %v4646 = vld [vmem:[%s4645] sm:$0xf]
        %v4647 = vld [vmem:[%s4645 + $0x4] sm:$0xf]
        %v4648 = vld [vmem:[%s4645 + $0x8] sm:$0xf]
        %v4649 = vld [vmem:[%s4645 + $0xc] sm:$0xf]
        %v4650 = vld [vmem:[%s4645 + $0x10] sm:$0xf]
        %v4651 = vld [vmem:[%s4645 + $0x14] sm:$0xf]
        %v4652 = vld [vmem:[%s4645 + $0x18] sm:$0xf]
        %v4653 = vld [vmem:[%s4645 + $0x1c] sm:$0xf]
        %v4654 = vld [vmem:[%s4645 + $0x20] sm:$0xf]
        %v4655 = vld [vmem:[%s4645 + $0x24] sm:$0xf]
        %v4656 = vld [vmem:[%s4645 + $0x28] sm:$0xf]
        %v4657 = vld [vmem:[%s4645 + $0x2c] sm:$0xf]
        %v4658 = vld [vmem:[%s4645 + $0x30] sm:$0xf]
        %v4659 = vld [vmem:[%s4645 + $0x34] sm:$0xf]
        %v4660 = vld [vmem:[%s4645 + $0x38] sm:$0xf]
        %v4661 = vld [vmem:[%s4645 + $0x3c] sm:$0xf]
        %v4662 = vld [vmem:[%s4645 + $0x40] sm:$0xf]
        %v4663 = vld [vmem:[%s4645 + $0x44] sm:$0xf]
        %v4664 = vld [vmem:[%s4645 + $0x48] sm:$0xf]
        %v4665 = vld [vmem:[%s4645 + $0x4c] sm:$0xf]
        %v4666 = vld [vmem:[%s4645 + $0x50] sm:$0xf]
        %v4667 = vld [vmem:[%s4645 + $0x54] sm:$0xf]
        %v4668 = vld [vmem:[%s4645 + $0x58] sm:$0xf]
        %v4669 = vld [vmem:[%s4645 + $0x5c] sm:$0xf]
        %v4670 = vld [vmem:[%s4645 + $0x60] sm:$0xf]
        %v4671 = vld [vmem:[%s4645 + $0x64] sm:$0xf]
        %v4672 = vld [vmem:[%s4645 + $0x68] sm:$0xf]
        %v4673 = vld [vmem:[%s4645 + $0x6c] sm:$0xf]
        %v4674 = vld [vmem:[%s4645 + $0x70] sm:$0xf]
        %v4675 = vld [vmem:[%s4645 + $0x74] sm:$0xf]
        %v4676 = vld [vmem:[%s4645 + $0x78] sm:$0xf]
        %v4677 = vld [vmem:[%s4645 + $0x7c] sm:$0xf]
        %v4678 = vld [vmem:[%s4645 + $0x80] sm:$0xf]
        %v4679 = vld [vmem:[%s4645 + $0x84] sm:$0xf]
        %v4680 = vld [vmem:[%s4645 + $0x88] sm:$0xf]
        %v4681 = vld [vmem:[%s4645 + $0x8c] sm:$0xf]
        %v4682 = vld [vmem:[%s4645 + $0x90] sm:$0xf]
        %v4683 = vld [vmem:[%s4645 + $0x94] sm:$0xf]
        %v4684 = vld [vmem:[%s4645 + $0x98] sm:$0xf]
        %v4685 = vld [vmem:[%s4645 + $0x9c] sm:$0xf]
        %v4686 = vld [vmem:[%s4645 + $0xa0] sm:$0xf]
        %v4687 = vld [vmem:[%s4645 + $0xa4] sm:$0xf]
        %v4688 = vld [vmem:[%s4645 + $0xa8] sm:$0xf]
        %v4689 = vld [vmem:[%s4645 + $0xac] sm:$0xf]
        %v4690 = vld [vmem:[%s4645 + $0xb0] sm:$0xf]
        %v4691 = vld [vmem:[%s4645 + $0xb4] sm:$0xf]
        %v4692 = vld [vmem:[%s4645 + $0xb8] sm:$0xf]
        %v4693 = vld [vmem:[%s4645 + $0xbc] sm:$0xf]
        %v4694 = vld [vmem:[%s4645 + $0xc0] sm:$0xf]
        %v4695 = vld [vmem:[%s4645 + $0xc4] sm:$0xf]
        %v4696 = vld [vmem:[%s4645 + $0xc8] sm:$0xf]
        %v4697 = vld [vmem:[%s4645 + $0xcc] sm:$0xf]
        %v4698 = vld [vmem:[%s4645 + $0xd0] sm:$0xf]
        %v4699 = vld [vmem:[%s4645 + $0xd4] sm:$0xf]
        %v4700 = vld [vmem:[%s4645 + $0xd8] sm:$0xf]
        %v4701 = vld [vmem:[%s4645 + $0xdc] sm:$0xf]
        %v4702 = vld [vmem:[%s4645 + $0xe0] sm:$0xf]
        %v4703 = vld [vmem:[%s4645 + $0xe4] sm:$0xf]
        %v4704 = vld [vmem:[%s4645 + $0xe8] sm:$0xf]
        %v4705 = vld [vmem:[%s4645 + $0xec] sm:$0xf]
        %v4706 = vld [vmem:[%s4645 + $0xf0] sm:$0xf]
        %v4707 = vld [vmem:[%s4645 + $0xf4] sm:$0xf]
        %v4708 = vld [vmem:[%s4645 + $0xf8] sm:$0xf]
        %v4709 = vld [vmem:[%s4645 + $0xfc] sm:$0xf]
        %v4710 = vld [vmem:[%s4645 + $0x100] sm:$0xf]
        %v4711 = vld [vmem:[%s4645 + $0x104] sm:$0xf]
        %v4712 = vld [vmem:[%s4645 + $0x108] sm:$0xf]
        %v4713 = vld [vmem:[%s4645 + $0x10c] sm:$0xf]
        %v4714 = vld [vmem:[%s4645 + $0x110] sm:$0xf]
        %v4715 = vld [vmem:[%s4645 + $0x114] sm:$0xf]
        %v4716 = vld [vmem:[%s4645 + $0x118] sm:$0xf]
        %v4717 = vld [vmem:[%s4645 + $0x11c] sm:$0xf]
        %v4718 = vld [vmem:[%s4645 + $0x120] sm:$0xf]
        %v4719 = vld [vmem:[%s4645 + $0x124] sm:$0xf]
        %v4720 = vld [vmem:[%s4645 + $0x128] sm:$0xf]
        %v4721 = vld [vmem:[%s4645 + $0x12c] sm:$0xf]
        %v4722 = vld [vmem:[%s4645 + $0x130] sm:$0xf]
        %v4723 = vld [vmem:[%s4645 + $0x134] sm:$0xf]
        %v4724 = vld [vmem:[%s4645 + $0x138] sm:$0xf]
        %v4725 = vld [vmem:[%s4645 + $0x13c] sm:$0xf]
        %v4726 = vld [vmem:[%s4645 + $0x140] sm:$0xf]
        %v4727 = vld [vmem:[%s4645 + $0x144] sm:$0xf]
        %v4728 = vld [vmem:[%s4645 + $0x148] sm:$0xf]
        %v4729 = vld [vmem:[%s4645 + $0x14c] sm:$0xf]
        %v4730 = vld [vmem:[%s4645 + $0x150] sm:$0xf]
        %v4731 = vld [vmem:[%s4645 + $0x154] sm:$0xf]
        %v4732 = vld [vmem:[%s4645 + $0x158] sm:$0xf]
        %v4733 = vld [vmem:[%s4645 + $0x15c] sm:$0xf]
        %v4734 = vld [vmem:[%s4645 + $0x160] sm:$0xf]
        %v4735 = vld [vmem:[%s4645 + $0x164] sm:$0xf]
        %v4736 = vld [vmem:[%s4645 + $0x168] sm:$0xf]
        %v4737 = vld [vmem:[%s4645 + $0x16c] sm:$0xf]
        %v4738 = vld [vmem:[%s4645 + $0x170] sm:$0xf]
        %v4739 = vld [vmem:[%s4645 + $0x174] sm:$0xf]
        %v4740 = vld [vmem:[%s4645 + $0x178] sm:$0xf]
        %v4741 = vld [vmem:[%s4645 + $0x17c] sm:$0xf]
        %v4742 = vld [vmem:[%s4645 + $0x180] sm:$0xf]
        %v4743 = vld [vmem:[%s4645 + $0x184] sm:$0xf]
        %v4744 = vld [vmem:[%s4645 + $0x188] sm:$0xf]
        %v4745 = vld [vmem:[%s4645 + $0x18c] sm:$0xf]
        %v4746 = vld [vmem:[%s4645 + $0x190] sm:$0xf]
        %v4747 = vld [vmem:[%s4645 + $0x194] sm:$0xf]
        %v4748 = vld [vmem:[%s4645 + $0x198] sm:$0xf]
        %v4749 = vld [vmem:[%s4645 + $0x19c] sm:$0xf]
        %v4750 = vld [vmem:[%s4645 + $0x1a0] sm:$0xf]
        %v4751 = vld [vmem:[%s4645 + $0x1a4] sm:$0xf]
        %v4752 = vld [vmem:[%s4645 + $0x1a8] sm:$0xf]
        %v4753 = vld [vmem:[%s4645 + $0x1ac] sm:$0xf]
        %v4754 = vld [vmem:[%s4645 + $0x1b0] sm:$0xf]
        %v4755 = vld [vmem:[%s4645 + $0x1b4] sm:$0xf]
        %v4756 = vld [vmem:[%s4645 + $0x1b8] sm:$0xf]
        %v4757 = vld [vmem:[%s4645 + $0x1bc] sm:$0xf]
        %v4758 = vld [vmem:[%s4645 + $0x1c0] sm:$0xf]
        %v4759 = vld [vmem:[%s4645 + $0x1c4] sm:$0xf]
        %v4760 = vld [vmem:[%s4645 + $0x1c8] sm:$0xf]
        %v4761 = vld [vmem:[%s4645 + $0x1cc] sm:$0xf]
        %v4762 = vld [vmem:[%s4645 + $0x1d0] sm:$0xf]
        %v4763 = vld [vmem:[%s4645 + $0x1d4] sm:$0xf]
        %v4764 = vld [vmem:[%s4645 + $0x1d8] sm:$0xf]
        %v4765 = vld [vmem:[%s4645 + $0x1dc] sm:$0xf]
        %v4766 = vld [vmem:[%s4645 + $0x1e0] sm:$0xf]
        %v4767 = vld [vmem:[%s4645 + $0x1e4] sm:$0xf]
        %v4768 = vld [vmem:[%s4645 + $0x1e8] sm:$0xf]
        %v4769 = vld [vmem:[%s4645 + $0x1ec] sm:$0xf]
        %v4770 = vld [vmem:[%s4645 + $0x1f0] sm:$0xf]
        %v4771 = vld [vmem:[%s4645 + $0x1f4] sm:$0xf]
        %v4772 = vld [vmem:[%s4645 + $0x1f8] sm:$0xf]
        %v4773 = vld [vmem:[%s4645 + $0x1fc] sm:$0xf]
        %v4774 = vld [vmem:[%s4645 + $0x200] sm:$0xf]
        %v4775 = vld [vmem:[%s4645 + $0x204] sm:$0xf]
        %v4776 = vld [vmem:[%s4645 + $0x208] sm:$0xf]
        %v4777 = vld [vmem:[%s4645 + $0x20c] sm:$0xf]
        %v4778 = vld [vmem:[%s4645 + $0x210] sm:$0xf]
        %v4779 = vld [vmem:[%s4645 + $0x214] sm:$0xf]
        %v4780 = vld [vmem:[%s4645 + $0x218] sm:$0xf]
        %v4781 = vld [vmem:[%s4645 + $0x21c] sm:$0xf]
        %v4782 = vld [vmem:[%s4645 + $0x220] sm:$0xf]
        %v4783 = vld [vmem:[%s4645 + $0x224] sm:$0xf]
        %v4784 = vld [vmem:[%s4645 + $0x228] sm:$0xf]
        %v4785 = vld [vmem:[%s4645 + $0x22c] sm:$0xf]
        %v4786 = vld [vmem:[%s4645 + $0x230] sm:$0xf]
        %v4787 = vld [vmem:[%s4645 + $0x234] sm:$0xf]
        %v4788 = vld [vmem:[%s4645 + $0x238] sm:$0xf]
        %v4789 = vld [vmem:[%s4645 + $0x23c] sm:$0xf]
        %s4790 = scalar_lea.vmem %s336, 1
        %v4791 = vld [vmem:[%s4790] sm:$0x1]
        %v4793 = vlaneseq
        %v4794 = vshrl.u32 %v4793, 7
        %v4795 = vsub.s32 0, %v4794
        %v4796 = vrot.slane %v4791, %v4795
        %v4843 = vunpack.c.l.b16 %v4600
        %v4844 = vunpack.c.h.b16 %v4600
        %v4845 = vunpack.c.l.b16 %v4601
        %v4846 = vunpack.c.h.b16 %v4601
        %v4847 = vunpack.c.l.b16 %v4602
        %v4848 = vunpack.c.h.b16 %v4602
        %v4849 = vunpack.c.l.b16 %v4603
        %v4850 = vunpack.c.h.b16 %v4603
        %v4851 = vunpack.c.l.b16 %v4604
        %v4852 = vunpack.c.l.b16 %v4605
        %v4853 = vunpack.c.h.b16 %v4605
        %v4854 = vunpack.c.l.b16 %v4606
        %v4855 = vunpack.c.h.b16 %v4606
        %v4856 = vunpack.c.l.b16 %v4607
        %v4857 = vunpack.c.h.b16 %v4607
        %v4858 = vunpack.c.l.b16 %v4608
        %v4859 = vunpack.c.h.b16 %v4608
        %v4860 = vunpack.c.l.b16 %v4609
        %v4861 = vunpack.c.l.b16 %v4610
        %v4862 = vunpack.c.h.b16 %v4610
        %v4863 = vunpack.c.l.b16 %v4611
        %v4864 = vunpack.c.h.b16 %v4611
        %v4865 = vunpack.c.l.b16 %v4612
        %v4866 = vunpack.c.h.b16 %v4612
        %v4867 = vunpack.c.l.b16 %v4613
        %v4868 = vunpack.c.h.b16 %v4613
        %v4869 = vunpack.c.l.b16 %v4614
        %v4870 = vunpack.c.l.b16 %v4615
        %v4871 = vunpack.c.h.b16 %v4615
        %v4872 = vunpack.c.l.b16 %v4616
        %v4873 = vunpack.c.h.b16 %v4616
        %v4874 = vunpack.c.l.b16 %v4617
        %v4875 = vunpack.c.h.b16 %v4617
        %v4876 = vunpack.c.l.b16 %v4618
        %v4877 = vunpack.c.h.b16 %v4618
        %v4878 = vunpack.c.l.b16 %v4619
        %v4879 = vunpack.c.l.b16 %v4620
        %v4880 = vunpack.c.h.b16 %v4620
        %v4881 = vunpack.c.l.b16 %v4621
        %v4882 = vunpack.c.h.b16 %v4621
        %v4883 = vunpack.c.l.b16 %v4622
        %v4884 = vunpack.c.h.b16 %v4622
        %v4885 = vunpack.c.l.b16 %v4623
        %v4886 = vunpack.c.h.b16 %v4623
        %v4887 = vunpack.c.l.b16 %v4624
        %v4888 = vunpack.c.l.b16 %v4625
        %v4889 = vunpack.c.h.b16 %v4625
        %v4890 = vunpack.c.l.b16 %v4626
        %v4891 = vunpack.c.h.b16 %v4626
        %v4892 = vunpack.c.l.b16 %v4627
        %v4893 = vunpack.c.h.b16 %v4627
        %v4894 = vunpack.c.l.b16 %v4628
        %v4895 = vunpack.c.h.b16 %v4628
        %v4896 = vunpack.c.l.b16 %v4629
        %v4897 = vunpack.c.l.b16 %v4630
        %v4898 = vunpack.c.h.b16 %v4630
        %v4899 = vunpack.c.l.b16 %v4631
        %v4900 = vunpack.c.h.b16 %v4631
        %v4901 = vunpack.c.l.b16 %v4632
        %v4902 = vunpack.c.h.b16 %v4632
        %v4903 = vunpack.c.l.b16 %v4633
        %v4904 = vunpack.c.h.b16 %v4633
        %v4905 = vunpack.c.l.b16 %v4634
        %v4906 = vunpack.c.l.b16 %v4635
        %v4907 = vunpack.c.h.b16 %v4635
        %v4908 = vunpack.c.l.b16 %v4636
        %v4909 = vunpack.c.h.b16 %v4636
        %v4910 = vunpack.c.l.b16 %v4637
        %v4911 = vunpack.c.h.b16 %v4637
        %v4912 = vunpack.c.l.b16 %v4638
        %v4913 = vunpack.c.h.b16 %v4638
        %v4914 = vunpack.c.l.b16 %v4639
        %v4915 = vunpack.c.l.b16 %v4640
        %v4916 = vunpack.c.h.b16 %v4640
        %v4917 = vunpack.c.l.b16 %v4641
        %v4918 = vunpack.c.h.b16 %v4641
        %v4919 = vunpack.c.l.b16 %v4642
        %v4920 = vunpack.c.h.b16 %v4642
        %v4921 = vunpack.c.l.b16 %v4643
        %v4922 = vunpack.c.h.b16 %v4643
        %v4923 = vunpack.c.l.b16 %v4644
        %v4924 = vpack.c.b16 %v4852, %v4843
        %v4925 = vpack.c.b16 %v4853, %v4844
        %v4926 = vpack.c.b16 %v4854, %v4845
        %v4927 = vpack.c.b16 %v4855, %v4846
        %v4928 = vpack.c.b16 %v4856, %v4847
        %v4929 = vpack.c.b16 %v4857, %v4848
        %v4930 = vpack.c.b16 %v4858, %v4849
        %v4931 = vpack.c.b16 %v4859, %v4850
        %v4932 = vpack.c.b16 %v4860, %v4851
        %v4933 = vpack.c.b16 %v4870, %v4861
        %v4934 = vpack.c.b16 %v4871, %v4862
        %v4935 = vpack.c.b16 %v4872, %v4863
        %v4936 = vpack.c.b16 %v4873, %v4864
        %v4937 = vpack.c.b16 %v4874, %v4865
        %v4938 = vpack.c.b16 %v4875, %v4866
        %v4939 = vpack.c.b16 %v4876, %v4867
        %v4940 = vpack.c.b16 %v4877, %v4868
        %v4941 = vpack.c.b16 %v4878, %v4869
        %v4942 = vpack.c.b16 %v4888, %v4879
        %v4943 = vpack.c.b16 %v4889, %v4880
        %v4944 = vpack.c.b16 %v4890, %v4881
        %v4945 = vpack.c.b16 %v4891, %v4882
        %v4946 = vpack.c.b16 %v4892, %v4883
        %v4947 = vpack.c.b16 %v4893, %v4884
        %v4948 = vpack.c.b16 %v4894, %v4885
        %v4949 = vpack.c.b16 %v4895, %v4886
        %v4950 = vpack.c.b16 %v4896, %v4887
        %v4951 = vpack.c.b16 %v4906, %v4897
        %v4952 = vpack.c.b16 %v4907, %v4898
        %v4953 = vpack.c.b16 %v4908, %v4899
        %v4954 = vpack.c.b16 %v4909, %v4900
        %v4955 = vpack.c.b16 %v4910, %v4901
        %v4956 = vpack.c.b16 %v4911, %v4902
        %v4957 = vpack.c.b16 %v4912, %v4903
        %v4958 = vpack.c.b16 %v4913, %v4904
        %v4959 = vpack.c.b16 %v4914, %v4905
        %v4960 = vpack.c.b16 %v4915, %v4915
        %v4961 = vpack.c.b16 %v4916, %v4916
        %v4962 = vpack.c.b16 %v4917, %v4917
        %v4963 = vpack.c.b16 %v4918, %v4918
        %v4964 = vpack.c.b16 %v4919, %v4919
        %v4965 = vpack.c.b16 %v4920, %v4920
        %v4966 = vpack.c.b16 %v4921, %v4921
        %v4967 = vpack.c.b16 %v4922, %v4922
        %v4968 = vpack.c.b16 %v4923, %v4923
        %v5158 = vunpack.c.l.b16 %v4646
        %v5159 = vunpack.c.l.b16 %v4647
        %v5160 = vunpack.c.l.b16 %v4648
        %v5161 = vunpack.c.l.b16 %v4649
        %v5162 = vunpack.c.l.b16 %v4650
        %v5163 = vunpack.c.l.b16 %v4651
        %v5164 = vunpack.c.l.b16 %v4652
        %v5165 = vunpack.c.l.b16 %v4653
        %v5166 = vunpack.c.l.b16 %v4654
        %v5167 = vunpack.c.l.b16 %v4655
        %v5168 = vunpack.c.l.b16 %v4656
        %v5169 = vunpack.c.l.b16 %v4657
        %v5170 = vunpack.c.l.b16 %v4658
        %v5171 = vunpack.c.l.b16 %v4659
        %v5172 = vunpack.c.l.b16 %v4660
        %v5173 = vunpack.c.l.b16 %v4661
        %v5174 = vunpack.c.l.b16 %v4662
        %v5175 = vunpack.c.l.b16 %v4663
        %v5176 = vunpack.c.l.b16 %v4664
        %v5177 = vunpack.c.l.b16 %v4665
        %v5178 = vunpack.c.l.b16 %v4666
        %v5179 = vunpack.c.l.b16 %v4667
        %v5180 = vunpack.c.l.b16 %v4668
        %v5181 = vunpack.c.l.b16 %v4669
        %v5182 = vunpack.c.l.b16 %v4670
        %v5183 = vunpack.c.l.b16 %v4671
        %v5184 = vunpack.c.l.b16 %v4672
        %v5185 = vunpack.c.l.b16 %v4673
        %v5186 = vunpack.c.l.b16 %v4674
        %v5187 = vunpack.c.l.b16 %v4675
        %v5188 = vunpack.c.l.b16 %v4676
        %v5189 = vunpack.c.l.b16 %v4677
        %v5190 = vunpack.c.l.b16 %v4678
        %v5191 = vunpack.c.l.b16 %v4679
        %v5192 = vunpack.c.l.b16 %v4680
        %v5193 = vunpack.c.l.b16 %v4681
        %v5194 = vunpack.c.l.b16 %v4682
        %v5195 = vunpack.c.l.b16 %v4683
        %v5196 = vunpack.c.l.b16 %v4684
        %v5197 = vunpack.c.l.b16 %v4685
        %v5198 = vunpack.c.l.b16 %v4686
        %v5199 = vunpack.c.l.b16 %v4687
        %v5200 = vunpack.c.l.b16 %v4688
        %v5201 = vunpack.c.l.b16 %v4689
        %v5202 = vunpack.c.l.b16 %v4690
        %v5203 = vunpack.c.l.b16 %v4691
        %v5204 = vunpack.c.l.b16 %v4692
        %v5205 = vunpack.c.l.b16 %v4693
        %v5206 = vunpack.c.l.b16 %v4694
        %v5207 = vunpack.c.l.b16 %v4695
        %v5208 = vunpack.c.l.b16 %v4696
        %v5209 = vunpack.c.l.b16 %v4697
        %v5210 = vunpack.c.l.b16 %v4698
        %v5211 = vunpack.c.l.b16 %v4699
        %v5212 = vunpack.c.l.b16 %v4700
        %v5213 = vunpack.c.l.b16 %v4701
        %v5214 = vunpack.c.l.b16 %v4702
        %v5215 = vunpack.c.l.b16 %v4703
        %v5216 = vunpack.c.l.b16 %v4704
        %v5217 = vunpack.c.l.b16 %v4705
        %v5218 = vunpack.c.l.b16 %v4706
        %v5219 = vunpack.c.l.b16 %v4707
        %v5220 = vunpack.c.l.b16 %v4708
        %v5221 = vunpack.c.l.b16 %v4709
        %v5222 = vunpack.c.l.b16 %v4710
        %v5223 = vunpack.c.l.b16 %v4711
        %v5224 = vunpack.c.l.b16 %v4712
        %v5225 = vunpack.c.l.b16 %v4713
        %v5226 = vunpack.c.l.b16 %v4714
        %v5227 = vunpack.c.l.b16 %v4715
        %v5228 = vunpack.c.l.b16 %v4716
        %v5229 = vunpack.c.l.b16 %v4717
        %v5230 = vunpack.c.l.b16 %v4718
        %v5231 = vunpack.c.l.b16 %v4719
        %v5232 = vunpack.c.l.b16 %v4720
        %v5233 = vunpack.c.l.b16 %v4721
        %v5234 = vunpack.c.l.b16 %v4722
        %v5235 = vunpack.c.l.b16 %v4723
        %v5236 = vunpack.c.l.b16 %v4724
        %v5237 = vunpack.c.l.b16 %v4725
        %v5238 = vunpack.c.l.b16 %v4726
        %v5239 = vunpack.c.l.b16 %v4727
        %v5240 = vunpack.c.l.b16 %v4728
        %v5241 = vunpack.c.l.b16 %v4729
        %v5242 = vunpack.c.l.b16 %v4730
        %v5243 = vunpack.c.l.b16 %v4731
        %v5244 = vunpack.c.l.b16 %v4732
        %v5245 = vunpack.c.l.b16 %v4733
        %v5246 = vunpack.c.l.b16 %v4734
        %v5247 = vunpack.c.l.b16 %v4735
        %v5248 = vunpack.c.l.b16 %v4736
        %v5249 = vunpack.c.l.b16 %v4737
        %v5250 = vunpack.c.l.b16 %v4738
        %v5251 = vunpack.c.l.b16 %v4739
        %v5252 = vunpack.c.l.b16 %v4740
        %v5253 = vunpack.c.l.b16 %v4741
        %v5254 = vunpack.c.l.b16 %v4742
        %v5255 = vunpack.c.l.b16 %v4743
        %v5256 = vunpack.c.l.b16 %v4744
        %v5257 = vunpack.c.l.b16 %v4745
        %v5258 = vunpack.c.l.b16 %v4746
        %v5259 = vunpack.c.l.b16 %v4747
        %v5260 = vunpack.c.l.b16 %v4748
        %v5261 = vunpack.c.l.b16 %v4749
        %v5262 = vunpack.c.l.b16 %v4750
        %v5263 = vunpack.c.l.b16 %v4751
        %v5264 = vunpack.c.l.b16 %v4752
        %v5265 = vunpack.c.l.b16 %v4753
        %v5266 = vunpack.c.l.b16 %v4754
        %v5267 = vunpack.c.l.b16 %v4755
        %v5268 = vunpack.c.l.b16 %v4756
        %v5269 = vunpack.c.l.b16 %v4757
        %v5270 = vunpack.c.l.b16 %v4758
        %v5271 = vunpack.c.l.b16 %v4759
        %v5272 = vunpack.c.l.b16 %v4760
        %v5273 = vunpack.c.l.b16 %v4761
        %v5274 = vunpack.c.l.b16 %v4762
        %v5275 = vunpack.c.l.b16 %v4763
        %v5276 = vunpack.c.l.b16 %v4764
        %v5277 = vunpack.c.l.b16 %v4765
        %v5278 = vunpack.c.l.b16 %v4766
        %v5279 = vunpack.c.l.b16 %v4767
        %v5280 = vunpack.c.l.b16 %v4768
        %v5281 = vunpack.c.l.b16 %v4769
        %v5282 = vunpack.c.l.b16 %v4770
        %v5283 = vunpack.c.l.b16 %v4771
        %v5284 = vunpack.c.l.b16 %v4772
        %v5285 = vunpack.c.l.b16 %v4773
        %v5286 = vunpack.c.l.b16 %v4774
        %v5287 = vunpack.c.l.b16 %v4775
        %v5288 = vunpack.c.l.b16 %v4776
        %v5289 = vunpack.c.l.b16 %v4777
        %v5290 = vunpack.c.l.b16 %v4778
        %v5291 = vunpack.c.l.b16 %v4779
        %v5292 = vunpack.c.l.b16 %v4780
        %v5293 = vunpack.c.l.b16 %v4781
        %v5294 = vunpack.c.l.b16 %v4782
        %v5295 = vunpack.c.l.b16 %v4783
        %v5296 = vunpack.c.l.b16 %v4784
        %v5297 = vunpack.c.l.b16 %v4785
        %v5298 = vunpack.c.l.b16 %v4786
        %v5299 = vunpack.c.l.b16 %v4787
        %v5300 = vunpack.c.l.b16 %v4788
        %v5301 = vunpack.c.l.b16 %v4789
        %v5302 = vpack.c.b16 %v5159, %v5158
        %v5303 = vpack.c.b16 %v5161, %v5160
        %v5304 = vpack.c.b16 %v5163, %v5162
        %v5305 = vpack.c.b16 %v5165, %v5164
        %v5306 = vpack.c.b16 %v5167, %v5166
        %v5307 = vpack.c.b16 %v5169, %v5168
        %v5308 = vpack.c.b16 %v5171, %v5170
        %v5309 = vpack.c.b16 %v5173, %v5172
        %v5310 = vpack.c.b16 %v5175, %v5174
        %v5311 = vpack.c.b16 %v5177, %v5176
        %v5312 = vpack.c.b16 %v5179, %v5178
        %v5313 = vpack.c.b16 %v5181, %v5180
        %v5314 = vpack.c.b16 %v5183, %v5182
        %v5315 = vpack.c.b16 %v5185, %v5184
        %v5316 = vpack.c.b16 %v5187, %v5186
        %v5317 = vpack.c.b16 %v5189, %v5188
        %v5318 = vpack.c.b16 %v5191, %v5190
        %v5319 = vpack.c.b16 %v5193, %v5192
        %v5320 = vpack.c.b16 %v5195, %v5194
        %v5321 = vpack.c.b16 %v5197, %v5196
        %v5322 = vpack.c.b16 %v5199, %v5198
        %v5323 = vpack.c.b16 %v5201, %v5200
        %v5324 = vpack.c.b16 %v5203, %v5202
        %v5325 = vpack.c.b16 %v5205, %v5204
        %v5326 = vpack.c.b16 %v5207, %v5206
        %v5327 = vpack.c.b16 %v5209, %v5208
        %v5328 = vpack.c.b16 %v5211, %v5210
        %v5329 = vpack.c.b16 %v5213, %v5212
        %v5330 = vpack.c.b16 %v5215, %v5214
        %v5331 = vpack.c.b16 %v5217, %v5216
        %v5332 = vpack.c.b16 %v5219, %v5218
        %v5333 = vpack.c.b16 %v5221, %v5220
        %v5334 = vpack.c.b16 %v5223, %v5222
        %v5335 = vpack.c.b16 %v5225, %v5224
        %v5336 = vpack.c.b16 %v5227, %v5226
        %v5337 = vpack.c.b16 %v5229, %v5228
        %v5338 = vpack.c.b16 %v5231, %v5230
        %v5339 = vpack.c.b16 %v5233, %v5232
        %v5340 = vpack.c.b16 %v5235, %v5234
        %v5341 = vpack.c.b16 %v5237, %v5236
        %v5342 = vpack.c.b16 %v5239, %v5238
        %v5343 = vpack.c.b16 %v5241, %v5240
        %v5344 = vpack.c.b16 %v5243, %v5242
        %v5345 = vpack.c.b16 %v5245, %v5244
        %v5346 = vpack.c.b16 %v5247, %v5246
        %v5347 = vpack.c.b16 %v5249, %v5248
        %v5348 = vpack.c.b16 %v5251, %v5250
        %v5349 = vpack.c.b16 %v5253, %v5252
        %v5350 = vpack.c.b16 %v5255, %v5254
        %v5351 = vpack.c.b16 %v5257, %v5256
        %v5352 = vpack.c.b16 %v5259, %v5258
        %v5353 = vpack.c.b16 %v5261, %v5260
        %v5354 = vpack.c.b16 %v5263, %v5262
        %v5355 = vpack.c.b16 %v5265, %v5264
        %v5356 = vpack.c.b16 %v5267, %v5266
        %v5357 = vpack.c.b16 %v5269, %v5268
        %v5358 = vpack.c.b16 %v5271, %v5270
        %v5359 = vpack.c.b16 %v5273, %v5272
        %v5360 = vpack.c.b16 %v5275, %v5274
        %v5361 = vpack.c.b16 %v5277, %v5276
        %v5362 = vpack.c.b16 %v5279, %v5278
        %v5363 = vpack.c.b16 %v5281, %v5280
        %v5364 = vpack.c.b16 %v5283, %v5282
        %v5365 = vpack.c.b16 %v5285, %v5284
        %v5366 = vpack.c.b16 %v5287, %v5286
        %v5367 = vpack.c.b16 %v5289, %v5288
        %v5368 = vpack.c.b16 %v5291, %v5290
        %v5369 = vpack.c.b16 %v5293, %v5292
        %v5370 = vpack.c.b16 %v5295, %v5294
        %v5371 = vpack.c.b16 %v5297, %v5296
        %v5372 = vpack.c.b16 %v5299, %v5298
        %v5373 = vpack.c.b16 %v5301, %v5300
        %5446 = vmatprep.subr.bf16.mxu0 0
        %5447 = vmatpush1.bf16.msra.mxu0 %v5302
        %5448 = vmatprep.subr.bf16.mxu0 0
        %5449 = vmatpush1.bf16.msra.mxu0 %v5303
        %5450 = vmatprep.subr.bf16.mxu0 0
        %5451 = vmatpush1.bf16.msra.mxu0 %v5304
        %5452 = vmatprep.subr.bf16.mxu0 0
        %5453 = vmatpush1.bf16.msra.mxu0 %v5305
        %5454 = vmatprep.subr.bf16.mxu0 0
        %5455 = vmatpush1.bf16.msra.mxu0 %v5306
        %5456 = vmatprep.subr.bf16.mxu0 0
        %5457 = vmatpush1.bf16.msra.mxu0 %v5307
        %5458 = vmatprep.subr.bf16.mxu0 0
        %5459 = vmatpush1.bf16.msra.mxu0 %v5308
        %5460 = vmatprep.subr.bf16.mxu0 0
        %5461 = vmatpush1.bf16.msra.mxu0 %v5309
        %5462 = vmatprep.subr.bf16.mxu0 0
        %5463 = vmatpush1.bf16.msra.mxu0 %v5310
        %5464 = vmatprep.subr.bf16.mxu0 0
        %5465 = vmatpush1.bf16.msra.mxu0 %v5311
        %5466 = vmatprep.subr.bf16.mxu0 0
        %5467 = vmatpush1.bf16.msra.mxu0 %v5312
        %5468 = vmatprep.subr.bf16.mxu0 0
        %5469 = vmatpush1.bf16.msra.mxu0 %v5313
        %5470 = vmatprep.subr.bf16.mxu0 0
        %5471 = vmatpush1.bf16.msra.mxu0 %v5314
        %5472 = vmatprep.subr.bf16.mxu0 0
        %5473 = vmatpush1.bf16.msra.mxu0 %v5315
        %5474 = vmatprep.subr.bf16.mxu0 0
        %5475 = vmatpush1.bf16.msra.mxu0 %v5316
        %5476 = vmatprep.subr.bf16.mxu0 0
        %5477 = vmatpush1.bf16.msra.mxu0 %v5317
        %5478 = vmatprep.mubr.bf16.mxu0 %v4925
        %5479 = vmatmul.mubr.bf16.gmra.mrb[0].mxu0 %v4924
        %v5480 = vpop.f32.mrb[0].mxu0
        %v5481 = vadd.f32 %v4796, %v5480
        %v5482 = vpop.f32.mrb[0].mxu0
        %v5483 = vpop.f32.mrb[0].mxu0
        %v5484 = vadd.f32 %v4796, %v5483
        %v5485 = vpop.f32.mrb[0].mxu0
        %5486 = vmatprep.mubr.bf16.mxu0 %v4934
        %5487 = vmatmul.mubr.bf16.gmra.mrb[0].mxu0 %v4933
        %v5488 = vpop.f32.mrb[0].mxu0
        %v5489 = vadd.f32 %v4796, %v5488
        %v5490 = vpop.f32.mrb[0].mxu0
        %v5491 = vpop.f32.mrb[0].mxu0
        %v5492 = vadd.f32 %v4796, %v5491
        %v5493 = vpop.f32.mrb[0].mxu0
        %5494 = vmatprep.mubr.bf16.mxu0 %v4943
        %5495 = vmatmul.mubr.bf16.gmra.mrb[0].mxu0 %v4942
        %v5496 = vpop.f32.mrb[0].mxu0
        %v5497 = vadd.f32 %v4796, %v5496
        %v5498 = vpop.f32.mrb[0].mxu0
        %v5499 = vpop.f32.mrb[0].mxu0
        %v5500 = vadd.f32 %v4796, %v5499
        %v5501 = vpop.f32.mrb[0].mxu0
        %5502 = vmatprep.mubr.bf16.mxu0 %v4952
        %5503 = vmatmul.mubr.bf16.gmra.mrb[0].mxu0 %v4951
        %v5504 = vpop.f32.mrb[0].mxu0
        %v5505 = vadd.f32 %v4796, %v5504
        %v5506 = vpop.f32.mrb[0].mxu0
        %v5507 = vpop.f32.mrb[0].mxu0
        %v5508 = vadd.f32 %v4796, %v5507
        %v5509 = vpop.f32.mrb[0].mxu0
        %5510 = vmatprep.mubr.bf16.mxu0 %v4961
        %5511 = vmatmul.mubr.bf16.gmra.mrb[0].mxu0 %v4960
        %v5512 = vpop.f32.mrb[0].mxu0
        %v5513 = vadd.f32 %v4796, %v5512
        %v5514 = vpop.f32.mrb[0].mxu0
        %v5515 = vpop.f32.mrb[0].mxu0
        %v5516 = vpop.f32.mrb[0].mxu0
        %5517 = vdwg.mxu0
        %5518 = vmatprep.subr.bf16.mxu0 0
        %5519 = vmatpush1.bf16.msra.mxu0 %v5318
        %5520 = vmatprep.subr.bf16.mxu0 0
        %5521 = vmatpush1.bf16.msra.mxu0 %v5319
        %5522 = vmatprep.subr.bf16.mxu0 0
        %5523 = vmatpush1.bf16.msra.mxu0 %v5320
        %5524 = vmatprep.subr.bf16.mxu0 0
        %5525 = vmatpush1.bf16.msra.mxu0 %v5321
        %5526 = vmatprep.subr.bf16.mxu0 0
        %5527 = vmatpush1.bf16.msra.mxu0 %v5322
        %5528 = vmatprep.subr.bf16.mxu0 0
        %5529 = vmatpush1.bf16.msra.mxu0 %v5323
        %5530 = vmatprep.subr.bf16.mxu0 0
        %5531 = vmatpush1.bf16.msra.mxu0 %v5324
        %5532 = vmatprep.subr.bf16.mxu0 0
        %5533 = vmatpush1.bf16.msra.mxu0 %v5325
        %5534 = vmatprep.subr.bf16.mxu0 0
        %5535 = vmatpush1.bf16.msra.mxu0 %v5326
        %5536 = vmatprep.subr.bf16.mxu0 0
        %5537 = vmatpush1.bf16.msra.mxu0 %v5327
        %5538 = vmatprep.subr.bf16.mxu0 0
        %5539 = vmatpush1.bf16.msra.mxu0 %v5328
        %5540 = vmatprep.subr.bf16.mxu0 0
        %5541 = vmatpush1.bf16.msra.mxu0 %v5329
        %5542 = vmatprep.subr.bf16.mxu0 0
        %5543 = vmatpush1.bf16.msra.mxu0 %v5330
        %5544 = vmatprep.subr.bf16.mxu0 0
        %5545 = vmatpush1.bf16.msra.mxu0 %v5331
        %5546 = vmatprep.subr.bf16.mxu0 0
        %5547 = vmatpush1.bf16.msra.mxu0 %v5332
        %5548 = vmatprep.subr.bf16.mxu0 0
        %5549 = vmatpush1.bf16.msra.mxu0 %v5333
        %5550 = vmatprep.mubr.bf16.mxu0 %v4927
        %5551 = vmatmul.mubr.bf16.gmra.mrb[0].mxu0 %v4926
        %v5552 = vpop.f32.mrb[0].mxu0
        %v5553 = vadd.f32 %v5481, %v5552
        %v5554 = vpop.f32.mrb[0].mxu0
        %v5555 = vpop.f32.mrb[0].mxu0
        %v5556 = vadd.f32 %v5484, %v5555
        %v5557 = vpop.f32.mrb[0].mxu0
        %5558 = vmatprep.mubr.bf16.mxu0 %v4936
        %5559 = vmatmul.mubr.bf16.gmra.mrb[0].mxu0 %v4935
        %v5560 = vpop.f32.mrb[0].mxu0
        %v5561 = vadd.f32 %v5489, %v5560
        %v5562 = vpop.f32.mrb[0].mxu0
        %v5563 = vpop.f32.mrb[0].mxu0
        %v5564 = vadd.f32 %v5492, %v5563
        %v5565 = vpop.f32.mrb[0].mxu0
        %5566 = vmatprep.mubr.bf16.mxu0 %v4945
        %5567 = vmatmul.mubr.bf16.gmra.mrb[0].mxu0 %v4944
        %v5568 = vpop.f32.mrb[0].mxu0
        %v5569 = vadd.f32 %v5497, %v5568
        %v5570 = vpop.f32.mrb[0].mxu0
        %v5571 = vpop.f32.mrb[0].mxu0
        %v5572 = vadd.f32 %v5500, %v5571
        %v5573 = vpop.f32.mrb[0].mxu0
        %5574 = vmatprep.mubr.bf16.mxu0 %v4954
        %5575 = vmatmul.mubr.bf16.gmra.mrb[0].mxu0 %v4953
        %v5576 = vpop.f32.mrb[0].mxu0
        %v5577 = vadd.f32 %v5505, %v5576
        %v5578 = vpop.f32.mrb[0].mxu0
        %v5579 = vpop.f32.mrb[0].mxu0
        %v5580 = vadd.f32 %v5508, %v5579
        %v5581 = vpop.f32.mrb[0].mxu0
        %5582 = vmatprep.mubr.bf16.mxu0 %v4963
        %5583 = vmatmul.mubr.bf16.gmra.mrb[0].mxu0 %v4962
        %v5584 = vpop.f32.mrb[0].mxu0
        %v5585 = vadd.f32 %v5513, %v5584
        %v5586 = vpop.f32.mrb[0].mxu0
        %v5587 = vpop.f32.mrb[0].mxu0
        %v5588 = vpop.f32.mrb[0].mxu0
        %5589 = vdwg.mxu0
        %5590 = vmatprep.subr.bf16.mxu0 0
        %5591 = vmatpush1.bf16.msra.mxu0 %v5334
        %5592 = vmatprep.subr.bf16.mxu0 0
        %5593 = vmatpush1.bf16.msra.mxu0 %v5335
        %5594 = vmatprep.subr.bf16.mxu0 0
        %5595 = vmatpush1.bf16.msra.mxu0 %v5336
        %5596 = vmatprep.subr.bf16.mxu0 0
        %5597 = vmatpush1.bf16.msra.mxu0 %v5337
        %5598 = vmatprep.subr.bf16.mxu0 0
        %5599 = vmatpush1.bf16.msra.mxu0 %v5338
        %5600 = vmatprep.subr.bf16.mxu0 0
        %5601 = vmatpush1.bf16.msra.mxu0 %v5339
        %5602 = vmatprep.subr.bf16.mxu0 0
        %5603 = vmatpush1.bf16.msra.mxu0 %v5340
        %5604 = vmatprep.subr.bf16.mxu0 0
        %5605 = vmatpush1.bf16.msra.mxu0 %v5341
        %5606 = vmatprep.subr.bf16.mxu0 0
        %5607 = vmatpush1.bf16.msra.mxu0 %v5342
        %5608 = vmatprep.subr.bf16.mxu0 0
        %5609 = vmatpush1.bf16.msra.mxu0 %v5343
        %5610 = vmatprep.subr.bf16.mxu0 0
        %5611 = vmatpush1.bf16.msra.mxu0 %v5344
        %5612 = vmatprep.subr.bf16.mxu0 0
        %5613 = vmatpush1.bf16.msra.mxu0 %v5345
        %5614 = vmatprep.subr.bf16.mxu0 0
        %5615 = vmatpush1.bf16.msra.mxu0 %v5346
        %5616 = vmatprep.subr.bf16.mxu0 0
        %5617 = vmatpush1.bf16.msra.mxu0 %v5347
        %5618 = vmatprep.subr.bf16.mxu0 0
        %5619 = vmatpush1.bf16.msra.mxu0 %v5348
        %5620 = vmatprep.subr.bf16.mxu0 0
        %5621 = vmatpush1.bf16.msra.mxu0 %v5349
        %5622 = vmatprep.mubr.bf16.mxu0 %v4929
        %5623 = vmatmul.mubr.bf16.gmra.mrb[0].mxu0 %v4928
        %v5624 = vpop.f32.mrb[0].mxu0
        %v5625 = vadd.f32 %v5553, %v5624
        %v5626 = vpop.f32.mrb[0].mxu0
        %v5627 = vpop.f32.mrb[0].mxu0
        %v5628 = vadd.f32 %v5556, %v5627
        %v5629 = vpop.f32.mrb[0].mxu0
        %5630 = vmatprep.mubr.bf16.mxu0 %v4938
        %5631 = vmatmul.mubr.bf16.gmra.mrb[0].mxu0 %v4937
        %v5632 = vpop.f32.mrb[0].mxu0
        %v5633 = vadd.f32 %v5561, %v5632
        %v5634 = vpop.f32.mrb[0].mxu0
        %v5635 = vpop.f32.mrb[0].mxu0
        %v5636 = vadd.f32 %v5564, %v5635
        %v5637 = vpop.f32.mrb[0].mxu0
        %5638 = vmatprep.mubr.bf16.mxu0 %v4947
        %5639 = vmatmul.mubr.bf16.gmra.mrb[0].mxu0 %v4946
        %v5640 = vpop.f32.mrb[0].mxu0
        %v5641 = vadd.f32 %v5569, %v5640
        %v5642 = vpop.f32.mrb[0].mxu0
        %v5643 = vpop.f32.mrb[0].mxu0
        %v5644 = vadd.f32 %v5572, %v5643
        %v5645 = vpop.f32.mrb[0].mxu0
        %5646 = vmatprep.mubr.bf16.mxu0 %v4956
        %5647 = vmatmul.mubr.bf16.gmra.mrb[0].mxu0 %v4955
        %v5648 = vpop.f32.mrb[0].mxu0
        %v5649 = vadd.f32 %v5577, %v5648
        %v5650 = vpop.f32.mrb[0].mxu0
        %v5651 = vpop.f32.mrb[0].mxu0
        %v5652 = vadd.f32 %v5580, %v5651
        %v5653 = vpop.f32.mrb[0].mxu0
        %5654 = vmatprep.mubr.bf16.mxu0 %v4965
        %5655 = vmatmul.mubr.bf16.gmra.mrb[0].mxu0 %v4964
        %v5656 = vpop.f32.mrb[0].mxu0
        %v5657 = vadd.f32 %v5585, %v5656
        %v5658 = vpop.f32.mrb[0].mxu0
        %v5659 = vpop.f32.mrb[0].mxu0
        %v5660 = vpop.f32.mrb[0].mxu0
        %5661 = vdwg.mxu0
        %5662 = vmatprep.subr.bf16.mxu0 0
        %5663 = vmatpush1.bf16.msra.mxu0 %v5350
        %5664 = vmatprep.subr.bf16.mxu0 0
        %5665 = vmatpush1.bf16.msra.mxu0 %v5351
        %5666 = vmatprep.subr.bf16.mxu0 0
        %5667 = vmatpush1.bf16.msra.mxu0 %v5352
        %5668 = vmatprep.subr.bf16.mxu0 0
        %5669 = vmatpush1.bf16.msra.mxu0 %v5353
        %5670 = vmatprep.subr.bf16.mxu0 0
        %5671 = vmatpush1.bf16.msra.mxu0 %v5354
        %5672 = vmatprep.subr.bf16.mxu0 0
        %5673 = vmatpush1.bf16.msra.mxu0 %v5355
        %5674 = vmatprep.subr.bf16.mxu0 0
        %5675 = vmatpush1.bf16.msra.mxu0 %v5356
        %5676 = vmatprep.subr.bf16.mxu0 0
        %5677 = vmatpush1.bf16.msra.mxu0 %v5357
        %5678 = vmatprep.subr.bf16.mxu0 0
        %5679 = vmatpush1.bf16.msra.mxu0 %v5358
        %5680 = vmatprep.subr.bf16.mxu0 0
        %5681 = vmatpush1.bf16.msra.mxu0 %v5359
        %5682 = vmatprep.subr.bf16.mxu0 0
        %5683 = vmatpush1.bf16.msra.mxu0 %v5360
        %5684 = vmatprep.subr.bf16.mxu0 0
        %5685 = vmatpush1.bf16.msra.mxu0 %v5361
        %5686 = vmatprep.subr.bf16.mxu0 0
        %5687 = vmatpush1.bf16.msra.mxu0 %v5362
        %5688 = vmatprep.subr.bf16.mxu0 0
        %5689 = vmatpush1.bf16.msra.mxu0 %v5363
        %5690 = vmatprep.subr.bf16.mxu0 0
        %5691 = vmatpush1.bf16.msra.mxu0 %v5364
        %5692 = vmatprep.subr.bf16.mxu0 0
        %5693 = vmatpush1.bf16.msra.mxu0 %v5365
        %5694 = vmatprep.mubr.bf16.mxu0 %v4931
        %5695 = vmatmul.mubr.bf16.gmra.mrb[0].mxu0 %v4930
        %v5696 = vpop.f32.mrb[0].mxu0
        %v5697 = vadd.f32 %v5625, %v5696
        %v5698 = vpop.f32.mrb[0].mxu0
        %v5699 = vpop.f32.mrb[0].mxu0
        %v5700 = vadd.f32 %v5628, %v5699
        %v5701 = vpop.f32.mrb[0].mxu0
        %5702 = vmatprep.mubr.bf16.mxu0 %v4940
        %5703 = vmatmul.mubr.bf16.gmra.mrb[0].mxu0 %v4939
        %v5704 = vpop.f32.mrb[0].mxu0
        %v5705 = vadd.f32 %v5633, %v5704
        %v5706 = vpop.f32.mrb[0].mxu0
        %v5707 = vpop.f32.mrb[0].mxu0
        %v5708 = vadd.f32 %v5636, %v5707
        %v5709 = vpop.f32.mrb[0].mxu0
        %5710 = vmatprep.mubr.bf16.mxu0 %v4949
        %5711 = vmatmul.mubr.bf16.gmra.mrb[0].mxu0 %v4948
        %v5712 = vpop.f32.mrb[0].mxu0
        %v5713 = vadd.f32 %v5641, %v5712
        %v5714 = vpop.f32.mrb[0].mxu0
        %v5715 = vpop.f32.mrb[0].mxu0
        %v5716 = vadd.f32 %v5644, %v5715
        %v5717 = vpop.f32.mrb[0].mxu0
        %5718 = vmatprep.mubr.bf16.mxu0 %v4958
        %5719 = vmatmul.mubr.bf16.gmra.mrb[0].mxu0 %v4957
        %v5720 = vpop.f32.mrb[0].mxu0
        %v5721 = vadd.f32 %v5649, %v5720
        %v5722 = vpop.f32.mrb[0].mxu0
        %v5723 = vpop.f32.mrb[0].mxu0
        %v5724 = vadd.f32 %v5652, %v5723
        %v5725 = vpop.f32.mrb[0].mxu0
        %5726 = vmatprep.mubr.bf16.mxu0 %v4967
        %5727 = vmatmul.mubr.bf16.gmra.mrb[0].mxu0 %v4966
        %v5728 = vpop.f32.mrb[0].mxu0
        %v5729 = vadd.f32 %v5657, %v5728
        %v5730 = vpop.f32.mrb[0].mxu0
        %v5731 = vpop.f32.mrb[0].mxu0
        %v5732 = vpop.f32.mrb[0].mxu0
        %5733 = vdwg.mxu0
        %5734 = vmatprep.subr.bf16.mxu0 0
        %5735 = vmatpush1.bf16.msra.mxu0 %v5366
        %5736 = vmatprep.subr.bf16.mxu0 0
        %5737 = vmatpush1.bf16.msra.mxu0 %v5367
        %5738 = vmatprep.subr.bf16.mxu0 0
        %5739 = vmatpush1.bf16.msra.mxu0 %v5368
        %5740 = vmatprep.subr.bf16.mxu0 0
        %5741 = vmatpush1.bf16.msra.mxu0 %v5369
        %5742 = vmatprep.subr.bf16.mxu0 0
        %5743 = vmatpush1.bf16.msra.mxu0 %v5370
        %5744 = vmatprep.subr.bf16.mxu0 0
        %5745 = vmatpush1.bf16.msra.mxu0 %v5371
        %5746 = vmatprep.subr.bf16.mxu0 0
        %5747 = vmatpush1.bf16.msra.mxu0 %v5372
        %5748 = vmatprep.subr.bf16.mxu0 0
        %5749 = vmatpush1.bf16.msra.mxu0 %v5373
        %5750 = vmatprep.subr.bf16.mxu0 0
        %5751 = vmatpush1.bf16.msra.mxu0 0
        %5752 = vmatprep.subr.bf16.mxu0 0
        %5753 = vmatpush1.bf16.msra.mxu0 0
        %5754 = vmatprep.subr.bf16.mxu0 0
        %5755 = vmatpush1.bf16.msra.mxu0 0
        %5756 = vmatprep.subr.bf16.mxu0 0
        %5757 = vmatpush1.bf16.msra.mxu0 0
        %5758 = vmatprep.subr.bf16.mxu0 0
        %5759 = vmatpush1.bf16.msra.mxu0 0
        %5760 = vmatprep.subr.bf16.mxu0 0
        %5761 = vmatpush1.bf16.msra.mxu0 0
        %5762 = vmatprep.subr.bf16.mxu0 0
        %5763 = vmatpush1.bf16.msra.mxu0 0
        %5764 = vmatprep.subr.bf16.mxu0 0
        %5765 = vmatpush1.bf16.msra.mxu0 0
        %5766 = vmatprep.mubr.bf16.mxu0 0
        %5767 = vmatmul.mubr.bf16.gmra.mrb[0].mxu0 %v4932
        %v5768 = vpop.f32.mrb[0].mxu0
        %v5769 = vadd.f32 %v5697, %v5768
        %v5770 = vpop.f32.mrb[0].mxu0
        %v5771 = vpop.f32.mrb[0].mxu0
        %v5772 = vadd.f32 %v5700, %v5771
        %v5773 = vpop.f32.mrb[0].mxu0
        %5774 = vmatprep.mubr.bf16.mxu0 0
        %5775 = vmatmul.mubr.bf16.gmra.mrb[0].mxu0 %v4941
        %v5776 = vpop.f32.mrb[0].mxu0
        %v5777 = vadd.f32 %v5705, %v5776
        %v5778 = vpop.f32.mrb[0].mxu0
        %v5779 = vpop.f32.mrb[0].mxu0
        %v5780 = vadd.f32 %v5708, %v5779
        %v5781 = vpop.f32.mrb[0].mxu0
        %5782 = vmatprep.mubr.bf16.mxu0 0
        %5783 = vmatmul.mubr.bf16.gmra.mrb[0].mxu0 %v4950
        %v5784 = vpop.f32.mrb[0].mxu0
        %v5785 = vadd.f32 %v5713, %v5784
        %v5786 = vpop.f32.mrb[0].mxu0
        %v5787 = vpop.f32.mrb[0].mxu0
        %v5788 = vadd.f32 %v5716, %v5787
        %v5789 = vpop.f32.mrb[0].mxu0
        %5790 = vmatprep.mubr.bf16.mxu0 0
        %5791 = vmatmul.mubr.bf16.gmra.mrb[0].mxu0 %v4959
        %v5792 = vpop.f32.mrb[0].mxu0
        %v5793 = vadd.f32 %v5721, %v5792
        %v5794 = vpop.f32.mrb[0].mxu0
        %v5795 = vpop.f32.mrb[0].mxu0
        %v5796 = vadd.f32 %v5724, %v5795
        %v5797 = vpop.f32.mrb[0].mxu0
        %5798 = vmatprep.mubr.bf16.mxu0 0
        %5799 = vmatmul.mubr.bf16.gmra.mrb[0].mxu0 %v4968
        %v5800 = vpop.f32.mrb[0].mxu0
        %v5801 = vadd.f32 %v5729, %v5800
        %v5802 = vpop.f32.mrb[0].mxu0
        %v5803 = vpop.f32.mrb[0].mxu0
        %v5804 = vpop.f32.mrb[0].mxu0
        %5805 = vdwg.mxu0
        %v5806 = vmax.f32 %v5769, 0.0
        %v5807 = vmax.f32 %v5772, 0.0
        %v5808 = vmax.f32 %v5777, 0.0
        %v5809 = vmax.f32 %v5780, 0.0
        %v5810 = vmax.f32 %v5785, 0.0
        %v5811 = vmax.f32 %v5788, 0.0
        %v5812 = vmax.f32 %v5793, 0.0
        %v5813 = vmax.f32 %v5796, 0.0
        %v5814 = vmax.f32 %v5801, 0.0
        %v5815 = vsel %vm1572, %v5806, 0.0
        %v5816 = vrot.slane %v5810, 3
        %v5817 = vsel %vm1575, %v5816, %v5815
        %v5818 = vrot.slane %v5806, 1
        %v5819 = vsel %vm1572, %v5818, 0.0
        %v5820 = vrot.slane %v5810, 4
        %v5821 = vsel %vm1575, %v5820, %v5819
        %v5822 = vrot.slane %v5806, 2
        %v5823 = vsel %vm1572, %v5822, 0.0
        %v5824 = vrot.slane %v5810, 5
        %v5825 = vsel %vm1575, %v5824, %v5823
        %v5826 = vrot.slane %v5806, 3
        %v5827 = vsel %vm1572, %v5826, 0.0
        %v5828 = vrot.slane %v5810, 6
        %v5829 = vsel %vm1575, %v5828, %v5827
        %v5830 = vrot.slane %v5806, 4
        %v5831 = vsel %vm1572, %v5830, 0.0
        %v5832 = vrot.slane %v5811, 7
        %v5833 = vsel %vm1575, %v5832, %v5831
        %v5834 = vrot.slane %v5806, 5
        %v5835 = vsel %vm1572, %v5834, 0.0
        %v5836 = vsel %vm1575, %v5811, %v5835
        %v5837 = vrot.slane %v5806, 6
        %v5838 = vsel %vm1572, %v5837, 0.0
        %v5839 = vrot.slane %v5811, 1
        %v5840 = vsel %vm1575, %v5839, %v5838
        %v5841 = vrot.slane %v5806, 7
        %v5842 = vsel %vm1572, %v5841, 0.0
        %v5843 = vrot.slane %v5811, 2
        %v5844 = vsel %vm1575, %v5843, %v5842
        %v5845 = vsel %vm1572, %v5807, 0.0
        %v5846 = vrot.slane %v5811, 3
        %v5847 = vsel %vm1575, %v5846, %v5845
        %v5848 = vrot.slane %v5807, 1
        %v5849 = vsel %vm1572, %v5848, 0.0
        %v5850 = vrot.slane %v5811, 4
        %v5851 = vsel %vm1575, %v5850, %v5849
        %v5852 = vrot.slane %v5807, 2
        %v5853 = vsel %vm1572, %v5852, 0.0
        %v5854 = vrot.slane %v5811, 5
        %v5855 = vsel %vm1575, %v5854, %v5853
        %v5856 = vrot.slane %v5807, 3
        %v5857 = vsel %vm1572, %v5856, 0.0
        %v5858 = vrot.slane %v5811, 6
        %v5859 = vsel %vm1575, %v5858, %v5857
        %v5860 = vrot.slane %v5807, 4
        %v5861 = vsel %vm1572, %v5860, 0.0
        %v5862 = vrot.slane %v5812, 7
        %v5863 = vsel %vm1575, %v5862, %v5861
        %v5864 = vrot.slane %v5807, 5
        %v5865 = vsel %vm1572, %v5864, 0.0
        %v5866 = vsel %vm1575, %v5812, %v5865
        %v5867 = vrot.slane %v5807, 6
        %v5868 = vsel %vm1572, %v5867, 0.0
        %v5869 = vrot.slane %v5812, 1
        %v5870 = vsel %vm1575, %v5869, %v5868
        %v5871 = vrot.slane %v5807, 7
        %v5872 = vsel %vm1572, %v5871, 0.0
        %v5873 = vrot.slane %v5812, 2
        %v5874 = vsel %vm1575, %v5873, %v5872
        %v5875 = vsel %vm1572, %v5808, 0.0
        %v5876 = vrot.slane %v5812, 3
        %v5877 = vsel %vm1575, %v5876, %v5875
        %v5878 = vrot.slane %v5808, 1
        %v5879 = vsel %vm1572, %v5878, 0.0
        %v5880 = vrot.slane %v5812, 4
        %v5881 = vsel %vm1575, %v5880, %v5879
        %v5882 = vrot.slane %v5808, 2
        %v5883 = vsel %vm1572, %v5882, 0.0
        %v5884 = vrot.slane %v5812, 5
        %v5885 = vsel %vm1575, %v5884, %v5883
        %v5886 = vrot.slane %v5808, 3
        %v5887 = vsel %vm1572, %v5886, 0.0
        %v5888 = vrot.slane %v5812, 6
        %v5889 = vsel %vm1575, %v5888, %v5887
        %v5890 = vrot.slane %v5808, 4
        %v5891 = vsel %vm1572, %v5890, 0.0
        %v5892 = vrot.slane %v5813, 7
        %v5893 = vsel %vm1575, %v5892, %v5891
        %v5894 = vrot.slane %v5808, 5
        %v5895 = vsel %vm1572, %v5894, 0.0
        %v5896 = vsel %vm1575, %v5813, %v5895
        %v5897 = vrot.slane %v5808, 6
        %v5898 = vsel %vm1572, %v5897, 0.0
        %v5899 = vrot.slane %v5813, 1
        %v5900 = vsel %vm1575, %v5899, %v5898
        %v5901 = vrot.slane %v5808, 7
        %v5902 = vsel %vm1572, %v5901, 0.0
        %v5903 = vrot.slane %v5813, 2
        %v5904 = vsel %vm1575, %v5903, %v5902
        %v5905 = vsel %vm1572, %v5809, 0.0
        %v5906 = vrot.slane %v5813, 3
        %v5907 = vsel %vm1575, %v5906, %v5905
        %v5908 = vrot.slane %v5809, 1
        %v5909 = vsel %vm1572, %v5908, 0.0
        %v5910 = vrot.slane %v5813, 4
        %v5911 = vsel %vm1575, %v5910, %v5909
        %v5912 = vrot.slane %v5809, 2
        %v5913 = vsel %vm1572, %v5912, 0.0
        %v5914 = vrot.slane %v5813, 5
        %v5915 = vsel %vm1575, %v5914, %v5913
        %v5916 = vrot.slane %v5809, 3
        %v5917 = vsel %vm1572, %v5916, 0.0
        %v5918 = vrot.slane %v5813, 6
        %v5919 = vsel %vm1575, %v5918, %v5917
        %v5920 = vrot.slane %v5809, 4
        %v5921 = vsel %vm1572, %v5920, 0.0
        %v5922 = vrot.slane %v5814, 7
        %v5923 = vsel %vm1575, %v5922, %v5921
        %v5924 = vrot.slane %v5809, 5
        %v5925 = vsel %vm1572, %v5924, 0.0
        %v5926 = vsel %vm1575, %v5814, %v5925
        %v5927 = vrot.slane %v5809, 6
        %v5928 = vsel %vm1572, %v5927, 0.0
        %v5929 = vrot.slane %v5814, 1
        %v5930 = vsel %vm1575, %v5929, %v5928
        %v5931 = vrot.slane %v5809, 7
        %v5932 = vsel %vm1572, %v5931, 0.0
        %v5933 = vrot.slane %v5814, 2
        %v5934 = vsel %vm1575, %v5933, %v5932
        %v5935 = vsel %vm1572, %v5810, 0.0
        %v5936 = vrot.slane %v5814, 3
        %v5937 = vsel %vm1575, %v5936, %v5935
        %v5938 = vrot.slane %v5810, 1
        %v5939 = vsel %vm1572, %v5938, 0.0
        %v5940 = vrot.slane %v5814, 4
        %v5941 = vsel %vm1575, %v5940, %v5939
        %v5942 = vrot.slane %v5810, 2
        %v5943 = vsel %vm1572, %v5942, 0.0
        %v5944 = vrot.slane %v5814, 5
        %v5945 = vsel %vm1575, %v5944, %v5943
        %v5946 = vsel %vm1572, %v5816, 0.0
        %v5947 = vrot.slane %v5814, 6
        %v5948 = vsel %vm1575, %v5947, %v5946
        %v5949 = vpack.c.bf16 %v5817, %v5817
        %v5950 = vpack.c.bf16 %v5821, %v5821
        %v5951 = vpack.c.bf16 %v5825, %v5825
        %v5952 = vpack.c.bf16 %v5829, %v5829
        %v5953 = vpack.c.bf16 %v5833, %v5833
        %v5954 = vpack.c.bf16 %v5836, %v5836
        %v5955 = vpack.c.bf16 %v5840, %v5840
        %v5956 = vpack.c.bf16 %v5844, %v5844
        %v5957 = vpack.c.bf16 %v5847, %v5847
        %v5958 = vpack.c.bf16 %v5851, %v5851
        %v5959 = vpack.c.bf16 %v5855, %v5855
        %v5960 = vpack.c.bf16 %v5859, %v5859
        %v5961 = vpack.c.bf16 %v5863, %v5863
        %v5962 = vpack.c.bf16 %v5866, %v5866
        %v5963 = vpack.c.bf16 %v5870, %v5870
        %v5964 = vpack.c.bf16 %v5874, %v5874
        %v5965 = vpack.c.bf16 %v5877, %v5877
        %v5966 = vpack.c.bf16 %v5881, %v5881
        %v5967 = vpack.c.bf16 %v5885, %v5885
        %v5968 = vpack.c.bf16 %v5889, %v5889
        %v5969 = vpack.c.bf16 %v5893, %v5893
        %v5970 = vpack.c.bf16 %v5896, %v5896
        %v5971 = vpack.c.bf16 %v5900, %v5900
        %v5972 = vpack.c.bf16 %v5904, %v5904
        %v5973 = vpack.c.bf16 %v5907, %v5907
        %v5974 = vpack.c.bf16 %v5911, %v5911
        %v5975 = vpack.c.bf16 %v5915, %v5915
        %v5976 = vpack.c.bf16 %v5919, %v5919
        %v5977 = vpack.c.bf16 %v5923, %v5923
        %v5978 = vpack.c.bf16 %v5926, %v5926
        %v5979 = vpack.c.bf16 %v5930, %v5930
        %v5980 = vpack.c.bf16 %v5934, %v5934
        %v5981 = vpack.c.bf16 %v5937, %v5937
        %v5982 = vpack.c.bf16 %v5941, %v5941
        %v5983 = vpack.c.bf16 %v5945, %v5945
        %v5984 = vpack.c.bf16 %v5948, %v5948
        %s5985 = scalar_lea.vmem %s343, 2736
        %v5986 = vld [vmem:[%s5985] sm:$0xff]
        %v5987 = vld [vmem:[%s5985 + $0x8] sm:$0xff]
        %v5988 = vld [vmem:[%s5985 + $0x10] sm:$0xff]
        %v5989 = vld [vmem:[%s5985 + $0x18] sm:$0xff]
        %v5990 = vld [vmem:[%s5985 + $0x20] sm:$0xff]
        %v5991 = vld [vmem:[%s5985 + $0x28] sm:$0xff]
        %v5992 = vld [vmem:[%s5985 + $0x30] sm:$0xff]
        %v5993 = vld [vmem:[%s5985 + $0x38] sm:$0xff]
        %v5994 = vld [vmem:[%s5985 + $0x40] sm:$0xff]
        %v5995 = vld [vmem:[%s5985 + $0x48] sm:$0xff]
        %v5996 = vld [vmem:[%s5985 + $0x50] sm:$0xff]
        %v5997 = vld [vmem:[%s5985 + $0x58] sm:$0xff]
        %v5998 = vld [vmem:[%s5985 + $0x60] sm:$0xff]
        %v5999 = vld [vmem:[%s5985 + $0x68] sm:$0xff]
        %v6000 = vld [vmem:[%s5985 + $0x70] sm:$0xff]
        %v6001 = vld [vmem:[%s5985 + $0x78] sm:$0xff]
        %v6002 = vld [vmem:[%s5985 + $0x80] sm:$0xff]
        %v6003 = vld [vmem:[%s5985 + $0x88] sm:$0xff]
        %v6004 = vld [vmem:[%s5985 + $0x90] sm:$0xff]
        %v6005 = vld [vmem:[%s5985 + $0x98] sm:$0xff]
        %v6006 = vld [vmem:[%s5985 + $0xa0] sm:$0xff]
        %v6007 = vld [vmem:[%s5985 + $0xa8] sm:$0xff]
        %v6008 = vld [vmem:[%s5985 + $0xb0] sm:$0xff]
        %v6009 = vld [vmem:[%s5985 + $0xb8] sm:$0xff]
        %v6010 = vld [vmem:[%s5985 + $0xc0] sm:$0xff]
        %v6011 = vld [vmem:[%s5985 + $0xc8] sm:$0xff]
        %v6012 = vld [vmem:[%s5985 + $0xd0] sm:$0xff]
        %v6013 = vld [vmem:[%s5985 + $0xd8] sm:$0xff]
        %v6014 = vld [vmem:[%s5985 + $0xe0] sm:$0xff]
        %v6015 = vld [vmem:[%s5985 + $0xe8] sm:$0xff]
        %v6016 = vld [vmem:[%s5985 + $0xf0] sm:$0xff]
        %v6017 = vld [vmem:[%s5985 + $0xf8] sm:$0xff]
        %v6018 = vld [vmem:[%s5985 + $0x100] sm:$0xff]
        %v6019 = vld [vmem:[%s5985 + $0x108] sm:$0xff]
        %v6020 = vld [vmem:[%s5985 + $0x110] sm:$0xff]
        %v6021 = vld [vmem:[%s5985 + $0x118] sm:$0xff]
        %v6022 = vld [vmem:[%s5985 + $0x120] sm:$0xff]
        %v6023 = vld [vmem:[%s5985 + $0x128] sm:$0xff]
        %v6024 = vld [vmem:[%s5985 + $0x130] sm:$0xff]
        %v6025 = vld [vmem:[%s5985 + $0x138] sm:$0xff]
        %v6026 = vld [vmem:[%s5985 + $0x140] sm:$0xff]
        %v6027 = vld [vmem:[%s5985 + $0x148] sm:$0xff]
        %v6028 = vld [vmem:[%s5985 + $0x150] sm:$0xff]
        %v6029 = vld [vmem:[%s5985 + $0x158] sm:$0xff]
        %v6030 = vld [vmem:[%s5985 + $0x160] sm:$0xff]
        %v6031 = vld [vmem:[%s5985 + $0x168] sm:$0xff]
        %v6032 = vld [vmem:[%s5985 + $0x170] sm:$0xff]
        %v6033 = vld [vmem:[%s5985 + $0x178] sm:$0xff]
        %v6034 = vld [vmem:[%s5985 + $0x180] sm:$0xff]
        %v6035 = vld [vmem:[%s5985 + $0x188] sm:$0xff]
        %v6036 = vld [vmem:[%s5985 + $0x190] sm:$0xff]
        %v6037 = vld [vmem:[%s5985 + $0x198] sm:$0xff]
        %v6038 = vld [vmem:[%s5985 + $0x1a0] sm:$0xff]
        %v6039 = vld [vmem:[%s5985 + $0x1a8] sm:$0xff]
        %v6040 = vld [vmem:[%s5985 + $0x1b0] sm:$0xff]
        %v6041 = vld [vmem:[%s5985 + $0x1b8] sm:$0xff]
        %v6042 = vld [vmem:[%s5985 + $0x1c0] sm:$0xff]
        %v6043 = vld [vmem:[%s5985 + $0x1c8] sm:$0xff]
        %v6044 = vld [vmem:[%s5985 + $0x1d0] sm:$0xff]
        %v6045 = vld [vmem:[%s5985 + $0x1d8] sm:$0xff]
        %v6046 = vld [vmem:[%s5985 + $0x1e0] sm:$0xff]
        %v6047 = vld [vmem:[%s5985 + $0x1e8] sm:$0xff]
        %v6048 = vld [vmem:[%s5985 + $0x1f0] sm:$0xff]
        %v6049 = vld [vmem:[%s5985 + $0x1f8] sm:$0xff]
        %v6050 = vld [vmem:[%s5985 + $0x200] sm:$0xff]
        %v6051 = vld [vmem:[%s5985 + $0x208] sm:$0xff]
        %v6052 = vld [vmem:[%s5985 + $0x210] sm:$0xff]
        %v6053 = vld [vmem:[%s5985 + $0x218] sm:$0xff]
        %v6054 = vld [vmem:[%s5985 + $0x220] sm:$0xff]
        %v6055 = vld [vmem:[%s5985 + $0x228] sm:$0xff]
        %v6056 = vld [vmem:[%s5985 + $0x230] sm:$0xff]
        %v6057 = vld [vmem:[%s5985 + $0x238] sm:$0xff]
        %v6058 = vld [vmem:[%s5985 + $0x240] sm:$0xff]
        %v6059 = vld [vmem:[%s5985 + $0x248] sm:$0xff]
        %v6060 = vld [vmem:[%s5985 + $0x250] sm:$0xff]
        %v6061 = vld [vmem:[%s5985 + $0x258] sm:$0xff]
        %v6062 = vld [vmem:[%s5985 + $0x260] sm:$0xff]
        %v6063 = vld [vmem:[%s5985 + $0x268] sm:$0xff]
        %v6064 = vld [vmem:[%s5985 + $0x270] sm:$0xff]
        %v6065 = vld [vmem:[%s5985 + $0x278] sm:$0xff]
        %v6066 = vld [vmem:[%s5985 + $0x280] sm:$0xff]
        %v6067 = vld [vmem:[%s5985 + $0x288] sm:$0xff]
        %v6068 = vld [vmem:[%s5985 + $0x290] sm:$0xff]
        %v6069 = vld [vmem:[%s5985 + $0x298] sm:$0xff]
        %v6070 = vld [vmem:[%s5985 + $0x2a0] sm:$0xff]
        %v6071 = vld [vmem:[%s5985 + $0x2a8] sm:$0xff]
        %v6072 = vld [vmem:[%s5985 + $0x2b0] sm:$0xff]
        %v6073 = vld [vmem:[%s5985 + $0x2b8] sm:$0xff]
        %v6074 = vld [vmem:[%s5985 + $0x2c0] sm:$0xff]
        %v6075 = vld [vmem:[%s5985 + $0x2c8] sm:$0xff]
        %v6076 = vld [vmem:[%s5985 + $0x2d0] sm:$0xff]
        %v6077 = vld [vmem:[%s5985 + $0x2d8] sm:$0xff]
        %v6078 = vld [vmem:[%s5985 + $0x2e0] sm:$0xff]
        %v6079 = vld [vmem:[%s5985 + $0x2e8] sm:$0xff]
        %v6080 = vld [vmem:[%s5985 + $0x2f0] sm:$0xff]
        %v6081 = vld [vmem:[%s5985 + $0x2f8] sm:$0xff]
        %v6082 = vld [vmem:[%s5985 + $0x300] sm:$0xff]
        %v6083 = vld [vmem:[%s5985 + $0x308] sm:$0xff]
        %v6084 = vld [vmem:[%s5985 + $0x310] sm:$0xff]
        %v6085 = vld [vmem:[%s5985 + $0x318] sm:$0xff]
        %v6086 = vld [vmem:[%s5985 + $0x320] sm:$0xff]
        %v6087 = vld [vmem:[%s5985 + $0x328] sm:$0xff]
        %v6088 = vld [vmem:[%s5985 + $0x330] sm:$0xff]
        %v6089 = vld [vmem:[%s5985 + $0x338] sm:$0xff]
        %v6090 = vld [vmem:[%s5985 + $0x340] sm:$0xff]
        %v6091 = vld [vmem:[%s5985 + $0x348] sm:$0xff]
        %v6092 = vld [vmem:[%s5985 + $0x350] sm:$0xff]
        %v6093 = vld [vmem:[%s5985 + $0x358] sm:$0xff]
        %v6094 = vld [vmem:[%s5985 + $0x360] sm:$0xff]
        %v6095 = vld [vmem:[%s5985 + $0x368] sm:$0xff]
        %v6096 = vld [vmem:[%s5985 + $0x370] sm:$0xff]
        %v6097 = vld [vmem:[%s5985 + $0x378] sm:$0xff]
        %v6098 = vld [vmem:[%s5985 + $0x380] sm:$0xff]
        %v6099 = vld [vmem:[%s5985 + $0x388] sm:$0xff]
        %v6100 = vld [vmem:[%s5985 + $0x390] sm:$0xff]
        %v6101 = vld [vmem:[%s5985 + $0x398] sm:$0xff]
        %v6102 = vld [vmem:[%s5985 + $0x3a0] sm:$0xff]
        %v6103 = vld [vmem:[%s5985 + $0x3a8] sm:$0xff]
        %v6104 = vld [vmem:[%s5985 + $0x3b0] sm:$0xff]
        %v6105 = vld [vmem:[%s5985 + $0x3b8] sm:$0xff]
        %v6106 = vld [vmem:[%s5985 + $0x3c0] sm:$0xff]
        %v6107 = vld [vmem:[%s5985 + $0x3c8] sm:$0xff]
        %v6108 = vld [vmem:[%s5985 + $0x3d0] sm:$0xff]
        %v6109 = vld [vmem:[%s5985 + $0x3d8] sm:$0xff]
        %v6110 = vld [vmem:[%s5985 + $0x3e0] sm:$0xff]
        %v6111 = vld [vmem:[%s5985 + $0x3e8] sm:$0xff]
        %v6112 = vld [vmem:[%s5985 + $0x3f0] sm:$0xff]
        %v6113 = vld [vmem:[%s5985 + $0x3f8] sm:$0xff]
        %v6114 = vld [vmem:[%s5985 + $0x400] sm:$0xff]
        %v6115 = vld [vmem:[%s5985 + $0x408] sm:$0xff]
        %v6116 = vld [vmem:[%s5985 + $0x410] sm:$0xff]
        %v6117 = vld [vmem:[%s5985 + $0x418] sm:$0xff]
        %v6118 = vld [vmem:[%s5985 + $0x420] sm:$0xff]
        %v6119 = vld [vmem:[%s5985 + $0x428] sm:$0xff]
        %v6120 = vld [vmem:[%s5985 + $0x430] sm:$0xff]
        %v6121 = vld [vmem:[%s5985 + $0x438] sm:$0xff]
        %v6122 = vld [vmem:[%s5985 + $0x440] sm:$0xff]
        %v6123 = vld [vmem:[%s5985 + $0x448] sm:$0xff]
        %v6124 = vld [vmem:[%s5985 + $0x450] sm:$0xff]
        %v6125 = vld [vmem:[%s5985 + $0x458] sm:$0xff]
        %v6126 = vld [vmem:[%s5985 + $0x460] sm:$0xff]
        %v6127 = vld [vmem:[%s5985 + $0x468] sm:$0xff]
        %v6128 = vld [vmem:[%s5985 + $0x470] sm:$0xff]
        %v6129 = vld [vmem:[%s5985 + $0x478] sm:$0xff]
        %v6130 = vld [vmem:[%s5985 + $0x480] sm:$0xff]
        %v6131 = vld [vmem:[%s5985 + $0x488] sm:$0xff]
        %v6132 = vld [vmem:[%s5985 + $0x490] sm:$0xff]
        %v6133 = vld [vmem:[%s5985 + $0x498] sm:$0xff]
        %v6134 = vld [vmem:[%s5985 + $0x4a0] sm:$0xff]
        %v6135 = vld [vmem:[%s5985 + $0x4a8] sm:$0xff]
        %v6136 = vld [vmem:[%s5985 + $0x4b0] sm:$0xff]
        %v6137 = vld [vmem:[%s5985 + $0x4b8] sm:$0xff]
        %v6138 = vld [vmem:[%s5985 + $0x4c0] sm:$0xff]
        %v6139 = vld [vmem:[%s5985 + $0x4c8] sm:$0xff]
        %v6140 = vld [vmem:[%s5985 + $0x4d0] sm:$0xff]
        %v6141 = vld [vmem:[%s5985 + $0x4d8] sm:$0xff]
        %v6142 = vld [vmem:[%s5985 + $0x4e0] sm:$0xff]
        %v6143 = vld [vmem:[%s5985 + $0x4e8] sm:$0xff]
        %v6144 = vld [vmem:[%s5985 + $0x4f0] sm:$0xff]
        %v6145 = vld [vmem:[%s5985 + $0x4f8] sm:$0xff]
        %v6146 = vld [vmem:[%s5985 + $0x500] sm:$0xff]
        %v6147 = vld [vmem:[%s5985 + $0x508] sm:$0xff]
        %v6148 = vld [vmem:[%s5985 + $0x510] sm:$0xff]
        %v6149 = vld [vmem:[%s5985 + $0x518] sm:$0xff]
        %v6150 = vld [vmem:[%s5985 + $0x520] sm:$0xff]
        %v6151 = vld [vmem:[%s5985 + $0x528] sm:$0xff]
        %v6152 = vld [vmem:[%s5985 + $0x530] sm:$0xff]
        %v6153 = vld [vmem:[%s5985 + $0x538] sm:$0xff]
        %v6154 = vld [vmem:[%s5985 + $0x540] sm:$0xff]
        %v6155 = vld [vmem:[%s5985 + $0x548] sm:$0xff]
        %v6156 = vld [vmem:[%s5985 + $0x550] sm:$0xff]
        %v6157 = vld [vmem:[%s5985 + $0x558] sm:$0xff]
        %v6158 = vld [vmem:[%s5985 + $0x560] sm:$0xff]
        %v6159 = vld [vmem:[%s5985 + $0x568] sm:$0xff]
        %v6160 = vld [vmem:[%s5985 + $0x570] sm:$0xff]
        %v6161 = vld [vmem:[%s5985 + $0x578] sm:$0xff]
        %v6162 = vld [vmem:[%s5985 + $0x580] sm:$0xff]
        %v6163 = vld [vmem:[%s5985 + $0x588] sm:$0xff]
        %v6164 = vld [vmem:[%s5985 + $0x590] sm:$0xff]
        %v6165 = vld [vmem:[%s5985 + $0x598] sm:$0xff]
        %v6166 = vld [vmem:[%s5985 + $0x5a0] sm:$0xff]
        %v6167 = vld [vmem:[%s5985 + $0x5a8] sm:$0xff]
        %v6168 = vld [vmem:[%s5985 + $0x5b0] sm:$0xff]
        %v6169 = vld [vmem:[%s5985 + $0x5b8] sm:$0xff]
        %v6170 = vld [vmem:[%s5985 + $0x5c0] sm:$0xff]
        %v6171 = vld [vmem:[%s5985 + $0x5c8] sm:$0xff]
        %v6172 = vld [vmem:[%s5985 + $0x5d0] sm:$0xff]
        %v6173 = vld [vmem:[%s5985 + $0x5d8] sm:$0xff]
        %v6174 = vld [vmem:[%s5985 + $0x5e0] sm:$0xff]
        %v6175 = vld [vmem:[%s5985 + $0x5e8] sm:$0xff]
        %v6176 = vld [vmem:[%s5985 + $0x5f0] sm:$0xff]
        %v6177 = vld [vmem:[%s5985 + $0x5f8] sm:$0xff]
        %v6178 = vld [vmem:[%s5985 + $0x600] sm:$0xff]
        %v6179 = vld [vmem:[%s5985 + $0x608] sm:$0xff]
        %v6180 = vld [vmem:[%s5985 + $0x610] sm:$0xff]
        %v6181 = vld [vmem:[%s5985 + $0x618] sm:$0xff]
        %v6182 = vld [vmem:[%s5985 + $0x620] sm:$0xff]
        %v6183 = vld [vmem:[%s5985 + $0x628] sm:$0xff]
        %v6184 = vld [vmem:[%s5985 + $0x630] sm:$0xff]
        %v6185 = vld [vmem:[%s5985 + $0x638] sm:$0xff]
        %v6186 = vld [vmem:[%s5985 + $0x640] sm:$0xff]
        %v6187 = vld [vmem:[%s5985 + $0x648] sm:$0xff]
        %v6188 = vld [vmem:[%s5985 + $0x650] sm:$0xff]
        %v6189 = vld [vmem:[%s5985 + $0x658] sm:$0xff]
        %v6190 = vld [vmem:[%s5985 + $0x660] sm:$0xff]
        %v6191 = vld [vmem:[%s5985 + $0x668] sm:$0xff]
        %v6192 = vld [vmem:[%s5985 + $0x670] sm:$0xff]
        %v6193 = vld [vmem:[%s5985 + $0x678] sm:$0xff]
        %v6194 = vld [vmem:[%s5985 + $0x680] sm:$0xff]
        %v6195 = vld [vmem:[%s5985 + $0x688] sm:$0xff]
        %v6196 = vld [vmem:[%s5985 + $0x690] sm:$0xff]
        %v6197 = vld [vmem:[%s5985 + $0x698] sm:$0xff]
        %v6198 = vld [vmem:[%s5985 + $0x6a0] sm:$0xff]
        %v6199 = vld [vmem:[%s5985 + $0x6a8] sm:$0xff]
        %v6200 = vld [vmem:[%s5985 + $0x6b0] sm:$0xff]
        %v6201 = vld [vmem:[%s5985 + $0x6b8] sm:$0xff]
        %v6202 = vld [vmem:[%s5985 + $0x6c0] sm:$0xff]
        %v6203 = vld [vmem:[%s5985 + $0x6c8] sm:$0xff]
        %v6204 = vld [vmem:[%s5985 + $0x6d0] sm:$0xff]
        %v6205 = vld [vmem:[%s5985 + $0x6d8] sm:$0xff]
        %v6206 = vld [vmem:[%s5985 + $0x6e0] sm:$0xff]
        %v6207 = vld [vmem:[%s5985 + $0x6e8] sm:$0xff]
        %v6208 = vld [vmem:[%s5985 + $0x6f0] sm:$0xff]
        %v6209 = vld [vmem:[%s5985 + $0x6f8] sm:$0xff]
        %v6210 = vld [vmem:[%s5985 + $0x700] sm:$0xff]
        %v6211 = vld [vmem:[%s5985 + $0x708] sm:$0xff]
        %v6212 = vld [vmem:[%s5985 + $0x710] sm:$0xff]
        %v6213 = vld [vmem:[%s5985 + $0x718] sm:$0xff]
        %v6214 = vld [vmem:[%s5985 + $0x720] sm:$0xff]
        %v6215 = vld [vmem:[%s5985 + $0x728] sm:$0xff]
        %v6216 = vld [vmem:[%s5985 + $0x730] sm:$0xff]
        %v6217 = vld [vmem:[%s5985 + $0x738] sm:$0xff]
        %v6218 = vld [vmem:[%s5985 + $0x740] sm:$0xff]
        %v6219 = vld [vmem:[%s5985 + $0x748] sm:$0xff]
        %v6220 = vld [vmem:[%s5985 + $0x750] sm:$0xff]
        %v6221 = vld [vmem:[%s5985 + $0x758] sm:$0xff]
        %v6222 = vld [vmem:[%s5985 + $0x760] sm:$0xff]
        %v6223 = vld [vmem:[%s5985 + $0x768] sm:$0xff]
        %v6224 = vld [vmem:[%s5985 + $0x770] sm:$0xff]
        %v6225 = vld [vmem:[%s5985 + $0x778] sm:$0xff]
        %v6226 = vld [vmem:[%s5985 + $0x780] sm:$0xff]
        %v6227 = vld [vmem:[%s5985 + $0x788] sm:$0xff]
        %v6228 = vld [vmem:[%s5985 + $0x790] sm:$0xff]
        %v6229 = vld [vmem:[%s5985 + $0x798] sm:$0xff]
        %v6230 = vld [vmem:[%s5985 + $0x7a0] sm:$0xff]
        %v6231 = vld [vmem:[%s5985 + $0x7a8] sm:$0xff]
        %v6232 = vld [vmem:[%s5985 + $0x7b0] sm:$0xff]
        %v6233 = vld [vmem:[%s5985 + $0x7b8] sm:$0xff]
        %v6234 = vld [vmem:[%s5985 + $0x7c0] sm:$0xff]
        %v6235 = vld [vmem:[%s5985 + $0x7c8] sm:$0xff]
        %v6236 = vld [vmem:[%s5985 + $0x7d0] sm:$0xff]
        %v6237 = vld [vmem:[%s5985 + $0x7d8] sm:$0xff]
        %v6238 = vld [vmem:[%s5985 + $0x7e0] sm:$0xff]
        %v6239 = vld [vmem:[%s5985 + $0x7e8] sm:$0xff]
        %v6240 = vld [vmem:[%s5985 + $0x7f0] sm:$0xff]
        %v6241 = vld [vmem:[%s5985 + $0x7f8] sm:$0xff]
        %v6242 = vld [vmem:[%s5985 + $0x800] sm:$0xff]
        %v6243 = vld [vmem:[%s5985 + $0x808] sm:$0xff]
        %v6244 = vld [vmem:[%s5985 + $0x810] sm:$0xff]
        %v6245 = vld [vmem:[%s5985 + $0x818] sm:$0xff]
        %v6246 = vld [vmem:[%s5985 + $0x820] sm:$0xff]
        %v6247 = vld [vmem:[%s5985 + $0x828] sm:$0xff]
        %v6248 = vld [vmem:[%s5985 + $0x830] sm:$0xff]
        %v6249 = vld [vmem:[%s5985 + $0x838] sm:$0xff]
        %v6250 = vld [vmem:[%s5985 + $0x840] sm:$0xff]
        %v6251 = vld [vmem:[%s5985 + $0x848] sm:$0xff]
        %v6252 = vld [vmem:[%s5985 + $0x850] sm:$0xff]
        %v6253 = vld [vmem:[%s5985 + $0x858] sm:$0xff]
        %v6254 = vld [vmem:[%s5985 + $0x860] sm:$0xff]
        %v6255 = vld [vmem:[%s5985 + $0x868] sm:$0xff]
        %v6256 = vld [vmem:[%s5985 + $0x870] sm:$0xff]
        %v6257 = vld [vmem:[%s5985 + $0x878] sm:$0xff]
        %v6258 = vld [vmem:[%s5985 + $0x880] sm:$0xff]
        %v6259 = vld [vmem:[%s5985 + $0x888] sm:$0xff]
        %v6260 = vld [vmem:[%s5985 + $0x890] sm:$0xff]
        %v6261 = vld [vmem:[%s5985 + $0x898] sm:$0xff]
        %v6262 = vld [vmem:[%s5985 + $0x8a0] sm:$0xff]
        %v6263 = vld [vmem:[%s5985 + $0x8a8] sm:$0xff]
        %v6264 = vld [vmem:[%s5985 + $0x8b0] sm:$0xff]
        %v6265 = vld [vmem:[%s5985 + $0x8b8] sm:$0xff]
        %v6266 = vld [vmem:[%s5985 + $0x8c0] sm:$0xff]
        %v6267 = vld [vmem:[%s5985 + $0x8c8] sm:$0xff]
        %v6268 = vld [vmem:[%s5985 + $0x8d0] sm:$0xff]
        %v6269 = vld [vmem:[%s5985 + $0x8d8] sm:$0xff]
        %v6270 = vld [vmem:[%s5985 + $0x8e0] sm:$0xff]
        %v6271 = vld [vmem:[%s5985 + $0x8e8] sm:$0xff]
        %v6272 = vld [vmem:[%s5985 + $0x8f0] sm:$0xff]
        %v6273 = vld [vmem:[%s5985 + $0x8f8] sm:$0xff]
        %v6274 = vld [vmem:[%s5985 + $0x900] sm:$0xff]
        %v6275 = vld [vmem:[%s5985 + $0x908] sm:$0xff]
        %v6276 = vld [vmem:[%s5985 + $0x910] sm:$0xff]
        %v6277 = vld [vmem:[%s5985 + $0x918] sm:$0xff]
        %v6278 = vld [vmem:[%s5985 + $0x920] sm:$0xff]
        %v6279 = vld [vmem:[%s5985 + $0x928] sm:$0xff]
        %v6280 = vld [vmem:[%s5985 + $0x930] sm:$0xff]
        %v6281 = vld [vmem:[%s5985 + $0x938] sm:$0xff]
        %v6282 = vld [vmem:[%s5985 + $0x940] sm:$0xff]
        %v6283 = vld [vmem:[%s5985 + $0x948] sm:$0xff]
        %v6284 = vld [vmem:[%s5985 + $0x950] sm:$0xff]
        %v6285 = vld [vmem:[%s5985 + $0x958] sm:$0xff]
        %v6286 = vld [vmem:[%s5985 + $0x960] sm:$0xff]
        %v6287 = vld [vmem:[%s5985 + $0x968] sm:$0xff]
        %v6288 = vld [vmem:[%s5985 + $0x970] sm:$0xff]
        %v6289 = vld [vmem:[%s5985 + $0x978] sm:$0xff]
        %v6290 = vld [vmem:[%s5985 + $0x980] sm:$0xff]
        %v6291 = vld [vmem:[%s5985 + $0x988] sm:$0xff]
        %v6292 = vld [vmem:[%s5985 + $0x990] sm:$0xff]
        %v6293 = vld [vmem:[%s5985 + $0x998] sm:$0xff]
        %v6294 = vld [vmem:[%s5985 + $0x9a0] sm:$0xff]
        %v6295 = vld [vmem:[%s5985 + $0x9a8] sm:$0xff]
        %v6296 = vld [vmem:[%s5985 + $0x9b0] sm:$0xff]
        %v6297 = vld [vmem:[%s5985 + $0x9b8] sm:$0xff]
        %v6298 = vld [vmem:[%s5985 + $0x9c0] sm:$0xff]
        %v6299 = vld [vmem:[%s5985 + $0x9c8] sm:$0xff]
        %v6300 = vld [vmem:[%s5985 + $0x9d0] sm:$0xff]
        %v6301 = vld [vmem:[%s5985 + $0x9d8] sm:$0xff]
        %v6302 = vld [vmem:[%s5985 + $0x9e0] sm:$0xff]
        %v6303 = vld [vmem:[%s5985 + $0x9e8] sm:$0xff]
        %v6304 = vld [vmem:[%s5985 + $0x9f0] sm:$0xff]
        %v6305 = vld [vmem:[%s5985 + $0x9f8] sm:$0xff]
        %v6306 = vld [vmem:[%s5985 + $0xa00] sm:$0xff]
        %v6307 = vld [vmem:[%s5985 + $0xa08] sm:$0xff]
        %v6308 = vld [vmem:[%s5985 + $0xa10] sm:$0xff]
        %v6309 = vld [vmem:[%s5985 + $0xa18] sm:$0xff]
        %v6310 = vld [vmem:[%s5985 + $0xa20] sm:$0x77]
        %v6311 = vld [vmem:[%s5985 + $0xa28] sm:$0x77]
        %v6312 = vld [vmem:[%s5985 + $0xa30] sm:$0x77]
        %v6313 = vld [vmem:[%s5985 + $0xa38] sm:$0x77]
        %v6314 = vld [vmem:[%s5985 + $0xa40] sm:$0x77]
        %v6315 = vld [vmem:[%s5985 + $0xa48] sm:$0x77]
        %v6316 = vld [vmem:[%s5985 + $0xa50] sm:$0x77]
        %v6317 = vld [vmem:[%s5985 + $0xa58] sm:$0x77]
        %v6318 = vld [vmem:[%s5985 + $0xa60] sm:$0x77]
        %v6319 = vld [vmem:[%s5985 + $0xa68] sm:$0x77]
        %v6320 = vld [vmem:[%s5985 + $0xa70] sm:$0x77]
        %v6321 = vld [vmem:[%s5985 + $0xa78] sm:$0x77]
        %v6322 = vld [vmem:[%s5985 + $0xa80] sm:$0x77]
        %v6323 = vld [vmem:[%s5985 + $0xa88] sm:$0x77]
        %v6324 = vld [vmem:[%s5985 + $0xa90] sm:$0x77]
        %v6325 = vld [vmem:[%s5985 + $0xa98] sm:$0x77]
        %v6326 = vld [vmem:[%s5985 + $0xaa0] sm:$0x77]
        %v6327 = vld [vmem:[%s5985 + $0xaa8] sm:$0x77]
        %s6328 = scalar_lea.vmem %s349, 2
        %v6329 = vld [vmem:[%s6328] sm:$0x3]
        %v6331 = vlaneseq
        %v6332 = vshrl.u32 %v6331, 7
        %v6333 = vsub.s32 0, %v6332
        %v6334 = vrot.slane %v6329, %v6333
        %v6335 = vlaneseq
        %v6336 = vshrl.u32 %v6335, 7
        %v6337 = vsub.s32 1, %v6336
        %v6338 = vrot.slane %v6329, %v6337
        %v6683 = vunpack.c.l.b16 %v5986
        %v6684 = vunpack.c.h.b16 %v5986
        %v6685 = vunpack.c.l.b16 %v5987
        %v6686 = vunpack.c.h.b16 %v5987
        %v6687 = vunpack.c.l.b16 %v5988
        %v6688 = vunpack.c.h.b16 %v5988
        %v6689 = vunpack.c.l.b16 %v5989
        %v6690 = vunpack.c.h.b16 %v5989
        %v6691 = vunpack.c.l.b16 %v5990
        %v6692 = vunpack.c.h.b16 %v5990
        %v6693 = vunpack.c.l.b16 %v5991
        %v6694 = vunpack.c.h.b16 %v5991
        %v6695 = vunpack.c.l.b16 %v5992
        %v6696 = vunpack.c.h.b16 %v5992
        %v6697 = vunpack.c.l.b16 %v5993
        %v6698 = vunpack.c.h.b16 %v5993
        %v6699 = vunpack.c.l.b16 %v5994
        %v6700 = vunpack.c.h.b16 %v5994
        %v6701 = vunpack.c.l.b16 %v5995
        %v6702 = vunpack.c.h.b16 %v5995
        %v6703 = vunpack.c.l.b16 %v5996
        %v6704 = vunpack.c.h.b16 %v5996
        %v6705 = vunpack.c.l.b16 %v5997
        %v6706 = vunpack.c.h.b16 %v5997
        %v6707 = vunpack.c.l.b16 %v5998
        %v6708 = vunpack.c.h.b16 %v5998
        %v6709 = vunpack.c.l.b16 %v5999
        %v6710 = vunpack.c.h.b16 %v5999
        %v6711 = vunpack.c.l.b16 %v6000
        %v6712 = vunpack.c.h.b16 %v6000
        %v6713 = vunpack.c.l.b16 %v6001
        %v6714 = vunpack.c.h.b16 %v6001
        %v6715 = vunpack.c.l.b16 %v6002
        %v6716 = vunpack.c.h.b16 %v6002
        %v6717 = vunpack.c.l.b16 %v6003
        %v6718 = vunpack.c.h.b16 %v6003
        %v6719 = vunpack.c.l.b16 %v6004
        %v6720 = vunpack.c.h.b16 %v6004
        %v6721 = vunpack.c.l.b16 %v6005
        %v6722 = vunpack.c.h.b16 %v6005
        %v6723 = vunpack.c.l.b16 %v6006
        %v6724 = vunpack.c.h.b16 %v6006
        %v6725 = vunpack.c.l.b16 %v6007
        %v6726 = vunpack.c.h.b16 %v6007
        %v6727 = vunpack.c.l.b16 %v6008
        %v6728 = vunpack.c.h.b16 %v6008
        %v6729 = vunpack.c.l.b16 %v6009
        %v6730 = vunpack.c.h.b16 %v6009
        %v6731 = vunpack.c.l.b16 %v6010
        %v6732 = vunpack.c.h.b16 %v6010
        %v6733 = vunpack.c.l.b16 %v6011
        %v6734 = vunpack.c.h.b16 %v6011
        %v6735 = vunpack.c.l.b16 %v6012
        %v6736 = vunpack.c.h.b16 %v6012
        %v6737 = vunpack.c.l.b16 %v6013
        %v6738 = vunpack.c.h.b16 %v6013
        %v6739 = vunpack.c.l.b16 %v6014
        %v6740 = vunpack.c.h.b16 %v6014
        %v6741 = vunpack.c.l.b16 %v6015
        %v6742 = vunpack.c.h.b16 %v6015
        %v6743 = vunpack.c.l.b16 %v6016
        %v6744 = vunpack.c.h.b16 %v6016
        %v6745 = vunpack.c.l.b16 %v6017
        %v6746 = vunpack.c.h.b16 %v6017
        %v6747 = vunpack.c.l.b16 %v6018
        %v6748 = vunpack.c.h.b16 %v6018
        %v6749 = vunpack.c.l.b16 %v6019
        %v6750 = vunpack.c.h.b16 %v6019
        %v6751 = vunpack.c.l.b16 %v6020
        %v6752 = vunpack.c.h.b16 %v6020
        %v6753 = vunpack.c.l.b16 %v6021
        %v6754 = vunpack.c.h.b16 %v6021
        %v6755 = vunpack.c.l.b16 %v6022
        %v6756 = vunpack.c.h.b16 %v6022
        %v6757 = vunpack.c.l.b16 %v6023
        %v6758 = vunpack.c.h.b16 %v6023
        %v6759 = vunpack.c.l.b16 %v6024
        %v6760 = vunpack.c.h.b16 %v6024
        %v6761 = vunpack.c.l.b16 %v6025
        %v6762 = vunpack.c.h.b16 %v6025
        %v6763 = vunpack.c.l.b16 %v6026
        %v6764 = vunpack.c.h.b16 %v6026
        %v6765 = vunpack.c.l.b16 %v6027
        %v6766 = vunpack.c.h.b16 %v6027
        %v6767 = vunpack.c.l.b16 %v6028
        %v6768 = vunpack.c.h.b16 %v6028
        %v6769 = vunpack.c.l.b16 %v6029
        %v6770 = vunpack.c.h.b16 %v6029
        %v6771 = vunpack.c.l.b16 %v6030
        %v6772 = vunpack.c.h.b16 %v6030
        %v6773 = vunpack.c.l.b16 %v6031
        %v6774 = vunpack.c.h.b16 %v6031
        %v6775 = vunpack.c.l.b16 %v6032
        %v6776 = vunpack.c.h.b16 %v6032
        %v6777 = vunpack.c.l.b16 %v6033
        %v6778 = vunpack.c.h.b16 %v6033
        %v6779 = vunpack.c.l.b16 %v6034
        %v6780 = vunpack.c.h.b16 %v6034
        %v6781 = vunpack.c.l.b16 %v6035
        %v6782 = vunpack.c.h.b16 %v6035
        %v6783 = vunpack.c.l.b16 %v6036
        %v6784 = vunpack.c.h.b16 %v6036
        %v6785 = vunpack.c.l.b16 %v6037
        %v6786 = vunpack.c.h.b16 %v6037
        %v6787 = vunpack.c.l.b16 %v6038
        %v6788 = vunpack.c.h.b16 %v6038
        %v6789 = vunpack.c.l.b16 %v6039
        %v6790 = vunpack.c.h.b16 %v6039
        %v6791 = vunpack.c.l.b16 %v6040
        %v6792 = vunpack.c.h.b16 %v6040
        %v6793 = vunpack.c.l.b16 %v6041
        %v6794 = vunpack.c.h.b16 %v6041
        %v6795 = vunpack.c.l.b16 %v6042
        %v6796 = vunpack.c.h.b16 %v6042
        %v6797 = vunpack.c.l.b16 %v6043
        %v6798 = vunpack.c.h.b16 %v6043
        %v6799 = vunpack.c.l.b16 %v6044
        %v6800 = vunpack.c.h.b16 %v6044
        %v6801 = vunpack.c.l.b16 %v6045
        %v6802 = vunpack.c.h.b16 %v6045
        %v6803 = vunpack.c.l.b16 %v6046
        %v6804 = vunpack.c.h.b16 %v6046
        %v6805 = vunpack.c.l.b16 %v6047
        %v6806 = vunpack.c.h.b16 %v6047
        %v6807 = vunpack.c.l.b16 %v6048
        %v6808 = vunpack.c.h.b16 %v6048
        %v6809 = vunpack.c.l.b16 %v6049
        %v6810 = vunpack.c.h.b16 %v6049
        %v6811 = vunpack.c.l.b16 %v6050
        %v6812 = vunpack.c.h.b16 %v6050
        %v6813 = vunpack.c.l.b16 %v6051
        %v6814 = vunpack.c.h.b16 %v6051
        %v6815 = vunpack.c.l.b16 %v6052
        %v6816 = vunpack.c.h.b16 %v6052
        %v6817 = vunpack.c.l.b16 %v6053
        %v6818 = vunpack.c.h.b16 %v6053
        %v6819 = vunpack.c.l.b16 %v6054
        %v6820 = vunpack.c.h.b16 %v6054
        %v6821 = vunpack.c.l.b16 %v6055
        %v6822 = vunpack.c.h.b16 %v6055
        %v6823 = vunpack.c.l.b16 %v6056
        %v6824 = vunpack.c.h.b16 %v6056
        %v6825 = vunpack.c.l.b16 %v6057
        %v6826 = vunpack.c.h.b16 %v6057
        %v6827 = vunpack.c.l.b16 %v6058
        %v6828 = vunpack.c.h.b16 %v6058
        %v6829 = vunpack.c.l.b16 %v6059
        %v6830 = vunpack.c.h.b16 %v6059
        %v6831 = vunpack.c.l.b16 %v6060
        %v6832 = vunpack.c.h.b16 %v6060
        %v6833 = vunpack.c.l.b16 %v6061
        %v6834 = vunpack.c.h.b16 %v6061
        %v6835 = vunpack.c.l.b16 %v6062
        %v6836 = vunpack.c.h.b16 %v6062
        %v6837 = vunpack.c.l.b16 %v6063
        %v6838 = vunpack.c.h.b16 %v6063
        %v6839 = vunpack.c.l.b16 %v6064
        %v6840 = vunpack.c.h.b16 %v6064
        %v6841 = vunpack.c.l.b16 %v6065
        %v6842 = vunpack.c.h.b16 %v6065
        %v6843 = vunpack.c.l.b16 %v6066
        %v6844 = vunpack.c.h.b16 %v6066
        %v6845 = vunpack.c.l.b16 %v6067
        %v6846 = vunpack.c.h.b16 %v6067
        %v6847 = vunpack.c.l.b16 %v6068
        %v6848 = vunpack.c.h.b16 %v6068
        %v6849 = vunpack.c.l.b16 %v6069
        %v6850 = vunpack.c.h.b16 %v6069
        %v6851 = vunpack.c.l.b16 %v6070
        %v6852 = vunpack.c.h.b16 %v6070
        %v6853 = vunpack.c.l.b16 %v6071
        %v6854 = vunpack.c.h.b16 %v6071
        %v6855 = vunpack.c.l.b16 %v6072
        %v6856 = vunpack.c.h.b16 %v6072
        %v6857 = vunpack.c.l.b16 %v6073
        %v6858 = vunpack.c.h.b16 %v6073
        %v6859 = vunpack.c.l.b16 %v6074
        %v6860 = vunpack.c.h.b16 %v6074
        %v6861 = vunpack.c.l.b16 %v6075
        %v6862 = vunpack.c.h.b16 %v6075
        %v6863 = vunpack.c.l.b16 %v6076
        %v6864 = vunpack.c.h.b16 %v6076
        %v6865 = vunpack.c.l.b16 %v6077
        %v6866 = vunpack.c.h.b16 %v6077
        %v6867 = vunpack.c.l.b16 %v6078
        %v6868 = vunpack.c.h.b16 %v6078
        %v6869 = vunpack.c.l.b16 %v6079
        %v6870 = vunpack.c.h.b16 %v6079
        %v6871 = vunpack.c.l.b16 %v6080
        %v6872 = vunpack.c.h.b16 %v6080
        %v6873 = vunpack.c.l.b16 %v6081
        %v6874 = vunpack.c.h.b16 %v6081
        %v6875 = vunpack.c.l.b16 %v6082
        %v6876 = vunpack.c.h.b16 %v6082
        %v6877 = vunpack.c.l.b16 %v6083
        %v6878 = vunpack.c.h.b16 %v6083
        %v6879 = vunpack.c.l.b16 %v6084
        %v6880 = vunpack.c.h.b16 %v6084
        %v6881 = vunpack.c.l.b16 %v6085
        %v6882 = vunpack.c.h.b16 %v6085
        %v6883 = vunpack.c.l.b16 %v6086
        %v6884 = vunpack.c.h.b16 %v6086
        %v6885 = vunpack.c.l.b16 %v6087
        %v6886 = vunpack.c.h.b16 %v6087
        %v6887 = vunpack.c.l.b16 %v6088
        %v6888 = vunpack.c.h.b16 %v6088
        %v6889 = vunpack.c.l.b16 %v6089
        %v6890 = vunpack.c.h.b16 %v6089
        %v6891 = vunpack.c.l.b16 %v6090
        %v6892 = vunpack.c.h.b16 %v6090
        %v6893 = vunpack.c.l.b16 %v6091
        %v6894 = vunpack.c.h.b16 %v6091
        %v6895 = vunpack.c.l.b16 %v6092
        %v6896 = vunpack.c.h.b16 %v6092
        %v6897 = vunpack.c.l.b16 %v6093
        %v6898 = vunpack.c.h.b16 %v6093
        %v6899 = vunpack.c.l.b16 %v6094
        %v6900 = vunpack.c.h.b16 %v6094
        %v6901 = vunpack.c.l.b16 %v6095
        %v6902 = vunpack.c.h.b16 %v6095
        %v6903 = vunpack.c.l.b16 %v6096
        %v6904 = vunpack.c.h.b16 %v6096
        %v6905 = vunpack.c.l.b16 %v6097
        %v6906 = vunpack.c.h.b16 %v6097
        %v6907 = vunpack.c.l.b16 %v6098
        %v6908 = vunpack.c.h.b16 %v6098
        %v6909 = vunpack.c.l.b16 %v6099
        %v6910 = vunpack.c.h.b16 %v6099
        %v6911 = vunpack.c.l.b16 %v6100
        %v6912 = vunpack.c.h.b16 %v6100
        %v6913 = vunpack.c.l.b16 %v6101
        %v6914 = vunpack.c.h.b16 %v6101
        %v6915 = vunpack.c.l.b16 %v6102
        %v6916 = vunpack.c.h.b16 %v6102
        %v6917 = vunpack.c.l.b16 %v6103
        %v6918 = vunpack.c.h.b16 %v6103
        %v6919 = vunpack.c.l.b16 %v6104
        %v6920 = vunpack.c.h.b16 %v6104
        %v6921 = vunpack.c.l.b16 %v6105
        %v6922 = vunpack.c.h.b16 %v6105
        %v6923 = vunpack.c.l.b16 %v6106
        %v6924 = vunpack.c.h.b16 %v6106
        %v6925 = vunpack.c.l.b16 %v6107
        %v6926 = vunpack.c.h.b16 %v6107
        %v6927 = vunpack.c.l.b16 %v6108
        %v6928 = vunpack.c.h.b16 %v6108
        %v6929 = vunpack.c.l.b16 %v6109
        %v6930 = vunpack.c.h.b16 %v6109
        %v6931 = vunpack.c.l.b16 %v6110
        %v6932 = vunpack.c.h.b16 %v6110
        %v6933 = vunpack.c.l.b16 %v6111
        %v6934 = vunpack.c.h.b16 %v6111
        %v6935 = vunpack.c.l.b16 %v6112
        %v6936 = vunpack.c.h.b16 %v6112
        %v6937 = vunpack.c.l.b16 %v6113
        %v6938 = vunpack.c.h.b16 %v6113
        %v6939 = vunpack.c.l.b16 %v6114
        %v6940 = vunpack.c.h.b16 %v6114
        %v6941 = vunpack.c.l.b16 %v6115
        %v6942 = vunpack.c.h.b16 %v6115
        %v6943 = vunpack.c.l.b16 %v6116
        %v6944 = vunpack.c.h.b16 %v6116
        %v6945 = vunpack.c.l.b16 %v6117
        %v6946 = vunpack.c.h.b16 %v6117
        %v6947 = vunpack.c.l.b16 %v6118
        %v6948 = vunpack.c.h.b16 %v6118
        %v6949 = vunpack.c.l.b16 %v6119
        %v6950 = vunpack.c.h.b16 %v6119
        %v6951 = vunpack.c.l.b16 %v6120
        %v6952 = vunpack.c.h.b16 %v6120
        %v6953 = vunpack.c.l.b16 %v6121
        %v6954 = vunpack.c.h.b16 %v6121
        %v6955 = vunpack.c.l.b16 %v6122
        %v6956 = vunpack.c.h.b16 %v6122
        %v6957 = vunpack.c.l.b16 %v6123
        %v6958 = vunpack.c.h.b16 %v6123
        %v6959 = vunpack.c.l.b16 %v6124
        %v6960 = vunpack.c.h.b16 %v6124
        %v6961 = vunpack.c.l.b16 %v6125
        %v6962 = vunpack.c.h.b16 %v6125
        %v6963 = vunpack.c.l.b16 %v6126
        %v6964 = vunpack.c.h.b16 %v6126
        %v6965 = vunpack.c.l.b16 %v6127
        %v6966 = vunpack.c.h.b16 %v6127
        %v6967 = vunpack.c.l.b16 %v6128
        %v6968 = vunpack.c.h.b16 %v6128
        %v6969 = vunpack.c.l.b16 %v6129
        %v6970 = vunpack.c.h.b16 %v6129
        %v6971 = vunpack.c.l.b16 %v6130
        %v6972 = vunpack.c.h.b16 %v6130
        %v6973 = vunpack.c.l.b16 %v6131
        %v6974 = vunpack.c.h.b16 %v6131
        %v6975 = vunpack.c.l.b16 %v6132
        %v6976 = vunpack.c.h.b16 %v6132
        %v6977 = vunpack.c.l.b16 %v6133
        %v6978 = vunpack.c.h.b16 %v6133
        %v6979 = vunpack.c.l.b16 %v6134
        %v6980 = vunpack.c.h.b16 %v6134
        %v6981 = vunpack.c.l.b16 %v6135
        %v6982 = vunpack.c.h.b16 %v6135
        %v6983 = vunpack.c.l.b16 %v6136
        %v6984 = vunpack.c.h.b16 %v6136
        %v6985 = vunpack.c.l.b16 %v6137
        %v6986 = vunpack.c.h.b16 %v6137
        %v6987 = vunpack.c.l.b16 %v6138
        %v6988 = vunpack.c.h.b16 %v6138
        %v6989 = vunpack.c.l.b16 %v6139
        %v6990 = vunpack.c.h.b16 %v6139
        %v6991 = vunpack.c.l.b16 %v6140
        %v6992 = vunpack.c.h.b16 %v6140
        %v6993 = vunpack.c.l.b16 %v6141
        %v6994 = vunpack.c.h.b16 %v6141
        %v6995 = vunpack.c.l.b16 %v6142
        %v6996 = vunpack.c.h.b16 %v6142
        %v6997 = vunpack.c.l.b16 %v6143
        %v6998 = vunpack.c.h.b16 %v6143
        %v6999 = vunpack.c.l.b16 %v6144
        %v7000 = vunpack.c.h.b16 %v6144
        %v7001 = vunpack.c.l.b16 %v6145
        %v7002 = vunpack.c.h.b16 %v6145
        %v7003 = vunpack.c.l.b16 %v6146
        %v7004 = vunpack.c.h.b16 %v6146
        %v7005 = vunpack.c.l.b16 %v6147
        %v7006 = vunpack.c.h.b16 %v6147
        %v7007 = vunpack.c.l.b16 %v6148
        %v7008 = vunpack.c.h.b16 %v6148
        %v7009 = vunpack.c.l.b16 %v6149
        %v7010 = vunpack.c.h.b16 %v6149
        %v7011 = vunpack.c.l.b16 %v6150
        %v7012 = vunpack.c.h.b16 %v6150
        %v7013 = vunpack.c.l.b16 %v6151
        %v7014 = vunpack.c.h.b16 %v6151
        %v7015 = vunpack.c.l.b16 %v6152
        %v7016 = vunpack.c.h.b16 %v6152
        %v7017 = vunpack.c.l.b16 %v6153
        %v7018 = vunpack.c.h.b16 %v6153
        %v7019 = vunpack.c.l.b16 %v6154
        %v7020 = vunpack.c.h.b16 %v6154
        %v7021 = vunpack.c.l.b16 %v6155
        %v7022 = vunpack.c.h.b16 %v6155
        %v7023 = vunpack.c.l.b16 %v6156
        %v7024 = vunpack.c.h.b16 %v6156
        %v7025 = vunpack.c.l.b16 %v6157
        %v7026 = vunpack.c.h.b16 %v6157
        %v7027 = vunpack.c.l.b16 %v6158
        %v7028 = vunpack.c.h.b16 %v6158
        %v7029 = vunpack.c.l.b16 %v6159
        %v7030 = vunpack.c.h.b16 %v6159
        %v7031 = vunpack.c.l.b16 %v6160
        %v7032 = vunpack.c.h.b16 %v6160
        %v7033 = vunpack.c.l.b16 %v6161
        %v7034 = vunpack.c.h.b16 %v6161
        %v7035 = vunpack.c.l.b16 %v6162
        %v7036 = vunpack.c.h.b16 %v6162
        %v7037 = vunpack.c.l.b16 %v6163
        %v7038 = vunpack.c.h.b16 %v6163
        %v7039 = vunpack.c.l.b16 %v6164
        %v7040 = vunpack.c.h.b16 %v6164
        %v7041 = vunpack.c.l.b16 %v6165
        %v7042 = vunpack.c.h.b16 %v6165
        %v7043 = vunpack.c.l.b16 %v6166
        %v7044 = vunpack.c.h.b16 %v6166
        %v7045 = vunpack.c.l.b16 %v6167
        %v7046 = vunpack.c.h.b16 %v6167
        %v7047 = vunpack.c.l.b16 %v6168
        %v7048 = vunpack.c.h.b16 %v6168
        %v7049 = vunpack.c.l.b16 %v6169
        %v7050 = vunpack.c.h.b16 %v6169
        %v7051 = vunpack.c.l.b16 %v6170
        %v7052 = vunpack.c.h.b16 %v6170
        %v7053 = vunpack.c.l.b16 %v6171
        %v7054 = vunpack.c.h.b16 %v6171
        %v7055 = vunpack.c.l.b16 %v6172
        %v7056 = vunpack.c.h.b16 %v6172
        %v7057 = vunpack.c.l.b16 %v6173
        %v7058 = vunpack.c.h.b16 %v6173
        %v7059 = vunpack.c.l.b16 %v6174
        %v7060 = vunpack.c.h.b16 %v6174
        %v7061 = vunpack.c.l.b16 %v6175
        %v7062 = vunpack.c.h.b16 %v6175
        %v7063 = vunpack.c.l.b16 %v6176
        %v7064 = vunpack.c.h.b16 %v6176
        %v7065 = vunpack.c.l.b16 %v6177
        %v7066 = vunpack.c.h.b16 %v6177
        %v7067 = vunpack.c.l.b16 %v6178
        %v7068 = vunpack.c.h.b16 %v6178
        %v7069 = vunpack.c.l.b16 %v6179
        %v7070 = vunpack.c.h.b16 %v6179
        %v7071 = vunpack.c.l.b16 %v6180
        %v7072 = vunpack.c.h.b16 %v6180
        %v7073 = vunpack.c.l.b16 %v6181
        %v7074 = vunpack.c.h.b16 %v6181
        %v7075 = vunpack.c.l.b16 %v6182
        %v7076 = vunpack.c.h.b16 %v6182
        %v7077 = vunpack.c.l.b16 %v6183
        %v7078 = vunpack.c.h.b16 %v6183
        %v7079 = vunpack.c.l.b16 %v6184
        %v7080 = vunpack.c.h.b16 %v6184
        %v7081 = vunpack.c.l.b16 %v6185
        %v7082 = vunpack.c.h.b16 %v6185
        %v7083 = vunpack.c.l.b16 %v6186
        %v7084 = vunpack.c.h.b16 %v6186
        %v7085 = vunpack.c.l.b16 %v6187
        %v7086 = vunpack.c.h.b16 %v6187
        %v7087 = vunpack.c.l.b16 %v6188
        %v7088 = vunpack.c.h.b16 %v6188
        %v7089 = vunpack.c.l.b16 %v6189
        %v7090 = vunpack.c.h.b16 %v6189
        %v7091 = vunpack.c.l.b16 %v6190
        %v7092 = vunpack.c.h.b16 %v6190
        %v7093 = vunpack.c.l.b16 %v6191
        %v7094 = vunpack.c.h.b16 %v6191
        %v7095 = vunpack.c.l.b16 %v6192
        %v7096 = vunpack.c.h.b16 %v6192
        %v7097 = vunpack.c.l.b16 %v6193
        %v7098 = vunpack.c.h.b16 %v6193
        %v7099 = vunpack.c.l.b16 %v6194
        %v7100 = vunpack.c.h.b16 %v6194
        %v7101 = vunpack.c.l.b16 %v6195
        %v7102 = vunpack.c.h.b16 %v6195
        %v7103 = vunpack.c.l.b16 %v6196
        %v7104 = vunpack.c.h.b16 %v6196
        %v7105 = vunpack.c.l.b16 %v6197
        %v7106 = vunpack.c.h.b16 %v6197
        %v7107 = vunpack.c.l.b16 %v6198
        %v7108 = vunpack.c.h.b16 %v6198
        %v7109 = vunpack.c.l.b16 %v6199
        %v7110 = vunpack.c.h.b16 %v6199
        %v7111 = vunpack.c.l.b16 %v6200
        %v7112 = vunpack.c.h.b16 %v6200
        %v7113 = vunpack.c.l.b16 %v6201
        %v7114 = vunpack.c.h.b16 %v6201
        %v7115 = vunpack.c.l.b16 %v6202
        %v7116 = vunpack.c.h.b16 %v6202
        %v7117 = vunpack.c.l.b16 %v6203
        %v7118 = vunpack.c.h.b16 %v6203
        %v7119 = vunpack.c.l.b16 %v6204
        %v7120 = vunpack.c.h.b16 %v6204
        %v7121 = vunpack.c.l.b16 %v6205
        %v7122 = vunpack.c.h.b16 %v6205
        %v7123 = vunpack.c.l.b16 %v6206
        %v7124 = vunpack.c.h.b16 %v6206
        %v7125 = vunpack.c.l.b16 %v6207
        %v7126 = vunpack.c.h.b16 %v6207
        %v7127 = vunpack.c.l.b16 %v6208
        %v7128 = vunpack.c.h.b16 %v6208
        %v7129 = vunpack.c.l.b16 %v6209
        %v7130 = vunpack.c.h.b16 %v6209
        %v7131 = vunpack.c.l.b16 %v6210
        %v7132 = vunpack.c.h.b16 %v6210
        %v7133 = vunpack.c.l.b16 %v6211
        %v7134 = vunpack.c.h.b16 %v6211
        %v7135 = vunpack.c.l.b16 %v6212
        %v7136 = vunpack.c.h.b16 %v6212
        %v7137 = vunpack.c.l.b16 %v6213
        %v7138 = vunpack.c.h.b16 %v6213
        %v7139 = vunpack.c.l.b16 %v6214
        %v7140 = vunpack.c.h.b16 %v6214
        %v7141 = vunpack.c.l.b16 %v6215
        %v7142 = vunpack.c.h.b16 %v6215
        %v7143 = vunpack.c.l.b16 %v6216
        %v7144 = vunpack.c.h.b16 %v6216
        %v7145 = vunpack.c.l.b16 %v6217
        %v7146 = vunpack.c.h.b16 %v6217
        %v7147 = vunpack.c.l.b16 %v6218
        %v7148 = vunpack.c.h.b16 %v6218
        %v7149 = vunpack.c.l.b16 %v6219
        %v7150 = vunpack.c.h.b16 %v6219
        %v7151 = vunpack.c.l.b16 %v6220
        %v7152 = vunpack.c.h.b16 %v6220
        %v7153 = vunpack.c.l.b16 %v6221
        %v7154 = vunpack.c.h.b16 %v6221
        %v7155 = vunpack.c.l.b16 %v6222
        %v7156 = vunpack.c.h.b16 %v6222
        %v7157 = vunpack.c.l.b16 %v6223
        %v7158 = vunpack.c.h.b16 %v6223
        %v7159 = vunpack.c.l.b16 %v6224
        %v7160 = vunpack.c.h.b16 %v6224
        %v7161 = vunpack.c.l.b16 %v6225
        %v7162 = vunpack.c.h.b16 %v6225
        %v7163 = vunpack.c.l.b16 %v6226
        %v7164 = vunpack.c.h.b16 %v6226
        %v7165 = vunpack.c.l.b16 %v6227
        %v7166 = vunpack.c.h.b16 %v6227
        %v7167 = vunpack.c.l.b16 %v6228
        %v7168 = vunpack.c.h.b16 %v6228
        %v7169 = vunpack.c.l.b16 %v6229
        %v7170 = vunpack.c.h.b16 %v6229
        %v7171 = vunpack.c.l.b16 %v6230
        %v7172 = vunpack.c.h.b16 %v6230
        %v7173 = vunpack.c.l.b16 %v6231
        %v7174 = vunpack.c.h.b16 %v6231
        %v7175 = vunpack.c.l.b16 %v6232
        %v7176 = vunpack.c.h.b16 %v6232
        %v7177 = vunpack.c.l.b16 %v6233
        %v7178 = vunpack.c.h.b16 %v6233
        %v7179 = vunpack.c.l.b16 %v6234
        %v7180 = vunpack.c.h.b16 %v6234
        %v7181 = vunpack.c.l.b16 %v6235
        %v7182 = vunpack.c.h.b16 %v6235
        %v7183 = vunpack.c.l.b16 %v6236
        %v7184 = vunpack.c.h.b16 %v6236
        %v7185 = vunpack.c.l.b16 %v6237
        %v7186 = vunpack.c.h.b16 %v6237
        %v7187 = vunpack.c.l.b16 %v6238
        %v7188 = vunpack.c.h.b16 %v6238
        %v7189 = vunpack.c.l.b16 %v6239
        %v7190 = vunpack.c.h.b16 %v6239
        %v7191 = vunpack.c.l.b16 %v6240
        %v7192 = vunpack.c.h.b16 %v6240
        %v7193 = vunpack.c.l.b16 %v6241
        %v7194 = vunpack.c.h.b16 %v6241
        %v7195 = vunpack.c.l.b16 %v6242
        %v7196 = vunpack.c.h.b16 %v6242
        %v7197 = vunpack.c.l.b16 %v6243
        %v7198 = vunpack.c.h.b16 %v6243
        %v7199 = vunpack.c.l.b16 %v6244
        %v7200 = vunpack.c.h.b16 %v6244
        %v7201 = vunpack.c.l.b16 %v6245
        %v7202 = vunpack.c.h.b16 %v6245
        %v7203 = vunpack.c.l.b16 %v6246
        %v7204 = vunpack.c.h.b16 %v6246
        %v7205 = vunpack.c.l.b16 %v6247
        %v7206 = vunpack.c.h.b16 %v6247
        %v7207 = vunpack.c.l.b16 %v6248
        %v7208 = vunpack.c.h.b16 %v6248
        %v7209 = vunpack.c.l.b16 %v6249
        %v7210 = vunpack.c.h.b16 %v6249
        %v7211 = vunpack.c.l.b16 %v6250
        %v7212 = vunpack.c.h.b16 %v6250
        %v7213 = vunpack.c.l.b16 %v6251
        %v7214 = vunpack.c.h.b16 %v6251
        %v7215 = vunpack.c.l.b16 %v6252
        %v7216 = vunpack.c.h.b16 %v6252
        %v7217 = vunpack.c.l.b16 %v6253
        %v7218 = vunpack.c.h.b16 %v6253
        %v7219 = vunpack.c.l.b16 %v6254
        %v7220 = vunpack.c.h.b16 %v6254
        %v7221 = vunpack.c.l.b16 %v6255
        %v7222 = vunpack.c.h.b16 %v6255
        %v7223 = vunpack.c.l.b16 %v6256
        %v7224 = vunpack.c.h.b16 %v6256
        %v7225 = vunpack.c.l.b16 %v6257
        %v7226 = vunpack.c.h.b16 %v6257
        %v7227 = vunpack.c.l.b16 %v6258
        %v7228 = vunpack.c.h.b16 %v6258
        %v7229 = vunpack.c.l.b16 %v6259
        %v7230 = vunpack.c.h.b16 %v6259
        %v7231 = vunpack.c.l.b16 %v6260
        %v7232 = vunpack.c.h.b16 %v6260
        %v7233 = vunpack.c.l.b16 %v6261
        %v7234 = vunpack.c.h.b16 %v6261
        %v7235 = vunpack.c.l.b16 %v6262
        %v7236 = vunpack.c.h.b16 %v6262
        %v7237 = vunpack.c.l.b16 %v6263
        %v7238 = vunpack.c.h.b16 %v6263
        %v7239 = vunpack.c.l.b16 %v6264
        %v7240 = vunpack.c.h.b16 %v6264
        %v7241 = vunpack.c.l.b16 %v6265
        %v7242 = vunpack.c.h.b16 %v6265
        %v7243 = vunpack.c.l.b16 %v6266
        %v7244 = vunpack.c.h.b16 %v6266
        %v7245 = vunpack.c.l.b16 %v6267
        %v7246 = vunpack.c.h.b16 %v6267
        %v7247 = vunpack.c.l.b16 %v6268
        %v7248 = vunpack.c.h.b16 %v6268
        %v7249 = vunpack.c.l.b16 %v6269
        %v7250 = vunpack.c.h.b16 %v6269
        %v7251 = vunpack.c.l.b16 %v6270
        %v7252 = vunpack.c.h.b16 %v6270
        %v7253 = vunpack.c.l.b16 %v6271
        %v7254 = vunpack.c.h.b16 %v6271
        %v7255 = vunpack.c.l.b16 %v6272
        %v7256 = vunpack.c.h.b16 %v6272
        %v7257 = vunpack.c.l.b16 %v6273
        %v7258 = vunpack.c.h.b16 %v6273
        %v7259 = vunpack.c.l.b16 %v6274
        %v7260 = vunpack.c.h.b16 %v6274
        %v7261 = vunpack.c.l.b16 %v6275
        %v7262 = vunpack.c.h.b16 %v6275
        %v7263 = vunpack.c.l.b16 %v6276
        %v7264 = vunpack.c.h.b16 %v6276
        %v7265 = vunpack.c.l.b16 %v6277
        %v7266 = vunpack.c.h.b16 %v6277
        %v7267 = vunpack.c.l.b16 %v6278
        %v7268 = vunpack.c.h.b16 %v6278
        %v7269 = vunpack.c.l.b16 %v6279
        %v7270 = vunpack.c.h.b16 %v6279
        %v7271 = vunpack.c.l.b16 %v6280
        %v7272 = vunpack.c.h.b16 %v6280
        %v7273 = vunpack.c.l.b16 %v6281
        %v7274 = vunpack.c.h.b16 %v6281
        %v7275 = vunpack.c.l.b16 %v6282
        %v7276 = vunpack.c.h.b16 %v6282
        %v7277 = vunpack.c.l.b16 %v6283
        %v7278 = vunpack.c.h.b16 %v6283
        %v7279 = vunpack.c.l.b16 %v6284
        %v7280 = vunpack.c.h.b16 %v6284
        %v7281 = vunpack.c.l.b16 %v6285
        %v7282 = vunpack.c.h.b16 %v6285
        %v7283 = vunpack.c.l.b16 %v6286
        %v7284 = vunpack.c.h.b16 %v6286
        %v7285 = vunpack.c.l.b16 %v6287
        %v7286 = vunpack.c.h.b16 %v6287
        %v7287 = vunpack.c.l.b16 %v6288
        %v7288 = vunpack.c.h.b16 %v6288
        %v7289 = vunpack.c.l.b16 %v6289
        %v7290 = vunpack.c.h.b16 %v6289
        %v7291 = vunpack.c.l.b16 %v6290
        %v7292 = vunpack.c.h.b16 %v6290
        %v7293 = vunpack.c.l.b16 %v6291
        %v7294 = vunpack.c.h.b16 %v6291
        %v7295 = vunpack.c.l.b16 %v6292
        %v7296 = vunpack.c.h.b16 %v6292
        %v7297 = vunpack.c.l.b16 %v6293
        %v7298 = vunpack.c.h.b16 %v6293
        %v7299 = vunpack.c.l.b16 %v6294
        %v7300 = vunpack.c.h.b16 %v6294
        %v7301 = vunpack.c.l.b16 %v6295
        %v7302 = vunpack.c.h.b16 %v6295
        %v7303 = vunpack.c.l.b16 %v6296
        %v7304 = vunpack.c.h.b16 %v6296
        %v7305 = vunpack.c.l.b16 %v6297
        %v7306 = vunpack.c.h.b16 %v6297
        %v7307 = vunpack.c.l.b16 %v6298
        %v7308 = vunpack.c.h.b16 %v6298
        %v7309 = vunpack.c.l.b16 %v6299
        %v7310 = vunpack.c.h.b16 %v6299
        %v7311 = vunpack.c.l.b16 %v6300
        %v7312 = vunpack.c.h.b16 %v6300
        %v7313 = vunpack.c.l.b16 %v6301
        %v7314 = vunpack.c.h.b16 %v6301
        %v7315 = vunpack.c.l.b16 %v6302
        %v7316 = vunpack.c.h.b16 %v6302
        %v7317 = vunpack.c.l.b16 %v6303
        %v7318 = vunpack.c.h.b16 %v6303
        %v7319 = vunpack.c.l.b16 %v6304
        %v7320 = vunpack.c.h.b16 %v6304
        %v7321 = vunpack.c.l.b16 %v6305
        %v7322 = vunpack.c.h.b16 %v6305
        %v7323 = vunpack.c.l.b16 %v6306
        %v7324 = vunpack.c.h.b16 %v6306
        %v7325 = vunpack.c.l.b16 %v6307
        %v7326 = vunpack.c.h.b16 %v6307
        %v7327 = vunpack.c.l.b16 %v6308
        %v7328 = vunpack.c.h.b16 %v6308
        %v7329 = vunpack.c.l.b16 %v6309
        %v7330 = vunpack.c.h.b16 %v6309
        %v7331 = vunpack.c.l.b16 %v6310
        %v7332 = vunpack.c.h.b16 %v6310
        %v7333 = vunpack.c.l.b16 %v6311
        %v7334 = vunpack.c.h.b16 %v6311
        %v7335 = vunpack.c.l.b16 %v6312
        %v7336 = vunpack.c.h.b16 %v6312
        %v7337 = vunpack.c.l.b16 %v6313
        %v7338 = vunpack.c.h.b16 %v6313
        %v7339 = vunpack.c.l.b16 %v6314
        %v7340 = vunpack.c.h.b16 %v6314
        %v7341 = vunpack.c.l.b16 %v6315
        %v7342 = vunpack.c.h.b16 %v6315
        %v7343 = vunpack.c.l.b16 %v6316
        %v7344 = vunpack.c.h.b16 %v6316
        %v7345 = vunpack.c.l.b16 %v6317
        %v7346 = vunpack.c.h.b16 %v6317
        %v7347 = vunpack.c.l.b16 %v6318
        %v7348 = vunpack.c.h.b16 %v6318
        %v7349 = vunpack.c.l.b16 %v6319
        %v7350 = vunpack.c.h.b16 %v6319
        %v7351 = vunpack.c.l.b16 %v6320
        %v7352 = vunpack.c.h.b16 %v6320
        %v7353 = vunpack.c.l.b16 %v6321
        %v7354 = vunpack.c.h.b16 %v6321
        %v7355 = vunpack.c.l.b16 %v6322
        %v7356 = vunpack.c.h.b16 %v6322
        %v7357 = vunpack.c.l.b16 %v6323
        %v7358 = vunpack.c.h.b16 %v6323
        %v7359 = vunpack.c.l.b16 %v6324
        %v7360 = vunpack.c.h.b16 %v6324
        %v7361 = vunpack.c.l.b16 %v6325
        %v7362 = vunpack.c.h.b16 %v6325
        %v7363 = vunpack.c.l.b16 %v6326
        %v7364 = vunpack.c.h.b16 %v6326
        %v7365 = vunpack.c.l.b16 %v6327
        %v7366 = vunpack.c.h.b16 %v6327
        %v7367 = vpack.c.b16 %v6719, %v6683
        %v7368 = vpack.c.b16 %v6720, %v6684
        %v7369 = vpack.c.b16 %v6721, %v6685
        %v7370 = vpack.c.b16 %v6722, %v6686
        %v7371 = vpack.c.b16 %v6723, %v6687
        %v7372 = vpack.c.b16 %v6724, %v6688
        %v7373 = vpack.c.b16 %v6725, %v6689
        %v7374 = vpack.c.b16 %v6726, %v6690
        %v7375 = vpack.c.b16 %v6727, %v6691
        %v7376 = vpack.c.b16 %v6728, %v6692
        %v7377 = vpack.c.b16 %v6729, %v6693
        %v7378 = vpack.c.b16 %v6730, %v6694
        %v7379 = vpack.c.b16 %v6731, %v6695
        %v7380 = vpack.c.b16 %v6732, %v6696
        %v7381 = vpack.c.b16 %v6733, %v6697
        %v7382 = vpack.c.b16 %v6734, %v6698
        %v7383 = vpack.c.b16 %v6735, %v6699
        %v7384 = vpack.c.b16 %v6736, %v6700
        %v7385 = vpack.c.b16 %v6737, %v6701
        %v7386 = vpack.c.b16 %v6738, %v6702
        %v7387 = vpack.c.b16 %v6739, %v6703
        %v7388 = vpack.c.b16 %v6740, %v6704
        %v7389 = vpack.c.b16 %v6741, %v6705
        %v7390 = vpack.c.b16 %v6742, %v6706
        %v7391 = vpack.c.b16 %v6743, %v6707
        %v7392 = vpack.c.b16 %v6744, %v6708
        %v7393 = vpack.c.b16 %v6745, %v6709
        %v7394 = vpack.c.b16 %v6746, %v6710
        %v7395 = vpack.c.b16 %v6747, %v6711
        %v7396 = vpack.c.b16 %v6748, %v6712
        %v7397 = vpack.c.b16 %v6749, %v6713
        %v7398 = vpack.c.b16 %v6750, %v6714
        %v7399 = vpack.c.b16 %v6751, %v6715
        %v7400 = vpack.c.b16 %v6752, %v6716
        %v7401 = vpack.c.b16 %v6753, %v6717
        %v7402 = vpack.c.b16 %v6754, %v6718
        %v7403 = vpack.c.b16 %v6791, %v6755
        %v7404 = vpack.c.b16 %v6792, %v6756
        %v7405 = vpack.c.b16 %v6793, %v6757
        %v7406 = vpack.c.b16 %v6794, %v6758
        %v7407 = vpack.c.b16 %v6795, %v6759
        %v7408 = vpack.c.b16 %v6796, %v6760
        %v7409 = vpack.c.b16 %v6797, %v6761
        %v7410 = vpack.c.b16 %v6798, %v6762
        %v7411 = vpack.c.b16 %v6799, %v6763
        %v7412 = vpack.c.b16 %v6800, %v6764
        %v7413 = vpack.c.b16 %v6801, %v6765
        %v7414 = vpack.c.b16 %v6802, %v6766
        %v7415 = vpack.c.b16 %v6803, %v6767
        %v7416 = vpack.c.b16 %v6804, %v6768
        %v7417 = vpack.c.b16 %v6805, %v6769
        %v7418 = vpack.c.b16 %v6806, %v6770
        %v7419 = vpack.c.b16 %v6807, %v6771
        %v7420 = vpack.c.b16 %v6808, %v6772
        %v7421 = vpack.c.b16 %v6809, %v6773
        %v7422 = vpack.c.b16 %v6810, %v6774
        %v7423 = vpack.c.b16 %v6811, %v6775
        %v7424 = vpack.c.b16 %v6812, %v6776
        %v7425 = vpack.c.b16 %v6813, %v6777
        %v7426 = vpack.c.b16 %v6814, %v6778
        %v7427 = vpack.c.b16 %v6815, %v6779
        %v7428 = vpack.c.b16 %v6816, %v6780
        %v7429 = vpack.c.b16 %v6817, %v6781
        %v7430 = vpack.c.b16 %v6818, %v6782
        %v7431 = vpack.c.b16 %v6819, %v6783
        %v7432 = vpack.c.b16 %v6820, %v6784
        %v7433 = vpack.c.b16 %v6821, %v6785
        %v7434 = vpack.c.b16 %v6822, %v6786
        %v7435 = vpack.c.b16 %v6823, %v6787
        %v7436 = vpack.c.b16 %v6824, %v6788
        %v7437 = vpack.c.b16 %v6825, %v6789
        %v7438 = vpack.c.b16 %v6826, %v6790
        %v7439 = vpack.c.b16 %v6863, %v6827
        %v7440 = vpack.c.b16 %v6864, %v6828
        %v7441 = vpack.c.b16 %v6865, %v6829
        %v7442 = vpack.c.b16 %v6866, %v6830
        %v7443 = vpack.c.b16 %v6867, %v6831
        %v7444 = vpack.c.b16 %v6868, %v6832
        %v7445 = vpack.c.b16 %v6869, %v6833
        %v7446 = vpack.c.b16 %v6870, %v6834
        %v7447 = vpack.c.b16 %v6871, %v6835
        %v7448 = vpack.c.b16 %v6872, %v6836
        %v7449 = vpack.c.b16 %v6873, %v6837
        %v7450 = vpack.c.b16 %v6874, %v6838
        %v7451 = vpack.c.b16 %v6875, %v6839
        %v7452 = vpack.c.b16 %v6876, %v6840
        %v7453 = vpack.c.b16 %v6877, %v6841
        %v7454 = vpack.c.b16 %v6878, %v6842
        %v7455 = vpack.c.b16 %v6879, %v6843
        %v7456 = vpack.c.b16 %v6880, %v6844
        %v7457 = vpack.c.b16 %v6881, %v6845
        %v7458 = vpack.c.b16 %v6882, %v6846
        %v7459 = vpack.c.b16 %v6883, %v6847
        %v7460 = vpack.c.b16 %v6884, %v6848
        %v7461 = vpack.c.b16 %v6885, %v6849
        %v7462 = vpack.c.b16 %v6886, %v6850
        %v7463 = vpack.c.b16 %v6887, %v6851
        %v7464 = vpack.c.b16 %v6888, %v6852
        %v7465 = vpack.c.b16 %v6889, %v6853
        %v7466 = vpack.c.b16 %v6890, %v6854
        %v7467 = vpack.c.b16 %v6891, %v6855
        %v7468 = vpack.c.b16 %v6892, %v6856
        %v7469 = vpack.c.b16 %v6893, %v6857
        %v7470 = vpack.c.b16 %v6894, %v6858
        %v7471 = vpack.c.b16 %v6895, %v6859
        %v7472 = vpack.c.b16 %v6896, %v6860
        %v7473 = vpack.c.b16 %v6897, %v6861
        %v7474 = vpack.c.b16 %v6898, %v6862
        %v7475 = vpack.c.b16 %v6935, %v6899
        %v7476 = vpack.c.b16 %v6936, %v6900
        %v7477 = vpack.c.b16 %v6937, %v6901
        %v7478 = vpack.c.b16 %v6938, %v6902
        %v7479 = vpack.c.b16 %v6939, %v6903
        %v7480 = vpack.c.b16 %v6940, %v6904
        %v7481 = vpack.c.b16 %v6941, %v6905
        %v7482 = vpack.c.b16 %v6942, %v6906
        %v7483 = vpack.c.b16 %v6943, %v6907
        %v7484 = vpack.c.b16 %v6944, %v6908
        %v7485 = vpack.c.b16 %v6945, %v6909
        %v7486 = vpack.c.b16 %v6946, %v6910
        %v7487 = vpack.c.b16 %v6947, %v6911
        %v7488 = vpack.c.b16 %v6948, %v6912
        %v7489 = vpack.c.b16 %v6949, %v6913
        %v7490 = vpack.c.b16 %v6950, %v6914
        %v7491 = vpack.c.b16 %v6951, %v6915
        %v7492 = vpack.c.b16 %v6952, %v6916
        %v7493 = vpack.c.b16 %v6953, %v6917
        %v7494 = vpack.c.b16 %v6954, %v6918
        %v7495 = vpack.c.b16 %v6955, %v6919
        %v7496 = vpack.c.b16 %v6956, %v6920
        %v7497 = vpack.c.b16 %v6957, %v6921
        %v7498 = vpack.c.b16 %v6958, %v6922
        %v7499 = vpack.c.b16 %v6959, %v6923
        %v7500 = vpack.c.b16 %v6960, %v6924
        %v7501 = vpack.c.b16 %v6961, %v6925
        %v7502 = vpack.c.b16 %v6962, %v6926
        %v7503 = vpack.c.b16 %v6963, %v6927
        %v7504 = vpack.c.b16 %v6964, %v6928
        %v7505 = vpack.c.b16 %v6965, %v6929
        %v7506 = vpack.c.b16 %v6966, %v6930
        %v7507 = vpack.c.b16 %v6967, %v6931
        %v7508 = vpack.c.b16 %v6968, %v6932
        %v7509 = vpack.c.b16 %v6969, %v6933
        %v7510 = vpack.c.b16 %v6970, %v6934
        %v7511 = vpack.c.b16 %v7007, %v6971
        %v7512 = vpack.c.b16 %v7008, %v6972
        %v7513 = vpack.c.b16 %v7009, %v6973
        %v7514 = vpack.c.b16 %v7010, %v6974
        %v7515 = vpack.c.b16 %v7011, %v6975
        %v7516 = vpack.c.b16 %v7012, %v6976
        %v7517 = vpack.c.b16 %v7013, %v6977
        %v7518 = vpack.c.b16 %v7014, %v6978
        %v7519 = vpack.c.b16 %v7015, %v6979
        %v7520 = vpack.c.b16 %v7016, %v6980
        %v7521 = vpack.c.b16 %v7017, %v6981
        %v7522 = vpack.c.b16 %v7018, %v6982
        %v7523 = vpack.c.b16 %v7019, %v6983
        %v7524 = vpack.c.b16 %v7020, %v6984
        %v7525 = vpack.c.b16 %v7021, %v6985
        %v7526 = vpack.c.b16 %v7022, %v6986
        %v7527 = vpack.c.b16 %v7023, %v6987
        %v7528 = vpack.c.b16 %v7024, %v6988
        %v7529 = vpack.c.b16 %v7025, %v6989
        %v7530 = vpack.c.b16 %v7026, %v6990
        %v7531 = vpack.c.b16 %v7027, %v6991
        %v7532 = vpack.c.b16 %v7028, %v6992
        %v7533 = vpack.c.b16 %v7029, %v6993
        %v7534 = vpack.c.b16 %v7030, %v6994
        %v7535 = vpack.c.b16 %v7031, %v6995
        %v7536 = vpack.c.b16 %v7032, %v6996
        %v7537 = vpack.c.b16 %v7033, %v6997
        %v7538 = vpack.c.b16 %v7034, %v6998
        %v7539 = vpack.c.b16 %v7035, %v6999
        %v7540 = vpack.c.b16 %v7036, %v7000
        %v7541 = vpack.c.b16 %v7037, %v7001
        %v7542 = vpack.c.b16 %v7038, %v7002
        %v7543 = vpack.c.b16 %v7039, %v7003
        %v7544 = vpack.c.b16 %v7040, %v7004
        %v7545 = vpack.c.b16 %v7041, %v7005
        %v7546 = vpack.c.b16 %v7042, %v7006
        %v7547 = vpack.c.b16 %v7079, %v7043
        %v7548 = vpack.c.b16 %v7080, %v7044
        %v7549 = vpack.c.b16 %v7081, %v7045
        %v7550 = vpack.c.b16 %v7082, %v7046
        %v7551 = vpack.c.b16 %v7083, %v7047
        %v7552 = vpack.c.b16 %v7084, %v7048
        %v7553 = vpack.c.b16 %v7085, %v7049
        %v7554 = vpack.c.b16 %v7086, %v7050
        %v7555 = vpack.c.b16 %v7087, %v7051
        %v7556 = vpack.c.b16 %v7088, %v7052
        %v7557 = vpack.c.b16 %v7089, %v7053
        %v7558 = vpack.c.b16 %v7090, %v7054
        %v7559 = vpack.c.b16 %v7091, %v7055
        %v7560 = vpack.c.b16 %v7092, %v7056
        %v7561 = vpack.c.b16 %v7093, %v7057
        %v7562 = vpack.c.b16 %v7094, %v7058
        %v7563 = vpack.c.b16 %v7095, %v7059
        %v7564 = vpack.c.b16 %v7096, %v7060
        %v7565 = vpack.c.b16 %v7097, %v7061
        %v7566 = vpack.c.b16 %v7098, %v7062
        %v7567 = vpack.c.b16 %v7099, %v7063
        %v7568 = vpack.c.b16 %v7100, %v7064
        %v7569 = vpack.c.b16 %v7101, %v7065
        %v7570 = vpack.c.b16 %v7102, %v7066
        %v7571 = vpack.c.b16 %v7103, %v7067
        %v7572 = vpack.c.b16 %v7104, %v7068
        %v7573 = vpack.c.b16 %v7105, %v7069
        %v7574 = vpack.c.b16 %v7106, %v7070
        %v7575 = vpack.c.b16 %v7107, %v7071
        %v7576 = vpack.c.b16 %v7108, %v7072
        %v7577 = vpack.c.b16 %v7109, %v7073
        %v7578 = vpack.c.b16 %v7110, %v7074
        %v7579 = vpack.c.b16 %v7111, %v7075
        %v7580 = vpack.c.b16 %v7112, %v7076
        %v7581 = vpack.c.b16 %v7113, %v7077
        %v7582 = vpack.c.b16 %v7114, %v7078
        %v7583 = vpack.c.b16 %v7151, %v7115
        %v7584 = vpack.c.b16 %v7152, %v7116
        %v7585 = vpack.c.b16 %v7153, %v7117
        %v7586 = vpack.c.b16 %v7154, %v7118
        %v7587 = vpack.c.b16 %v7155, %v7119
        %v7588 = vpack.c.b16 %v7156, %v7120
        %v7589 = vpack.c.b16 %v7157, %v7121
        %v7590 = vpack.c.b16 %v7158, %v7122
        %v7591 = vpack.c.b16 %v7159, %v7123
        %v7592 = vpack.c.b16 %v7160, %v7124
        %v7593 = vpack.c.b16 %v7161, %v7125
        %v7594 = vpack.c.b16 %v7162, %v7126
        %v7595 = vpack.c.b16 %v7163, %v7127
        %v7596 = vpack.c.b16 %v7164, %v7128
        %v7597 = vpack.c.b16 %v7165, %v7129
        %v7598 = vpack.c.b16 %v7166, %v7130
        %v7599 = vpack.c.b16 %v7167, %v7131
        %v7600 = vpack.c.b16 %v7168, %v7132
        %v7601 = vpack.c.b16 %v7169, %v7133
        %v7602 = vpack.c.b16 %v7170, %v7134
        %v7603 = vpack.c.b16 %v7171, %v7135
        %v7604 = vpack.c.b16 %v7172, %v7136
        %v7605 = vpack.c.b16 %v7173, %v7137
        %v7606 = vpack.c.b16 %v7174, %v7138
        %v7607 = vpack.c.b16 %v7175, %v7139
        %v7608 = vpack.c.b16 %v7176, %v7140
        %v7609 = vpack.c.b16 %v7177, %v7141
        %v7610 = vpack.c.b16 %v7178, %v7142
        %v7611 = vpack.c.b16 %v7179, %v7143
        %v7612 = vpack.c.b16 %v7180, %v7144
        %v7613 = vpack.c.b16 %v7181, %v7145
        %v7614 = vpack.c.b16 %v7182, %v7146
        %v7615 = vpack.c.b16 %v7183, %v7147
        %v7616 = vpack.c.b16 %v7184, %v7148
        %v7617 = vpack.c.b16 %v7185, %v7149
        %v7618 = vpack.c.b16 %v7186, %v7150
        %v7619 = vpack.c.b16 %v7223, %v7187
        %v7620 = vpack.c.b16 %v7224, %v7188
        %v7621 = vpack.c.b16 %v7225, %v7189
        %v7622 = vpack.c.b16 %v7226, %v7190
        %v7623 = vpack.c.b16 %v7227, %v7191
        %v7624 = vpack.c.b16 %v7228, %v7192
        %v7625 = vpack.c.b16 %v7229, %v7193
        %v7626 = vpack.c.b16 %v7230, %v7194
        %v7627 = vpack.c.b16 %v7231, %v7195
        %v7628 = vpack.c.b16 %v7232, %v7196
        %v7629 = vpack.c.b16 %v7233, %v7197
        %v7630 = vpack.c.b16 %v7234, %v7198
        %v7631 = vpack.c.b16 %v7235, %v7199
        %v7632 = vpack.c.b16 %v7236, %v7200
        %v7633 = vpack.c.b16 %v7237, %v7201
        %v7634 = vpack.c.b16 %v7238, %v7202
        %v7635 = vpack.c.b16 %v7239, %v7203
        %v7636 = vpack.c.b16 %v7240, %v7204
        %v7637 = vpack.c.b16 %v7241, %v7205
        %v7638 = vpack.c.b16 %v7242, %v7206
        %v7639 = vpack.c.b16 %v7243, %v7207
        %v7640 = vpack.c.b16 %v7244, %v7208
        %v7641 = vpack.c.b16 %v7245, %v7209
        %v7642 = vpack.c.b16 %v7246, %v7210
        %v7643 = vpack.c.b16 %v7247, %v7211
        %v7644 = vpack.c.b16 %v7248, %v7212
        %v7645 = vpack.c.b16 %v7249, %v7213
        %v7646 = vpack.c.b16 %v7250, %v7214
        %v7647 = vpack.c.b16 %v7251, %v7215
        %v7648 = vpack.c.b16 %v7252, %v7216
        %v7649 = vpack.c.b16 %v7253, %v7217
        %v7650 = vpack.c.b16 %v7254, %v7218
        %v7651 = vpack.c.b16 %v7255, %v7219
        %v7652 = vpack.c.b16 %v7256, %v7220
        %v7653 = vpack.c.b16 %v7257, %v7221
        %v7654 = vpack.c.b16 %v7258, %v7222
        %v7655 = vpack.c.b16 %v7295, %v7259
        %v7656 = vpack.c.b16 %v7296, %v7260
        %v7657 = vpack.c.b16 %v7297, %v7261
        %v7658 = vpack.c.b16 %v7298, %v7262
        %v7659 = vpack.c.b16 %v7299, %v7263
        %v7660 = vpack.c.b16 %v7300, %v7264
        %v7661 = vpack.c.b16 %v7301, %v7265
        %v7662 = vpack.c.b16 %v7302, %v7266
        %v7663 = vpack.c.b16 %v7303, %v7267
        %v7664 = vpack.c.b16 %v7304, %v7268
        %v7665 = vpack.c.b16 %v7305, %v7269
        %v7666 = vpack.c.b16 %v7306, %v7270
        %v7667 = vpack.c.b16 %v7307, %v7271
        %v7668 = vpack.c.b16 %v7308, %v7272
        %v7669 = vpack.c.b16 %v7309, %v7273
        %v7670 = vpack.c.b16 %v7310, %v7274
        %v7671 = vpack.c.b16 %v7311, %v7275
        %v7672 = vpack.c.b16 %v7312, %v7276
        %v7673 = vpack.c.b16 %v7313, %v7277
        %v7674 = vpack.c.b16 %v7314, %v7278
        %v7675 = vpack.c.b16 %v7315, %v7279
        %v7676 = vpack.c.b16 %v7316, %v7280
        %v7677 = vpack.c.b16 %v7317, %v7281
        %v7678 = vpack.c.b16 %v7318, %v7282
        %v7679 = vpack.c.b16 %v7319, %v7283
        %v7680 = vpack.c.b16 %v7320, %v7284
        %v7681 = vpack.c.b16 %v7321, %v7285
        %v7682 = vpack.c.b16 %v7322, %v7286
        %v7683 = vpack.c.b16 %v7323, %v7287
        %v7684 = vpack.c.b16 %v7324, %v7288
        %v7685 = vpack.c.b16 %v7325, %v7289
        %v7686 = vpack.c.b16 %v7326, %v7290
        %v7687 = vpack.c.b16 %v7327, %v7291
        %v7688 = vpack.c.b16 %v7328, %v7292
        %v7689 = vpack.c.b16 %v7329, %v7293
        %v7690 = vpack.c.b16 %v7330, %v7294
        %v7691 = vpack.c.b16 %v7331, %v7331
        %v7692 = vpack.c.b16 %v7332, %v7332
        %v7693 = vpack.c.b16 %v7333, %v7333
        %v7694 = vpack.c.b16 %v7334, %v7334
        %v7695 = vpack.c.b16 %v7335, %v7335
        %v7696 = vpack.c.b16 %v7336, %v7336
        %v7697 = vpack.c.b16 %v7337, %v7337
        %v7698 = vpack.c.b16 %v7338, %v7338
        %v7699 = vpack.c.b16 %v7339, %v7339
        %v7700 = vpack.c.b16 %v7340, %v7340
        %v7701 = vpack.c.b16 %v7341, %v7341
        %v7702 = vpack.c.b16 %v7342, %v7342
        %v7703 = vpack.c.b16 %v7343, %v7343
        %v7704 = vpack.c.b16 %v7344, %v7344
        %v7705 = vpack.c.b16 %v7345, %v7345
        %v7706 = vpack.c.b16 %v7346, %v7346
        %v7707 = vpack.c.b16 %v7347, %v7347
        %v7708 = vpack.c.b16 %v7348, %v7348
        %v7709 = vpack.c.b16 %v7349, %v7349
        %v7710 = vpack.c.b16 %v7350, %v7350
        %v7711 = vpack.c.b16 %v7351, %v7351
        %v7712 = vpack.c.b16 %v7352, %v7352
        %v7713 = vpack.c.b16 %v7353, %v7353
        %v7714 = vpack.c.b16 %v7354, %v7354
        %v7715 = vpack.c.b16 %v7355, %v7355
        %v7716 = vpack.c.b16 %v7356, %v7356
        %v7717 = vpack.c.b16 %v7357, %v7357
        %v7718 = vpack.c.b16 %v7358, %v7358
        %v7719 = vpack.c.b16 %v7359, %v7359
        %v7720 = vpack.c.b16 %v7360, %v7360
        %v7721 = vpack.c.b16 %v7361, %v7361
        %v7722 = vpack.c.b16 %v7362, %v7362
        %v7723 = vpack.c.b16 %v7363, %v7363
        %v7724 = vpack.c.b16 %v7364, %v7364
        %v7725 = vpack.c.b16 %v7365, %v7365
        %v7726 = vpack.c.b16 %v7366, %v7366
        %8087 = vmatprep.subr.bf16.mxu0 %v7368
        %8088 = vmatpush1.bf16.xpose.msra.mxu0 %v7367
        %8089 = vmatprep.subr.bf16.mxu0 %v7404
        %8090 = vmatpush1.bf16.xpose.msra.mxu0 %v7403
        %8091 = vmatprep.subr.bf16.mxu0 %v7440
        %8092 = vmatpush1.bf16.xpose.msra.mxu0 %v7439
        %8093 = vmatprep.subr.bf16.mxu0 %v7476
        %8094 = vmatpush1.bf16.xpose.msra.mxu0 %v7475
        %8095 = vmatprep.subr.bf16.mxu0 %v7512
        %8096 = vmatpush1.bf16.xpose.msra.mxu0 %v7511
        %8097 = vmatprep.subr.bf16.mxu0 %v7548
        %8098 = vmatpush1.bf16.xpose.msra.mxu0 %v7547
        %8099 = vmatprep.subr.bf16.mxu0 %v7584
        %8100 = vmatpush1.bf16.xpose.msra.mxu0 %v7583
        %8101 = vmatprep.subr.bf16.mxu0 %v7620
        %8102 = vmatpush1.bf16.xpose.msra.mxu0 %v7619
        %8103 = vmatprep.subr.bf16.mxu0 %v7656
        %8104 = vmatpush1.bf16.xpose.msra.mxu0 %v7655
        %8105 = vmatprep.subr.bf16.mxu0 %v7692
        %8106 = vmatpush1.bf16.xpose.msra.mxu0 %v7691
        %8107 = vmatprep.subr.bf16.mxu0 0
        %8108 = vmatpush1.bf16.xpose.msra.mxu0 0
        %8109 = vmatprep.subr.bf16.mxu0 0
        %8110 = vmatpush1.bf16.xpose.msra.mxu0 0
        %8111 = vmatprep.subr.bf16.mxu0 0
        %8112 = vmatpush1.bf16.xpose.msra.mxu0 0
        %8113 = vmatprep.subr.bf16.mxu0 0
        %8114 = vmatpush1.bf16.xpose.msra.mxu0 0
        %8115 = vmatprep.subr.bf16.mxu0 0
        %8116 = vmatpush1.bf16.xpose.msra.mxu0 0
        %8117 = vmatprep.subr.bf16.mxu0 0
        %8118 = vmatpush1.bf16.xpose.msra.mxu0 0
        %8119 = vmatprep.mubr.bf16.mxu0 %v5950
        %8120 = vmatmul.mubr.bf16.gmra.mrb[0].mxu0 %v5949
        %v8121 = vpop.f32.mrb[0].mxu0
        %v8122 = vadd.f32 %v6334, %v8121
        %v8123 = vpop.f32.mrb[0].mxu0
        %v8124 = vadd.f32 %v6338, %v8123
        %v8125 = vpop.f32.mrb[0].mxu0
        %v8126 = vpop.f32.mrb[0].mxu0
        %8127 = vdwg.mxu0
        %8128 = vmatprep.subr.bf16.mxu0 %v7370
        %8129 = vmatpush1.bf16.xpose.msra.mxu0 %v7369
        %8130 = vmatprep.subr.bf16.mxu0 %v7406
        %8131 = vmatpush1.bf16.xpose.msra.mxu0 %v7405
        %8132 = vmatprep.subr.bf16.mxu0 %v7442
        %8133 = vmatpush1.bf16.xpose.msra.mxu0 %v7441
        %8134 = vmatprep.subr.bf16.mxu0 %v7478
        %8135 = vmatpush1.bf16.xpose.msra.mxu0 %v7477
        %8136 = vmatprep.subr.bf16.mxu0 %v7514
        %8137 = vmatpush1.bf16.xpose.msra.mxu0 %v7513
        %8138 = vmatprep.subr.bf16.mxu0 %v7550
        %8139 = vmatpush1.bf16.xpose.msra.mxu0 %v7549
        %8140 = vmatprep.subr.bf16.mxu0 %v7586
        %8141 = vmatpush1.bf16.xpose.msra.mxu0 %v7585
        %8142 = vmatprep.subr.bf16.mxu0 %v7622
        %8143 = vmatpush1.bf16.xpose.msra.mxu0 %v7621
        %8144 = vmatprep.subr.bf16.mxu0 %v7658
        %8145 = vmatpush1.bf16.xpose.msra.mxu0 %v7657
        %8146 = vmatprep.subr.bf16.mxu0 %v7694
        %8147 = vmatpush1.bf16.xpose.msra.mxu0 %v7693
        %8148 = vmatprep.subr.bf16.mxu0 0
        %8149 = vmatpush1.bf16.xpose.msra.mxu0 0
        %8150 = vmatprep.subr.bf16.mxu0 0
        %8151 = vmatpush1.bf16.xpose.msra.mxu0 0
        %8152 = vmatprep.subr.bf16.mxu0 0
        %8153 = vmatpush1.bf16.xpose.msra.mxu0 0
        %8154 = vmatprep.subr.bf16.mxu0 0
        %8155 = vmatpush1.bf16.xpose.msra.mxu0 0
        %8156 = vmatprep.subr.bf16.mxu0 0
        %8157 = vmatpush1.bf16.xpose.msra.mxu0 0
        %8158 = vmatprep.subr.bf16.mxu0 0
        %8159 = vmatpush1.bf16.xpose.msra.mxu0 0
        %8160 = vmatprep.mubr.bf16.mxu0 %v5952
        %8161 = vmatmul.mubr.bf16.gmra.mrb[0].mxu0 %v5951
        %v8162 = vpop.f32.mrb[0].mxu0
        %v8163 = vadd.f32 %v8122, %v8162
        %v8164 = vpop.f32.mrb[0].mxu0
        %v8165 = vadd.f32 %v8124, %v8164
        %v8166 = vpop.f32.mrb[0].mxu0
        %v8167 = vpop.f32.mrb[0].mxu0
        %8168 = vdwg.mxu0
        %8169 = vmatprep.subr.bf16.mxu0 %v7372
        %8170 = vmatpush1.bf16.xpose.msra.mxu0 %v7371
        %8171 = vmatprep.subr.bf16.mxu0 %v7408
        %8172 = vmatpush1.bf16.xpose.msra.mxu0 %v7407
        %8173 = vmatprep.subr.bf16.mxu0 %v7444
        %8174 = vmatpush1.bf16.xpose.msra.mxu0 %v7443
        %8175 = vmatprep.subr.bf16.mxu0 %v7480
        %8176 = vmatpush1.bf16.xpose.msra.mxu0 %v7479
        %8177 = vmatprep.subr.bf16.mxu0 %v7516
        %8178 = vmatpush1.bf16.xpose.msra.mxu0 %v7515
        %8179 = vmatprep.subr.bf16.mxu0 %v7552
        %8180 = vmatpush1.bf16.xpose.msra.mxu0 %v7551
        %8181 = vmatprep.subr.bf16.mxu0 %v7588
        %8182 = vmatpush1.bf16.xpose.msra.mxu0 %v7587
        %8183 = vmatprep.subr.bf16.mxu0 %v7624
        %8184 = vmatpush1.bf16.xpose.msra.mxu0 %v7623
        %8185 = vmatprep.subr.bf16.mxu0 %v7660
        %8186 = vmatpush1.bf16.xpose.msra.mxu0 %v7659
        %8187 = vmatprep.subr.bf16.mxu0 %v7696
        %8188 = vmatpush1.bf16.xpose.msra.mxu0 %v7695
        %8189 = vmatprep.subr.bf16.mxu0 0
        %8190 = vmatpush1.bf16.xpose.msra.mxu0 0
        %8191 = vmatprep.subr.bf16.mxu0 0
        %8192 = vmatpush1.bf16.xpose.msra.mxu0 0
        %8193 = vmatprep.subr.bf16.mxu0 0
        %8194 = vmatpush1.bf16.xpose.msra.mxu0 0
        %8195 = vmatprep.subr.bf16.mxu0 0
        %8196 = vmatpush1.bf16.xpose.msra.mxu0 0
        %8197 = vmatprep.subr.bf16.mxu0 0
        %8198 = vmatpush1.bf16.xpose.msra.mxu0 0
        %8199 = vmatprep.subr.bf16.mxu0 0
        %8200 = vmatpush1.bf16.xpose.msra.mxu0 0
        %8201 = vmatprep.mubr.bf16.mxu0 %v5954
        %8202 = vmatmul.mubr.bf16.gmra.mrb[0].mxu0 %v5953
        %v8203 = vpop.f32.mrb[0].mxu0
        %v8204 = vadd.f32 %v8163, %v8203
        %v8205 = vpop.f32.mrb[0].mxu0
        %v8206 = vadd.f32 %v8165, %v8205
        %v8207 = vpop.f32.mrb[0].mxu0
        %v8208 = vpop.f32.mrb[0].mxu0
        %8209 = vdwg.mxu0
        %8210 = vmatprep.subr.bf16.mxu0 %v7374
        %8211 = vmatpush1.bf16.xpose.msra.mxu0 %v7373
        %8212 = vmatprep.subr.bf16.mxu0 %v7410
        %8213 = vmatpush1.bf16.xpose.msra.mxu0 %v7409
        %8214 = vmatprep.subr.bf16.mxu0 %v7446
        %8215 = vmatpush1.bf16.xpose.msra.mxu0 %v7445
        %8216 = vmatprep.subr.bf16.mxu0 %v7482
        %8217 = vmatpush1.bf16.xpose.msra.mxu0 %v7481
        %8218 = vmatprep.subr.bf16.mxu0 %v7518
        %8219 = vmatpush1.bf16.xpose.msra.mxu0 %v7517
        %8220 = vmatprep.subr.bf16.mxu0 %v7554
        %8221 = vmatpush1.bf16.xpose.msra.mxu0 %v7553
        %8222 = vmatprep.subr.bf16.mxu0 %v7590
        %8223 = vmatpush1.bf16.xpose.msra.mxu0 %v7589
        %8224 = vmatprep.subr.bf16.mxu0 %v7626
        %8225 = vmatpush1.bf16.xpose.msra.mxu0 %v7625
        %8226 = vmatprep.subr.bf16.mxu0 %v7662
        %8227 = vmatpush1.bf16.xpose.msra.mxu0 %v7661
        %8228 = vmatprep.subr.bf16.mxu0 %v7698
        %8229 = vmatpush1.bf16.xpose.msra.mxu0 %v7697
        %8230 = vmatprep.subr.bf16.mxu0 0
        %8231 = vmatpush1.bf16.xpose.msra.mxu0 0
        %8232 = vmatprep.subr.bf16.mxu0 0
        %8233 = vmatpush1.bf16.xpose.msra.mxu0 0
        %8234 = vmatprep.subr.bf16.mxu0 0
        %8235 = vmatpush1.bf16.xpose.msra.mxu0 0
        %8236 = vmatprep.subr.bf16.mxu0 0
        %8237 = vmatpush1.bf16.xpose.msra.mxu0 0
        %8238 = vmatprep.subr.bf16.mxu0 0
        %8239 = vmatpush1.bf16.xpose.msra.mxu0 0
        %8240 = vmatprep.subr.bf16.mxu0 0
        %8241 = vmatpush1.bf16.xpose.msra.mxu0 0
        %8242 = vmatprep.mubr.bf16.mxu0 %v5956
        %8243 = vmatmul.mubr.bf16.gmra.mrb[0].mxu0 %v5955
        %v8244 = vpop.f32.mrb[0].mxu0
        %v8245 = vadd.f32 %v8204, %v8244
        %v8246 = vpop.f32.mrb[0].mxu0
        %v8247 = vadd.f32 %v8206, %v8246
        %v8248 = vpop.f32.mrb[0].mxu0
        %v8249 = vpop.f32.mrb[0].mxu0
        %8250 = vdwg.mxu0
        %8251 = vmatprep.subr.bf16.mxu0 %v7376
        %8252 = vmatpush1.bf16.xpose.msra.mxu0 %v7375
        %8253 = vmatprep.subr.bf16.mxu0 %v7412
        %8254 = vmatpush1.bf16.xpose.msra.mxu0 %v7411
        %8255 = vmatprep.subr.bf16.mxu0 %v7448
        %8256 = vmatpush1.bf16.xpose.msra.mxu0 %v7447
        %8257 = vmatprep.subr.bf16.mxu0 %v7484
        %8258 = vmatpush1.bf16.xpose.msra.mxu0 %v7483
        %8259 = vmatprep.subr.bf16.mxu0 %v7520
        %8260 = vmatpush1.bf16.xpose.msra.mxu0 %v7519
        %8261 = vmatprep.subr.bf16.mxu0 %v7556
        %8262 = vmatpush1.bf16.xpose.msra.mxu0 %v7555
        %8263 = vmatprep.subr.bf16.mxu0 %v7592
        %8264 = vmatpush1.bf16.xpose.msra.mxu0 %v7591
        %8265 = vmatprep.subr.bf16.mxu0 %v7628
        %8266 = vmatpush1.bf16.xpose.msra.mxu0 %v7627
        %8267 = vmatprep.subr.bf16.mxu0 %v7664
        %8268 = vmatpush1.bf16.xpose.msra.mxu0 %v7663
        %8269 = vmatprep.subr.bf16.mxu0 %v7700
        %8270 = vmatpush1.bf16.xpose.msra.mxu0 %v7699
        %8271 = vmatprep.subr.bf16.mxu0 0
        %8272 = vmatpush1.bf16.xpose.msra.mxu0 0
        %8273 = vmatprep.subr.bf16.mxu0 0
        %8274 = vmatpush1.bf16.xpose.msra.mxu0 0
        %8275 = vmatprep.subr.bf16.mxu0 0
        %8276 = vmatpush1.bf16.xpose.msra.mxu0 0
        %8277 = vmatprep.subr.bf16.mxu0 0
        %8278 = vmatpush1.bf16.xpose.msra.mxu0 0
        %8279 = vmatprep.subr.bf16.mxu0 0
        %8280 = vmatpush1.bf16.xpose.msra.mxu0 0
        %8281 = vmatprep.subr.bf16.mxu0 0
        %8282 = vmatpush1.bf16.xpose.msra.mxu0 0
        %8283 = vmatprep.mubr.bf16.mxu0 %v5958
        %8284 = vmatmul.mubr.bf16.gmra.mrb[0].mxu0 %v5957
        %v8285 = vpop.f32.mrb[0].mxu0
        %v8286 = vadd.f32 %v8245, %v8285
        %v8287 = vpop.f32.mrb[0].mxu0
        %v8288 = vadd.f32 %v8247, %v8287
        %v8289 = vpop.f32.mrb[0].mxu0
        %v8290 = vpop.f32.mrb[0].mxu0
        %8291 = vdwg.mxu0
        %8292 = vmatprep.subr.bf16.mxu0 %v7378
        %8293 = vmatpush1.bf16.xpose.msra.mxu0 %v7377
        %8294 = vmatprep.subr.bf16.mxu0 %v7414
        %8295 = vmatpush1.bf16.xpose.msra.mxu0 %v7413
        %8296 = vmatprep.subr.bf16.mxu0 %v7450
        %8297 = vmatpush1.bf16.xpose.msra.mxu0 %v7449
        %8298 = vmatprep.subr.bf16.mxu0 %v7486
        %8299 = vmatpush1.bf16.xpose.msra.mxu0 %v7485
        %8300 = vmatprep.subr.bf16.mxu0 %v7522
        %8301 = vmatpush1.bf16.xpose.msra.mxu0 %v7521
        %8302 = vmatprep.subr.bf16.mxu0 %v7558
        %8303 = vmatpush1.bf16.xpose.msra.mxu0 %v7557
        %8304 = vmatprep.subr.bf16.mxu0 %v7594
        %8305 = vmatpush1.bf16.xpose.msra.mxu0 %v7593
        %8306 = vmatprep.subr.bf16.mxu0 %v7630
        %8307 = vmatpush1.bf16.xpose.msra.mxu0 %v7629
        %8308 = vmatprep.subr.bf16.mxu0 %v7666
        %8309 = vmatpush1.bf16.xpose.msra.mxu0 %v7665
        %8310 = vmatprep.subr.bf16.mxu0 %v7702
        %8311 = vmatpush1.bf16.xpose.msra.mxu0 %v7701
        %8312 = vmatprep.subr.bf16.mxu0 0
        %8313 = vmatpush1.bf16.xpose.msra.mxu0 0
        %8314 = vmatprep.subr.bf16.mxu0 0
        %8315 = vmatpush1.bf16.xpose.msra.mxu0 0
        %8316 = vmatprep.subr.bf16.mxu0 0
        %8317 = vmatpush1.bf16.xpose.msra.mxu0 0
        %8318 = vmatprep.subr.bf16.mxu0 0
        %8319 = vmatpush1.bf16.xpose.msra.mxu0 0
        %8320 = vmatprep.subr.bf16.mxu0 0
        %8321 = vmatpush1.bf16.xpose.msra.mxu0 0
        %8322 = vmatprep.subr.bf16.mxu0 0
        %8323 = vmatpush1.bf16.xpose.msra.mxu0 0
        %8324 = vmatprep.mubr.bf16.mxu0 %v5960
        %8325 = vmatmul.mubr.bf16.gmra.mrb[0].mxu0 %v5959
        %v8326 = vpop.f32.mrb[0].mxu0
        %v8327 = vadd.f32 %v8286, %v8326
        %v8328 = vpop.f32.mrb[0].mxu0
        %v8329 = vadd.f32 %v8288, %v8328
        %v8330 = vpop.f32.mrb[0].mxu0
        %v8331 = vpop.f32.mrb[0].mxu0
        %8332 = vdwg.mxu0
        %8333 = vmatprep.subr.bf16.mxu0 %v7380
        %8334 = vmatpush1.bf16.xpose.msra.mxu0 %v7379
        %8335 = vmatprep.subr.bf16.mxu0 %v7416
        %8336 = vmatpush1.bf16.xpose.msra.mxu0 %v7415
        %8337 = vmatprep.subr.bf16.mxu0 %v7452
        %8338 = vmatpush1.bf16.xpose.msra.mxu0 %v7451
        %8339 = vmatprep.subr.bf16.mxu0 %v7488
        %8340 = vmatpush1.bf16.xpose.msra.mxu0 %v7487
        %8341 = vmatprep.subr.bf16.mxu0 %v7524
        %8342 = vmatpush1.bf16.xpose.msra.mxu0 %v7523
        %8343 = vmatprep.subr.bf16.mxu0 %v7560
        %8344 = vmatpush1.bf16.xpose.msra.mxu0 %v7559
        %8345 = vmatprep.subr.bf16.mxu0 %v7596
        %8346 = vmatpush1.bf16.xpose.msra.mxu0 %v7595
        %8347 = vmatprep.subr.bf16.mxu0 %v7632
        %8348 = vmatpush1.bf16.xpose.msra.mxu0 %v7631
        %8349 = vmatprep.subr.bf16.mxu0 %v7668
        %8350 = vmatpush1.bf16.xpose.msra.mxu0 %v7667
        %8351 = vmatprep.subr.bf16.mxu0 %v7704
        %8352 = vmatpush1.bf16.xpose.msra.mxu0 %v7703
        %8353 = vmatprep.subr.bf16.mxu0 0
        %8354 = vmatpush1.bf16.xpose.msra.mxu0 0
        %8355 = vmatprep.subr.bf16.mxu0 0
        %8356 = vmatpush1.bf16.xpose.msra.mxu0 0
        %8357 = vmatprep.subr.bf16.mxu0 0
        %8358 = vmatpush1.bf16.xpose.msra.mxu0 0
        %8359 = vmatprep.subr.bf16.mxu0 0
        %8360 = vmatpush1.bf16.xpose.msra.mxu0 0
        %8361 = vmatprep.subr.bf16.mxu0 0
        %8362 = vmatpush1.bf16.xpose.msra.mxu0 0
        %8363 = vmatprep.subr.bf16.mxu0 0
        %8364 = vmatpush1.bf16.xpose.msra.mxu0 0
        %8365 = vmatprep.mubr.bf16.mxu0 %v5962
        %8366 = vmatmul.mubr.bf16.gmra.mrb[0].mxu0 %v5961
        %v8367 = vpop.f32.mrb[0].mxu0
        %v8368 = vadd.f32 %v8327, %v8367
        %v8369 = vpop.f32.mrb[0].mxu0
        %v8370 = vadd.f32 %v8329, %v8369
        %v8371 = vpop.f32.mrb[0].mxu0
        %v8372 = vpop.f32.mrb[0].mxu0
        %8373 = vdwg.mxu0
        %8374 = vmatprep.subr.bf16.mxu0 %v7382
        %8375 = vmatpush1.bf16.xpose.msra.mxu0 %v7381
        %8376 = vmatprep.subr.bf16.mxu0 %v7418
        %8377 = vmatpush1.bf16.xpose.msra.mxu0 %v7417
        %8378 = vmatprep.subr.bf16.mxu0 %v7454
        %8379 = vmatpush1.bf16.xpose.msra.mxu0 %v7453
        %8380 = vmatprep.subr.bf16.mxu0 %v7490
        %8381 = vmatpush1.bf16.xpose.msra.mxu0 %v7489
        %8382 = vmatprep.subr.bf16.mxu0 %v7526
        %8383 = vmatpush1.bf16.xpose.msra.mxu0 %v7525
        %8384 = vmatprep.subr.bf16.mxu0 %v7562
        %8385 = vmatpush1.bf16.xpose.msra.mxu0 %v7561
        %8386 = vmatprep.subr.bf16.mxu0 %v7598
        %8387 = vmatpush1.bf16.xpose.msra.mxu0 %v7597
        %8388 = vmatprep.subr.bf16.mxu0 %v7634
        %8389 = vmatpush1.bf16.xpose.msra.mxu0 %v7633
        %8390 = vmatprep.subr.bf16.mxu0 %v7670
        %8391 = vmatpush1.bf16.xpose.msra.mxu0 %v7669
        %8392 = vmatprep.subr.bf16.mxu0 %v7706
        %8393 = vmatpush1.bf16.xpose.msra.mxu0 %v7705
        %8394 = vmatprep.subr.bf16.mxu0 0
        %8395 = vmatpush1.bf16.xpose.msra.mxu0 0
        %8396 = vmatprep.subr.bf16.mxu0 0
        %8397 = vmatpush1.bf16.xpose.msra.mxu0 0
        %8398 = vmatprep.subr.bf16.mxu0 0
        %8399 = vmatpush1.bf16.xpose.msra.mxu0 0
        %8400 = vmatprep.subr.bf16.mxu0 0
        %8401 = vmatpush1.bf16.xpose.msra.mxu0 0
        %8402 = vmatprep.subr.bf16.mxu0 0
        %8403 = vmatpush1.bf16.xpose.msra.mxu0 0
        %8404 = vmatprep.subr.bf16.mxu0 0
        %8405 = vmatpush1.bf16.xpose.msra.mxu0 0
        %8406 = vmatprep.mubr.bf16.mxu0 %v5964
        %8407 = vmatmul.mubr.bf16.gmra.mrb[0].mxu0 %v5963
        %v8408 = vpop.f32.mrb[0].mxu0
        %v8409 = vadd.f32 %v8368, %v8408
        %v8410 = vpop.f32.mrb[0].mxu0
        %v8411 = vadd.f32 %v8370, %v8410
        %v8412 = vpop.f32.mrb[0].mxu0
        %v8413 = vpop.f32.mrb[0].mxu0
        %8414 = vdwg.mxu0
        %8415 = vmatprep.subr.bf16.mxu0 %v7384
        %8416 = vmatpush1.bf16.xpose.msra.mxu0 %v7383
        %8417 = vmatprep.subr.bf16.mxu0 %v7420
        %8418 = vmatpush1.bf16.xpose.msra.mxu0 %v7419
        %8419 = vmatprep.subr.bf16.mxu0 %v7456
        %8420 = vmatpush1.bf16.xpose.msra.mxu0 %v7455
        %8421 = vmatprep.subr.bf16.mxu0 %v7492
        %8422 = vmatpush1.bf16.xpose.msra.mxu0 %v7491
        %8423 = vmatprep.subr.bf16.mxu0 %v7528
        %8424 = vmatpush1.bf16.xpose.msra.mxu0 %v7527
        %8425 = vmatprep.subr.bf16.mxu0 %v7564
        %8426 = vmatpush1.bf16.xpose.msra.mxu0 %v7563
        %8427 = vmatprep.subr.bf16.mxu0 %v7600
        %8428 = vmatpush1.bf16.xpose.msra.mxu0 %v7599
        %8429 = vmatprep.subr.bf16.mxu0 %v7636
        %8430 = vmatpush1.bf16.xpose.msra.mxu0 %v7635
        %8431 = vmatprep.subr.bf16.mxu0 %v7672
        %8432 = vmatpush1.bf16.xpose.msra.mxu0 %v7671
        %8433 = vmatprep.subr.bf16.mxu0 %v7708
        %8434 = vmatpush1.bf16.xpose.msra.mxu0 %v7707
        %8435 = vmatprep.subr.bf16.mxu0 0
        %8436 = vmatpush1.bf16.xpose.msra.mxu0 0
        %8437 = vmatprep.subr.bf16.mxu0 0
        %8438 = vmatpush1.bf16.xpose.msra.mxu0 0
        %8439 = vmatprep.subr.bf16.mxu0 0
        %8440 = vmatpush1.bf16.xpose.msra.mxu0 0
        %8441 = vmatprep.subr.bf16.mxu0 0
        %8442 = vmatpush1.bf16.xpose.msra.mxu0 0
        %8443 = vmatprep.subr.bf16.mxu0 0
        %8444 = vmatpush1.bf16.xpose.msra.mxu0 0
        %8445 = vmatprep.subr.bf16.mxu0 0
        %8446 = vmatpush1.bf16.xpose.msra.mxu0 0
        %8447 = vmatprep.mubr.bf16.mxu0 %v5966
        %8448 = vmatmul.mubr.bf16.gmra.mrb[0].mxu0 %v5965
        %v8449 = vpop.f32.mrb[0].mxu0
        %v8450 = vadd.f32 %v8409, %v8449
        %v8451 = vpop.f32.mrb[0].mxu0
        %v8452 = vadd.f32 %v8411, %v8451
        %v8453 = vpop.f32.mrb[0].mxu0
        %v8454 = vpop.f32.mrb[0].mxu0
        %8455 = vdwg.mxu0
        %8456 = vmatprep.subr.bf16.mxu0 %v7386
        %8457 = vmatpush1.bf16.xpose.msra.mxu0 %v7385
        %8458 = vmatprep.subr.bf16.mxu0 %v7422
        %8459 = vmatpush1.bf16.xpose.msra.mxu0 %v7421
        %8460 = vmatprep.subr.bf16.mxu0 %v7458
        %8461 = vmatpush1.bf16.xpose.msra.mxu0 %v7457
        %8462 = vmatprep.subr.bf16.mxu0 %v7494
        %8463 = vmatpush1.bf16.xpose.msra.mxu0 %v7493
        %8464 = vmatprep.subr.bf16.mxu0 %v7530
        %8465 = vmatpush1.bf16.xpose.msra.mxu0 %v7529
        %8466 = vmatprep.subr.bf16.mxu0 %v7566
        %8467 = vmatpush1.bf16.xpose.msra.mxu0 %v7565
        %8468 = vmatprep.subr.bf16.mxu0 %v7602
        %8469 = vmatpush1.bf16.xpose.msra.mxu0 %v7601
        %8470 = vmatprep.subr.bf16.mxu0 %v7638
        %8471 = vmatpush1.bf16.xpose.msra.mxu0 %v7637
        %8472 = vmatprep.subr.bf16.mxu0 %v7674
        %8473 = vmatpush1.bf16.xpose.msra.mxu0 %v7673
        %8474 = vmatprep.subr.bf16.mxu0 %v7710
        %8475 = vmatpush1.bf16.xpose.msra.mxu0 %v7709
        %8476 = vmatprep.subr.bf16.mxu0 0
        %8477 = vmatpush1.bf16.xpose.msra.mxu0 0
        %8478 = vmatprep.subr.bf16.mxu0 0
        %8479 = vmatpush1.bf16.xpose.msra.mxu0 0
        %8480 = vmatprep.subr.bf16.mxu0 0
        %8481 = vmatpush1.bf16.xpose.msra.mxu0 0
        %8482 = vmatprep.subr.bf16.mxu0 0
        %8483 = vmatpush1.bf16.xpose.msra.mxu0 0
        %8484 = vmatprep.subr.bf16.mxu0 0
        %8485 = vmatpush1.bf16.xpose.msra.mxu0 0
        %8486 = vmatprep.subr.bf16.mxu0 0
        %8487 = vmatpush1.bf16.xpose.msra.mxu0 0
        %8488 = vmatprep.mubr.bf16.mxu0 %v5968
        %8489 = vmatmul.mubr.bf16.gmra.mrb[0].mxu0 %v5967
        %v8490 = vpop.f32.mrb[0].mxu0
        %v8491 = vadd.f32 %v8450, %v8490
        %v8492 = vpop.f32.mrb[0].mxu0
        %v8493 = vadd.f32 %v8452, %v8492
        %v8494 = vpop.f32.mrb[0].mxu0
        %v8495 = vpop.f32.mrb[0].mxu0
        %8496 = vdwg.mxu0
        %8497 = vmatprep.subr.bf16.mxu0 %v7388
        %8498 = vmatpush1.bf16.xpose.msra.mxu0 %v7387
        %8499 = vmatprep.subr.bf16.mxu0 %v7424
        %8500 = vmatpush1.bf16.xpose.msra.mxu0 %v7423
        %8501 = vmatprep.subr.bf16.mxu0 %v7460
        %8502 = vmatpush1.bf16.xpose.msra.mxu0 %v7459
        %8503 = vmatprep.subr.bf16.mxu0 %v7496
        %8504 = vmatpush1.bf16.xpose.msra.mxu0 %v7495
        %8505 = vmatprep.subr.bf16.mxu0 %v7532
        %8506 = vmatpush1.bf16.xpose.msra.mxu0 %v7531
        %8507 = vmatprep.subr.bf16.mxu0 %v7568
        %8508 = vmatpush1.bf16.xpose.msra.mxu0 %v7567
        %8509 = vmatprep.subr.bf16.mxu0 %v7604
        %8510 = vmatpush1.bf16.xpose.msra.mxu0 %v7603
        %8511 = vmatprep.subr.bf16.mxu0 %v7640
        %8512 = vmatpush1.bf16.xpose.msra.mxu0 %v7639
        %8513 = vmatprep.subr.bf16.mxu0 %v7676
        %8514 = vmatpush1.bf16.xpose.msra.mxu0 %v7675
        %8515 = vmatprep.subr.bf16.mxu0 %v7712
        %8516 = vmatpush1.bf16.xpose.msra.mxu0 %v7711
        %8517 = vmatprep.subr.bf16.mxu0 0
        %8518 = vmatpush1.bf16.xpose.msra.mxu0 0
        %8519 = vmatprep.subr.bf16.mxu0 0
        %8520 = vmatpush1.bf16.xpose.msra.mxu0 0
        %8521 = vmatprep.subr.bf16.mxu0 0
        %8522 = vmatpush1.bf16.xpose.msra.mxu0 0
        %8523 = vmatprep.subr.bf16.mxu0 0
        %8524 = vmatpush1.bf16.xpose.msra.mxu0 0
        %8525 = vmatprep.subr.bf16.mxu0 0
        %8526 = vmatpush1.bf16.xpose.msra.mxu0 0
        %8527 = vmatprep.subr.bf16.mxu0 0
        %8528 = vmatpush1.bf16.xpose.msra.mxu0 0
        %8529 = vmatprep.mubr.bf16.mxu0 %v5970
        %8530 = vmatmul.mubr.bf16.gmra.mrb[0].mxu0 %v5969
        %v8531 = vpop.f32.mrb[0].mxu0
        %v8532 = vadd.f32 %v8491, %v8531
        %v8533 = vpop.f32.mrb[0].mxu0
        %v8534 = vadd.f32 %v8493, %v8533
        %v8535 = vpop.f32.mrb[0].mxu0
        %v8536 = vpop.f32.mrb[0].mxu0
        %8537 = vdwg.mxu0
        %8538 = vmatprep.subr.bf16.mxu0 %v7390
        %8539 = vmatpush1.bf16.xpose.msra.mxu0 %v7389
        %8540 = vmatprep.subr.bf16.mxu0 %v7426
        %8541 = vmatpush1.bf16.xpose.msra.mxu0 %v7425
        %8542 = vmatprep.subr.bf16.mxu0 %v7462
        %8543 = vmatpush1.bf16.xpose.msra.mxu0 %v7461
        %8544 = vmatprep.subr.bf16.mxu0 %v7498
        %8545 = vmatpush1.bf16.xpose.msra.mxu0 %v7497
        %8546 = vmatprep.subr.bf16.mxu0 %v7534
        %8547 = vmatpush1.bf16.xpose.msra.mxu0 %v7533
        %8548 = vmatprep.subr.bf16.mxu0 %v7570
        %8549 = vmatpush1.bf16.xpose.msra.mxu0 %v7569
        %8550 = vmatprep.subr.bf16.mxu0 %v7606
        %8551 = vmatpush1.bf16.xpose.msra.mxu0 %v7605
        %8552 = vmatprep.subr.bf16.mxu0 %v7642
        %8553 = vmatpush1.bf16.xpose.msra.mxu0 %v7641
        %8554 = vmatprep.subr.bf16.mxu0 %v7678
        %8555 = vmatpush1.bf16.xpose.msra.mxu0 %v7677
        %8556 = vmatprep.subr.bf16.mxu0 %v7714
        %8557 = vmatpush1.bf16.xpose.msra.mxu0 %v7713
        %8558 = vmatprep.subr.bf16.mxu0 0
        %8559 = vmatpush1.bf16.xpose.msra.mxu0 0
        %8560 = vmatprep.subr.bf16.mxu0 0
        %8561 = vmatpush1.bf16.xpose.msra.mxu0 0
        %8562 = vmatprep.subr.bf16.mxu0 0
        %8563 = vmatpush1.bf16.xpose.msra.mxu0 0
        %8564 = vmatprep.subr.bf16.mxu0 0
        %8565 = vmatpush1.bf16.xpose.msra.mxu0 0
        %8566 = vmatprep.subr.bf16.mxu0 0
        %8567 = vmatpush1.bf16.xpose.msra.mxu0 0
        %8568 = vmatprep.subr.bf16.mxu0 0
        %8569 = vmatpush1.bf16.xpose.msra.mxu0 0
        %8570 = vmatprep.mubr.bf16.mxu0 %v5972
        %8571 = vmatmul.mubr.bf16.gmra.mrb[0].mxu0 %v5971
        %v8572 = vpop.f32.mrb[0].mxu0
        %v8573 = vadd.f32 %v8532, %v8572
        %v8574 = vpop.f32.mrb[0].mxu0
        %v8575 = vadd.f32 %v8534, %v8574
        %v8576 = vpop.f32.mrb[0].mxu0
        %v8577 = vpop.f32.mrb[0].mxu0
        %8578 = vdwg.mxu0
        %8579 = vmatprep.subr.bf16.mxu0 %v7392
        %8580 = vmatpush1.bf16.xpose.msra.mxu0 %v7391
        %8581 = vmatprep.subr.bf16.mxu0 %v7428
        %8582 = vmatpush1.bf16.xpose.msra.mxu0 %v7427
        %8583 = vmatprep.subr.bf16.mxu0 %v7464
        %8584 = vmatpush1.bf16.xpose.msra.mxu0 %v7463
        %8585 = vmatprep.subr.bf16.mxu0 %v7500
        %8586 = vmatpush1.bf16.xpose.msra.mxu0 %v7499
        %8587 = vmatprep.subr.bf16.mxu0 %v7536
        %8588 = vmatpush1.bf16.xpose.msra.mxu0 %v7535
        %8589 = vmatprep.subr.bf16.mxu0 %v7572
        %8590 = vmatpush1.bf16.xpose.msra.mxu0 %v7571
        %8591 = vmatprep.subr.bf16.mxu0 %v7608
        %8592 = vmatpush1.bf16.xpose.msra.mxu0 %v7607
        %8593 = vmatprep.subr.bf16.mxu0 %v7644
        %8594 = vmatpush1.bf16.xpose.msra.mxu0 %v7643
        %8595 = vmatprep.subr.bf16.mxu0 %v7680
        %8596 = vmatpush1.bf16.xpose.msra.mxu0 %v7679
        %8597 = vmatprep.subr.bf16.mxu0 %v7716
        %8598 = vmatpush1.bf16.xpose.msra.mxu0 %v7715
        %8599 = vmatprep.subr.bf16.mxu0 0
        %8600 = vmatpush1.bf16.xpose.msra.mxu0 0
        %8601 = vmatprep.subr.bf16.mxu0 0
        %8602 = vmatpush1.bf16.xpose.msra.mxu0 0
        %8603 = vmatprep.subr.bf16.mxu0 0
        %8604 = vmatpush1.bf16.xpose.msra.mxu0 0
        %8605 = vmatprep.subr.bf16.mxu0 0
        %8606 = vmatpush1.bf16.xpose.msra.mxu0 0
        %8607 = vmatprep.subr.bf16.mxu0 0
        %8608 = vmatpush1.bf16.xpose.msra.mxu0 0
        %8609 = vmatprep.subr.bf16.mxu0 0
        %8610 = vmatpush1.bf16.xpose.msra.mxu0 0
        %8611 = vmatprep.mubr.bf16.mxu0 %v5974
        %8612 = vmatmul.mubr.bf16.gmra.mrb[0].mxu0 %v5973
        %v8613 = vpop.f32.mrb[0].mxu0
        %v8614 = vadd.f32 %v8573, %v8613
        %v8615 = vpop.f32.mrb[0].mxu0
        %v8616 = vadd.f32 %v8575, %v8615
        %v8617 = vpop.f32.mrb[0].mxu0
        %v8618 = vpop.f32.mrb[0].mxu0
        %8619 = vdwg.mxu0
        %8620 = vmatprep.subr.bf16.mxu0 %v7394
        %8621 = vmatpush1.bf16.xpose.msra.mxu0 %v7393
        %8622 = vmatprep.subr.bf16.mxu0 %v7430
        %8623 = vmatpush1.bf16.xpose.msra.mxu0 %v7429
        %8624 = vmatprep.subr.bf16.mxu0 %v7466
        %8625 = vmatpush1.bf16.xpose.msra.mxu0 %v7465
        %8626 = vmatprep.subr.bf16.mxu0 %v7502
        %8627 = vmatpush1.bf16.xpose.msra.mxu0 %v7501
        %8628 = vmatprep.subr.bf16.mxu0 %v7538
        %8629 = vmatpush1.bf16.xpose.msra.mxu0 %v7537
        %8630 = vmatprep.subr.bf16.mxu0 %v7574
        %8631 = vmatpush1.bf16.xpose.msra.mxu0 %v7573
        %8632 = vmatprep.subr.bf16.mxu0 %v7610
        %8633 = vmatpush1.bf16.xpose.msra.mxu0 %v7609
        %8634 = vmatprep.subr.bf16.mxu0 %v7646
        %8635 = vmatpush1.bf16.xpose.msra.mxu0 %v7645
        %8636 = vmatprep.subr.bf16.mxu0 %v7682
        %8637 = vmatpush1.bf16.xpose.msra.mxu0 %v7681
        %8638 = vmatprep.subr.bf16.mxu0 %v7718
        %8639 = vmatpush1.bf16.xpose.msra.mxu0 %v7717
        %8640 = vmatprep.subr.bf16.mxu0 0
        %8641 = vmatpush1.bf16.xpose.msra.mxu0 0
        %8642 = vmatprep.subr.bf16.mxu0 0
        %8643 = vmatpush1.bf16.xpose.msra.mxu0 0
        %8644 = vmatprep.subr.bf16.mxu0 0
        %8645 = vmatpush1.bf16.xpose.msra.mxu0 0
        %8646 = vmatprep.subr.bf16.mxu0 0
        %8647 = vmatpush1.bf16.xpose.msra.mxu0 0
        %8648 = vmatprep.subr.bf16.mxu0 0
        %8649 = vmatpush1.bf16.xpose.msra.mxu0 0
        %8650 = vmatprep.subr.bf16.mxu0 0
        %8651 = vmatpush1.bf16.xpose.msra.mxu0 0
        %8652 = vmatprep.mubr.bf16.mxu0 %v5976
        %8653 = vmatmul.mubr.bf16.gmra.mrb[0].mxu0 %v5975
        %v8654 = vpop.f32.mrb[0].mxu0
        %v8655 = vadd.f32 %v8614, %v8654
        %v8656 = vpop.f32.mrb[0].mxu0
        %v8657 = vadd.f32 %v8616, %v8656
        %v8658 = vpop.f32.mrb[0].mxu0
        %v8659 = vpop.f32.mrb[0].mxu0
        %8660 = vdwg.mxu0
        %8661 = vmatprep.subr.bf16.mxu0 %v7396
        %8662 = vmatpush1.bf16.xpose.msra.mxu0 %v7395
        %8663 = vmatprep.subr.bf16.mxu0 %v7432
        %8664 = vmatpush1.bf16.xpose.msra.mxu0 %v7431
        %8665 = vmatprep.subr.bf16.mxu0 %v7468
        %8666 = vmatpush1.bf16.xpose.msra.mxu0 %v7467
        %8667 = vmatprep.subr.bf16.mxu0 %v7504
        %8668 = vmatpush1.bf16.xpose.msra.mxu0 %v7503
        %8669 = vmatprep.subr.bf16.mxu0 %v7540
        %8670 = vmatpush1.bf16.xpose.msra.mxu0 %v7539
        %8671 = vmatprep.subr.bf16.mxu0 %v7576
        %8672 = vmatpush1.bf16.xpose.msra.mxu0 %v7575
        %8673 = vmatprep.subr.bf16.mxu0 %v7612
        %8674 = vmatpush1.bf16.xpose.msra.mxu0 %v7611
        %8675 = vmatprep.subr.bf16.mxu0 %v7648
        %8676 = vmatpush1.bf16.xpose.msra.mxu0 %v7647
        %8677 = vmatprep.subr.bf16.mxu0 %v7684
        %8678 = vmatpush1.bf16.xpose.msra.mxu0 %v7683
        %8679 = vmatprep.subr.bf16.mxu0 %v7720
        %8680 = vmatpush1.bf16.xpose.msra.mxu0 %v7719
        %8681 = vmatprep.subr.bf16.mxu0 0
        %8682 = vmatpush1.bf16.xpose.msra.mxu0 0
        %8683 = vmatprep.subr.bf16.mxu0 0
        %8684 = vmatpush1.bf16.xpose.msra.mxu0 0
        %8685 = vmatprep.subr.bf16.mxu0 0
        %8686 = vmatpush1.bf16.xpose.msra.mxu0 0
        %8687 = vmatprep.subr.bf16.mxu0 0
        %8688 = vmatpush1.bf16.xpose.msra.mxu0 0
        %8689 = vmatprep.subr.bf16.mxu0 0
        %8690 = vmatpush1.bf16.xpose.msra.mxu0 0
        %8691 = vmatprep.subr.bf16.mxu0 0
        %8692 = vmatpush1.bf16.xpose.msra.mxu0 0
        %8693 = vmatprep.mubr.bf16.mxu0 %v5978
        %8694 = vmatmul.mubr.bf16.gmra.mrb[0].mxu0 %v5977
        %v8695 = vpop.f32.mrb[0].mxu0
        %v8696 = vadd.f32 %v8655, %v8695
        %v8697 = vpop.f32.mrb[0].mxu0
        %v8698 = vadd.f32 %v8657, %v8697
        %v8699 = vpop.f32.mrb[0].mxu0
        %v8700 = vpop.f32.mrb[0].mxu0
        %8701 = vdwg.mxu0
        %8702 = vmatprep.subr.bf16.mxu0 %v7398
        %8703 = vmatpush1.bf16.xpose.msra.mxu0 %v7397
        %8704 = vmatprep.subr.bf16.mxu0 %v7434
        %8705 = vmatpush1.bf16.xpose.msra.mxu0 %v7433
        %8706 = vmatprep.subr.bf16.mxu0 %v7470
        %8707 = vmatpush1.bf16.xpose.msra.mxu0 %v7469
        %8708 = vmatprep.subr.bf16.mxu0 %v7506
        %8709 = vmatpush1.bf16.xpose.msra.mxu0 %v7505
        %8710 = vmatprep.subr.bf16.mxu0 %v7542
        %8711 = vmatpush1.bf16.xpose.msra.mxu0 %v7541
        %8712 = vmatprep.subr.bf16.mxu0 %v7578
        %8713 = vmatpush1.bf16.xpose.msra.mxu0 %v7577
        %8714 = vmatprep.subr.bf16.mxu0 %v7614
        %8715 = vmatpush1.bf16.xpose.msra.mxu0 %v7613
        %8716 = vmatprep.subr.bf16.mxu0 %v7650
        %8717 = vmatpush1.bf16.xpose.msra.mxu0 %v7649
        %8718 = vmatprep.subr.bf16.mxu0 %v7686
        %8719 = vmatpush1.bf16.xpose.msra.mxu0 %v7685
        %8720 = vmatprep.subr.bf16.mxu0 %v7722
        %8721 = vmatpush1.bf16.xpose.msra.mxu0 %v7721
        %8722 = vmatprep.subr.bf16.mxu0 0
        %8723 = vmatpush1.bf16.xpose.msra.mxu0 0
        %8724 = vmatprep.subr.bf16.mxu0 0
        %8725 = vmatpush1.bf16.xpose.msra.mxu0 0
        %8726 = vmatprep.subr.bf16.mxu0 0
        %8727 = vmatpush1.bf16.xpose.msra.mxu0 0
        %8728 = vmatprep.subr.bf16.mxu0 0
        %8729 = vmatpush1.bf16.xpose.msra.mxu0 0
        %8730 = vmatprep.subr.bf16.mxu0 0
        %8731 = vmatpush1.bf16.xpose.msra.mxu0 0
        %8732 = vmatprep.subr.bf16.mxu0 0
        %8733 = vmatpush1.bf16.xpose.msra.mxu0 0
        %8734 = vmatprep.mubr.bf16.mxu0 %v5980
        %8735 = vmatmul.mubr.bf16.gmra.mrb[0].mxu0 %v5979
        %v8736 = vpop.f32.mrb[0].mxu0
        %v8737 = vadd.f32 %v8696, %v8736
        %v8738 = vpop.f32.mrb[0].mxu0
        %v8739 = vadd.f32 %v8698, %v8738
        %v8740 = vpop.f32.mrb[0].mxu0
        %v8741 = vpop.f32.mrb[0].mxu0
        %8742 = vdwg.mxu0
        %8743 = vmatprep.subr.bf16.mxu0 %v7400
        %8744 = vmatpush1.bf16.xpose.msra.mxu0 %v7399
        %8745 = vmatprep.subr.bf16.mxu0 %v7436
        %8746 = vmatpush1.bf16.xpose.msra.mxu0 %v7435
        %8747 = vmatprep.subr.bf16.mxu0 %v7472
        %8748 = vmatpush1.bf16.xpose.msra.mxu0 %v7471
        %8749 = vmatprep.subr.bf16.mxu0 %v7508
        %8750 = vmatpush1.bf16.xpose.msra.mxu0 %v7507
        %8751 = vmatprep.subr.bf16.mxu0 %v7544
        %8752 = vmatpush1.bf16.xpose.msra.mxu0 %v7543
        %8753 = vmatprep.subr.bf16.mxu0 %v7580
        %8754 = vmatpush1.bf16.xpose.msra.mxu0 %v7579
        %8755 = vmatprep.subr.bf16.mxu0 %v7616
        %8756 = vmatpush1.bf16.xpose.msra.mxu0 %v7615
        %8757 = vmatprep.subr.bf16.mxu0 %v7652
        %8758 = vmatpush1.bf16.xpose.msra.mxu0 %v7651
        %8759 = vmatprep.subr.bf16.mxu0 %v7688
        %8760 = vmatpush1.bf16.xpose.msra.mxu0 %v7687
        %8761 = vmatprep.subr.bf16.mxu0 %v7724
        %8762 = vmatpush1.bf16.xpose.msra.mxu0 %v7723
        %8763 = vmatprep.subr.bf16.mxu0 0
        %8764 = vmatpush1.bf16.xpose.msra.mxu0 0
        %8765 = vmatprep.subr.bf16.mxu0 0
        %8766 = vmatpush1.bf16.xpose.msra.mxu0 0
        %8767 = vmatprep.subr.bf16.mxu0 0
        %8768 = vmatpush1.bf16.xpose.msra.mxu0 0
        %8769 = vmatprep.subr.bf16.mxu0 0
        %8770 = vmatpush1.bf16.xpose.msra.mxu0 0
        %8771 = vmatprep.subr.bf16.mxu0 0
        %8772 = vmatpush1.bf16.xpose.msra.mxu0 0
        %8773 = vmatprep.subr.bf16.mxu0 0
        %8774 = vmatpush1.bf16.xpose.msra.mxu0 0
        %8775 = vmatprep.mubr.bf16.mxu0 %v5982
        %8776 = vmatmul.mubr.bf16.gmra.mrb[0].mxu0 %v5981
        %v8777 = vpop.f32.mrb[0].mxu0
        %v8778 = vadd.f32 %v8737, %v8777
        %v8779 = vpop.f32.mrb[0].mxu0
        %v8780 = vadd.f32 %v8739, %v8779
        %v8781 = vpop.f32.mrb[0].mxu0
        %v8782 = vpop.f32.mrb[0].mxu0
        %8783 = vdwg.mxu0
        %8784 = vmatprep.subr.bf16.mxu0 %v7402
        %8785 = vmatpush1.bf16.xpose.msra.mxu0 %v7401
        %8786 = vmatprep.subr.bf16.mxu0 %v7438
        %8787 = vmatpush1.bf16.xpose.msra.mxu0 %v7437
        %8788 = vmatprep.subr.bf16.mxu0 %v7474
        %8789 = vmatpush1.bf16.xpose.msra.mxu0 %v7473
        %8790 = vmatprep.subr.bf16.mxu0 %v7510
        %8791 = vmatpush1.bf16.xpose.msra.mxu0 %v7509
        %8792 = vmatprep.subr.bf16.mxu0 %v7546
        %8793 = vmatpush1.bf16.xpose.msra.mxu0 %v7545
        %8794 = vmatprep.subr.bf16.mxu0 %v7582
        %8795 = vmatpush1.bf16.xpose.msra.mxu0 %v7581
        %8796 = vmatprep.subr.bf16.mxu0 %v7618
        %8797 = vmatpush1.bf16.xpose.msra.mxu0 %v7617
        %8798 = vmatprep.subr.bf16.mxu0 %v7654
        %8799 = vmatpush1.bf16.xpose.msra.mxu0 %v7653
        %8800 = vmatprep.subr.bf16.mxu0 %v7690
        %8801 = vmatpush1.bf16.xpose.msra.mxu0 %v7689
        %8802 = vmatprep.subr.bf16.mxu0 %v7726
        %8803 = vmatpush1.bf16.xpose.msra.mxu0 %v7725
        %8804 = vmatprep.subr.bf16.mxu0 0
        %8805 = vmatpush1.bf16.xpose.msra.mxu0 0
        %8806 = vmatprep.subr.bf16.mxu0 0
        %8807 = vmatpush1.bf16.xpose.msra.mxu0 0
        %8808 = vmatprep.subr.bf16.mxu0 0
        %8809 = vmatpush1.bf16.xpose.msra.mxu0 0
        %8810 = vmatprep.subr.bf16.mxu0 0
        %8811 = vmatpush1.bf16.xpose.msra.mxu0 0
        %8812 = vmatprep.subr.bf16.mxu0 0
        %8813 = vmatpush1.bf16.xpose.msra.mxu0 0
        %8814 = vmatprep.subr.bf16.mxu0 0
        %8815 = vmatpush1.bf16.xpose.msra.mxu0 0
        %8816 = vmatprep.mubr.bf16.mxu0 %v5984
        %8817 = vmatmul.mubr.bf16.gmra.mrb[0].mxu0 %v5983
        %v8818 = vpop.f32.mrb[0].mxu0
        %v8819 = vadd.f32 %v8778, %v8818
        %v8820 = vpop.f32.mrb[0].mxu0
        %v8821 = vadd.f32 %v8780, %v8820
        %v8822 = vpop.f32.mrb[0].mxu0
        %v8823 = vpop.f32.mrb[0].mxu0
        %8824 = vdwg.mxu0
        %v8825 = vmax.f32 %v8819, 0.0
        %v8826 = vmax.f32 %v8821, 0.0
        %v8829 = vcombine.low %v8825, %v8826
        %v8831 = vunpack.c.l.s4 1983009808
        %v8832 = vunpack.c.0.s8 %v8831
        %v8833 = vlaneseq
        %v8834 = vshrl.u32 %v8833, 7
        %v8835 = vsub.s32 %v8832, %v8834
        %v8836 = vrot.slane %v8829, %v8835
        %s8838 = scalar_lea.vmem %s356, 4
        %8839 = vst.msk [vmem:[%s8838] sm:$0xf] %vm4597, %v8836
        %s8840 = smul.u32 2, %s22
        %p8841 = scmp.lt.s32.totalorder %s8840, 19
        %s8842 = scalar_select %p8841, %s8840, 19
        %s8843 = smul.addr %s8842, 2
        %s8844 = smul.addr %s8843, 2
        %s8845 = scalar_lea.vmem %s5, %s8844
        // Predicated region
        $region49: #{roi_layer_forward.1} parent=39 // pred_check
          %p8846 = pneg %p170
        $region50: #{roi_layer_forward.1} parent=39 // pred_check_branch
          %8848 = sbr.rel (%p8846) target = $region52
        $region51: #{roi_layer_forward.1} parent=39 // pred_region
          %s8849 = smul.u32 2, %s22
        $region52: #{roi_layer_forward.1} parent=39 // pred_fallthru
          _
      $region40: #{roi_layer_forward.1} parent=5 // pred_fallthru
        _
      %p8850 = scmp.le.s32.totalorder 2, %s17
      // Predicated region
      $region53: #{roi_layer_forward.1} parent=5 // pred_check
        %p8851 = pneg %p8850
      $region54: #{roi_layer_forward.1} parent=5 // pred_check_branch
        %8853 = sbr.rel (%p8851) target = $region56
      $region55: #{roi_layer_forward.1} parent=5 // pred_region
        %s8854 = ssub.s32 %s17, 2
        // Predicated region
        $region57: #{roi_layer_forward.1} parent=55 // pred_check
          %p8855 = pneg %p176
        $region58: #{roi_layer_forward.1} parent=55 // pred_check_branch
          %8857 = sbr.rel (%p8855) target = $region60
        $region59: #{roi_layer_forward.1} parent=55 // pred_region
          %s8858 = smul.u32 2, %s23
          %p8859 = scmp.lt.s32.totalorder %s8858, 19
          %s8860 = scalar_select %p8859, %s8858, 19
          %s8861 = smul.addr %s8860, 2
          %s8862 = smul.addr %s8861, 2
          %s8863 = scalar_lea.vmem %s5, %s8862
        $region60: #{roi_layer_forward.1} parent=55 // pred_fallthru
          _
      $region56: #{roi_layer_forward.1} parent=5 // pred_fallthru
        _
    $region6: #{roi_layer_forward.1} parent=1 // loop_footer
      %s21 = sadd.s32 1, %s17
    $region7: #{roi_layer_forward.1} parent=1 // loop_footer_branch
      %16 = sbr.rel target = $region3
    $region8: #{roi_layer_forward.1} parent=1 // loop_exit
      _
    %8864 = vsyncpa [#allocation3], 1
    %s8865 = scalar_lea.sflag [#allocation3], 1
    %8866 = vsyncpa %s8865, 1
    %8867 = vsyncpa [#allocation5], 1
    %s8868 = scalar_lea.sflag [#allocation5], 1
    %8869 = vsyncpa %s8868, 1

</llo_original>
